<compile_context>
chip_gen: v6e
topology: v6e:2x2x1
jax: 0.10.0
libtpu: 0.0.40
codegen_flags: <defaults>
</compile_context>

<pallas_src>
import math
import jax
import jax.numpy as jnp
from jax.experimental import pallas as pl
from jax.experimental.pallas import tpu as pltpu

# ---- synthetic cfg -----------------------------------------------------------
DIST_RES = 5          # cfg.dist_res
POSE_ENCODE = True    # cfg.pose_encode
DIST_CH = 2 * DIST_RES + 1                                      # 11
BW_CH = 24
POSE_CH = 69
INPUT_CH = BW_CH + DIST_CH + (POSE_CH if POSE_ENCODE else 0)    # 104
D = 8
W = 256
SKIPS = (4,)

TN = 512   # points per tile (multiple of 128; large to amortise step overhead)


def _bwrefine_kernel(feat_ref, *rest):
    out_ref = rest[-1]
    p = rest[:-1]          # 19 param refs (see _pack_params for the order)

    feat_f32 = feat_ref[0]                     # (INPUT_CH, TN) f32
    bwinit = feat_f32[:BW_CH, :]               # (24, TN) f32 (first 24 channels)
    feat = feat_f32.astype(jnp.bfloat16)       # bf16 matmul operand

    def layer(x, w_ref, b_ref):
        h = jnp.dot(w_ref[...], x, preferred_element_type=jnp.float32) + b_ref[...]
        return jnp.maximum(h, 0.0).astype(jnp.bfloat16)

    # layers 0..4
    net = feat
    for i in range(5):
        net = layer(net, p[2 * i], p[2 * i + 1])

    # layer 5: skip concat [feat, net] folded into two clean matmuls
    h5 = (jnp.dot(p[10][...], feat, preferred_element_type=jnp.float32)
          + jnp.dot(p[11][...], net, preferred_element_type=jnp.float32)
          + p[12][...])
    net = jnp.maximum(h5, 0.0).astype(jnp.bfloat16)

    # layers 6, 7
    net = layer(net, p[13], p[14])
    net = layer(net, p[15], p[16])

    # 24-channel head -> (24, TN) logits in f32
    bw = jnp.dot(p[17][...], net, preferred_element_type=jnp.float32) + p[18][...]

    # residual in log-space + softmax over the 24 channels (sublane axis)
    bw = jnp.log(bwinit + 1e-9) + bw
    bw = bw - jnp.max(bw, axis=0, keepdims=True)
    e = jnp.exp(bw)
    out_ref[0] = e * pl.reciprocal(jnp.sum(e, axis=0, keepdims=True), approx=False)


def _init_params(key):
    """Conv1d(out, in, 1) -> (in, out) matmul weight + (1, out) bias.
    PyTorch default init: U(-1/sqrt(fan_in), 1/sqrt(fan_in))."""
    dims = [(INPUT_CH, W)]
    for i in range(D - 1):
        if i in SKIPS:
            dims.append((W + INPUT_CH, W))
        else:
            dims.append((W, W))
    dims.append((W, BW_CH))  # bw_fc

    params = []
    for (cin, cout) in dims:
        key, kw, kb = jax.random.split(key, 3)
        bound = 1.0 / math.sqrt(cin)
        w = jax.random.uniform(kw, (cin, cout), jnp.float32, -bound, bound)
        b = jax.random.uniform(kb, (1, cout), jnp.float32, -bound, bound)
        params.append((w, b))
    return params


def _pack_params(params):
    """Transpose weights to (Cout, Cin) bf16, biases to (Cout, 1) f32, and split
    the skip layer's weight into feat / net halves."""
    flat = []
    for i, (w, b) in enumerate(params):
        bcol = jnp.transpose(b, (1, 0))                              # (Cout, 1) f32
        if i == 5:  # layer after the skip concat: rows [feat(104) | net(256)]
            w_feat = jnp.transpose(w[:INPUT_CH]).astype(jnp.bfloat16)   # (W, INPUT_CH)
            w_net = jnp.transpose(w[INPUT_CH:]).astype(jnp.bfloat16)    # (W, W)
            flat.extend([w_feat, w_net, bcol])
        else:
            flat.extend([jnp.transpose(w).astype(jnp.bfloat16), bcol])
    return flat


@jax.jit
def bwrefine_forward(bw_init, dist, poses, params):
    """bw_init: (B, 24, N), dist: (B, 11, N), poses: (B, 69, N)  -> (B, 24, N)"""
    B, _, N = bw_init.shape

    # channels-first concat (native layout, no transposes needed)
    if POSE_ENCODE:
        features = jnp.concatenate([bw_init, dist, poses], axis=1)   # (B, 104, N)
    else:
        features = jnp.concatenate([bw_init, dist], axis=1)

    # pad N up to a multiple of TN (tail handling)
    n_tiles = pl.cdiv(N, TN)
    Np = n_tiles * TN
    if Np != N:
        features = jnp.pad(features, ((0, 0), (0, 0), (0, Np - N)))

    flat_params = _pack_params(params)
    # weights never change across the grid: constant (0, 0) block index, so they
    # stay resident in VMEM for the whole kernel.
    param_specs = [pl.BlockSpec(p.shape, lambda bi, ni: (0, 0)) for p in flat_params]

    # advisory cost estimate (the kernel is strongly compute-bound)
    flops_per_point = 2 * (INPUT_CH * W          # layer 0
                           + 4 * W * W           # layers 1..4
                           + (INPUT_CH + W) * W  # layer 5 (skip)
                           + 2 * W * W           # layers 6, 7
                           + W * BW_CH)          # head
    param_bytes = sum(int(p.size) * p.dtype.itemsize for p in flat_params)
    cost = pl.CostEstimate(
        flops=int(B) * int(Np) * int(flops_per_point),
        transcendentals=int(B) * int(Np) * (2 * BW_CH + 1),   # log + exp + recip
        bytes_accessed=int(B) * int(Np) * (INPUT_CH + BW_CH) * 4 + param_bytes,
    )

    out = pl.pallas_call(
        _bwrefine_kernel,
        out_shape=jax.ShapeDtypeStruct((B, BW_CH, Np), jnp.float32),
        grid_spec=pltpu.PrefetchScalarGridSpec(
            num_scalar_prefetch=0,
            grid=(B, n_tiles),
            in_specs=[
                pl.BlockSpec((1, INPUT_CH, TN), lambda bi, ni: (bi, 0, ni)),
            ] + param_specs,
            out_specs=pl.BlockSpec((1, BW_CH, TN), lambda bi, ni: (bi, 0, ni)),
        ),
        compiler_params=pltpu.CompilerParams(
            dimension_semantics=("parallel", "parallel")),
        cost_estimate=cost,
    )(features, *flat_params)

    return out[:, :, :N]


def _reference_forward(bw_init, dist, poses, params):
    """Pure-JAX reference matching the PyTorch semantics (same bf16/f32 mix)."""
    if POSE_ENCODE:
        features = jnp.concatenate([bw_init, dist, poses], axis=1)   # (B, C, N)
    else:
        features = jnp.concatenate([bw_init, dist], axis=1)
    x = jnp.transpose(features, (0, 2, 1)).astype(jnp.bfloat16)
    feat = x
    for i in range(D):
        w, b = params[i]
        h = jnp.einsum('bnc,co->bno', x, w.astype(jnp.bfloat16),
                       preferred_element_type=jnp.float32) + b
        x = jnp.maximum(h, 0.0).astype(jnp.bfloat16)
        if i in SKIPS:
            x = jnp.concatenate([feat, x], axis=-1)
    w, b = params[D]
    bw = jnp.einsum('bnc,co->bno', x, w.astype(jnp.bfloat16),
                    preferred_element_type=jnp.float32) + b
    bw = jnp.log(jnp.transpose(bw_init, (0, 2, 1)) + 1e-9) + bw
    bw = jax.nn.softmax(bw, axis=-1)
    return jnp.transpose(bw, (0, 2, 1))


if __name__ == "__main__":
    key = jax.random.PRNGKey(0)
    kp, k1, k2, k3 = jax.random.split(key, 4)

    B, N = 2, 300   # N not a multiple of TN -> exercises the padded tail
    params = _init_params(kp)

    # bw_init are valid blend weights (positive, sum to 1 over the 24 channels)
    bw_init = jax.nn.softmax(jax.random.normal(k1, (B, BW_CH, N), jnp.float32), axis=1)
    dist = jax.random.normal(k2, (B, DIST_CH, N), jnp.float32)
    poses = jax.random.normal(k3, (B, POSE_CH, N), jnp.float32)

    out = bwrefine_forward(bw_init, dist, poses, params)
    out = jax.block_until_ready(out)

    ref = _reference_forward(bw_init, dist, poses, params)
    assert out.shape == (B, BW_CH, N)
    assert bool(jnp.all(jnp.isfinite(out)))
    assert jnp.allclose(out, ref, atol=1e-3, rtol=1e-3), \
        float(jnp.max(jnp.abs(out - ref)))

    print("KERNEL_OK")
</pallas_src>

<mosaic_0001>
module attributes {stable_mosaic.version = 11 : i64} {
  func.func @_bwrefine_kernel(%arg0: i32, %arg1: i32, %arg2: memref<1x104x512xf32, #tpu.memory_space<vmem>>, %arg3: memref<256x104xbf16, #tpu.memory_space<vmem>>, %arg4: memref<256x1xf32, #tpu.memory_space<vmem>>, %arg5: memref<256x256xbf16, #tpu.memory_space<vmem>>, %arg6: memref<256x1xf32, #tpu.memory_space<vmem>>, %arg7: memref<256x256xbf16, #tpu.memory_space<vmem>>, %arg8: memref<256x1xf32, #tpu.memory_space<vmem>>, %arg9: memref<256x256xbf16, #tpu.memory_space<vmem>>, %arg10: memref<256x1xf32, #tpu.memory_space<vmem>>, %arg11: memref<256x256xbf16, #tpu.memory_space<vmem>>, %arg12: memref<256x1xf32, #tpu.memory_space<vmem>>, %arg13: memref<256x104xbf16, #tpu.memory_space<vmem>>, %arg14: memref<256x256xbf16, #tpu.memory_space<vmem>>, %arg15: memref<256x1xf32, #tpu.memory_space<vmem>>, %arg16: memref<256x256xbf16, #tpu.memory_space<vmem>>, %arg17: memref<256x1xf32, #tpu.memory_space<vmem>>, %arg18: memref<256x256xbf16, #tpu.memory_space<vmem>>, %arg19: memref<256x1xf32, #tpu.memory_space<vmem>>, %arg20: memref<24x256xbf16, #tpu.memory_space<vmem>>, %arg21: memref<24x1xf32, #tpu.memory_space<vmem>>, %arg22: memref<1x24x512xf32, #tpu.memory_space<vmem>>) attributes {dimension_semantics = [#tpu.dimension_semantics<parallel>, #tpu.dimension_semantics<parallel>], iteration_bounds = array<i64: 2, 1>, scalar_prefetch = 0 : i64, scratch_operands = 0 : i64, tpu.core_type = #tpu.core_type<tc>, window_params = [{transform_indices = @transform_0, window_bounds = array<i64: 1, 104, 512>}, {pipeline_mode = #tpu.pipeline_mode<synchronous>, transform_indices = @transform_1, window_bounds = array<i64: 256, 104>}, {pipeline_mode = #tpu.pipeline_mode<synchronous>, transform_indices = @transform_2, window_bounds = array<i64: 256, 1>}, {pipeline_mode = #tpu.pipeline_mode<synchronous>, transform_indices = @transform_3, window_bounds = array<i64: 256, 256>}, {pipeline_mode = #tpu.pipeline_mode<synchronous>, transform_indices = @transform_4, window_bounds = array<i64: 256, 1>}, {pipeline_mode = #tpu.pipeline_mode<synchronous>, transform_indices = @transform_5, window_bounds = array<i64: 256, 256>}, {pipeline_mode = #tpu.pipeline_mode<synchronous>, transform_indices = @transform_6, window_bounds = array<i64: 256, 1>}, {pipeline_mode = #tpu.pipeline_mode<synchronous>, transform_indices = @transform_7, window_bounds = array<i64: 256, 256>}, {pipeline_mode = #tpu.pipeline_mode<synchronous>, transform_indices = @transform_8, window_bounds = array<i64: 256, 1>}, {pipeline_mode = #tpu.pipeline_mode<synchronous>, transform_indices = @transform_9, window_bounds = array<i64: 256, 256>}, {pipeline_mode = #tpu.pipeline_mode<synchronous>, transform_indices = @transform_10, window_bounds = array<i64: 256, 1>}, {pipeline_mode = #tpu.pipeline_mode<synchronous>, transform_indices = @transform_11, window_bounds = array<i64: 256, 104>}, {pipeline_mode = #tpu.pipeline_mode<synchronous>, transform_indices = @transform_12, window_bounds = array<i64: 256, 256>}, {pipeline_mode = #tpu.pipeline_mode<synchronous>, transform_indices = @transform_13, window_bounds = array<i64: 256, 1>}, {pipeline_mode = #tpu.pipeline_mode<synchronous>, transform_indices = @transform_14, window_bounds = array<i64: 256, 256>}, {pipeline_mode = #tpu.pipeline_mode<synchronous>, transform_indices = @transform_15, window_bounds = array<i64: 256, 1>}, {pipeline_mode = #tpu.pipeline_mode<synchronous>, transform_indices = @transform_16, window_bounds = array<i64: 256, 256>}, {pipeline_mode = #tpu.pipeline_mode<synchronous>, transform_indices = @transform_17, window_bounds = array<i64: 256, 1>}, {pipeline_mode = #tpu.pipeline_mode<synchronous>, transform_indices = @transform_18, window_bounds = array<i64: 24, 256>}, {pipeline_mode = #tpu.pipeline_mode<synchronous>, transform_indices = @transform_19, window_bounds = array<i64: 24, 1>}, {transform_indices = @transform_20, window_bounds = array<i64: 1, 24, 512>}]} {
    %c0 = arith.constant 0 : index
    %c0_0 = arith.constant 0 : index
    %c0_1 = arith.constant 0 : index
    %0 = vector.load %arg2[%c0, %c0_0, %c0_1] : memref<1x104x512xf32, #tpu.memory_space<vmem>>, vector<1x104x512xf32>
    %1 = vector.shape_cast %0 : vector<1x104x512xf32> to vector<104x512xf32>
    %2 = vector.extract_strided_slice %1 {offsets = [0, 0], sizes = [24, 512], strides = [1, 1]} : vector<104x512xf32> to vector<24x512xf32>
    %3 = arith.truncf %1 : vector<104x512xf32> to vector<104x512xbf16>
    %c0_2 = arith.constant 0 : index
    %c0_3 = arith.constant 0 : index
    %4 = vector.load %arg3[%c0_2, %c0_3] : memref<256x104xbf16, #tpu.memory_space<vmem>>, vector<256x104xbf16>
    %cst = arith.constant dense<0.000000e+00> : vector<256x512xf32>
    %5 = tpu.matmul %4, %3, %cst {dimension_numbers = #tpu.dot_dimension_numbers<[1], [0], [0], [1], [0, 0, 1, 1], [], []>} : vector<256x104xbf16>, vector<104x512xbf16>, vector<256x512xf32> -> vector<256x512xf32>
    %c0_4 = arith.constant 0 : index
    %c0_5 = arith.constant 0 : index
    %6 = vector.load %arg4[%c0_4, %c0_5] : memref<256x1xf32, #tpu.memory_space<vmem>>, vector<256x1xf32>
    %7 = vector.broadcast %6 : vector<256x1xf32> to vector<256x512xf32>
    %8 = arith.addf %5, %7 : vector<256x512xf32>
    %cst_6 = arith.constant 0.000000e+00 : f32
    %9 = vector.broadcast %cst_6 : f32 to vector<256x512xf32>
    %10 = arith.maximumf %8, %9 : vector<256x512xf32>
    %11 = arith.truncf %10 : vector<256x512xf32> to vector<256x512xbf16>
    %c0_7 = arith.constant 0 : index
    %c0_8 = arith.constant 0 : index
    %12 = vector.load %arg5[%c0_7, %c0_8] : memref<256x256xbf16, #tpu.memory_space<vmem>>, vector<256x256xbf16>
    %cst_9 = arith.constant dense<0.000000e+00> : vector<256x512xf32>
    %13 = tpu.matmul %12, %11, %cst_9 {dimension_numbers = #tpu.dot_dimension_numbers<[1], [0], [0], [1], [0, 0, 1, 1], [], []>} : vector<256x256xbf16>, vector<256x512xbf16>, vector<256x512xf32> -> vector<256x512xf32>
    %c0_10 = arith.constant 0 : index
    %c0_11 = arith.constant 0 : index
    %14 = vector.load %arg6[%c0_10, %c0_11] : memref<256x1xf32, #tpu.memory_space<vmem>>, vector<256x1xf32>
    %15 = vector.broadcast %14 : vector<256x1xf32> to vector<256x512xf32>
    %16 = arith.addf %13, %15 : vector<256x512xf32>
    %cst_12 = arith.constant 0.000000e+00 : f32
    %17 = vector.broadcast %cst_12 : f32 to vector<256x512xf32>
    %18 = arith.maximumf %16, %17 : vector<256x512xf32>
    %19 = arith.truncf %18 : vector<256x512xf32> to vector<256x512xbf16>
    %c0_13 = arith.constant 0 : index
    %c0_14 = arith.constant 0 : index
    %20 = vector.load %arg7[%c0_13, %c0_14] : memref<256x256xbf16, #tpu.memory_space<vmem>>, vector<256x256xbf16>
    %cst_15 = arith.constant dense<0.000000e+00> : vector<256x512xf32>
    %21 = tpu.matmul %20, %19, %cst_15 {dimension_numbers = #tpu.dot_dimension_numbers<[1], [0], [0], [1], [0, 0, 1, 1], [], []>} : vector<256x256xbf16>, vector<256x512xbf16>, vector<256x512xf32> -> vector<256x512xf32>
    %c0_16 = arith.constant 0 : index
    %c0_17 = arith.constant 0 : index
    %22 = vector.load %arg8[%c0_16, %c0_17] : memref<256x1xf32, #tpu.memory_space<vmem>>, vector<256x1xf32>
    %23 = vector.broadcast %22 : vector<256x1xf32> to vector<256x512xf32>
    %24 = arith.addf %21, %23 : vector<256x512xf32>
    %cst_18 = arith.constant 0.000000e+00 : f32
    %25 = vector.broadcast %cst_18 : f32 to vector<256x512xf32>
    %26 = arith.maximumf %24, %25 : vector<256x512xf32>
    %27 = arith.truncf %26 : vector<256x512xf32> to vector<256x512xbf16>
    %c0_19 = arith.constant 0 : index
    %c0_20 = arith.constant 0 : index
    %28 = vector.load %arg9[%c0_19, %c0_20] : memref<256x256xbf16, #tpu.memory_space<vmem>>, vector<256x256xbf16>
    %cst_21 = arith.constant dense<0.000000e+00> : vector<256x512xf32>
    %29 = tpu.matmul %28, %27, %cst_21 {dimension_numbers = #tpu.dot_dimension_numbers<[1], [0], [0], [1], [0, 0, 1, 1], [], []>} : vector<256x256xbf16>, vector<256x512xbf16>, vector<256x512xf32> -> vector<256x512xf32>
    %c0_22 = arith.constant 0 : index
    %c0_23 = arith.constant 0 : index
    %30 = vector.load %arg10[%c0_22, %c0_23] : memref<256x1xf32, #tpu.memory_space<vmem>>, vector<256x1xf32>
    %31 = vector.broadcast %30 : vector<256x1xf32> to vector<256x512xf32>
    %32 = arith.addf %29, %31 : vector<256x512xf32>
    %cst_24 = arith.constant 0.000000e+00 : f32
    %33 = vector.broadcast %cst_24 : f32 to vector<256x512xf32>
    %34 = arith.maximumf %32, %33 : vector<256x512xf32>
    %35 = arith.truncf %34 : vector<256x512xf32> to vector<256x512xbf16>
    %c0_25 = arith.constant 0 : index
    %c0_26 = arith.constant 0 : index
    %36 = vector.load %arg11[%c0_25, %c0_26] : memref<256x256xbf16, #tpu.memory_space<vmem>>, vector<256x256xbf16>
    %cst_27 = arith.constant dense<0.000000e+00> : vector<256x512xf32>
    %37 = tpu.matmul %36, %35, %cst_27 {dimension_numbers = #tpu.dot_dimension_numbers<[1], [0], [0], [1], [0, 0, 1, 1], [], []>} : vector<256x256xbf16>, vector<256x512xbf16>, vector<256x512xf32> -> vector<256x512xf32>
    %c0_28 = arith.constant 0 : index
    %c0_29 = arith.constant 0 : index
    %38 = vector.load %arg12[%c0_28, %c0_29] : memref<256x1xf32, #tpu.memory_space<vmem>>, vector<256x1xf32>
    %39 = vector.broadcast %38 : vector<256x1xf32> to vector<256x512xf32>
    %40 = arith.addf %37, %39 : vector<256x512xf32>
    %cst_30 = arith.constant 0.000000e+00 : f32
    %41 = vector.broadcast %cst_30 : f32 to vector<256x512xf32>
    %42 = arith.maximumf %40, %41 : vector<256x512xf32>
    %43 = arith.truncf %42 : vector<256x512xf32> to vector<256x512xbf16>
    %c0_31 = arith.constant 0 : index
    %c0_32 = arith.constant 0 : index
    %44 = vector.load %arg13[%c0_31, %c0_32] : memref<256x104xbf16, #tpu.memory_space<vmem>>, vector<256x104xbf16>
    %cst_33 = arith.constant dense<0.000000e+00> : vector<256x512xf32>
    %45 = tpu.matmul %44, %3, %cst_33 {dimension_numbers = #tpu.dot_dimension_numbers<[1], [0], [0], [1], [0, 0, 1, 1], [], []>} : vector<256x104xbf16>, vector<104x512xbf16>, vector<256x512xf32> -> vector<256x512xf32>
    %c0_34 = arith.constant 0 : index
    %c0_35 = arith.constant 0 : index
    %46 = vector.load %arg14[%c0_34, %c0_35] : memref<256x256xbf16, #tpu.memory_space<vmem>>, vector<256x256xbf16>
    %cst_36 = arith.constant dense<0.000000e+00> : vector<256x512xf32>
    %47 = tpu.matmul %46, %43, %cst_36 {dimension_numbers = #tpu.dot_dimension_numbers<[1], [0], [0], [1], [0, 0, 1, 1], [], []>} : vector<256x256xbf16>, vector<256x512xbf16>, vector<256x512xf32> -> vector<256x512xf32>
    %48 = arith.addf %45, %47 : vector<256x512xf32>
    %c0_37 = arith.constant 0 : index
    %c0_38 = arith.constant 0 : index
    %49 = vector.load %arg15[%c0_37, %c0_38] : memref<256x1xf32, #tpu.memory_space<vmem>>, vector<256x1xf32>
    %50 = vector.broadcast %49 : vector<256x1xf32> to vector<256x512xf32>
    %51 = arith.addf %48, %50 : vector<256x512xf32>
    %cst_39 = arith.constant 0.000000e+00 : f32
    %52 = vector.broadcast %cst_39 : f32 to vector<256x512xf32>
    %53 = arith.maximumf %51, %52 : vector<256x512xf32>
    %54 = arith.truncf %53 : vector<256x512xf32> to vector<256x512xbf16>
    %c0_40 = arith.constant 0 : index
    %c0_41 = arith.constant 0 : index
    %55 = vector.load %arg16[%c0_40, %c0_41] : memref<256x256xbf16, #tpu.memory_space<vmem>>, vector<256x256xbf16>
    %cst_42 = arith.constant dense<0.000000e+00> : vector<256x512xf32>
    %56 = tpu.matmul %55, %54, %cst_42 {dimension_numbers = #tpu.dot_dimension_numbers<[1], [0], [0], [1], [0, 0, 1, 1], [], []>} : vector<256x256xbf16>, vector<256x512xbf16>, vector<256x512xf32> -> vector<256x512xf32>
    %c0_43 = arith.constant 0 : index
    %c0_44 = arith.constant 0 : index
    %57 = vector.load %arg17[%c0_43, %c0_44] : memref<256x1xf32, #tpu.memory_space<vmem>>, vector<256x1xf32>
    %58 = vector.broadcast %57 : vector<256x1xf32> to vector<256x512xf32>
    %59 = arith.addf %56, %58 : vector<256x512xf32>
    %cst_45 = arith.constant 0.000000e+00 : f32
    %60 = vector.broadcast %cst_45 : f32 to vector<256x512xf32>
    %61 = arith.maximumf %59, %60 : vector<256x512xf32>
    %62 = arith.truncf %61 : vector<256x512xf32> to vector<256x512xbf16>
    %c0_46 = arith.constant 0 : index
    %c0_47 = arith.constant 0 : index
    %63 = vector.load %arg18[%c0_46, %c0_47] : memref<256x256xbf16, #tpu.memory_space<vmem>>, vector<256x256xbf16>
    %cst_48 = arith.constant dense<0.000000e+00> : vector<256x512xf32>
    %64 = tpu.matmul %63, %62, %cst_48 {dimension_numbers = #tpu.dot_dimension_numbers<[1], [0], [0], [1], [0, 0, 1, 1], [], []>} : vector<256x256xbf16>, vector<256x512xbf16>, vector<256x512xf32> -> vector<256x512xf32>
    %c0_49 = arith.constant 0 : index
    %c0_50 = arith.constant 0 : index
    %65 = vector.load %arg19[%c0_49, %c0_50] : memref<256x1xf32, #tpu.memory_space<vmem>>, vector<256x1xf32>
    %66 = vector.broadcast %65 : vector<256x1xf32> to vector<256x512xf32>
    %67 = arith.addf %64, %66 : vector<256x512xf32>
    %cst_51 = arith.constant 0.000000e+00 : f32
    %68 = vector.broadcast %cst_51 : f32 to vector<256x512xf32>
    %69 = arith.maximumf %67, %68 : vector<256x512xf32>
    %70 = arith.truncf %69 : vector<256x512xf32> to vector<256x512xbf16>
    %c0_52 = arith.constant 0 : index
    %c0_53 = arith.constant 0 : index
    %71 = vector.load %arg20[%c0_52, %c0_53] : memref<24x256xbf16, #tpu.memory_space<vmem>>, vector<24x256xbf16>
    %cst_54 = arith.constant dense<0.000000e+00> : vector<24x512xf32>
    %72 = tpu.matmul %71, %70, %cst_54 {dimension_numbers = #tpu.dot_dimension_numbers<[1], [0], [0], [1], [0, 0, 1, 1], [], []>} : vector<24x256xbf16>, vector<256x512xbf16>, vector<24x512xf32> -> vector<24x512xf32>
    %c0_55 = arith.constant 0 : index
    %c0_56 = arith.constant 0 : index
    %73 = vector.load %arg21[%c0_55, %c0_56] : memref<24x1xf32, #tpu.memory_space<vmem>>, vector<24x1xf32>
    %74 = vector.broadcast %73 : vector<24x1xf32> to vector<24x512xf32>
    %75 = arith.addf %72, %74 : vector<24x512xf32>
    %cst_57 = arith.constant 9.99999971E-10 : f32
    %76 = vector.broadcast %cst_57 : f32 to vector<24x512xf32>
    %77 = arith.addf %2, %76 : vector<24x512xf32>
    %78 = math.log %77 : vector<24x512xf32>
    %79 = arith.addf %78, %75 : vector<24x512xf32>
    %cst_58 = arith.constant dense<0xFF800000> : vector<512xf32>
    %80 = vector.multi_reduction <maximumf>, %79, %cst_58 [0] : vector<24x512xf32> to vector<512xf32>
    %81 = vector.shape_cast %80 : vector<512xf32> to vector<1x512xf32>
    %82 = vector.broadcast %81 : vector<1x512xf32> to vector<24x512xf32>
    %83 = arith.subf %79, %82 : vector<24x512xf32>
    %84 = math.exp %83 : vector<24x512xf32>
    %cst_59 = arith.constant dense<0.000000e+00> : vector<512xf32>
    %85 = vector.multi_reduction <add>, %84, %cst_59 [0] : vector<24x512xf32> to vector<512xf32>
    %86 = vector.shape_cast %85 : vector<512xf32> to vector<1x512xf32>
    %87 = tpu.reciprocal %86 : vector<1x512xf32> -> vector<1x512xf32>
    %88 = vector.broadcast %87 : vector<1x512xf32> to vector<24x512xf32>
    %89 = arith.mulf %84, %88 : vector<24x512xf32>
    %c0_60 = arith.constant 0 : index
    %c0_61 = arith.constant 0 : index
    %c0_62 = arith.constant 0 : index
    %90 = vector.load %arg22[%c0_60, %c0_61, %c0_62] : memref<1x24x512xf32, #tpu.memory_space<vmem>>, vector<1x24x512xf32>
    %91 = vector.shape_cast %90 : vector<1x24x512xf32> to vector<24x512xf32>
    %92 = vector.shape_cast %89 : vector<24x512xf32> to vector<1x24x512xf32>
    tpu.vector_store %arg22[%c0_60, %c0_61, %c0_62], %92 {strides = array<i32>} : memref<1x24x512xf32, #tpu.memory_space<vmem>>, vector<1x24x512xf32>,
    return
  }
  func.func @transform_0(%arg0: i32, %arg1: i32) -> (i32, i32, i32) {
    %c0_i32 = arith.constant 0 : i32
    %c0_i32_0 = arith.constant 0 : i32
    return %arg0, %c0_i32, %arg1 : i32, i32, i32
  }
  func.func @transform_1(%arg0: i32, %arg1: i32) -> (i32, i32) {
    %c0_i32 = arith.constant 0 : i32
    %c0_i32_0 = arith.constant 0 : i32
    %c0_i32_1 = arith.constant 0 : i32
    return %c0_i32, %c0_i32_0 : i32, i32
  }
  func.func @transform_2(%arg0: i32, %arg1: i32) -> (i32, i32) {
    %c0_i32 = arith.constant 0 : i32
    %c0_i32_0 = arith.constant 0 : i32
    %c0_i32_1 = arith.constant 0 : i32
    return %c0_i32, %c0_i32_0 : i32, i32
  }
  func.func @transform_3(%arg0: i32, %arg1: i32) -> (i32, i32) {
    %c0_i32 = arith.constant 0 : i32
    %c0_i32_0 = arith.constant 0 : i32
    %c0_i32_1 = arith.constant 0 : i32
    return %c0_i32, %c0_i32_0 : i32, i32
  }
  func.func @transform_4(%arg0: i32, %arg1: i32) -> (i32, i32) {
    %c0_i32 = arith.constant 0 : i32
    %c0_i32_0 = arith.constant 0 : i32
    %c0_i32_1 = arith.constant 0 : i32
    return %c0_i32, %c0_i32_0 : i32, i32
  }
  func.func @transform_5(%arg0: i32, %arg1: i32) -> (i32, i32) {
    %c0_i32 = arith.constant 0 : i32
    %c0_i32_0 = arith.constant 0 : i32
    %c0_i32_1 = arith.constant 0 : i32
    return %c0_i32, %c0_i32_0 : i32, i32
  }
  func.func @transform_6(%arg0: i32, %arg1: i32) -> (i32, i32) {
    %c0_i32 = arith.constant 0 : i32
    %c0_i32_0 = arith.constant 0 : i32
    %c0_i32_1 = arith.constant 0 : i32
    return %c0_i32, %c0_i32_0 : i32, i32
  }
  func.func @transform_7(%arg0: i32, %arg1: i32) -> (i32, i32) {
    %c0_i32 = arith.constant 0 : i32
    %c0_i32_0 = arith.constant 0 : i32
    %c0_i32_1 = arith.constant 0 : i32
    return %c0_i32, %c0_i32_0 : i32, i32
  }
  func.func @transform_8(%arg0: i32, %arg1: i32) -> (i32, i32) {
    %c0_i32 = arith.constant 0 : i32
    %c0_i32_0 = arith.constant 0 : i32
    %c0_i32_1 = arith.constant 0 : i32
    return %c0_i32, %c0_i32_0 : i32, i32
  }
  func.func @transform_9(%arg0: i32, %arg1: i32) -> (i32, i32) {
    %c0_i32 = arith.constant 0 : i32
    %c0_i32_0 = arith.constant 0 : i32
    %c0_i32_1 = arith.constant 0 : i32
    return %c0_i32, %c0_i32_0 : i32, i32
  }
  func.func @transform_10(%arg0: i32, %arg1: i32) -> (i32, i32) {
    %c0_i32 = arith.constant 0 : i32
    %c0_i32_0 = arith.constant 0 : i32
    %c0_i32_1 = arith.constant 0 : i32
    return %c0_i32, %c0_i32_0 : i32, i32
  }
  func.func @transform_11(%arg0: i32, %arg1: i32) -> (i32, i32) {
    %c0_i32 = arith.constant 0 : i32
    %c0_i32_0 = arith.constant 0 : i32
    %c0_i32_1 = arith.constant 0 : i32
    return %c0_i32, %c0_i32_0 : i32, i32
  }
  func.func @transform_12(%arg0: i32, %arg1: i32) -> (i32, i32) {
    %c0_i32 = arith.constant 0 : i32
    %c0_i32_0 = arith.constant 0 : i32
    %c0_i32_1 = arith.constant 0 : i32
    return %c0_i32, %c0_i32_0 : i32, i32
  }
  func.func @transform_13(%arg0: i32, %arg1: i32) -> (i32, i32) {
    %c0_i32 = arith.constant 0 : i32
    %c0_i32_0 = arith.constant 0 : i32
    %c0_i32_1 = arith.constant 0 : i32
    return %c0_i32, %c0_i32_0 : i32, i32
  }
  func.func @transform_14(%arg0: i32, %arg1: i32) -> (i32, i32) {
    %c0_i32 = arith.constant 0 : i32
    %c0_i32_0 = arith.constant 0 : i32
    %c0_i32_1 = arith.constant 0 : i32
    return %c0_i32, %c0_i32_0 : i32, i32
  }
  func.func @transform_15(%arg0: i32, %arg1: i32) -> (i32, i32) {
    %c0_i32 = arith.constant 0 : i32
    %c0_i32_0 = arith.constant 0 : i32
    %c0_i32_1 = arith.constant 0 : i32
    return %c0_i32, %c0_i32_0 : i32, i32
  }
  func.func @transform_16(%arg0: i32, %arg1: i32) -> (i32, i32) {
    %c0_i32 = arith.constant 0 : i32
    %c0_i32_0 = arith.constant 0 : i32
    %c0_i32_1 = arith.constant 0 : i32
    return %c0_i32, %c0_i32_0 : i32, i32
  }
  func.func @transform_17(%arg0: i32, %arg1: i32) -> (i32, i32) {
    %c0_i32 = arith.constant 0 : i32
    %c0_i32_0 = arith.constant 0 : i32
    %c0_i32_1 = arith.constant 0 : i32
    return %c0_i32, %c0_i32_0 : i32, i32
  }
  func.func @transform_18(%arg0: i32, %arg1: i32) -> (i32, i32) {
    %c0_i32 = arith.constant 0 : i32
    %c0_i32_0 = arith.constant 0 : i32
    %c0_i32_1 = arith.constant 0 : i32
    return %c0_i32, %c0_i32_0 : i32, i32
  }
  func.func @transform_19(%arg0: i32, %arg1: i32) -> (i32, i32) {
    %c0_i32 = arith.constant 0 : i32
    %c0_i32_0 = arith.constant 0 : i32
    %c0_i32_1 = arith.constant 0 : i32
    return %c0_i32, %c0_i32_0 : i32, i32
  }
  func.func @transform_20(%arg0: i32, %arg1: i32) -> (i32, i32, i32) {
    %c0_i32 = arith.constant 0 : i32
    %c0_i32_0 = arith.constant 0 : i32
    return %arg0, %c0_i32, %arg1 : i32, i32, i32
  }
}

</mosaic_0001>

<llo_original>
// kernel: bwrefine_forward.1
$region0: #{bwrefine_forward.1}
  #allocation0 [shape = 'u32[]', space=smem, size = 0x4, offset = 0x4, fixed_abs, tag = 'smem constant byte address 0x4 - core index']
  #allocation1 [shape = 'u32[144,128]{1,0:T(1,128)}', space=vmem, size = 0x12000, scoped, tag = 'internal scratch']
  %s0 = inlined_call_operand.vmem [shape: f32[2,104,512], index: 0, kind: input, shape index: {}]
  %s1 = inlined_call_operand.vmem [shape: bf16[256,104], index: 1, kind: input, shape index: {}]
  %s2 = inlined_call_operand.vmem [shape: f32[256,1], index: 2, kind: input, shape index: {}]
  %s3 = inlined_call_operand.vmem [shape: bf16[256,256], index: 3, kind: input, shape index: {}]
  %s4 = inlined_call_operand.vmem [shape: f32[256,1], index: 4, kind: input, shape index: {}]
  %s5 = inlined_call_operand.vmem [shape: bf16[256,256], index: 5, kind: input, shape index: {}]
  %s6 = inlined_call_operand.vmem [shape: f32[256,1], index: 6, kind: input, shape index: {}]
  %s7 = inlined_call_operand.vmem [shape: bf16[256,256], index: 7, kind: input, shape index: {}]
  %s8 = inlined_call_operand.vmem [shape: f32[256,1], index: 8, kind: input, shape index: {}]
  %s9 = inlined_call_operand.vmem [shape: bf16[256,256], index: 9, kind: input, shape index: {}]
  %s10 = inlined_call_operand.vmem [shape: f32[256,1], index: 10, kind: input, shape index: {}]
  %s11 = inlined_call_operand.vmem [shape: bf16[256,104], index: 11, kind: input, shape index: {}]
  %s12 = inlined_call_operand.vmem [shape: bf16[256,256], index: 12, kind: input, shape index: {}]
  %s13 = inlined_call_operand.vmem [shape: f32[256,1], index: 13, kind: input, shape index: {}]
  %s14 = inlined_call_operand.vmem [shape: bf16[256,256], index: 14, kind: input, shape index: {}]
  %s15 = inlined_call_operand.vmem [shape: f32[256,1], index: 15, kind: input, shape index: {}]
  %s16 = inlined_call_operand.vmem [shape: bf16[256,256], index: 16, kind: input, shape index: {}]
  %s17 = inlined_call_operand.vmem [shape: f32[256,1], index: 17, kind: input, shape index: {}]
  %s18 = inlined_call_operand.vmem [shape: bf16[24,256], index: 18, kind: input, shape index: {}]
  %s19 = inlined_call_operand.vmem [shape: f32[24,1], index: 19, kind: input, shape index: {}]
  %s20 = inlined_call_operand.vmem [shape: f32[2,24,512], index: 20, kind: output, shape index: {}]
  %s21 = sld [smem:[#allocation0]]
  $region113: #{bwrefine_forward.1} parent=0
    _
  %s23 = ssub.s32 1, %s21
  %s24 = scalar_select 0, %s23, %s21
  loop: start=0, step=1, limit=4
  $region2: #{bwrefine_forward.1} parent=0 // loop_pre_header
    _
  $region3: #{bwrefine_forward.1} parent=0 // loop_header
    %s26 = sphi 0, %s30
    %p27 = scmp.ge.s32.totalorder %s26, 4
    %s33 = sphi 0, %s45
    %s34 = sphi 0, %s41
    %s35 = sphi 0, %s33
    %s36 = sphi 0, %s34
    %s37 = sphi 0, %s35
    %s38 = sphi 0, %s36
    %s50 = sphi 0, %s52
    %s53 = sphi 0, %s50
    %s54 = sphi 0, %s53
    %s70 = sphi 0, %s54
    %s74 = sphi 0, %s74
    %s76 = sphi 0, %s74
    %s77 = sphi 0, %s76
    %s91 = sphi 0, %s77
    %s95 = sphi 0, %s95
    %s97 = sphi 0, %s95
    %s98 = sphi 0, %s97
    %s112 = sphi 0, %s98
    %s116 = sphi 0, %s116
    %s118 = sphi 0, %s116
    %s119 = sphi 0, %s118
    %s133 = sphi 0, %s119
    %s137 = sphi 0, %s137
    %s139 = sphi 0, %s137
    %s140 = sphi 0, %s139
    %s154 = sphi 0, %s140
    %s158 = sphi 0, %s158
    %s160 = sphi 0, %s158
    %s161 = sphi 0, %s160
    %s175 = sphi 0, %s161
    %s179 = sphi 0, %s179
    %s181 = sphi 0, %s179
    %s182 = sphi 0, %s181
    %s196 = sphi 0, %s182
    %s200 = sphi 0, %s200
    %s202 = sphi 0, %s200
    %s203 = sphi 0, %s202
    %s217 = sphi 0, %s203
    %s221 = sphi 0, %s221
    %s223 = sphi 0, %s221
    %s224 = sphi 0, %s223
    %s238 = sphi 0, %s224
    %s242 = sphi 0, %s242
    %s244 = sphi 0, %s242
    %s245 = sphi 0, %s244
    %s259 = sphi 0, %s245
    %s263 = sphi 0, %s263
    %s265 = sphi 0, %s263
    %s266 = sphi 0, %s265
    %s280 = sphi 0, %s266
    %s284 = sphi 0, %s284
    %s286 = sphi 0, %s284
    %s287 = sphi 0, %s286
    %s301 = sphi 0, %s287
    %s305 = sphi 0, %s305
    %s307 = sphi 0, %s305
    %s308 = sphi 0, %s307
    %s322 = sphi 0, %s308
    %s326 = sphi 0, %s326
    %s328 = sphi 0, %s326
    %s329 = sphi 0, %s328
    %s343 = sphi 0, %s329
    %s347 = sphi 0, %s347
    %s349 = sphi 0, %s347
    %s350 = sphi 0, %s349
    %s364 = sphi 0, %s350
    %s368 = sphi 0, %s368
    %s370 = sphi 0, %s368
    %s371 = sphi 0, %s370
    %s385 = sphi 0, %s371
    %s389 = sphi 0, %s389
    %s391 = sphi 0, %s389
    %s392 = sphi 0, %s391
    %s406 = sphi 0, %s392
    %s410 = sphi 0, %s410
    %s412 = sphi 0, %s410
    %s413 = sphi 0, %s412
    %s427 = sphi 0, %s413
    %s431 = sphi 0, %s431
    %s433 = sphi 0, %s431
    %s434 = sphi 0, %s433
    %s448 = sphi 0, %s434
    %s452 = sphi 0, %s452
    %s454 = sphi 0, %s452
    %s455 = sphi 0, %s454
    %s469 = sphi 0, %s455
    %s477 = sphi 0, %s479
    %s480 = sphi 0, %s477
    %s481 = sphi 0, %s480
    %s497 = sphi 0, %s481
  $region4: #{bwrefine_forward.1} parent=0 // loop_header_branch
    %29 = sbr.rel (%p27) target = $region8
  $region5: #{bwrefine_forward.1} parent=0 // loop_body
    %s31 = ssub.s32 %s26, 1
    %s32 = ssub.s32 %s26, 2
    %s39 = sadd.s32 1, %s34
    %p40 = scmp.ge.s32.totalorder %s39, 1
    %s41 = scalar_select %p40, 0, %s39
    %s42 = sadd.s32 1, %s33
    %s43 = scalar_select %p40, %s42, %s33
    %p44 = scmp.ge.s32.totalorder %s43, 2
    %s45 = scalar_select %p44, 0, %s43
    %s46 = ssub.s32 %s33, %s45
    %s47 = ssub.s32 %s34, %s41
    %s48 = sor.u32 %s46, %s47
    %p49 = scmp.eq.s32.totalorder %s48, 0
    %s51 = sadd.s32 %s50, 1
    %s52 = scalar_select %p49, %s50, %s51
    %p55 = pneg %p49
    %p56 = scmp.eq.s32.totalorder %s26, 1
    %p57 = por %p55, %p56
    %p58 = scmp.ne.s32.totalorder %s50, %s53
    %p59 = scmp.eq.s32.totalorder %s26, 0
    %p60 = por %p58, %p59
    %p61 = scmp.ne.s32.totalorder %s50, %s53
    %p62 = scmp.eq.s32.totalorder %s31, 1
    %p63 = por %p61, %p62
    %p64 = scmp.ne.s32.totalorder %s53, %s54
    %p65 = scmp.eq.s32.totalorder %s31, 0
    %p66 = por %p64, %p65
    %p67 = scmp.ne.s32.totalorder %s53, %s54
    %p68 = scmp.eq.s32.totalorder %s32, 1
    %p69 = por %p67, %p68
    %p71 = scmp.ne.s32.totalorder %s54, %s70
    %p72 = scmp.eq.s32.totalorder %s32, 0
    %p73 = por %p71, %p72
    %s75 = sadd.s32 %s74, 1
    %p78 = scmp.eq.s32.totalorder %s26, 1
    %p79 = scmp.ne.s32.totalorder %s74, %s76
    %p80 = scmp.eq.s32.totalorder %s26, 0
    %p81 = por %p79, %p80
    %p82 = scmp.ne.s32.totalorder %s74, %s76
    %p83 = scmp.eq.s32.totalorder %s31, 1
    %p84 = por %p82, %p83
    %p85 = scmp.ne.s32.totalorder %s76, %s77
    %p86 = scmp.eq.s32.totalorder %s31, 0
    %p87 = por %p85, %p86
    %p88 = scmp.ne.s32.totalorder %s76, %s77
    %p89 = scmp.eq.s32.totalorder %s32, 1
    %p90 = por %p88, %p89
    %p92 = scmp.ne.s32.totalorder %s77, %s91
    %p93 = scmp.eq.s32.totalorder %s32, 0
    %p94 = por %p92, %p93
    %s96 = sadd.s32 %s95, 1
    %p99 = scmp.eq.s32.totalorder %s26, 1
    %p100 = scmp.ne.s32.totalorder %s95, %s97
    %p101 = scmp.eq.s32.totalorder %s26, 0
    %p102 = por %p100, %p101
    %p103 = scmp.ne.s32.totalorder %s95, %s97
    %p104 = scmp.eq.s32.totalorder %s31, 1
    %p105 = por %p103, %p104
    %p106 = scmp.ne.s32.totalorder %s97, %s98
    %p107 = scmp.eq.s32.totalorder %s31, 0
    %p108 = por %p106, %p107
    %p109 = scmp.ne.s32.totalorder %s97, %s98
    %p110 = scmp.eq.s32.totalorder %s32, 1
    %p111 = por %p109, %p110
    %p113 = scmp.ne.s32.totalorder %s98, %s112
    %p114 = scmp.eq.s32.totalorder %s32, 0
    %p115 = por %p113, %p114
    %s117 = sadd.s32 %s116, 1
    %p120 = scmp.eq.s32.totalorder %s26, 1
    %p121 = scmp.ne.s32.totalorder %s116, %s118
    %p122 = scmp.eq.s32.totalorder %s26, 0
    %p123 = por %p121, %p122
    %p124 = scmp.ne.s32.totalorder %s116, %s118
    %p125 = scmp.eq.s32.totalorder %s31, 1
    %p126 = por %p124, %p125
    %p127 = scmp.ne.s32.totalorder %s118, %s119
    %p128 = scmp.eq.s32.totalorder %s31, 0
    %p129 = por %p127, %p128
    %p130 = scmp.ne.s32.totalorder %s118, %s119
    %p131 = scmp.eq.s32.totalorder %s32, 1
    %p132 = por %p130, %p131
    %p134 = scmp.ne.s32.totalorder %s119, %s133
    %p135 = scmp.eq.s32.totalorder %s32, 0
    %p136 = por %p134, %p135
    %s138 = sadd.s32 %s137, 1
    %p141 = scmp.eq.s32.totalorder %s26, 1
    %p142 = scmp.ne.s32.totalorder %s137, %s139
    %p143 = scmp.eq.s32.totalorder %s26, 0
    %p144 = por %p142, %p143
    %p145 = scmp.ne.s32.totalorder %s137, %s139
    %p146 = scmp.eq.s32.totalorder %s31, 1
    %p147 = por %p145, %p146
    %p148 = scmp.ne.s32.totalorder %s139, %s140
    %p149 = scmp.eq.s32.totalorder %s31, 0
    %p150 = por %p148, %p149
    %p151 = scmp.ne.s32.totalorder %s139, %s140
    %p152 = scmp.eq.s32.totalorder %s32, 1
    %p153 = por %p151, %p152
    %p155 = scmp.ne.s32.totalorder %s140, %s154
    %p156 = scmp.eq.s32.totalorder %s32, 0
    %p157 = por %p155, %p156
    %s159 = sadd.s32 %s158, 1
    %p162 = scmp.eq.s32.totalorder %s26, 1
    %p163 = scmp.ne.s32.totalorder %s158, %s160
    %p164 = scmp.eq.s32.totalorder %s26, 0
    %p165 = por %p163, %p164
    %p166 = scmp.ne.s32.totalorder %s158, %s160
    %p167 = scmp.eq.s32.totalorder %s31, 1
    %p168 = por %p166, %p167
    %p169 = scmp.ne.s32.totalorder %s160, %s161
    %p170 = scmp.eq.s32.totalorder %s31, 0
    %p171 = por %p169, %p170
    %p172 = scmp.ne.s32.totalorder %s160, %s161
    %p173 = scmp.eq.s32.totalorder %s32, 1
    %p174 = por %p172, %p173
    %p176 = scmp.ne.s32.totalorder %s161, %s175
    %p177 = scmp.eq.s32.totalorder %s32, 0
    %p178 = por %p176, %p177
    %s180 = sadd.s32 %s179, 1
    %p183 = scmp.eq.s32.totalorder %s26, 1
    %p184 = scmp.ne.s32.totalorder %s179, %s181
    %p185 = scmp.eq.s32.totalorder %s26, 0
    %p186 = por %p184, %p185
    %p187 = scmp.ne.s32.totalorder %s179, %s181
    %p188 = scmp.eq.s32.totalorder %s31, 1
    %p189 = por %p187, %p188
    %p190 = scmp.ne.s32.totalorder %s181, %s182
    %p191 = scmp.eq.s32.totalorder %s31, 0
    %p192 = por %p190, %p191
    %p193 = scmp.ne.s32.totalorder %s181, %s182
    %p194 = scmp.eq.s32.totalorder %s32, 1
    %p195 = por %p193, %p194
    %p197 = scmp.ne.s32.totalorder %s182, %s196
    %p198 = scmp.eq.s32.totalorder %s32, 0
    %p199 = por %p197, %p198
    %s201 = sadd.s32 %s200, 1
    %p204 = scmp.eq.s32.totalorder %s26, 1
    %p205 = scmp.ne.s32.totalorder %s200, %s202
    %p206 = scmp.eq.s32.totalorder %s26, 0
    %p207 = por %p205, %p206
    %p208 = scmp.ne.s32.totalorder %s200, %s202
    %p209 = scmp.eq.s32.totalorder %s31, 1
    %p210 = por %p208, %p209
    %p211 = scmp.ne.s32.totalorder %s202, %s203
    %p212 = scmp.eq.s32.totalorder %s31, 0
    %p213 = por %p211, %p212
    %p214 = scmp.ne.s32.totalorder %s202, %s203
    %p215 = scmp.eq.s32.totalorder %s32, 1
    %p216 = por %p214, %p215
    %p218 = scmp.ne.s32.totalorder %s203, %s217
    %p219 = scmp.eq.s32.totalorder %s32, 0
    %p220 = por %p218, %p219
    %s222 = sadd.s32 %s221, 1
    %p225 = scmp.eq.s32.totalorder %s26, 1
    %p226 = scmp.ne.s32.totalorder %s221, %s223
    %p227 = scmp.eq.s32.totalorder %s26, 0
    %p228 = por %p226, %p227
    %p229 = scmp.ne.s32.totalorder %s221, %s223
    %p230 = scmp.eq.s32.totalorder %s31, 1
    %p231 = por %p229, %p230
    %p232 = scmp.ne.s32.totalorder %s223, %s224
    %p233 = scmp.eq.s32.totalorder %s31, 0
    %p234 = por %p232, %p233
    %p235 = scmp.ne.s32.totalorder %s223, %s224
    %p236 = scmp.eq.s32.totalorder %s32, 1
    %p237 = por %p235, %p236
    %p239 = scmp.ne.s32.totalorder %s224, %s238
    %p240 = scmp.eq.s32.totalorder %s32, 0
    %p241 = por %p239, %p240
    %s243 = sadd.s32 %s242, 1
    %p246 = scmp.eq.s32.totalorder %s26, 1
    %p247 = scmp.ne.s32.totalorder %s242, %s244
    %p248 = scmp.eq.s32.totalorder %s26, 0
    %p249 = por %p247, %p248
    %p250 = scmp.ne.s32.totalorder %s242, %s244
    %p251 = scmp.eq.s32.totalorder %s31, 1
    %p252 = por %p250, %p251
    %p253 = scmp.ne.s32.totalorder %s244, %s245
    %p254 = scmp.eq.s32.totalorder %s31, 0
    %p255 = por %p253, %p254
    %p256 = scmp.ne.s32.totalorder %s244, %s245
    %p257 = scmp.eq.s32.totalorder %s32, 1
    %p258 = por %p256, %p257
    %p260 = scmp.ne.s32.totalorder %s245, %s259
    %p261 = scmp.eq.s32.totalorder %s32, 0
    %p262 = por %p260, %p261
    %s264 = sadd.s32 %s263, 1
    %p267 = scmp.eq.s32.totalorder %s26, 1
    %p268 = scmp.ne.s32.totalorder %s263, %s265
    %p269 = scmp.eq.s32.totalorder %s26, 0
    %p270 = por %p268, %p269
    %p271 = scmp.ne.s32.totalorder %s263, %s265
    %p272 = scmp.eq.s32.totalorder %s31, 1
    %p273 = por %p271, %p272
    %p274 = scmp.ne.s32.totalorder %s265, %s266
    %p275 = scmp.eq.s32.totalorder %s31, 0
    %p276 = por %p274, %p275
    %p277 = scmp.ne.s32.totalorder %s265, %s266
    %p278 = scmp.eq.s32.totalorder %s32, 1
    %p279 = por %p277, %p278
    %p281 = scmp.ne.s32.totalorder %s266, %s280
    %p282 = scmp.eq.s32.totalorder %s32, 0
    %p283 = por %p281, %p282
    %s285 = sadd.s32 %s284, 1
    %p288 = scmp.eq.s32.totalorder %s26, 1
    %p289 = scmp.ne.s32.totalorder %s284, %s286
    %p290 = scmp.eq.s32.totalorder %s26, 0
    %p291 = por %p289, %p290
    %p292 = scmp.ne.s32.totalorder %s284, %s286
    %p293 = scmp.eq.s32.totalorder %s31, 1
    %p294 = por %p292, %p293
    %p295 = scmp.ne.s32.totalorder %s286, %s287
    %p296 = scmp.eq.s32.totalorder %s31, 0
    %p297 = por %p295, %p296
    %p298 = scmp.ne.s32.totalorder %s286, %s287
    %p299 = scmp.eq.s32.totalorder %s32, 1
    %p300 = por %p298, %p299
    %p302 = scmp.ne.s32.totalorder %s287, %s301
    %p303 = scmp.eq.s32.totalorder %s32, 0
    %p304 = por %p302, %p303
    %s306 = sadd.s32 %s305, 1
    %p309 = scmp.eq.s32.totalorder %s26, 1
    %p310 = scmp.ne.s32.totalorder %s305, %s307
    %p311 = scmp.eq.s32.totalorder %s26, 0
    %p312 = por %p310, %p311
    %p313 = scmp.ne.s32.totalorder %s305, %s307
    %p314 = scmp.eq.s32.totalorder %s31, 1
    %p315 = por %p313, %p314
    %p316 = scmp.ne.s32.totalorder %s307, %s308
    %p317 = scmp.eq.s32.totalorder %s31, 0
    %p318 = por %p316, %p317
    %p319 = scmp.ne.s32.totalorder %s307, %s308
    %p320 = scmp.eq.s32.totalorder %s32, 1
    %p321 = por %p319, %p320
    %p323 = scmp.ne.s32.totalorder %s308, %s322
    %p324 = scmp.eq.s32.totalorder %s32, 0
    %p325 = por %p323, %p324
    %s327 = sadd.s32 %s326, 1
    %p330 = scmp.eq.s32.totalorder %s26, 1
    %p331 = scmp.ne.s32.totalorder %s326, %s328
    %p332 = scmp.eq.s32.totalorder %s26, 0
    %p333 = por %p331, %p332
    %p334 = scmp.ne.s32.totalorder %s326, %s328
    %p335 = scmp.eq.s32.totalorder %s31, 1
    %p336 = por %p334, %p335
    %p337 = scmp.ne.s32.totalorder %s328, %s329
    %p338 = scmp.eq.s32.totalorder %s31, 0
    %p339 = por %p337, %p338
    %p340 = scmp.ne.s32.totalorder %s328, %s329
    %p341 = scmp.eq.s32.totalorder %s32, 1
    %p342 = por %p340, %p341
    %p344 = scmp.ne.s32.totalorder %s329, %s343
    %p345 = scmp.eq.s32.totalorder %s32, 0
    %p346 = por %p344, %p345
    %s348 = sadd.s32 %s347, 1
    %p351 = scmp.eq.s32.totalorder %s26, 1
    %p352 = scmp.ne.s32.totalorder %s347, %s349
    %p353 = scmp.eq.s32.totalorder %s26, 0
    %p354 = por %p352, %p353
    %p355 = scmp.ne.s32.totalorder %s347, %s349
    %p356 = scmp.eq.s32.totalorder %s31, 1
    %p357 = por %p355, %p356
    %p358 = scmp.ne.s32.totalorder %s349, %s350
    %p359 = scmp.eq.s32.totalorder %s31, 0
    %p360 = por %p358, %p359
    %p361 = scmp.ne.s32.totalorder %s349, %s350
    %p362 = scmp.eq.s32.totalorder %s32, 1
    %p363 = por %p361, %p362
    %p365 = scmp.ne.s32.totalorder %s350, %s364
    %p366 = scmp.eq.s32.totalorder %s32, 0
    %p367 = por %p365, %p366
    %s369 = sadd.s32 %s368, 1
    %p372 = scmp.eq.s32.totalorder %s26, 1
    %p373 = scmp.ne.s32.totalorder %s368, %s370
    %p374 = scmp.eq.s32.totalorder %s26, 0
    %p375 = por %p373, %p374
    %p376 = scmp.ne.s32.totalorder %s368, %s370
    %p377 = scmp.eq.s32.totalorder %s31, 1
    %p378 = por %p376, %p377
    %p379 = scmp.ne.s32.totalorder %s370, %s371
    %p380 = scmp.eq.s32.totalorder %s31, 0
    %p381 = por %p379, %p380
    %p382 = scmp.ne.s32.totalorder %s370, %s371
    %p383 = scmp.eq.s32.totalorder %s32, 1
    %p384 = por %p382, %p383
    %p386 = scmp.ne.s32.totalorder %s371, %s385
    %p387 = scmp.eq.s32.totalorder %s32, 0
    %p388 = por %p386, %p387
    %s390 = sadd.s32 %s389, 1
    %p393 = scmp.eq.s32.totalorder %s26, 1
    %p394 = scmp.ne.s32.totalorder %s389, %s391
    %p395 = scmp.eq.s32.totalorder %s26, 0
    %p396 = por %p394, %p395
    %p397 = scmp.ne.s32.totalorder %s389, %s391
    %p398 = scmp.eq.s32.totalorder %s31, 1
    %p399 = por %p397, %p398
    %p400 = scmp.ne.s32.totalorder %s391, %s392
    %p401 = scmp.eq.s32.totalorder %s31, 0
    %p402 = por %p400, %p401
    %p403 = scmp.ne.s32.totalorder %s391, %s392
    %p404 = scmp.eq.s32.totalorder %s32, 1
    %p405 = por %p403, %p404
    %p407 = scmp.ne.s32.totalorder %s392, %s406
    %p408 = scmp.eq.s32.totalorder %s32, 0
    %p409 = por %p407, %p408
    %s411 = sadd.s32 %s410, 1
    %p414 = scmp.eq.s32.totalorder %s26, 1
    %p415 = scmp.ne.s32.totalorder %s410, %s412
    %p416 = scmp.eq.s32.totalorder %s26, 0
    %p417 = por %p415, %p416
    %p418 = scmp.ne.s32.totalorder %s410, %s412
    %p419 = scmp.eq.s32.totalorder %s31, 1
    %p420 = por %p418, %p419
    %p421 = scmp.ne.s32.totalorder %s412, %s413
    %p422 = scmp.eq.s32.totalorder %s31, 0
    %p423 = por %p421, %p422
    %p424 = scmp.ne.s32.totalorder %s412, %s413
    %p425 = scmp.eq.s32.totalorder %s32, 1
    %p426 = por %p424, %p425
    %p428 = scmp.ne.s32.totalorder %s413, %s427
    %p429 = scmp.eq.s32.totalorder %s32, 0
    %p430 = por %p428, %p429
    %s432 = sadd.s32 %s431, 1
    %p435 = scmp.eq.s32.totalorder %s26, 1
    %p436 = scmp.ne.s32.totalorder %s431, %s433
    %p437 = scmp.eq.s32.totalorder %s26, 0
    %p438 = por %p436, %p437
    %p439 = scmp.ne.s32.totalorder %s431, %s433
    %p440 = scmp.eq.s32.totalorder %s31, 1
    %p441 = por %p439, %p440
    %p442 = scmp.ne.s32.totalorder %s433, %s434
    %p443 = scmp.eq.s32.totalorder %s31, 0
    %p444 = por %p442, %p443
    %p445 = scmp.ne.s32.totalorder %s433, %s434
    %p446 = scmp.eq.s32.totalorder %s32, 1
    %p447 = por %p445, %p446
    %p449 = scmp.ne.s32.totalorder %s434, %s448
    %p450 = scmp.eq.s32.totalorder %s32, 0
    %p451 = por %p449, %p450
    %s453 = sadd.s32 %s452, 1
    %p456 = scmp.eq.s32.totalorder %s26, 1
    %p457 = scmp.ne.s32.totalorder %s452, %s454
    %p458 = scmp.eq.s32.totalorder %s26, 0
    %p459 = por %p457, %p458
    %p460 = scmp.ne.s32.totalorder %s452, %s454
    %p461 = scmp.eq.s32.totalorder %s31, 1
    %p462 = por %p460, %p461
    %p463 = scmp.ne.s32.totalorder %s454, %s455
    %p464 = scmp.eq.s32.totalorder %s31, 0
    %p465 = por %p463, %p464
    %p466 = scmp.ne.s32.totalorder %s454, %s455
    %p467 = scmp.eq.s32.totalorder %s32, 1
    %p468 = por %p466, %p467
    %p470 = scmp.ne.s32.totalorder %s455, %s469
    %p471 = scmp.eq.s32.totalorder %s32, 0
    %p472 = por %p470, %p471
    %s473 = ssub.s32 %s33, %s45
    %s474 = ssub.s32 %s34, %s41
    %s475 = sor.u32 %s473, %s474
    %p476 = scmp.eq.s32.totalorder %s475, 0
    %s478 = sadd.s32 %s477, 1
    %s479 = scalar_select %p476, %s477, %s478
    %p482 = pneg %p476
    %p483 = scmp.eq.s32.totalorder %s26, 1
    %p484 = por %p482, %p483
    %p485 = scmp.ne.s32.totalorder %s477, %s480
    %p486 = scmp.eq.s32.totalorder %s26, 0
    %p487 = por %p485, %p486
    %p488 = scmp.ne.s32.totalorder %s477, %s480
    %p489 = scmp.eq.s32.totalorder %s31, 1
    %p490 = por %p488, %p489
    %p491 = scmp.ne.s32.totalorder %s480, %s481
    %p492 = scmp.eq.s32.totalorder %s31, 0
    %p493 = por %p491, %p492
    %p494 = scmp.ne.s32.totalorder %s480, %s481
    %p495 = scmp.eq.s32.totalorder %s32, 1
    %p496 = por %p494, %p495
    %p498 = scmp.ne.s32.totalorder %s481, %s497
    %p499 = scmp.eq.s32.totalorder %s32, 0
    %p500 = por %p498, %p499
    %p501 = scmp.le.s32.totalorder 1, %s26
    %p502 = scmp.lt.s32.totalorder %s26, 3
    %p503 = pnand %p501, %p502
    %p504 = pneg %p503
    // Predicated region
    $region9: #{bwrefine_forward.1} parent=5 // pred_check
      _
    $region10: #{bwrefine_forward.1} parent=5 // pred_check_branch
      %506 = sbr.rel (%p503) target = $region12
    $region11: #{bwrefine_forward.1} parent=5 // pred_region
      %s507 = ssub.s32 %s26, 1
      // Predicated region
      $region13: #{bwrefine_forward.1} parent=11 // pred_check
        %p508 = pneg %p87
      $region14: #{bwrefine_forward.1} parent=11 // pred_check_branch
        %510 = sbr.rel (%p508) target = $region16
      $region15: #{bwrefine_forward.1} parent=11 // pred_region
        _
      $region16: #{bwrefine_forward.1} parent=11 // pred_fallthru
        _
      // Predicated region
      $region17: #{bwrefine_forward.1} parent=11 // pred_check
        %p511 = pneg %p108
      $region18: #{bwrefine_forward.1} parent=11 // pred_check_branch
        %513 = sbr.rel (%p511) target = $region20
      $region19: #{bwrefine_forward.1} parent=11 // pred_region
        _
      $region20: #{bwrefine_forward.1} parent=11 // pred_fallthru
        _
      // Predicated region
      $region21: #{bwrefine_forward.1} parent=11 // pred_check
        %p514 = pneg %p129
      $region22: #{bwrefine_forward.1} parent=11 // pred_check_branch
        %516 = sbr.rel (%p514) target = $region24
      $region23: #{bwrefine_forward.1} parent=11 // pred_region
        _
      $region24: #{bwrefine_forward.1} parent=11 // pred_fallthru
        _
      // Predicated region
      $region25: #{bwrefine_forward.1} parent=11 // pred_check
        %p517 = pneg %p150
      $region26: #{bwrefine_forward.1} parent=11 // pred_check_branch
        %519 = sbr.rel (%p517) target = $region28
      $region27: #{bwrefine_forward.1} parent=11 // pred_region
        _
      $region28: #{bwrefine_forward.1} parent=11 // pred_fallthru
        _
      // Predicated region
      $region29: #{bwrefine_forward.1} parent=11 // pred_check
        %p520 = pneg %p171
      $region30: #{bwrefine_forward.1} parent=11 // pred_check_branch
        %522 = sbr.rel (%p520) target = $region32
      $region31: #{bwrefine_forward.1} parent=11 // pred_region
        _
      $region32: #{bwrefine_forward.1} parent=11 // pred_fallthru
        _
      // Predicated region
      $region33: #{bwrefine_forward.1} parent=11 // pred_check
        %p523 = pneg %p192
      $region34: #{bwrefine_forward.1} parent=11 // pred_check_branch
        %525 = sbr.rel (%p523) target = $region36
      $region35: #{bwrefine_forward.1} parent=11 // pred_region
        _
      $region36: #{bwrefine_forward.1} parent=11 // pred_fallthru
        _
      // Predicated region
      $region37: #{bwrefine_forward.1} parent=11 // pred_check
        %p526 = pneg %p213
      $region38: #{bwrefine_forward.1} parent=11 // pred_check_branch
        %528 = sbr.rel (%p526) target = $region40
      $region39: #{bwrefine_forward.1} parent=11 // pred_region
        _
      $region40: #{bwrefine_forward.1} parent=11 // pred_fallthru
        _
      // Predicated region
      $region41: #{bwrefine_forward.1} parent=11 // pred_check
        %p529 = pneg %p234
      $region42: #{bwrefine_forward.1} parent=11 // pred_check_branch
        %531 = sbr.rel (%p529) target = $region44
      $region43: #{bwrefine_forward.1} parent=11 // pred_region
        _
      $region44: #{bwrefine_forward.1} parent=11 // pred_fallthru
        _
      // Predicated region
      $region45: #{bwrefine_forward.1} parent=11 // pred_check
        %p532 = pneg %p255
      $region46: #{bwrefine_forward.1} parent=11 // pred_check_branch
        %534 = sbr.rel (%p532) target = $region48
      $region47: #{bwrefine_forward.1} parent=11 // pred_region
        _
      $region48: #{bwrefine_forward.1} parent=11 // pred_fallthru
        _
      // Predicated region
      $region49: #{bwrefine_forward.1} parent=11 // pred_check
        %p535 = pneg %p276
      $region50: #{bwrefine_forward.1} parent=11 // pred_check_branch
        %537 = sbr.rel (%p535) target = $region52
      $region51: #{bwrefine_forward.1} parent=11 // pred_region
        _
      $region52: #{bwrefine_forward.1} parent=11 // pred_fallthru
        _
      // Predicated region
      $region53: #{bwrefine_forward.1} parent=11 // pred_check
        %p538 = pneg %p297
      $region54: #{bwrefine_forward.1} parent=11 // pred_check_branch
        %540 = sbr.rel (%p538) target = $region56
      $region55: #{bwrefine_forward.1} parent=11 // pred_region
        _
      $region56: #{bwrefine_forward.1} parent=11 // pred_fallthru
        _
      // Predicated region
      $region57: #{bwrefine_forward.1} parent=11 // pred_check
        %p541 = pneg %p318
      $region58: #{bwrefine_forward.1} parent=11 // pred_check_branch
        %543 = sbr.rel (%p541) target = $region60
      $region59: #{bwrefine_forward.1} parent=11 // pred_region
        _
      $region60: #{bwrefine_forward.1} parent=11 // pred_fallthru
        _
      // Predicated region
      $region61: #{bwrefine_forward.1} parent=11 // pred_check
        %p544 = pneg %p339
      $region62: #{bwrefine_forward.1} parent=11 // pred_check_branch
        %546 = sbr.rel (%p544) target = $region64
      $region63: #{bwrefine_forward.1} parent=11 // pred_region
        _
      $region64: #{bwrefine_forward.1} parent=11 // pred_fallthru
        _
      // Predicated region
      $region65: #{bwrefine_forward.1} parent=11 // pred_check
        %p547 = pneg %p360
      $region66: #{bwrefine_forward.1} parent=11 // pred_check_branch
        %549 = sbr.rel (%p547) target = $region68
      $region67: #{bwrefine_forward.1} parent=11 // pred_region
        _
      $region68: #{bwrefine_forward.1} parent=11 // pred_fallthru
        _
      // Predicated region
      $region69: #{bwrefine_forward.1} parent=11 // pred_check
        %p550 = pneg %p381
      $region70: #{bwrefine_forward.1} parent=11 // pred_check_branch
        %552 = sbr.rel (%p550) target = $region72
      $region71: #{bwrefine_forward.1} parent=11 // pred_region
        _
      $region72: #{bwrefine_forward.1} parent=11 // pred_fallthru
        _
      // Predicated region
      $region73: #{bwrefine_forward.1} parent=11 // pred_check
        %p553 = pneg %p402
      $region74: #{bwrefine_forward.1} parent=11 // pred_check_branch
        %555 = sbr.rel (%p553) target = $region76
      $region75: #{bwrefine_forward.1} parent=11 // pred_region
        _
      $region76: #{bwrefine_forward.1} parent=11 // pred_fallthru
        _
      // Predicated region
      $region77: #{bwrefine_forward.1} parent=11 // pred_check
        %p556 = pneg %p423
      $region78: #{bwrefine_forward.1} parent=11 // pred_check_branch
        %558 = sbr.rel (%p556) target = $region80
      $region79: #{bwrefine_forward.1} parent=11 // pred_region
        _
      $region80: #{bwrefine_forward.1} parent=11 // pred_fallthru
        _
      // Predicated region
      $region81: #{bwrefine_forward.1} parent=11 // pred_check
        %p559 = pneg %p444
      $region82: #{bwrefine_forward.1} parent=11 // pred_check_branch
        %561 = sbr.rel (%p559) target = $region84
      $region83: #{bwrefine_forward.1} parent=11 // pred_region
        _
      $region84: #{bwrefine_forward.1} parent=11 // pred_fallthru
        _
      // Predicated region
      $region85: #{bwrefine_forward.1} parent=11 // pred_check
        %p562 = pneg %p465
      $region86: #{bwrefine_forward.1} parent=11 // pred_check_branch
        %564 = sbr.rel (%p562) target = $region88
      $region87: #{bwrefine_forward.1} parent=11 // pred_region
        _
      $region88: #{bwrefine_forward.1} parent=11 // pred_fallthru
        _
    $region12: #{bwrefine_forward.1} parent=5 // pred_fallthru
      _
    %p565 = scmp.lt.s32.totalorder %s26, 2
    // Predicated region
    $region89: #{bwrefine_forward.1} parent=5 // pred_check
      %p566 = pneg %p565
    $region90: #{bwrefine_forward.1} parent=5 // pred_check_branch
      %568 = sbr.rel (%p566) target = $region92
    $region91: #{bwrefine_forward.1} parent=5 // pred_region
      // Predicated region
      $region93: #{bwrefine_forward.1} parent=91 // pred_check
        %p569 = pneg %p60
      $region94: #{bwrefine_forward.1} parent=91 // pred_check_branch
        %571 = sbr.rel (%p569) target = $region96
      $region95: #{bwrefine_forward.1} parent=91 // pred_region
        %s572 = smul.u32 4, %s34
        %p573 = scmp.lt.s32.totalorder %s33, 1
        %s574 = scalar_select %p573, %s33, 1
        %p575 = scmp.lt.s32.totalorder %s572, 3
        %s576 = scalar_select %p575, %s572, 3
        %s577 = smul.addr %s574, 52
        %s578 = sadd.s32 %s576, %s577
        %s579 = smul.addr %s578, 8
        %s580 = scalar_lea.vmem %s0, %s579
        %s581 = smul.u32 4, %s34
      $region96: #{bwrefine_forward.1} parent=91 // pred_fallthru
        _
    $region92: #{bwrefine_forward.1} parent=5 // pred_fallthru
      _
    %p582 = scmp.le.s32.totalorder 1, %s26
    %p583 = scmp.lt.s32.totalorder %s26, 3
    %p584 = pnand %p582, %p583
    %p585 = pneg %p584
    // Predicated region
    $region97: #{bwrefine_forward.1} parent=5 // pred_check
      _
    $region98: #{bwrefine_forward.1} parent=5 // pred_check_branch
      %587 = sbr.rel (%p584) target = $region100
    $region99: #{bwrefine_forward.1} parent=5 // pred_region
      %s588 = ssub.s32 %s26, 1
      %s589 = smul.u32 4, %s36
      %p590 = scmp.lt.s32.totalorder %s35, 1
      %s591 = scalar_select %p590, %s35, 1
      %p592 = scmp.lt.s32.totalorder %s589, 3
      %s593 = scalar_select %p592, %s589, 3
      %s594 = smul.addr %s591, 52
      %s595 = sadd.s32 %s593, %s594
      %s596 = smul.addr %s595, 8
      %s597 = scalar_lea.vmem %s0, %s596
      %p598 = pneg %p66
      %p599 = pneg %p63
      %p600 = pneg %p87
      %p601 = pneg %p84
      %p602 = pneg %p108
      %p603 = pneg %p105
      %p604 = pneg %p129
      %p605 = pneg %p126
      %p606 = pneg %p150
      %p607 = pneg %p147
      %p608 = pneg %p171
      %p609 = pneg %p168
      %p610 = pneg %p192
      %p611 = pneg %p189
      %p612 = pneg %p213
      %p613 = pneg %p210
      %p614 = pneg %p234
      %p615 = pneg %p231
      %p616 = pneg %p255
      %p617 = pneg %p252
      %p618 = pneg %p276
      %p619 = pneg %p273
      %p620 = pneg %p297
      %p621 = pneg %p294
      %p622 = pneg %p318
      %p623 = pneg %p315
      %p624 = pneg %p339
      %p625 = pneg %p336
      %p626 = pneg %p360
      %p627 = pneg %p357
      %p628 = pneg %p381
      %p629 = pneg %p378
      %p630 = pneg %p402
      %p631 = pneg %p399
      %p632 = pneg %p423
      %p633 = pneg %p420
      %p634 = pneg %p444
      %p635 = pneg %p441
      %p636 = pneg %p465
      %p637 = pneg %p462
      %p638 = pneg %p493
      %p639 = pneg %p490
      %s640 = smul.u32 4, %s36
      %p641 = scmp.lt.s32.totalorder %s35, 1
      %s642 = scalar_select %p641, %s35, 1
      %p643 = scmp.lt.s32.totalorder %s640, 3
      %s644 = scalar_select %p643, %s640, 3
      %s645 = smul.addr %s642, 12
      %s646 = sadd.s32 %s644, %s645
      %s647 = smul.addr %s646, 8
      %s648 = scalar_lea.vmem %s20, %s647
      %s649 = smul.u32 4, %s36
      %p650 = scmp.lt.s32.totalorder %s35, 1
      %s651 = scalar_select %p650, %s35, 1
      %p652 = scmp.lt.s32.totalorder %s649, 3
      %s653 = scalar_select %p652, %s649, 3
      %s654 = smul.addr %s651, 52
      %s655 = sadd.s32 %s653, %s654
      %s656 = smul.addr %s655, 8
      %s657 = scalar_lea.vmem %s0, %s656
      %s658 = smul.u32 4, %s36
      %s659 = smul.u32 4, %s36
      %p660 = scmp.lt.s32.totalorder %s35, 1
      %s661 = scalar_select %p660, %s35, 1
      %p662 = scmp.lt.s32.totalorder %s659, 3
      %s663 = scalar_select %p662, %s659, 3
      %s664 = smul.addr %s661, 12
      %s665 = sadd.s32 %s663, %s664
      %s666 = smul.addr %s665, 8
      %s667 = scalar_lea.vmem %s20, %s666
      %s668 = smul.u32 4, %s36
      %v670 = vld [vmem:[%s657] sm:$0xff]
      %v671 = vld [vmem:[%s657 + $0x8] sm:$0xff]
      %v672 = vld [vmem:[%s657 + $0x10] sm:$0xff]
      %v673 = vld [vmem:[%s657 + $0x18] sm:$0xff]
      %v674 = vld [vmem:[%s657 + $0x20] sm:$0xff]
      %v675 = vld [vmem:[%s657 + $0x28] sm:$0xff]
      %v676 = vld [vmem:[%s657 + $0x30] sm:$0xff]
      %v677 = vld [vmem:[%s657 + $0x38] sm:$0xff]
      %v678 = vld [vmem:[%s657 + $0x40] sm:$0xff]
      %v679 = vld [vmem:[%s657 + $0x48] sm:$0xff]
      %v680 = vld [vmem:[%s657 + $0x50] sm:$0xff]
      %v681 = vld [vmem:[%s657 + $0x58] sm:$0xff]
      %v682 = vld [vmem:[%s657 + $0x60] sm:$0xff]
      %v683 = vld [vmem:[%s657 + $0x68] sm:$0xff]
      %v684 = vld [vmem:[%s657 + $0x70] sm:$0xff]
      %v685 = vld [vmem:[%s657 + $0x78] sm:$0xff]
      %v686 = vld [vmem:[%s657 + $0x80] sm:$0xff]
      %v687 = vld [vmem:[%s657 + $0x88] sm:$0xff]
      %v688 = vld [vmem:[%s657 + $0x90] sm:$0xff]
      %v689 = vld [vmem:[%s657 + $0x98] sm:$0xff]
      %v690 = vld [vmem:[%s657 + $0xa0] sm:$0xff]
      %v691 = vld [vmem:[%s657 + $0xa8] sm:$0xff]
      %v692 = vld [vmem:[%s657 + $0xb0] sm:$0xff]
      %v693 = vld [vmem:[%s657 + $0xb8] sm:$0xff]
      %v694 = vld [vmem:[%s657 + $0xc0] sm:$0xff]
      %v695 = vld [vmem:[%s657 + $0xc8] sm:$0xff]
      %v696 = vld [vmem:[%s657 + $0xd0] sm:$0xff]
      %v697 = vld [vmem:[%s657 + $0xd8] sm:$0xff]
      %v698 = vld [vmem:[%s657 + $0xe0] sm:$0xff]
      %v699 = vld [vmem:[%s657 + $0xe8] sm:$0xff]
      %v700 = vld [vmem:[%s657 + $0xf0] sm:$0xff]
      %v701 = vld [vmem:[%s657 + $0xf8] sm:$0xff]
      %v702 = vld [vmem:[%s657 + $0x100] sm:$0xff]
      %v703 = vld [vmem:[%s657 + $0x108] sm:$0xff]
      %v704 = vld [vmem:[%s657 + $0x110] sm:$0xff]
      %v705 = vld [vmem:[%s657 + $0x118] sm:$0xff]
      %v706 = vld [vmem:[%s657 + $0x120] sm:$0xff]
      %v707 = vld [vmem:[%s657 + $0x128] sm:$0xff]
      %v708 = vld [vmem:[%s657 + $0x130] sm:$0xff]
      %v709 = vld [vmem:[%s657 + $0x138] sm:$0xff]
      %v710 = vld [vmem:[%s657 + $0x140] sm:$0xff]
      %v711 = vld [vmem:[%s657 + $0x148] sm:$0xff]
      %v712 = vld [vmem:[%s657 + $0x150] sm:$0xff]
      %v713 = vld [vmem:[%s657 + $0x158] sm:$0xff]
      %v714 = vld [vmem:[%s657 + $0x160] sm:$0xff]
      %v715 = vld [vmem:[%s657 + $0x168] sm:$0xff]
      %v716 = vld [vmem:[%s657 + $0x170] sm:$0xff]
      %v717 = vld [vmem:[%s657 + $0x178] sm:$0xff]
      %v718 = vld [vmem:[%s657 + $0x180] sm:$0xff]
      %v719 = vld [vmem:[%s657 + $0x188] sm:$0xff]
      %v720 = vld [vmem:[%s657 + $0x190] sm:$0xff]
      %v721 = vld [vmem:[%s657 + $0x198] sm:$0xff]
      %v722 = vpack.c.bf16 %v674, %v670
      %v723 = vpack.c.bf16 %v675, %v671
      %v724 = vpack.c.bf16 %v676, %v672
      %v725 = vpack.c.bf16 %v677, %v673
      %v726 = vpack.c.bf16 %v682, %v678
      %v727 = vpack.c.bf16 %v683, %v679
      %v728 = vpack.c.bf16 %v684, %v680
      %v729 = vpack.c.bf16 %v685, %v681
      %v730 = vpack.c.bf16 %v690, %v686
      %v731 = vpack.c.bf16 %v691, %v687
      %v732 = vpack.c.bf16 %v692, %v688
      %v733 = vpack.c.bf16 %v693, %v689
      %v734 = vpack.c.bf16 %v698, %v694
      %v735 = vpack.c.bf16 %v699, %v695
      %v736 = vpack.c.bf16 %v700, %v696
      %v737 = vpack.c.bf16 %v701, %v697
      %v738 = vpack.c.bf16 %v706, %v702
      %v739 = vpack.c.bf16 %v707, %v703
      %v740 = vpack.c.bf16 %v708, %v704
      %v741 = vpack.c.bf16 %v709, %v705
      %v742 = vpack.c.bf16 %v714, %v710
      %v743 = vpack.c.bf16 %v715, %v711
      %v744 = vpack.c.bf16 %v716, %v712
      %v745 = vpack.c.bf16 %v717, %v713
      %v746 = vpack.c.bf16 %v718, %v718
      %v747 = vpack.c.bf16 %v719, %v719
      %v748 = vpack.c.bf16 %v720, %v720
      %v749 = vpack.c.bf16 %v721, %v721
      %v750 = vld [vmem:[%s1] sm:$0xf]
      %v751 = vld [vmem:[%s1 + $0x4] sm:$0xf]
      %v752 = vld [vmem:[%s1 + $0x8] sm:$0xf]
      %v753 = vld [vmem:[%s1 + $0xc] sm:$0xf]
      %v754 = vld [vmem:[%s1 + $0x10] sm:$0xf]
      %v755 = vld [vmem:[%s1 + $0x14] sm:$0xf]
      %v756 = vld [vmem:[%s1 + $0x18] sm:$0xf]
      %v757 = vld [vmem:[%s1 + $0x1c] sm:$0xf]
      %v758 = vld [vmem:[%s1 + $0x20] sm:$0xf]
      %v759 = vld [vmem:[%s1 + $0x24] sm:$0xf]
      %v760 = vld [vmem:[%s1 + $0x28] sm:$0xf]
      %v761 = vld [vmem:[%s1 + $0x2c] sm:$0xf]
      %v762 = vld [vmem:[%s1 + $0x30] sm:$0xf]
      %v763 = vld [vmem:[%s1 + $0x34] sm:$0xf]
      %v764 = vld [vmem:[%s1 + $0x38] sm:$0xf]
      %v765 = vld [vmem:[%s1 + $0x3c] sm:$0xf]
      %v766 = vld [vmem:[%s1 + $0x40] sm:$0xf]
      %v767 = vld [vmem:[%s1 + $0x44] sm:$0xf]
      %v768 = vld [vmem:[%s1 + $0x48] sm:$0xf]
      %v769 = vld [vmem:[%s1 + $0x4c] sm:$0xf]
      %v770 = vld [vmem:[%s1 + $0x50] sm:$0xf]
      %v771 = vld [vmem:[%s1 + $0x54] sm:$0xf]
      %v772 = vld [vmem:[%s1 + $0x58] sm:$0xf]
      %v773 = vld [vmem:[%s1 + $0x5c] sm:$0xf]
      %v774 = vld [vmem:[%s1 + $0x60] sm:$0xf]
      %v775 = vld [vmem:[%s1 + $0x64] sm:$0xf]
      %v776 = vld [vmem:[%s1 + $0x68] sm:$0xf]
      %v777 = vld [vmem:[%s1 + $0x6c] sm:$0xf]
      %v778 = vld [vmem:[%s1 + $0x70] sm:$0xf]
      %v779 = vld [vmem:[%s1 + $0x74] sm:$0xf]
      %v780 = vld [vmem:[%s1 + $0x78] sm:$0xf]
      %v781 = vld [vmem:[%s1 + $0x7c] sm:$0xf]
      %v782 = vld [vmem:[%s2] sm:$0xff]
      %v783 = vld [vmem:[%s2 + $0x8] sm:$0xff]
      %v784 = vld [vmem:[%s2 + $0x10] sm:$0xff]
      %v785 = vld [vmem:[%s2 + $0x18] sm:$0xff]
      %v786 = vld [vmem:[%s2 + $0x20] sm:$0xff]
      %v787 = vld [vmem:[%s2 + $0x28] sm:$0xff]
      %v788 = vld [vmem:[%s2 + $0x30] sm:$0xff]
      %v789 = vld [vmem:[%s2 + $0x38] sm:$0xff]
      %v790 = vld [vmem:[%s2 + $0x40] sm:$0xff]
      %v791 = vld [vmem:[%s2 + $0x48] sm:$0xff]
      %v792 = vld [vmem:[%s2 + $0x50] sm:$0xff]
      %v793 = vld [vmem:[%s2 + $0x58] sm:$0xff]
      %v794 = vld [vmem:[%s2 + $0x60] sm:$0xff]
      %v795 = vld [vmem:[%s2 + $0x68] sm:$0xff]
      %v796 = vld [vmem:[%s2 + $0x70] sm:$0xff]
      %v797 = vld [vmem:[%s2 + $0x78] sm:$0xff]
      %v798 = vld [vmem:[%s2 + $0x80] sm:$0xff]
      %v799 = vld [vmem:[%s2 + $0x88] sm:$0xff]
      %v800 = vld [vmem:[%s2 + $0x90] sm:$0xff]
      %v801 = vld [vmem:[%s2 + $0x98] sm:$0xff]
      %v802 = vld [vmem:[%s2 + $0xa0] sm:$0xff]
      %v803 = vld [vmem:[%s2 + $0xa8] sm:$0xff]
      %v804 = vld [vmem:[%s2 + $0xb0] sm:$0xff]
      %v805 = vld [vmem:[%s2 + $0xb8] sm:$0xff]
      %v806 = vld [vmem:[%s2 + $0xc0] sm:$0xff]
      %v807 = vld [vmem:[%s2 + $0xc8] sm:$0xff]
      %v808 = vld [vmem:[%s2 + $0xd0] sm:$0xff]
      %v809 = vld [vmem:[%s2 + $0xd8] sm:$0xff]
      %v810 = vld [vmem:[%s2 + $0xe0] sm:$0xff]
      %v811 = vld [vmem:[%s2 + $0xe8] sm:$0xff]
      %v812 = vld [vmem:[%s2 + $0xf0] sm:$0xff]
      %v813 = vld [vmem:[%s2 + $0xf8] sm:$0xff]
      %815 = vset.pattern.permute.xlu0 0
      %816 = vperm.xlu0 %815, %v782
      %v817 = vpop.permute.xlu0 %816
      %820 = vset.pattern.permute.xlu0 0
      %821 = vperm.xlu0 %820, %v783
      %v822 = vpop.permute.xlu0 %821
      %825 = vset.pattern.permute.xlu0 0
      %826 = vperm.xlu0 %825, %v784
      %v827 = vpop.permute.xlu0 %826
      %830 = vset.pattern.permute.xlu0 0
      %831 = vperm.xlu0 %830, %v785
      %v832 = vpop.permute.xlu0 %831
      %835 = vset.pattern.permute.xlu0 0
      %836 = vperm.xlu0 %835, %v786
      %v837 = vpop.permute.xlu0 %836
      %840 = vset.pattern.permute.xlu0 0
      %841 = vperm.xlu0 %840, %v787
      %v842 = vpop.permute.xlu0 %841
      %845 = vset.pattern.permute.xlu0 0
      %846 = vperm.xlu0 %845, %v788
      %v847 = vpop.permute.xlu0 %846
      %850 = vset.pattern.permute.xlu0 0
      %851 = vperm.xlu0 %850, %v789
      %v852 = vpop.permute.xlu0 %851
      %855 = vset.pattern.permute.xlu0 0
      %856 = vperm.xlu0 %855, %v790
      %v857 = vpop.permute.xlu0 %856
      %860 = vset.pattern.permute.xlu0 0
      %861 = vperm.xlu0 %860, %v791
      %v862 = vpop.permute.xlu0 %861
      %865 = vset.pattern.permute.xlu0 0
      %866 = vperm.xlu0 %865, %v792
      %v867 = vpop.permute.xlu0 %866
      %870 = vset.pattern.permute.xlu0 0
      %871 = vperm.xlu0 %870, %v793
      %v872 = vpop.permute.xlu0 %871
      %875 = vset.pattern.permute.xlu0 0
      %876 = vperm.xlu0 %875, %v794
      %v877 = vpop.permute.xlu0 %876
      %880 = vset.pattern.permute.xlu0 0
      %881 = vperm.xlu0 %880, %v795
      %v882 = vpop.permute.xlu0 %881
      %885 = vset.pattern.permute.xlu0 0
      %886 = vperm.xlu0 %885, %v796
      %v887 = vpop.permute.xlu0 %886
      %890 = vset.pattern.permute.xlu0 0
      %891 = vperm.xlu0 %890, %v797
      %v892 = vpop.permute.xlu0 %891
      %895 = vset.pattern.permute.xlu0 0
      %896 = vperm.xlu0 %895, %v798
      %v897 = vpop.permute.xlu0 %896
      %900 = vset.pattern.permute.xlu0 0
      %901 = vperm.xlu0 %900, %v799
      %v902 = vpop.permute.xlu0 %901
      %905 = vset.pattern.permute.xlu0 0
      %906 = vperm.xlu0 %905, %v800
      %v907 = vpop.permute.xlu0 %906
      %910 = vset.pattern.permute.xlu0 0
      %911 = vperm.xlu0 %910, %v801
      %v912 = vpop.permute.xlu0 %911
      %915 = vset.pattern.permute.xlu0 0
      %916 = vperm.xlu0 %915, %v802
      %v917 = vpop.permute.xlu0 %916
      %920 = vset.pattern.permute.xlu0 0
      %921 = vperm.xlu0 %920, %v803
      %v922 = vpop.permute.xlu0 %921
      %925 = vset.pattern.permute.xlu0 0
      %926 = vperm.xlu0 %925, %v804
      %v927 = vpop.permute.xlu0 %926
      %930 = vset.pattern.permute.xlu0 0
      %931 = vperm.xlu0 %930, %v805
      %v932 = vpop.permute.xlu0 %931
      %935 = vset.pattern.permute.xlu0 0
      %936 = vperm.xlu0 %935, %v806
      %v937 = vpop.permute.xlu0 %936
      %940 = vset.pattern.permute.xlu0 0
      %941 = vperm.xlu0 %940, %v807
      %v942 = vpop.permute.xlu0 %941
      %945 = vset.pattern.permute.xlu0 0
      %946 = vperm.xlu0 %945, %v808
      %v947 = vpop.permute.xlu0 %946
      %950 = vset.pattern.permute.xlu0 0
      %951 = vperm.xlu0 %950, %v809
      %v952 = vpop.permute.xlu0 %951
      %955 = vset.pattern.permute.xlu0 0
      %956 = vperm.xlu0 %955, %v810
      %v957 = vpop.permute.xlu0 %956
      %960 = vset.pattern.permute.xlu0 0
      %961 = vperm.xlu0 %960, %v811
      %v962 = vpop.permute.xlu0 %961
      %965 = vset.pattern.permute.xlu0 0
      %966 = vperm.xlu0 %965, %v812
      %v967 = vpop.permute.xlu0 %966
      %970 = vset.pattern.permute.xlu0 0
      %971 = vperm.xlu0 %970, %v813
      %v972 = vpop.permute.xlu0 %971
      %v1006 = vunpack.c.l.b16 %v750
      %v1007 = vunpack.c.l.b16 %v751
      %v1008 = vunpack.c.l.b16 %v752
      %v1009 = vunpack.c.l.b16 %v753
      %v1010 = vunpack.c.l.b16 %v754
      %v1011 = vunpack.c.l.b16 %v755
      %v1012 = vunpack.c.l.b16 %v756
      %v1013 = vunpack.c.l.b16 %v757
      %v1014 = vunpack.c.l.b16 %v758
      %v1015 = vunpack.c.l.b16 %v759
      %v1016 = vunpack.c.l.b16 %v760
      %v1017 = vunpack.c.l.b16 %v761
      %v1018 = vunpack.c.l.b16 %v762
      %v1019 = vunpack.c.l.b16 %v763
      %v1020 = vunpack.c.l.b16 %v764
      %v1021 = vunpack.c.l.b16 %v765
      %v1022 = vunpack.c.l.b16 %v766
      %v1023 = vunpack.c.l.b16 %v767
      %v1024 = vunpack.c.l.b16 %v768
      %v1025 = vunpack.c.l.b16 %v769
      %v1026 = vunpack.c.l.b16 %v770
      %v1027 = vunpack.c.l.b16 %v771
      %v1028 = vunpack.c.l.b16 %v772
      %v1029 = vunpack.c.l.b16 %v773
      %v1030 = vunpack.c.l.b16 %v774
      %v1031 = vunpack.c.l.b16 %v775
      %v1032 = vunpack.c.l.b16 %v776
      %v1033 = vunpack.c.l.b16 %v777
      %v1034 = vunpack.c.l.b16 %v778
      %v1035 = vunpack.c.l.b16 %v779
      %v1036 = vunpack.c.l.b16 %v780
      %v1037 = vunpack.c.l.b16 %v781
      %v1038 = vpack.c.b16 %v1007, %v1006
      %v1039 = vpack.c.b16 %v1009, %v1008
      %v1040 = vpack.c.b16 %v1011, %v1010
      %v1041 = vpack.c.b16 %v1013, %v1012
      %v1042 = vpack.c.b16 %v1015, %v1014
      %v1043 = vpack.c.b16 %v1017, %v1016
      %v1044 = vpack.c.b16 %v1019, %v1018
      %v1045 = vpack.c.b16 %v1021, %v1020
      %v1046 = vpack.c.b16 %v1023, %v1022
      %v1047 = vpack.c.b16 %v1025, %v1024
      %v1048 = vpack.c.b16 %v1027, %v1026
      %v1049 = vpack.c.b16 %v1029, %v1028
      %v1050 = vpack.c.b16 %v1031, %v1030
      %v1051 = vpack.c.b16 %v1033, %v1032
      %v1052 = vpack.c.b16 %v1035, %v1034
      %v1053 = vpack.c.b16 %v1037, %v1036
      %vm1054 = vcmask 850944
      %v1056 = vsel %vm1054, %v1038, 0
      %v1059 = vsel %vm1054, %v1039, 0
      %v1062 = vsel %vm1054, %v1040, 0
      %v1065 = vsel %vm1054, %v1041, 0
      %v1068 = vsel %vm1054, %v1042, 0
      %v1071 = vsel %vm1054, %v1043, 0
      %v1074 = vsel %vm1054, %v1044, 0
      %v1077 = vsel %vm1054, %v1045, 0
      %v1080 = vsel %vm1054, %v1046, 0
      %v1083 = vsel %vm1054, %v1047, 0
      %v1086 = vsel %vm1054, %v1048, 0
      %v1089 = vsel %vm1054, %v1049, 0
      %v1092 = vsel %vm1054, %v1050, 0
      %v1095 = vsel %vm1054, %v1051, 0
      %v1098 = vsel %vm1054, %v1052, 0
      %v1101 = vsel %vm1054, %v1053, 0
      %vm1103 = vcmask 1043456
      %v1105 = vsel %vm1103, %v746, 0
      %v1108 = vsel %vm1103, %v747, 0
      %v1111 = vsel %vm1103, %v748, 0
      %v1114 = vsel %vm1103, %v749, 0
      %1116 = vmatprep.subr.bf16.mxu0 0
      %1117 = vmatpush1.bf16.msra.mxu0 0
      %1118 = vmatprep.subr.bf16.mxu0 %v1108
      %1119 = vmatpush1.bf16.msra.mxu0 %v1105
      %1120 = vmatprep.subr.bf16.mxu0 %v743
      %1121 = vmatpush1.bf16.msra.mxu0 %v742
      %1122 = vmatprep.subr.bf16.mxu0 %v739
      %1123 = vmatpush1.bf16.msra.mxu0 %v738
      %1124 = vmatprep.subr.bf16.mxu0 %v735
      %1125 = vmatpush1.bf16.msra.mxu0 %v734
      %1126 = vmatprep.subr.bf16.mxu0 %v731
      %1127 = vmatpush1.bf16.msra.mxu0 %v730
      %1128 = vmatprep.subr.bf16.mxu0 %v727
      %1129 = vmatpush1.bf16.msra.mxu0 %v726
      %1130 = vmatprep.subr.bf16.mxu0 %v723
      %1131 = vmatpush1.bf16.msra.mxu0 %v722
      %1132 = vmatprep.subr.bf16.mxu0 0
      %1133 = vmatpush2.bf16.msra.mxu0 0
      %1134 = vmatprep.subr.bf16.mxu0 0
      %1135 = vmatpush2.bf16.msra.mxu0 0
      %1136 = vmatprep.subr.bf16.mxu0 0
      %1137 = vmatpush2.bf16.msra.mxu0 0
      %1138 = vmatprep.subr.bf16.mxu0 0
      %1139 = vmatpush2.bf16.msra.mxu0 0
      %1140 = vmatprep.subr.bf16.mxu0 0
      %1141 = vmatpush2.bf16.msra.mxu0 0
      %1142 = vmatprep.subr.bf16.mxu0 0
      %1143 = vmatpush2.bf16.msra.mxu0 0
      %1144 = vmatprep.subr.bf16.mxu0 0
      %1145 = vmatpush2.bf16.msra.mxu0 0
      %1146 = vmatprep.subr.bf16.mxu0 0
      %1147 = vmatpush2.bf16.msra.mxu0 0
      %1148 = vmatprep.mubr.bf16.mxu0 0
      %1149 = vmatmul.mubr.bf16.gmra.mxu0 %v1056
      %v1150 = vpop.f32.mrf.mxu0
      %v1151 = vadd.f32 %v817, %v1150
      %v1152 = vpop.f32.mrf.mxu0
      %v1153 = vadd.f32 %v817, %v1152
      %v1154 = vpop.f32.mrf.mxu0
      %v1155 = vadd.f32 %v822, %v1154
      %v1156 = vpop.f32.mrf.mxu0
      %v1157 = vadd.f32 %v822, %v1156
      %1158 = vmatprep.mubr.bf16.mxu0 0
      %1159 = vmatmul.mubr.bf16.gmra.mxu0 %v1059
      %v1160 = vpop.f32.mrf.mxu0
      %v1161 = vadd.f32 %v827, %v1160
      %v1162 = vpop.f32.mrf.mxu0
      %v1163 = vadd.f32 %v827, %v1162
      %v1164 = vpop.f32.mrf.mxu0
      %v1165 = vadd.f32 %v832, %v1164
      %v1166 = vpop.f32.mrf.mxu0
      %v1167 = vadd.f32 %v832, %v1166
      %1168 = vmatprep.mubr.bf16.mxu0 0
      %1169 = vmatmul.mubr.bf16.gmra.mxu0 %v1062
      %v1170 = vpop.f32.mrf.mxu0
      %v1171 = vadd.f32 %v837, %v1170
      %v1172 = vpop.f32.mrf.mxu0
      %v1173 = vadd.f32 %v837, %v1172
      %v1174 = vpop.f32.mrf.mxu0
      %v1175 = vadd.f32 %v842, %v1174
      %v1176 = vpop.f32.mrf.mxu0
      %v1177 = vadd.f32 %v842, %v1176
      %1178 = vmatprep.mubr.bf16.mxu0 0
      %1179 = vmatmul.mubr.bf16.gmra.mxu0 %v1065
      %v1180 = vpop.f32.mrf.mxu0
      %v1181 = vadd.f32 %v847, %v1180
      %v1182 = vpop.f32.mrf.mxu0
      %v1183 = vadd.f32 %v847, %v1182
      %v1184 = vpop.f32.mrf.mxu0
      %v1185 = vadd.f32 %v852, %v1184
      %v1186 = vpop.f32.mrf.mxu0
      %v1187 = vadd.f32 %v852, %v1186
      %1188 = vmatprep.mubr.bf16.mxu0 0
      %1189 = vmatmul.mubr.bf16.gmra.mxu0 %v1068
      %v1190 = vpop.f32.mrf.mxu0
      %v1191 = vadd.f32 %v857, %v1190
      %v1192 = vpop.f32.mrf.mxu0
      %v1193 = vadd.f32 %v857, %v1192
      %v1194 = vpop.f32.mrf.mxu0
      %v1195 = vadd.f32 %v862, %v1194
      %v1196 = vpop.f32.mrf.mxu0
      %v1197 = vadd.f32 %v862, %v1196
      %1198 = vmatprep.mubr.bf16.mxu0 0
      %1199 = vmatmul.mubr.bf16.gmra.mxu0 %v1071
      %v1200 = vpop.f32.mrf.mxu0
      %v1201 = vadd.f32 %v867, %v1200
      %v1202 = vpop.f32.mrf.mxu0
      %v1203 = vadd.f32 %v867, %v1202
      %v1204 = vpop.f32.mrf.mxu0
      %v1205 = vadd.f32 %v872, %v1204
      %v1206 = vpop.f32.mrf.mxu0
      %v1207 = vadd.f32 %v872, %v1206
      %1208 = vmatprep.mubr.bf16.mxu0 0
      %1209 = vmatmul.mubr.bf16.gmra.mxu0 %v1074
      %v1210 = vpop.f32.mrf.mxu0
      %v1211 = vadd.f32 %v877, %v1210
      %v1212 = vpop.f32.mrf.mxu0
      %v1213 = vadd.f32 %v877, %v1212
      %v1214 = vpop.f32.mrf.mxu0
      %v1215 = vadd.f32 %v882, %v1214
      %v1216 = vpop.f32.mrf.mxu0
      %v1217 = vadd.f32 %v882, %v1216
      %1218 = vmatprep.mubr.bf16.mxu0 0
      %1219 = vmatmul.mubr.bf16.gmra.mxu0 %v1077
      %v1220 = vpop.f32.mrf.mxu0
      %v1221 = vadd.f32 %v887, %v1220
      %v1222 = vpop.f32.mrf.mxu0
      %v1223 = vadd.f32 %v887, %v1222
      %v1224 = vpop.f32.mrf.mxu0
      %v1225 = vadd.f32 %v892, %v1224
      %v1226 = vpop.f32.mrf.mxu0
      %v1227 = vadd.f32 %v892, %v1226
      %1228 = vmatprep.mubr.bf16.mxu0 0
      %1229 = vmatmul.mubr.bf16.gmra.mxu0 %v1080
      %v1230 = vpop.f32.mrf.mxu0
      %v1231 = vadd.f32 %v897, %v1230
      %v1232 = vpop.f32.mrf.mxu0
      %v1233 = vadd.f32 %v897, %v1232
      %v1234 = vpop.f32.mrf.mxu0
      %v1235 = vadd.f32 %v902, %v1234
      %v1236 = vpop.f32.mrf.mxu0
      %v1237 = vadd.f32 %v902, %v1236
      %1238 = vmatprep.mubr.bf16.mxu0 0
      %1239 = vmatmul.mubr.bf16.gmra.mxu0 %v1083
      %v1240 = vpop.f32.mrf.mxu0
      %v1241 = vadd.f32 %v907, %v1240
      %v1242 = vpop.f32.mrf.mxu0
      %v1243 = vadd.f32 %v907, %v1242
      %v1244 = vpop.f32.mrf.mxu0
      %v1245 = vadd.f32 %v912, %v1244
      %v1246 = vpop.f32.mrf.mxu0
      %v1247 = vadd.f32 %v912, %v1246
      %1248 = vmatprep.mubr.bf16.mxu0 0
      %1249 = vmatmul.mubr.bf16.gmra.mxu0 %v1086
      %v1250 = vpop.f32.mrf.mxu0
      %v1251 = vadd.f32 %v917, %v1250
      %v1252 = vpop.f32.mrf.mxu0
      %v1253 = vadd.f32 %v917, %v1252
      %v1254 = vpop.f32.mrf.mxu0
      %v1255 = vadd.f32 %v922, %v1254
      %v1256 = vpop.f32.mrf.mxu0
      %v1257 = vadd.f32 %v922, %v1256
      %1258 = vmatprep.mubr.bf16.mxu0 0
      %1259 = vmatmul.mubr.bf16.gmra.mxu0 %v1089
      %v1260 = vpop.f32.mrf.mxu0
      %v1261 = vadd.f32 %v927, %v1260
      %v1262 = vpop.f32.mrf.mxu0
      %v1263 = vadd.f32 %v927, %v1262
      %v1264 = vpop.f32.mrf.mxu0
      %v1265 = vadd.f32 %v932, %v1264
      %v1266 = vpop.f32.mrf.mxu0
      %v1267 = vadd.f32 %v932, %v1266
      %1268 = vmatprep.mubr.bf16.mxu0 0
      %1269 = vmatmul.mubr.bf16.gmra.mxu0 %v1092
      %v1270 = vpop.f32.mrf.mxu0
      %v1271 = vadd.f32 %v937, %v1270
      %v1272 = vpop.f32.mrf.mxu0
      %v1273 = vadd.f32 %v937, %v1272
      %v1274 = vpop.f32.mrf.mxu0
      %v1275 = vadd.f32 %v942, %v1274
      %v1276 = vpop.f32.mrf.mxu0
      %v1277 = vadd.f32 %v942, %v1276
      %1278 = vmatprep.mubr.bf16.mxu0 0
      %1279 = vmatmul.mubr.bf16.gmra.mxu0 %v1095
      %v1280 = vpop.f32.mrf.mxu0
      %v1281 = vadd.f32 %v947, %v1280
      %v1282 = vpop.f32.mrf.mxu0
      %v1283 = vadd.f32 %v947, %v1282
      %v1284 = vpop.f32.mrf.mxu0
      %v1285 = vadd.f32 %v952, %v1284
      %v1286 = vpop.f32.mrf.mxu0
      %v1287 = vadd.f32 %v952, %v1286
      %1288 = vmatprep.mubr.bf16.mxu0 0
      %1289 = vmatmul.mubr.bf16.gmra.mxu0 %v1098
      %v1290 = vpop.f32.mrf.mxu0
      %v1291 = vadd.f32 %v957, %v1290
      %v1292 = vpop.f32.mrf.mxu0
      %v1293 = vadd.f32 %v957, %v1292
      %v1294 = vpop.f32.mrf.mxu0
      %v1295 = vadd.f32 %v962, %v1294
      %v1296 = vpop.f32.mrf.mxu0
      %v1297 = vadd.f32 %v962, %v1296
      %1298 = vmatprep.mubr.bf16.mxu0 0
      %1299 = vmatmul.mubr.bf16.gmra.mxu0 %v1101
      %v1300 = vpop.f32.mrf.mxu0
      %v1301 = vadd.f32 %v967, %v1300
      %v1302 = vpop.f32.mrf.mxu0
      %v1303 = vadd.f32 %v967, %v1302
      %v1304 = vpop.f32.mrf.mxu0
      %v1305 = vadd.f32 %v972, %v1304
      %v1306 = vpop.f32.mrf.mxu0
      %v1307 = vadd.f32 %v972, %v1306
      %1308 = vdwg.mxu0
      %1309 = vmatprep.subr.bf16.mxu0 0
      %1310 = vmatpush1.bf16.msra.mxu0 0
      %1311 = vmatprep.subr.bf16.mxu0 %v1114
      %1312 = vmatpush1.bf16.msra.mxu0 %v1111
      %1313 = vmatprep.subr.bf16.mxu0 %v745
      %1314 = vmatpush1.bf16.msra.mxu0 %v744
      %1315 = vmatprep.subr.bf16.mxu0 %v741
      %1316 = vmatpush1.bf16.msra.mxu0 %v740
      %1317 = vmatprep.subr.bf16.mxu0 %v737
      %1318 = vmatpush1.bf16.msra.mxu0 %v736
      %1319 = vmatprep.subr.bf16.mxu0 %v733
      %1320 = vmatpush1.bf16.msra.mxu0 %v732
      %1321 = vmatprep.subr.bf16.mxu0 %v729
      %1322 = vmatpush1.bf16.msra.mxu0 %v728
      %1323 = vmatprep.subr.bf16.mxu0 %v725
      %1324 = vmatpush1.bf16.msra.mxu0 %v724
      %1325 = vmatprep.subr.bf16.mxu0 0
      %1326 = vmatpush2.bf16.msra.mxu0 0
      %1327 = vmatprep.subr.bf16.mxu0 0
      %1328 = vmatpush2.bf16.msra.mxu0 0
      %1329 = vmatprep.subr.bf16.mxu0 0
      %1330 = vmatpush2.bf16.msra.mxu0 0
      %1331 = vmatprep.subr.bf16.mxu0 0
      %1332 = vmatpush2.bf16.msra.mxu0 0
      %1333 = vmatprep.subr.bf16.mxu0 0
      %1334 = vmatpush2.bf16.msra.mxu0 0
      %1335 = vmatprep.subr.bf16.mxu0 0
      %1336 = vmatpush2.bf16.msra.mxu0 0
      %1337 = vmatprep.subr.bf16.mxu0 0
      %1338 = vmatpush2.bf16.msra.mxu0 0
      %1339 = vmatprep.subr.bf16.mxu0 0
      %1340 = vmatpush2.bf16.msra.mxu0 0
      %1341 = vmatprep.mubr.bf16.mxu0 0
      %1342 = vmatmul.mubr.bf16.gmra.mxu0 %v1056
      %v1343 = vpop.f32.mrf.mxu0
      %v1344 = vadd.f32 %v817, %v1343
      %v1345 = vpop.f32.mrf.mxu0
      %v1346 = vadd.f32 %v817, %v1345
      %v1347 = vpop.f32.mrf.mxu0
      %v1348 = vadd.f32 %v822, %v1347
      %v1349 = vpop.f32.mrf.mxu0
      %v1350 = vadd.f32 %v822, %v1349
      %1351 = vmatprep.mubr.bf16.mxu0 0
      %1352 = vmatmul.mubr.bf16.gmra.mxu0 %v1059
      %v1353 = vpop.f32.mrf.mxu0
      %v1354 = vadd.f32 %v827, %v1353
      %v1355 = vpop.f32.mrf.mxu0
      %v1356 = vadd.f32 %v827, %v1355
      %v1357 = vpop.f32.mrf.mxu0
      %v1358 = vadd.f32 %v832, %v1357
      %v1359 = vpop.f32.mrf.mxu0
      %v1360 = vadd.f32 %v832, %v1359
      %1361 = vmatprep.mubr.bf16.mxu0 0
      %1362 = vmatmul.mubr.bf16.gmra.mxu0 %v1062
      %v1363 = vpop.f32.mrf.mxu0
      %v1364 = vadd.f32 %v837, %v1363
      %v1365 = vpop.f32.mrf.mxu0
      %v1366 = vadd.f32 %v837, %v1365
      %v1367 = vpop.f32.mrf.mxu0
      %v1368 = vadd.f32 %v842, %v1367
      %v1369 = vpop.f32.mrf.mxu0
      %v1370 = vadd.f32 %v842, %v1369
      %1371 = vmatprep.mubr.bf16.mxu0 0
      %1372 = vmatmul.mubr.bf16.gmra.mxu0 %v1065
      %v1373 = vpop.f32.mrf.mxu0
      %v1374 = vadd.f32 %v847, %v1373
      %v1375 = vpop.f32.mrf.mxu0
      %v1376 = vadd.f32 %v847, %v1375
      %v1377 = vpop.f32.mrf.mxu0
      %v1378 = vadd.f32 %v852, %v1377
      %v1379 = vpop.f32.mrf.mxu0
      %v1380 = vadd.f32 %v852, %v1379
      %1381 = vmatprep.mubr.bf16.mxu0 0
      %1382 = vmatmul.mubr.bf16.gmra.mxu0 %v1068
      %v1383 = vpop.f32.mrf.mxu0
      %v1384 = vadd.f32 %v857, %v1383
      %v1385 = vpop.f32.mrf.mxu0
      %v1386 = vadd.f32 %v857, %v1385
      %v1387 = vpop.f32.mrf.mxu0
      %v1388 = vadd.f32 %v862, %v1387
      %v1389 = vpop.f32.mrf.mxu0
      %v1390 = vadd.f32 %v862, %v1389
      %1391 = vmatprep.mubr.bf16.mxu0 0
      %1392 = vmatmul.mubr.bf16.gmra.mxu0 %v1071
      %v1393 = vpop.f32.mrf.mxu0
      %v1394 = vadd.f32 %v867, %v1393
      %v1395 = vpop.f32.mrf.mxu0
      %v1396 = vadd.f32 %v867, %v1395
      %v1397 = vpop.f32.mrf.mxu0
      %v1398 = vadd.f32 %v872, %v1397
      %v1399 = vpop.f32.mrf.mxu0
      %v1400 = vadd.f32 %v872, %v1399
      %1401 = vmatprep.mubr.bf16.mxu0 0
      %1402 = vmatmul.mubr.bf16.gmra.mxu0 %v1074
      %v1403 = vpop.f32.mrf.mxu0
      %v1404 = vadd.f32 %v877, %v1403
      %v1405 = vpop.f32.mrf.mxu0
      %v1406 = vadd.f32 %v877, %v1405
      %v1407 = vpop.f32.mrf.mxu0
      %v1408 = vadd.f32 %v882, %v1407
      %v1409 = vpop.f32.mrf.mxu0
      %v1410 = vadd.f32 %v882, %v1409
      %1411 = vmatprep.mubr.bf16.mxu0 0
      %1412 = vmatmul.mubr.bf16.gmra.mxu0 %v1077
      %v1413 = vpop.f32.mrf.mxu0
      %v1414 = vadd.f32 %v887, %v1413
      %v1415 = vpop.f32.mrf.mxu0
      %v1416 = vadd.f32 %v887, %v1415
      %v1417 = vpop.f32.mrf.mxu0
      %v1418 = vadd.f32 %v892, %v1417
      %v1419 = vpop.f32.mrf.mxu0
      %v1420 = vadd.f32 %v892, %v1419
      %1421 = vmatprep.mubr.bf16.mxu0 0
      %1422 = vmatmul.mubr.bf16.gmra.mxu0 %v1080
      %v1423 = vpop.f32.mrf.mxu0
      %v1424 = vadd.f32 %v897, %v1423
      %v1425 = vpop.f32.mrf.mxu0
      %v1426 = vadd.f32 %v897, %v1425
      %v1427 = vpop.f32.mrf.mxu0
      %v1428 = vadd.f32 %v902, %v1427
      %v1429 = vpop.f32.mrf.mxu0
      %v1430 = vadd.f32 %v902, %v1429
      %1431 = vmatprep.mubr.bf16.mxu0 0
      %1432 = vmatmul.mubr.bf16.gmra.mxu0 %v1083
      %v1433 = vpop.f32.mrf.mxu0
      %v1434 = vadd.f32 %v907, %v1433
      %v1435 = vpop.f32.mrf.mxu0
      %v1436 = vadd.f32 %v907, %v1435
      %v1437 = vpop.f32.mrf.mxu0
      %v1438 = vadd.f32 %v912, %v1437
      %v1439 = vpop.f32.mrf.mxu0
      %v1440 = vadd.f32 %v912, %v1439
      %1441 = vmatprep.mubr.bf16.mxu0 0
      %1442 = vmatmul.mubr.bf16.gmra.mxu0 %v1086
      %v1443 = vpop.f32.mrf.mxu0
      %v1444 = vadd.f32 %v917, %v1443
      %v1445 = vpop.f32.mrf.mxu0
      %v1446 = vadd.f32 %v917, %v1445
      %v1447 = vpop.f32.mrf.mxu0
      %v1448 = vadd.f32 %v922, %v1447
      %v1449 = vpop.f32.mrf.mxu0
      %v1450 = vadd.f32 %v922, %v1449
      %1451 = vmatprep.mubr.bf16.mxu0 0
      %1452 = vmatmul.mubr.bf16.gmra.mxu0 %v1089
      %v1453 = vpop.f32.mrf.mxu0
      %v1454 = vadd.f32 %v927, %v1453
      %v1455 = vpop.f32.mrf.mxu0
      %v1456 = vadd.f32 %v927, %v1455
      %v1457 = vpop.f32.mrf.mxu0
      %v1458 = vadd.f32 %v932, %v1457
      %v1459 = vpop.f32.mrf.mxu0
      %v1460 = vadd.f32 %v932, %v1459
      %1461 = vmatprep.mubr.bf16.mxu0 0
      %1462 = vmatmul.mubr.bf16.gmra.mxu0 %v1092
      %v1463 = vpop.f32.mrf.mxu0
      %v1464 = vadd.f32 %v937, %v1463
      %v1465 = vpop.f32.mrf.mxu0
      %v1466 = vadd.f32 %v937, %v1465
      %v1467 = vpop.f32.mrf.mxu0
      %v1468 = vadd.f32 %v942, %v1467
      %v1469 = vpop.f32.mrf.mxu0
      %v1470 = vadd.f32 %v942, %v1469
      %1471 = vmatprep.mubr.bf16.mxu0 0
      %1472 = vmatmul.mubr.bf16.gmra.mxu0 %v1095
      %v1473 = vpop.f32.mrf.mxu0
      %v1474 = vadd.f32 %v947, %v1473
      %v1475 = vpop.f32.mrf.mxu0
      %v1476 = vadd.f32 %v947, %v1475
      %v1477 = vpop.f32.mrf.mxu0
      %v1478 = vadd.f32 %v952, %v1477
      %v1479 = vpop.f32.mrf.mxu0
      %v1480 = vadd.f32 %v952, %v1479
      %1481 = vmatprep.mubr.bf16.mxu0 0
      %1482 = vmatmul.mubr.bf16.gmra.mxu0 %v1098
      %v1483 = vpop.f32.mrf.mxu0
      %v1484 = vadd.f32 %v957, %v1483
      %v1485 = vpop.f32.mrf.mxu0
      %v1486 = vadd.f32 %v957, %v1485
      %v1487 = vpop.f32.mrf.mxu0
      %v1488 = vadd.f32 %v962, %v1487
      %v1489 = vpop.f32.mrf.mxu0
      %v1490 = vadd.f32 %v962, %v1489
      %1491 = vmatprep.mubr.bf16.mxu0 0
      %1492 = vmatmul.mubr.bf16.gmra.mxu0 %v1101
      %v1493 = vpop.f32.mrf.mxu0
      %v1494 = vadd.f32 %v967, %v1493
      %v1495 = vpop.f32.mrf.mxu0
      %v1496 = vadd.f32 %v967, %v1495
      %v1497 = vpop.f32.mrf.mxu0
      %v1498 = vadd.f32 %v972, %v1497
      %v1499 = vpop.f32.mrf.mxu0
      %v1500 = vadd.f32 %v972, %v1499
      %1501 = vdwg.mxu0
      %v1502 = vmax.f32 %v1151, 0.0
      %v1503 = vmax.f32 %v1153, 0.0
      %v1504 = vmax.f32 %v1344, 0.0
      %v1505 = vmax.f32 %v1346, 0.0
      %v1506 = vmax.f32 %v1155, 0.0
      %v1507 = vmax.f32 %v1157, 0.0
      %v1508 = vmax.f32 %v1348, 0.0
      %v1509 = vmax.f32 %v1350, 0.0
      %v1510 = vmax.f32 %v1161, 0.0
      %v1511 = vmax.f32 %v1163, 0.0
      %v1512 = vmax.f32 %v1354, 0.0
      %v1513 = vmax.f32 %v1356, 0.0
      %v1514 = vmax.f32 %v1165, 0.0
      %v1515 = vmax.f32 %v1167, 0.0
      %v1516 = vmax.f32 %v1358, 0.0
      %v1517 = vmax.f32 %v1360, 0.0
      %v1518 = vmax.f32 %v1171, 0.0
      %v1519 = vmax.f32 %v1173, 0.0
      %v1520 = vmax.f32 %v1364, 0.0
      %v1521 = vmax.f32 %v1366, 0.0
      %v1522 = vmax.f32 %v1175, 0.0
      %v1523 = vmax.f32 %v1177, 0.0
      %v1524 = vmax.f32 %v1368, 0.0
      %v1525 = vmax.f32 %v1370, 0.0
      %v1526 = vmax.f32 %v1181, 0.0
      %v1527 = vmax.f32 %v1183, 0.0
      %v1528 = vmax.f32 %v1374, 0.0
      %v1529 = vmax.f32 %v1376, 0.0
      %v1530 = vmax.f32 %v1185, 0.0
      %v1531 = vmax.f32 %v1187, 0.0
      %v1532 = vmax.f32 %v1378, 0.0
      %v1533 = vmax.f32 %v1380, 0.0
      %v1534 = vmax.f32 %v1191, 0.0
      %v1535 = vmax.f32 %v1193, 0.0
      %v1536 = vmax.f32 %v1384, 0.0
      %v1537 = vmax.f32 %v1386, 0.0
      %v1538 = vmax.f32 %v1195, 0.0
      %v1539 = vmax.f32 %v1197, 0.0
      %v1540 = vmax.f32 %v1388, 0.0
      %v1541 = vmax.f32 %v1390, 0.0
      %v1542 = vmax.f32 %v1201, 0.0
      %v1543 = vmax.f32 %v1203, 0.0
      %v1544 = vmax.f32 %v1394, 0.0
      %v1545 = vmax.f32 %v1396, 0.0
      %v1546 = vmax.f32 %v1205, 0.0
      %v1547 = vmax.f32 %v1207, 0.0
      %v1548 = vmax.f32 %v1398, 0.0
      %v1549 = vmax.f32 %v1400, 0.0
      %v1550 = vmax.f32 %v1211, 0.0
      %v1551 = vmax.f32 %v1213, 0.0
      %v1552 = vmax.f32 %v1404, 0.0
      %v1553 = vmax.f32 %v1406, 0.0
      %v1554 = vmax.f32 %v1215, 0.0
      %v1555 = vmax.f32 %v1217, 0.0
      %v1556 = vmax.f32 %v1408, 0.0
      %v1557 = vmax.f32 %v1410, 0.0
      %v1558 = vmax.f32 %v1221, 0.0
      %v1559 = vmax.f32 %v1223, 0.0
      %v1560 = vmax.f32 %v1414, 0.0
      %v1561 = vmax.f32 %v1416, 0.0
      %v1562 = vmax.f32 %v1225, 0.0
      %v1563 = vmax.f32 %v1227, 0.0
      %v1564 = vmax.f32 %v1418, 0.0
      %v1565 = vmax.f32 %v1420, 0.0
      %v1566 = vmax.f32 %v1231, 0.0
      %v1567 = vmax.f32 %v1233, 0.0
      %v1568 = vmax.f32 %v1424, 0.0
      %v1569 = vmax.f32 %v1426, 0.0
      %v1570 = vmax.f32 %v1235, 0.0
      %v1571 = vmax.f32 %v1237, 0.0
      %v1572 = vmax.f32 %v1428, 0.0
      %v1573 = vmax.f32 %v1430, 0.0
      %v1574 = vmax.f32 %v1241, 0.0
      %v1575 = vmax.f32 %v1243, 0.0
      %v1576 = vmax.f32 %v1434, 0.0
      %v1577 = vmax.f32 %v1436, 0.0
      %v1578 = vmax.f32 %v1245, 0.0
      %v1579 = vmax.f32 %v1247, 0.0
      %v1580 = vmax.f32 %v1438, 0.0
      %v1581 = vmax.f32 %v1440, 0.0
      %v1582 = vmax.f32 %v1251, 0.0
      %v1583 = vmax.f32 %v1253, 0.0
      %v1584 = vmax.f32 %v1444, 0.0
      %v1585 = vmax.f32 %v1446, 0.0
      %v1586 = vmax.f32 %v1255, 0.0
      %v1587 = vmax.f32 %v1257, 0.0
      %v1588 = vmax.f32 %v1448, 0.0
      %v1589 = vmax.f32 %v1450, 0.0
      %v1590 = vmax.f32 %v1261, 0.0
      %v1591 = vmax.f32 %v1263, 0.0
      %v1592 = vmax.f32 %v1454, 0.0
      %v1593 = vmax.f32 %v1456, 0.0
      %v1594 = vmax.f32 %v1265, 0.0
      %v1595 = vmax.f32 %v1267, 0.0
      %v1596 = vmax.f32 %v1458, 0.0
      %v1597 = vmax.f32 %v1460, 0.0
      %v1598 = vmax.f32 %v1271, 0.0
      %v1599 = vmax.f32 %v1273, 0.0
      %v1600 = vmax.f32 %v1464, 0.0
      %v1601 = vmax.f32 %v1466, 0.0
      %v1602 = vmax.f32 %v1275, 0.0
      %v1603 = vmax.f32 %v1277, 0.0
      %v1604 = vmax.f32 %v1468, 0.0
      %v1605 = vmax.f32 %v1470, 0.0
      %v1606 = vmax.f32 %v1281, 0.0
      %v1607 = vmax.f32 %v1283, 0.0
      %v1608 = vmax.f32 %v1474, 0.0
      %v1609 = vmax.f32 %v1476, 0.0
      %v1610 = vmax.f32 %v1285, 0.0
      %v1611 = vmax.f32 %v1287, 0.0
      %v1612 = vmax.f32 %v1478, 0.0
      %v1613 = vmax.f32 %v1480, 0.0
      %v1614 = vmax.f32 %v1291, 0.0
      %v1615 = vmax.f32 %v1293, 0.0
      %v1616 = vmax.f32 %v1484, 0.0
      %v1617 = vmax.f32 %v1486, 0.0
      %v1618 = vmax.f32 %v1295, 0.0
      %v1619 = vmax.f32 %v1297, 0.0
      %v1620 = vmax.f32 %v1488, 0.0
      %v1621 = vmax.f32 %v1490, 0.0
      %v1622 = vmax.f32 %v1301, 0.0
      %v1623 = vmax.f32 %v1303, 0.0
      %v1624 = vmax.f32 %v1494, 0.0
      %v1625 = vmax.f32 %v1496, 0.0
      %v1626 = vmax.f32 %v1305, 0.0
      %v1627 = vmax.f32 %v1307, 0.0
      %v1628 = vmax.f32 %v1498, 0.0
      %v1629 = vmax.f32 %v1500, 0.0
      %v1630 = vpack.c.bf16 %v1506, %v1502
      %v1631 = vpack.c.bf16 %v1507, %v1503
      %v1632 = vpack.c.bf16 %v1508, %v1504
      %v1633 = vpack.c.bf16 %v1509, %v1505
      %v1634 = vpack.c.bf16 %v1514, %v1510
      %v1635 = vpack.c.bf16 %v1515, %v1511
      %v1636 = vpack.c.bf16 %v1516, %v1512
      %v1637 = vpack.c.bf16 %v1517, %v1513
      %v1638 = vpack.c.bf16 %v1522, %v1518
      %v1639 = vpack.c.bf16 %v1523, %v1519
      %v1640 = vpack.c.bf16 %v1524, %v1520
      %v1641 = vpack.c.bf16 %v1525, %v1521
      %v1642 = vpack.c.bf16 %v1530, %v1526
      %v1643 = vpack.c.bf16 %v1531, %v1527
      %v1644 = vpack.c.bf16 %v1532, %v1528
      %v1645 = vpack.c.bf16 %v1533, %v1529
      %v1646 = vpack.c.bf16 %v1538, %v1534
      %v1647 = vpack.c.bf16 %v1539, %v1535
      %v1648 = vpack.c.bf16 %v1540, %v1536
      %v1649 = vpack.c.bf16 %v1541, %v1537
      %v1650 = vpack.c.bf16 %v1546, %v1542
      %v1651 = vpack.c.bf16 %v1547, %v1543
      %v1652 = vpack.c.bf16 %v1548, %v1544
      %v1653 = vpack.c.bf16 %v1549, %v1545
      %v1654 = vpack.c.bf16 %v1554, %v1550
      %v1655 = vpack.c.bf16 %v1555, %v1551
      %v1656 = vpack.c.bf16 %v1556, %v1552
      %v1657 = vpack.c.bf16 %v1557, %v1553
      %v1658 = vpack.c.bf16 %v1562, %v1558
      %v1659 = vpack.c.bf16 %v1563, %v1559
      %v1660 = vpack.c.bf16 %v1564, %v1560
      %v1661 = vpack.c.bf16 %v1565, %v1561
      %v1662 = vpack.c.bf16 %v1570, %v1566
      %v1663 = vpack.c.bf16 %v1571, %v1567
      %v1664 = vpack.c.bf16 %v1572, %v1568
      %v1665 = vpack.c.bf16 %v1573, %v1569
      %v1666 = vpack.c.bf16 %v1578, %v1574
      %v1667 = vpack.c.bf16 %v1579, %v1575
      %v1668 = vpack.c.bf16 %v1580, %v1576
      %v1669 = vpack.c.bf16 %v1581, %v1577
      %v1670 = vpack.c.bf16 %v1586, %v1582
      %v1671 = vpack.c.bf16 %v1587, %v1583
      %v1672 = vpack.c.bf16 %v1588, %v1584
      %v1673 = vpack.c.bf16 %v1589, %v1585
      %v1674 = vpack.c.bf16 %v1594, %v1590
      %v1675 = vpack.c.bf16 %v1595, %v1591
      %v1676 = vpack.c.bf16 %v1596, %v1592
      %v1677 = vpack.c.bf16 %v1597, %v1593
      %v1678 = vpack.c.bf16 %v1602, %v1598
      %v1679 = vpack.c.bf16 %v1603, %v1599
      %v1680 = vpack.c.bf16 %v1604, %v1600
      %v1681 = vpack.c.bf16 %v1605, %v1601
      %v1682 = vpack.c.bf16 %v1610, %v1606
      %v1683 = vpack.c.bf16 %v1611, %v1607
      %v1684 = vpack.c.bf16 %v1612, %v1608
      %v1685 = vpack.c.bf16 %v1613, %v1609
      %v1686 = vpack.c.bf16 %v1618, %v1614
      %v1687 = vpack.c.bf16 %v1619, %v1615
      %v1688 = vpack.c.bf16 %v1620, %v1616
      %v1689 = vpack.c.bf16 %v1621, %v1617
      %v1690 = vpack.c.bf16 %v1626, %v1622
      %v1691 = vpack.c.bf16 %v1627, %v1623
      %v1692 = vpack.c.bf16 %v1628, %v1624
      %v1693 = vpack.c.bf16 %v1629, %v1625
      %v1694 = vld [vmem:[%s3] sm:$0xff]
      %v1695 = vld [vmem:[%s3 + $0x8] sm:$0xff]
      %v1696 = vld [vmem:[%s3 + $0x10] sm:$0xff]
      %v1697 = vld [vmem:[%s3 + $0x18] sm:$0xff]
      %v1698 = vld [vmem:[%s3 + $0x20] sm:$0xff]
      %v1699 = vld [vmem:[%s3 + $0x28] sm:$0xff]
      %v1700 = vld [vmem:[%s3 + $0x30] sm:$0xff]
      %v1701 = vld [vmem:[%s3 + $0x38] sm:$0xff]
      %v1702 = vld [vmem:[%s3 + $0x40] sm:$0xff]
      %v1703 = vld [vmem:[%s3 + $0x48] sm:$0xff]
      %v1704 = vld [vmem:[%s3 + $0x50] sm:$0xff]
      %v1705 = vld [vmem:[%s3 + $0x58] sm:$0xff]
      %v1706 = vld [vmem:[%s3 + $0x60] sm:$0xff]
      %v1707 = vld [vmem:[%s3 + $0x68] sm:$0xff]
      %v1708 = vld [vmem:[%s3 + $0x70] sm:$0xff]
      %v1709 = vld [vmem:[%s3 + $0x78] sm:$0xff]
      %v1710 = vld [vmem:[%s3 + $0x80] sm:$0xff]
      %v1711 = vld [vmem:[%s3 + $0x88] sm:$0xff]
      %v1712 = vld [vmem:[%s3 + $0x90] sm:$0xff]
      %v1713 = vld [vmem:[%s3 + $0x98] sm:$0xff]
      %v1714 = vld [vmem:[%s3 + $0xa0] sm:$0xff]
      %v1715 = vld [vmem:[%s3 + $0xa8] sm:$0xff]
      %v1716 = vld [vmem:[%s3 + $0xb0] sm:$0xff]
      %v1717 = vld [vmem:[%s3 + $0xb8] sm:$0xff]
      %v1718 = vld [vmem:[%s3 + $0xc0] sm:$0xff]
      %v1719 = vld [vmem:[%s3 + $0xc8] sm:$0xff]
      %v1720 = vld [vmem:[%s3 + $0xd0] sm:$0xff]
      %v1721 = vld [vmem:[%s3 + $0xd8] sm:$0xff]
      %v1722 = vld [vmem:[%s3 + $0xe0] sm:$0xff]
      %v1723 = vld [vmem:[%s3 + $0xe8] sm:$0xff]
      %v1724 = vld [vmem:[%s3 + $0xf0] sm:$0xff]
      %v1725 = vld [vmem:[%s3 + $0xf8] sm:$0xff]
      %v1726 = vld [vmem:[%s4] sm:$0xff]
      %v1727 = vld [vmem:[%s4 + $0x8] sm:$0xff]
      %v1728 = vld [vmem:[%s4 + $0x10] sm:$0xff]
      %v1729 = vld [vmem:[%s4 + $0x18] sm:$0xff]
      %v1730 = vld [vmem:[%s4 + $0x20] sm:$0xff]
      %v1731 = vld [vmem:[%s4 + $0x28] sm:$0xff]
      %v1732 = vld [vmem:[%s4 + $0x30] sm:$0xff]
      %v1733 = vld [vmem:[%s4 + $0x38] sm:$0xff]
      %v1734 = vld [vmem:[%s4 + $0x40] sm:$0xff]
      %v1735 = vld [vmem:[%s4 + $0x48] sm:$0xff]
      %v1736 = vld [vmem:[%s4 + $0x50] sm:$0xff]
      %v1737 = vld [vmem:[%s4 + $0x58] sm:$0xff]
      %v1738 = vld [vmem:[%s4 + $0x60] sm:$0xff]
      %v1739 = vld [vmem:[%s4 + $0x68] sm:$0xff]
      %v1740 = vld [vmem:[%s4 + $0x70] sm:$0xff]
      %v1741 = vld [vmem:[%s4 + $0x78] sm:$0xff]
      %v1742 = vld [vmem:[%s4 + $0x80] sm:$0xff]
      %v1743 = vld [vmem:[%s4 + $0x88] sm:$0xff]
      %v1744 = vld [vmem:[%s4 + $0x90] sm:$0xff]
      %v1745 = vld [vmem:[%s4 + $0x98] sm:$0xff]
      %v1746 = vld [vmem:[%s4 + $0xa0] sm:$0xff]
      %v1747 = vld [vmem:[%s4 + $0xa8] sm:$0xff]
      %v1748 = vld [vmem:[%s4 + $0xb0] sm:$0xff]
      %v1749 = vld [vmem:[%s4 + $0xb8] sm:$0xff]
      %v1750 = vld [vmem:[%s4 + $0xc0] sm:$0xff]
      %v1751 = vld [vmem:[%s4 + $0xc8] sm:$0xff]
      %v1752 = vld [vmem:[%s4 + $0xd0] sm:$0xff]
      %v1753 = vld [vmem:[%s4 + $0xd8] sm:$0xff]
      %v1754 = vld [vmem:[%s4 + $0xe0] sm:$0xff]
      %v1755 = vld [vmem:[%s4 + $0xe8] sm:$0xff]
      %v1756 = vld [vmem:[%s4 + $0xf0] sm:$0xff]
      %v1757 = vld [vmem:[%s4 + $0xf8] sm:$0xff]
      %1759 = vset.pattern.permute.xlu0 0
      %1760 = vperm.xlu0 %1759, %v1726
      %v1761 = vpop.permute.xlu0 %1760
      %1764 = vset.pattern.permute.xlu0 0
      %1765 = vperm.xlu0 %1764, %v1727
      %v1766 = vpop.permute.xlu0 %1765
      %1769 = vset.pattern.permute.xlu0 0
      %1770 = vperm.xlu0 %1769, %v1728
      %v1771 = vpop.permute.xlu0 %1770
      %1774 = vset.pattern.permute.xlu0 0
      %1775 = vperm.xlu0 %1774, %v1729
      %v1776 = vpop.permute.xlu0 %1775
      %1779 = vset.pattern.permute.xlu0 0
      %1780 = vperm.xlu0 %1779, %v1730
      %v1781 = vpop.permute.xlu0 %1780
      %1784 = vset.pattern.permute.xlu0 0
      %1785 = vperm.xlu0 %1784, %v1731
      %v1786 = vpop.permute.xlu0 %1785
      %1789 = vset.pattern.permute.xlu0 0
      %1790 = vperm.xlu0 %1789, %v1732
      %v1791 = vpop.permute.xlu0 %1790
      %1794 = vset.pattern.permute.xlu0 0
      %1795 = vperm.xlu0 %1794, %v1733
      %v1796 = vpop.permute.xlu0 %1795
      %1799 = vset.pattern.permute.xlu0 0
      %1800 = vperm.xlu0 %1799, %v1734
      %v1801 = vpop.permute.xlu0 %1800
      %1804 = vset.pattern.permute.xlu0 0
      %1805 = vperm.xlu0 %1804, %v1735
      %v1806 = vpop.permute.xlu0 %1805
      %1809 = vset.pattern.permute.xlu0 0
      %1810 = vperm.xlu0 %1809, %v1736
      %v1811 = vpop.permute.xlu0 %1810
      %1814 = vset.pattern.permute.xlu0 0
      %1815 = vperm.xlu0 %1814, %v1737
      %v1816 = vpop.permute.xlu0 %1815
      %1819 = vset.pattern.permute.xlu0 0
      %1820 = vperm.xlu0 %1819, %v1738
      %v1821 = vpop.permute.xlu0 %1820
      %1824 = vset.pattern.permute.xlu0 0
      %1825 = vperm.xlu0 %1824, %v1739
      %v1826 = vpop.permute.xlu0 %1825
      %1829 = vset.pattern.permute.xlu0 0
      %1830 = vperm.xlu0 %1829, %v1740
      %v1831 = vpop.permute.xlu0 %1830
      %1834 = vset.pattern.permute.xlu0 0
      %1835 = vperm.xlu0 %1834, %v1741
      %v1836 = vpop.permute.xlu0 %1835
      %1839 = vset.pattern.permute.xlu0 0
      %1840 = vperm.xlu0 %1839, %v1742
      %v1841 = vpop.permute.xlu0 %1840
      %1844 = vset.pattern.permute.xlu0 0
      %1845 = vperm.xlu0 %1844, %v1743
      %v1846 = vpop.permute.xlu0 %1845
      %1849 = vset.pattern.permute.xlu0 0
      %1850 = vperm.xlu0 %1849, %v1744
      %v1851 = vpop.permute.xlu0 %1850
      %1854 = vset.pattern.permute.xlu0 0
      %1855 = vperm.xlu0 %1854, %v1745
      %v1856 = vpop.permute.xlu0 %1855
      %1859 = vset.pattern.permute.xlu0 0
      %1860 = vperm.xlu0 %1859, %v1746
      %v1861 = vpop.permute.xlu0 %1860
      %1864 = vset.pattern.permute.xlu0 0
      %1865 = vperm.xlu0 %1864, %v1747
      %v1866 = vpop.permute.xlu0 %1865
      %1869 = vset.pattern.permute.xlu0 0
      %1870 = vperm.xlu0 %1869, %v1748
      %v1871 = vpop.permute.xlu0 %1870
      %1874 = vset.pattern.permute.xlu0 0
      %1875 = vperm.xlu0 %1874, %v1749
      %v1876 = vpop.permute.xlu0 %1875
      %1879 = vset.pattern.permute.xlu0 0
      %1880 = vperm.xlu0 %1879, %v1750
      %v1881 = vpop.permute.xlu0 %1880
      %1884 = vset.pattern.permute.xlu0 0
      %1885 = vperm.xlu0 %1884, %v1751
      %v1886 = vpop.permute.xlu0 %1885
      %1889 = vset.pattern.permute.xlu0 0
      %1890 = vperm.xlu0 %1889, %v1752
      %v1891 = vpop.permute.xlu0 %1890
      %1894 = vset.pattern.permute.xlu0 0
      %1895 = vperm.xlu0 %1894, %v1753
      %v1896 = vpop.permute.xlu0 %1895
      %1899 = vset.pattern.permute.xlu0 0
      %1900 = vperm.xlu0 %1899, %v1754
      %v1901 = vpop.permute.xlu0 %1900
      %1904 = vset.pattern.permute.xlu0 0
      %1905 = vperm.xlu0 %1904, %v1755
      %v1906 = vpop.permute.xlu0 %1905
      %1909 = vset.pattern.permute.xlu0 0
      %1910 = vperm.xlu0 %1909, %v1756
      %v1911 = vpop.permute.xlu0 %1910
      %1914 = vset.pattern.permute.xlu0 0
      %1915 = vperm.xlu0 %1914, %v1757
      %v1916 = vpop.permute.xlu0 %1915
      %v1950 = vunpack.c.l.b16 %v1694
      %v1951 = vunpack.c.h.b16 %v1694
      %v1952 = vunpack.c.l.b16 %v1695
      %v1953 = vunpack.c.h.b16 %v1695
      %v1954 = vunpack.c.l.b16 %v1696
      %v1955 = vunpack.c.h.b16 %v1696
      %v1956 = vunpack.c.l.b16 %v1697
      %v1957 = vunpack.c.h.b16 %v1697
      %v1958 = vunpack.c.l.b16 %v1698
      %v1959 = vunpack.c.h.b16 %v1698
      %v1960 = vunpack.c.l.b16 %v1699
      %v1961 = vunpack.c.h.b16 %v1699
      %v1962 = vunpack.c.l.b16 %v1700
      %v1963 = vunpack.c.h.b16 %v1700
      %v1964 = vunpack.c.l.b16 %v1701
      %v1965 = vunpack.c.h.b16 %v1701
      %v1966 = vunpack.c.l.b16 %v1702
      %v1967 = vunpack.c.h.b16 %v1702
      %v1968 = vunpack.c.l.b16 %v1703
      %v1969 = vunpack.c.h.b16 %v1703
      %v1970 = vunpack.c.l.b16 %v1704
      %v1971 = vunpack.c.h.b16 %v1704
      %v1972 = vunpack.c.l.b16 %v1705
      %v1973 = vunpack.c.h.b16 %v1705
      %v1974 = vunpack.c.l.b16 %v1706
      %v1975 = vunpack.c.h.b16 %v1706
      %v1976 = vunpack.c.l.b16 %v1707
      %v1977 = vunpack.c.h.b16 %v1707
      %v1978 = vunpack.c.l.b16 %v1708
      %v1979 = vunpack.c.h.b16 %v1708
      %v1980 = vunpack.c.l.b16 %v1709
      %v1981 = vunpack.c.h.b16 %v1709
      %v1982 = vunpack.c.l.b16 %v1710
      %v1983 = vunpack.c.h.b16 %v1710
      %v1984 = vunpack.c.l.b16 %v1711
      %v1985 = vunpack.c.h.b16 %v1711
      %v1986 = vunpack.c.l.b16 %v1712
      %v1987 = vunpack.c.h.b16 %v1712
      %v1988 = vunpack.c.l.b16 %v1713
      %v1989 = vunpack.c.h.b16 %v1713
      %v1990 = vunpack.c.l.b16 %v1714
      %v1991 = vunpack.c.h.b16 %v1714
      %v1992 = vunpack.c.l.b16 %v1715
      %v1993 = vunpack.c.h.b16 %v1715
      %v1994 = vunpack.c.l.b16 %v1716
      %v1995 = vunpack.c.h.b16 %v1716
      %v1996 = vunpack.c.l.b16 %v1717
      %v1997 = vunpack.c.h.b16 %v1717
      %v1998 = vunpack.c.l.b16 %v1718
      %v1999 = vunpack.c.h.b16 %v1718
      %v2000 = vunpack.c.l.b16 %v1719
      %v2001 = vunpack.c.h.b16 %v1719
      %v2002 = vunpack.c.l.b16 %v1720
      %v2003 = vunpack.c.h.b16 %v1720
      %v2004 = vunpack.c.l.b16 %v1721
      %v2005 = vunpack.c.h.b16 %v1721
      %v2006 = vunpack.c.l.b16 %v1722
      %v2007 = vunpack.c.h.b16 %v1722
      %v2008 = vunpack.c.l.b16 %v1723
      %v2009 = vunpack.c.h.b16 %v1723
      %v2010 = vunpack.c.l.b16 %v1724
      %v2011 = vunpack.c.h.b16 %v1724
      %v2012 = vunpack.c.l.b16 %v1725
      %v2013 = vunpack.c.h.b16 %v1725
      %v2014 = vpack.c.b16 %v1952, %v1950
      %v2015 = vpack.c.b16 %v1953, %v1951
      %v2016 = vpack.c.b16 %v1956, %v1954
      %v2017 = vpack.c.b16 %v1957, %v1955
      %v2018 = vpack.c.b16 %v1960, %v1958
      %v2019 = vpack.c.b16 %v1961, %v1959
      %v2020 = vpack.c.b16 %v1964, %v1962
      %v2021 = vpack.c.b16 %v1965, %v1963
      %v2022 = vpack.c.b16 %v1968, %v1966
      %v2023 = vpack.c.b16 %v1969, %v1967
      %v2024 = vpack.c.b16 %v1972, %v1970
      %v2025 = vpack.c.b16 %v1973, %v1971
      %v2026 = vpack.c.b16 %v1976, %v1974
      %v2027 = vpack.c.b16 %v1977, %v1975
      %v2028 = vpack.c.b16 %v1980, %v1978
      %v2029 = vpack.c.b16 %v1981, %v1979
      %v2030 = vpack.c.b16 %v1984, %v1982
      %v2031 = vpack.c.b16 %v1985, %v1983
      %v2032 = vpack.c.b16 %v1988, %v1986
      %v2033 = vpack.c.b16 %v1989, %v1987
      %v2034 = vpack.c.b16 %v1992, %v1990
      %v2035 = vpack.c.b16 %v1993, %v1991
      %v2036 = vpack.c.b16 %v1996, %v1994
      %v2037 = vpack.c.b16 %v1997, %v1995
      %v2038 = vpack.c.b16 %v2000, %v1998
      %v2039 = vpack.c.b16 %v2001, %v1999
      %v2040 = vpack.c.b16 %v2004, %v2002
      %v2041 = vpack.c.b16 %v2005, %v2003
      %v2042 = vpack.c.b16 %v2008, %v2006
      %v2043 = vpack.c.b16 %v2009, %v2007
      %v2044 = vpack.c.b16 %v2012, %v2010
      %v2045 = vpack.c.b16 %v2013, %v2011
      %2078 = vmatprep.subr.bf16.mxu0 %v1659
      %2079 = vmatpush1.bf16.msra.mxu0 %v1658
      %2080 = vmatprep.subr.bf16.mxu0 %v1655
      %2081 = vmatpush1.bf16.msra.mxu0 %v1654
      %2082 = vmatprep.subr.bf16.mxu0 %v1651
      %2083 = vmatpush1.bf16.msra.mxu0 %v1650
      %2084 = vmatprep.subr.bf16.mxu0 %v1647
      %2085 = vmatpush1.bf16.msra.mxu0 %v1646
      %2086 = vmatprep.subr.bf16.mxu0 %v1643
      %2087 = vmatpush1.bf16.msra.mxu0 %v1642
      %2088 = vmatprep.subr.bf16.mxu0 %v1639
      %2089 = vmatpush1.bf16.msra.mxu0 %v1638
      %2090 = vmatprep.subr.bf16.mxu0 %v1635
      %2091 = vmatpush1.bf16.msra.mxu0 %v1634
      %2092 = vmatprep.subr.bf16.mxu0 %v1631
      %2093 = vmatpush1.bf16.msra.mxu0 %v1630
      %2094 = vmatprep.subr.bf16.mxu0 %v1691
      %2095 = vmatpush2.bf16.msra.mxu0 %v1690
      %2096 = vmatprep.subr.bf16.mxu0 %v1687
      %2097 = vmatpush2.bf16.msra.mxu0 %v1686
      %2098 = vmatprep.subr.bf16.mxu0 %v1683
      %2099 = vmatpush2.bf16.msra.mxu0 %v1682
      %2100 = vmatprep.subr.bf16.mxu0 %v1679
      %2101 = vmatpush2.bf16.msra.mxu0 %v1678
      %2102 = vmatprep.subr.bf16.mxu0 %v1675
      %2103 = vmatpush2.bf16.msra.mxu0 %v1674
      %2104 = vmatprep.subr.bf16.mxu0 %v1671
      %2105 = vmatpush2.bf16.msra.mxu0 %v1670
      %2106 = vmatprep.subr.bf16.mxu0 %v1667
      %2107 = vmatpush2.bf16.msra.mxu0 %v1666
      %2108 = vmatprep.subr.bf16.mxu0 %v1663
      %2109 = vmatpush2.bf16.msra.mxu0 %v1662
      %2110 = vmatprep.mubr.bf16.mxu0 %v2015
      %2111 = vmatmul.mubr.bf16.gmra.mxu0 %v2014
      %v2112 = vpop.f32.mrf.mxu0
      %v2113 = vadd.f32 %v1761, %v2112
      %v2114 = vpop.f32.mrf.mxu0
      %v2115 = vadd.f32 %v1761, %v2114
      %v2116 = vpop.f32.mrf.mxu0
      %v2117 = vadd.f32 %v1766, %v2116
      %v2118 = vpop.f32.mrf.mxu0
      %v2119 = vadd.f32 %v1766, %v2118
      %2120 = vmatprep.mubr.bf16.mxu0 %v2017
      %2121 = vmatmul.mubr.bf16.gmra.mxu0 %v2016
      %v2122 = vpop.f32.mrf.mxu0
      %v2123 = vadd.f32 %v1771, %v2122
      %v2124 = vpop.f32.mrf.mxu0
      %v2125 = vadd.f32 %v1771, %v2124
      %v2126 = vpop.f32.mrf.mxu0
      %v2127 = vadd.f32 %v1776, %v2126
      %v2128 = vpop.f32.mrf.mxu0
      %v2129 = vadd.f32 %v1776, %v2128
      %2130 = vmatprep.mubr.bf16.mxu0 %v2019
      %2131 = vmatmul.mubr.bf16.gmra.mxu0 %v2018
      %v2132 = vpop.f32.mrf.mxu0
      %v2133 = vadd.f32 %v1781, %v2132
      %v2134 = vpop.f32.mrf.mxu0
      %v2135 = vadd.f32 %v1781, %v2134
      %v2136 = vpop.f32.mrf.mxu0
      %v2137 = vadd.f32 %v1786, %v2136
      %v2138 = vpop.f32.mrf.mxu0
      %v2139 = vadd.f32 %v1786, %v2138
      %2140 = vmatprep.mubr.bf16.mxu0 %v2021
      %2141 = vmatmul.mubr.bf16.gmra.mxu0 %v2020
      %v2142 = vpop.f32.mrf.mxu0
      %v2143 = vadd.f32 %v1791, %v2142
      %v2144 = vpop.f32.mrf.mxu0
      %v2145 = vadd.f32 %v1791, %v2144
      %v2146 = vpop.f32.mrf.mxu0
      %v2147 = vadd.f32 %v1796, %v2146
      %v2148 = vpop.f32.mrf.mxu0
      %v2149 = vadd.f32 %v1796, %v2148
      %2150 = vmatprep.mubr.bf16.mxu0 %v2023
      %2151 = vmatmul.mubr.bf16.gmra.mxu0 %v2022
      %v2152 = vpop.f32.mrf.mxu0
      %v2153 = vadd.f32 %v1801, %v2152
      %v2154 = vpop.f32.mrf.mxu0
      %v2155 = vadd.f32 %v1801, %v2154
      %v2156 = vpop.f32.mrf.mxu0
      %v2157 = vadd.f32 %v1806, %v2156
      %v2158 = vpop.f32.mrf.mxu0
      %v2159 = vadd.f32 %v1806, %v2158
      %2160 = vmatprep.mubr.bf16.mxu0 %v2025
      %2161 = vmatmul.mubr.bf16.gmra.mxu0 %v2024
      %v2162 = vpop.f32.mrf.mxu0
      %v2163 = vadd.f32 %v1811, %v2162
      %v2164 = vpop.f32.mrf.mxu0
      %v2165 = vadd.f32 %v1811, %v2164
      %v2166 = vpop.f32.mrf.mxu0
      %v2167 = vadd.f32 %v1816, %v2166
      %v2168 = vpop.f32.mrf.mxu0
      %v2169 = vadd.f32 %v1816, %v2168
      %2170 = vmatprep.mubr.bf16.mxu0 %v2027
      %2171 = vmatmul.mubr.bf16.gmra.mxu0 %v2026
      %v2172 = vpop.f32.mrf.mxu0
      %v2173 = vadd.f32 %v1821, %v2172
      %v2174 = vpop.f32.mrf.mxu0
      %v2175 = vadd.f32 %v1821, %v2174
      %v2176 = vpop.f32.mrf.mxu0
      %v2177 = vadd.f32 %v1826, %v2176
      %v2178 = vpop.f32.mrf.mxu0
      %v2179 = vadd.f32 %v1826, %v2178
      %2180 = vmatprep.mubr.bf16.mxu0 %v2029
      %2181 = vmatmul.mubr.bf16.gmra.mxu0 %v2028
      %v2182 = vpop.f32.mrf.mxu0
      %v2183 = vadd.f32 %v1831, %v2182
      %v2184 = vpop.f32.mrf.mxu0
      %v2185 = vadd.f32 %v1831, %v2184
      %v2186 = vpop.f32.mrf.mxu0
      %v2187 = vadd.f32 %v1836, %v2186
      %v2188 = vpop.f32.mrf.mxu0
      %v2189 = vadd.f32 %v1836, %v2188
      %2190 = vmatprep.mubr.bf16.mxu0 %v2031
      %2191 = vmatmul.mubr.bf16.gmra.mxu0 %v2030
      %v2192 = vpop.f32.mrf.mxu0
      %v2193 = vadd.f32 %v1841, %v2192
      %v2194 = vpop.f32.mrf.mxu0
      %v2195 = vadd.f32 %v1841, %v2194
      %v2196 = vpop.f32.mrf.mxu0
      %v2197 = vadd.f32 %v1846, %v2196
      %v2198 = vpop.f32.mrf.mxu0
      %v2199 = vadd.f32 %v1846, %v2198
      %2200 = vmatprep.mubr.bf16.mxu0 %v2033
      %2201 = vmatmul.mubr.bf16.gmra.mxu0 %v2032
      %v2202 = vpop.f32.mrf.mxu0
      %v2203 = vadd.f32 %v1851, %v2202
      %v2204 = vpop.f32.mrf.mxu0
      %v2205 = vadd.f32 %v1851, %v2204
      %v2206 = vpop.f32.mrf.mxu0
      %v2207 = vadd.f32 %v1856, %v2206
      %v2208 = vpop.f32.mrf.mxu0
      %v2209 = vadd.f32 %v1856, %v2208
      %2210 = vmatprep.mubr.bf16.mxu0 %v2035
      %2211 = vmatmul.mubr.bf16.gmra.mxu0 %v2034
      %v2212 = vpop.f32.mrf.mxu0
      %v2213 = vadd.f32 %v1861, %v2212
      %v2214 = vpop.f32.mrf.mxu0
      %v2215 = vadd.f32 %v1861, %v2214
      %v2216 = vpop.f32.mrf.mxu0
      %v2217 = vadd.f32 %v1866, %v2216
      %v2218 = vpop.f32.mrf.mxu0
      %v2219 = vadd.f32 %v1866, %v2218
      %2220 = vmatprep.mubr.bf16.mxu0 %v2037
      %2221 = vmatmul.mubr.bf16.gmra.mxu0 %v2036
      %v2222 = vpop.f32.mrf.mxu0
      %v2223 = vadd.f32 %v1871, %v2222
      %v2224 = vpop.f32.mrf.mxu0
      %v2225 = vadd.f32 %v1871, %v2224
      %v2226 = vpop.f32.mrf.mxu0
      %v2227 = vadd.f32 %v1876, %v2226
      %v2228 = vpop.f32.mrf.mxu0
      %v2229 = vadd.f32 %v1876, %v2228
      %2230 = vmatprep.mubr.bf16.mxu0 %v2039
      %2231 = vmatmul.mubr.bf16.gmra.mxu0 %v2038
      %v2232 = vpop.f32.mrf.mxu0
      %v2233 = vadd.f32 %v1881, %v2232
      %v2234 = vpop.f32.mrf.mxu0
      %v2235 = vadd.f32 %v1881, %v2234
      %v2236 = vpop.f32.mrf.mxu0
      %v2237 = vadd.f32 %v1886, %v2236
      %v2238 = vpop.f32.mrf.mxu0
      %v2239 = vadd.f32 %v1886, %v2238
      %2240 = vmatprep.mubr.bf16.mxu0 %v2041
      %2241 = vmatmul.mubr.bf16.gmra.mxu0 %v2040
      %v2242 = vpop.f32.mrf.mxu0
      %v2243 = vadd.f32 %v1891, %v2242
      %v2244 = vpop.f32.mrf.mxu0
      %v2245 = vadd.f32 %v1891, %v2244
      %v2246 = vpop.f32.mrf.mxu0
      %v2247 = vadd.f32 %v1896, %v2246
      %v2248 = vpop.f32.mrf.mxu0
      %v2249 = vadd.f32 %v1896, %v2248
      %2250 = vmatprep.mubr.bf16.mxu0 %v2043
      %2251 = vmatmul.mubr.bf16.gmra.mxu0 %v2042
      %v2252 = vpop.f32.mrf.mxu0
      %v2253 = vadd.f32 %v1901, %v2252
      %v2254 = vpop.f32.mrf.mxu0
      %v2255 = vadd.f32 %v1901, %v2254
      %v2256 = vpop.f32.mrf.mxu0
      %v2257 = vadd.f32 %v1906, %v2256
      %v2258 = vpop.f32.mrf.mxu0
      %v2259 = vadd.f32 %v1906, %v2258
      %2260 = vmatprep.mubr.bf16.mxu0 %v2045
      %2261 = vmatmul.mubr.bf16.gmra.mxu0 %v2044
      %v2262 = vpop.f32.mrf.mxu0
      %v2263 = vadd.f32 %v1911, %v2262
      %v2264 = vpop.f32.mrf.mxu0
      %v2265 = vadd.f32 %v1911, %v2264
      %v2266 = vpop.f32.mrf.mxu0
      %v2267 = vadd.f32 %v1916, %v2266
      %v2268 = vpop.f32.mrf.mxu0
      %v2269 = vadd.f32 %v1916, %v2268
      %2270 = vdwg.mxu0
      %2271 = vmatprep.subr.bf16.mxu0 %v1661
      %2272 = vmatpush1.bf16.msra.mxu0 %v1660
      %2273 = vmatprep.subr.bf16.mxu0 %v1657
      %2274 = vmatpush1.bf16.msra.mxu0 %v1656
      %2275 = vmatprep.subr.bf16.mxu0 %v1653
      %2276 = vmatpush1.bf16.msra.mxu0 %v1652
      %2277 = vmatprep.subr.bf16.mxu0 %v1649
      %2278 = vmatpush1.bf16.msra.mxu0 %v1648
      %2279 = vmatprep.subr.bf16.mxu0 %v1645
      %2280 = vmatpush1.bf16.msra.mxu0 %v1644
      %2281 = vmatprep.subr.bf16.mxu0 %v1641
      %2282 = vmatpush1.bf16.msra.mxu0 %v1640
      %2283 = vmatprep.subr.bf16.mxu0 %v1637
      %2284 = vmatpush1.bf16.msra.mxu0 %v1636
      %2285 = vmatprep.subr.bf16.mxu0 %v1633
      %2286 = vmatpush1.bf16.msra.mxu0 %v1632
      %2287 = vmatprep.subr.bf16.mxu0 %v1693
      %2288 = vmatpush2.bf16.msra.mxu0 %v1692
      %2289 = vmatprep.subr.bf16.mxu0 %v1689
      %2290 = vmatpush2.bf16.msra.mxu0 %v1688
      %2291 = vmatprep.subr.bf16.mxu0 %v1685
      %2292 = vmatpush2.bf16.msra.mxu0 %v1684
      %2293 = vmatprep.subr.bf16.mxu0 %v1681
      %2294 = vmatpush2.bf16.msra.mxu0 %v1680
      %2295 = vmatprep.subr.bf16.mxu0 %v1677
      %2296 = vmatpush2.bf16.msra.mxu0 %v1676
      %2297 = vmatprep.subr.bf16.mxu0 %v1673
      %2298 = vmatpush2.bf16.msra.mxu0 %v1672
      %2299 = vmatprep.subr.bf16.mxu0 %v1669
      %2300 = vmatpush2.bf16.msra.mxu0 %v1668
      %2301 = vmatprep.subr.bf16.mxu0 %v1665
      %2302 = vmatpush2.bf16.msra.mxu0 %v1664
      %2303 = vmatprep.mubr.bf16.mxu0 %v2015
      %2304 = vmatmul.mubr.bf16.gmra.mxu0 %v2014
      %v2305 = vpop.f32.mrf.mxu0
      %v2306 = vadd.f32 %v1761, %v2305
      %v2307 = vpop.f32.mrf.mxu0
      %v2308 = vadd.f32 %v1761, %v2307
      %v2309 = vpop.f32.mrf.mxu0
      %v2310 = vadd.f32 %v1766, %v2309
      %v2311 = vpop.f32.mrf.mxu0
      %v2312 = vadd.f32 %v1766, %v2311
      %2313 = vmatprep.mubr.bf16.mxu0 %v2017
      %2314 = vmatmul.mubr.bf16.gmra.mxu0 %v2016
      %v2315 = vpop.f32.mrf.mxu0
      %v2316 = vadd.f32 %v1771, %v2315
      %v2317 = vpop.f32.mrf.mxu0
      %v2318 = vadd.f32 %v1771, %v2317
      %v2319 = vpop.f32.mrf.mxu0
      %v2320 = vadd.f32 %v1776, %v2319
      %v2321 = vpop.f32.mrf.mxu0
      %v2322 = vadd.f32 %v1776, %v2321
      %2323 = vmatprep.mubr.bf16.mxu0 %v2019
      %2324 = vmatmul.mubr.bf16.gmra.mxu0 %v2018
      %v2325 = vpop.f32.mrf.mxu0
      %v2326 = vadd.f32 %v1781, %v2325
      %v2327 = vpop.f32.mrf.mxu0
      %v2328 = vadd.f32 %v1781, %v2327
      %v2329 = vpop.f32.mrf.mxu0
      %v2330 = vadd.f32 %v1786, %v2329
      %v2331 = vpop.f32.mrf.mxu0
      %v2332 = vadd.f32 %v1786, %v2331
      %2333 = vmatprep.mubr.bf16.mxu0 %v2021
      %2334 = vmatmul.mubr.bf16.gmra.mxu0 %v2020
      %v2335 = vpop.f32.mrf.mxu0
      %v2336 = vadd.f32 %v1791, %v2335
      %v2337 = vpop.f32.mrf.mxu0
      %v2338 = vadd.f32 %v1791, %v2337
      %v2339 = vpop.f32.mrf.mxu0
      %v2340 = vadd.f32 %v1796, %v2339
      %v2341 = vpop.f32.mrf.mxu0
      %v2342 = vadd.f32 %v1796, %v2341
      %2343 = vmatprep.mubr.bf16.mxu0 %v2023
      %2344 = vmatmul.mubr.bf16.gmra.mxu0 %v2022
      %v2345 = vpop.f32.mrf.mxu0
      %v2346 = vadd.f32 %v1801, %v2345
      %v2347 = vpop.f32.mrf.mxu0
      %v2348 = vadd.f32 %v1801, %v2347
      %v2349 = vpop.f32.mrf.mxu0
      %v2350 = vadd.f32 %v1806, %v2349
      %v2351 = vpop.f32.mrf.mxu0
      %v2352 = vadd.f32 %v1806, %v2351
      %2353 = vmatprep.mubr.bf16.mxu0 %v2025
      %2354 = vmatmul.mubr.bf16.gmra.mxu0 %v2024
      %v2355 = vpop.f32.mrf.mxu0
      %v2356 = vadd.f32 %v1811, %v2355
      %v2357 = vpop.f32.mrf.mxu0
      %v2358 = vadd.f32 %v1811, %v2357
      %v2359 = vpop.f32.mrf.mxu0
      %v2360 = vadd.f32 %v1816, %v2359
      %v2361 = vpop.f32.mrf.mxu0
      %v2362 = vadd.f32 %v1816, %v2361
      %2363 = vmatprep.mubr.bf16.mxu0 %v2027
      %2364 = vmatmul.mubr.bf16.gmra.mxu0 %v2026
      %v2365 = vpop.f32.mrf.mxu0
      %v2366 = vadd.f32 %v1821, %v2365
      %v2367 = vpop.f32.mrf.mxu0
      %v2368 = vadd.f32 %v1821, %v2367
      %v2369 = vpop.f32.mrf.mxu0
      %v2370 = vadd.f32 %v1826, %v2369
      %v2371 = vpop.f32.mrf.mxu0
      %v2372 = vadd.f32 %v1826, %v2371
      %2373 = vmatprep.mubr.bf16.mxu0 %v2029
      %2374 = vmatmul.mubr.bf16.gmra.mxu0 %v2028
      %v2375 = vpop.f32.mrf.mxu0
      %v2376 = vadd.f32 %v1831, %v2375
      %v2377 = vpop.f32.mrf.mxu0
      %v2378 = vadd.f32 %v1831, %v2377
      %v2379 = vpop.f32.mrf.mxu0
      %v2380 = vadd.f32 %v1836, %v2379
      %v2381 = vpop.f32.mrf.mxu0
      %v2382 = vadd.f32 %v1836, %v2381
      %2383 = vmatprep.mubr.bf16.mxu0 %v2031
      %2384 = vmatmul.mubr.bf16.gmra.mxu0 %v2030
      %v2385 = vpop.f32.mrf.mxu0
      %v2386 = vadd.f32 %v1841, %v2385
      %v2387 = vpop.f32.mrf.mxu0
      %v2388 = vadd.f32 %v1841, %v2387
      %v2389 = vpop.f32.mrf.mxu0
      %v2390 = vadd.f32 %v1846, %v2389
      %v2391 = vpop.f32.mrf.mxu0
      %v2392 = vadd.f32 %v1846, %v2391
      %2393 = vmatprep.mubr.bf16.mxu0 %v2033
      %2394 = vmatmul.mubr.bf16.gmra.mxu0 %v2032
      %v2395 = vpop.f32.mrf.mxu0
      %v2396 = vadd.f32 %v1851, %v2395
      %v2397 = vpop.f32.mrf.mxu0
      %v2398 = vadd.f32 %v1851, %v2397
      %v2399 = vpop.f32.mrf.mxu0
      %v2400 = vadd.f32 %v1856, %v2399
      %v2401 = vpop.f32.mrf.mxu0
      %v2402 = vadd.f32 %v1856, %v2401
      %2403 = vmatprep.mubr.bf16.mxu0 %v2035
      %2404 = vmatmul.mubr.bf16.gmra.mxu0 %v2034
      %v2405 = vpop.f32.mrf.mxu0
      %v2406 = vadd.f32 %v1861, %v2405
      %v2407 = vpop.f32.mrf.mxu0
      %v2408 = vadd.f32 %v1861, %v2407
      %v2409 = vpop.f32.mrf.mxu0
      %v2410 = vadd.f32 %v1866, %v2409
      %v2411 = vpop.f32.mrf.mxu0
      %v2412 = vadd.f32 %v1866, %v2411
      %2413 = vmatprep.mubr.bf16.mxu0 %v2037
      %2414 = vmatmul.mubr.bf16.gmra.mxu0 %v2036
      %v2415 = vpop.f32.mrf.mxu0
      %v2416 = vadd.f32 %v1871, %v2415
      %v2417 = vpop.f32.mrf.mxu0
      %v2418 = vadd.f32 %v1871, %v2417
      %v2419 = vpop.f32.mrf.mxu0
      %v2420 = vadd.f32 %v1876, %v2419
      %v2421 = vpop.f32.mrf.mxu0
      %v2422 = vadd.f32 %v1876, %v2421
      %2423 = vmatprep.mubr.bf16.mxu0 %v2039
      %2424 = vmatmul.mubr.bf16.gmra.mxu0 %v2038
      %v2425 = vpop.f32.mrf.mxu0
      %v2426 = vadd.f32 %v1881, %v2425
      %v2427 = vpop.f32.mrf.mxu0
      %v2428 = vadd.f32 %v1881, %v2427
      %v2429 = vpop.f32.mrf.mxu0
      %v2430 = vadd.f32 %v1886, %v2429
      %v2431 = vpop.f32.mrf.mxu0
      %v2432 = vadd.f32 %v1886, %v2431
      %2433 = vmatprep.mubr.bf16.mxu0 %v2041
      %2434 = vmatmul.mubr.bf16.gmra.mxu0 %v2040
      %v2435 = vpop.f32.mrf.mxu0
      %v2436 = vadd.f32 %v1891, %v2435
      %v2437 = vpop.f32.mrf.mxu0
      %v2438 = vadd.f32 %v1891, %v2437
      %v2439 = vpop.f32.mrf.mxu0
      %v2440 = vadd.f32 %v1896, %v2439
      %v2441 = vpop.f32.mrf.mxu0
      %v2442 = vadd.f32 %v1896, %v2441
      %2443 = vmatprep.mubr.bf16.mxu0 %v2043
      %2444 = vmatmul.mubr.bf16.gmra.mxu0 %v2042
      %v2445 = vpop.f32.mrf.mxu0
      %v2446 = vadd.f32 %v1901, %v2445
      %v2447 = vpop.f32.mrf.mxu0
      %v2448 = vadd.f32 %v1901, %v2447
      %v2449 = vpop.f32.mrf.mxu0
      %v2450 = vadd.f32 %v1906, %v2449
      %v2451 = vpop.f32.mrf.mxu0
      %v2452 = vadd.f32 %v1906, %v2451
      %2453 = vmatprep.mubr.bf16.mxu0 %v2045
      %2454 = vmatmul.mubr.bf16.gmra.mxu0 %v2044
      %v2455 = vpop.f32.mrf.mxu0
      %v2456 = vadd.f32 %v1911, %v2455
      %v2457 = vpop.f32.mrf.mxu0
      %v2458 = vadd.f32 %v1911, %v2457
      %v2459 = vpop.f32.mrf.mxu0
      %v2460 = vadd.f32 %v1916, %v2459
      %v2461 = vpop.f32.mrf.mxu0
      %v2462 = vadd.f32 %v1916, %v2461
      %2463 = vdwg.mxu0
      %v2464 = vmax.f32 %v2113, 0.0
      %v2465 = vmax.f32 %v2115, 0.0
      %v2466 = vmax.f32 %v2306, 0.0
      %v2467 = vmax.f32 %v2308, 0.0
      %v2468 = vmax.f32 %v2117, 0.0
      %v2469 = vmax.f32 %v2119, 0.0
      %v2470 = vmax.f32 %v2310, 0.0
      %v2471 = vmax.f32 %v2312, 0.0
      %v2472 = vmax.f32 %v2123, 0.0
      %v2473 = vmax.f32 %v2125, 0.0
      %v2474 = vmax.f32 %v2316, 0.0
      %v2475 = vmax.f32 %v2318, 0.0
      %v2476 = vmax.f32 %v2127, 0.0
      %v2477 = vmax.f32 %v2129, 0.0
      %v2478 = vmax.f32 %v2320, 0.0
      %v2479 = vmax.f32 %v2322, 0.0
      %v2480 = vmax.f32 %v2133, 0.0
      %v2481 = vmax.f32 %v2135, 0.0
      %v2482 = vmax.f32 %v2326, 0.0
      %v2483 = vmax.f32 %v2328, 0.0
      %v2484 = vmax.f32 %v2137, 0.0
      %v2485 = vmax.f32 %v2139, 0.0
      %v2486 = vmax.f32 %v2330, 0.0
      %v2487 = vmax.f32 %v2332, 0.0
      %v2488 = vmax.f32 %v2143, 0.0
      %v2489 = vmax.f32 %v2145, 0.0
      %v2490 = vmax.f32 %v2336, 0.0
      %v2491 = vmax.f32 %v2338, 0.0
      %v2492 = vmax.f32 %v2147, 0.0
      %v2493 = vmax.f32 %v2149, 0.0
      %v2494 = vmax.f32 %v2340, 0.0
      %v2495 = vmax.f32 %v2342, 0.0
      %v2496 = vmax.f32 %v2153, 0.0
      %v2497 = vmax.f32 %v2155, 0.0
      %v2498 = vmax.f32 %v2346, 0.0
      %v2499 = vmax.f32 %v2348, 0.0
      %v2500 = vmax.f32 %v2157, 0.0
      %v2501 = vmax.f32 %v2159, 0.0
      %v2502 = vmax.f32 %v2350, 0.0
      %v2503 = vmax.f32 %v2352, 0.0
      %v2504 = vmax.f32 %v2163, 0.0
      %v2505 = vmax.f32 %v2165, 0.0
      %v2506 = vmax.f32 %v2356, 0.0
      %v2507 = vmax.f32 %v2358, 0.0
      %v2508 = vmax.f32 %v2167, 0.0
      %v2509 = vmax.f32 %v2169, 0.0
      %v2510 = vmax.f32 %v2360, 0.0
      %v2511 = vmax.f32 %v2362, 0.0
      %v2512 = vmax.f32 %v2173, 0.0
      %v2513 = vmax.f32 %v2175, 0.0
      %v2514 = vmax.f32 %v2366, 0.0
      %v2515 = vmax.f32 %v2368, 0.0
      %v2516 = vmax.f32 %v2177, 0.0
      %v2517 = vmax.f32 %v2179, 0.0
      %v2518 = vmax.f32 %v2370, 0.0
      %v2519 = vmax.f32 %v2372, 0.0
      %v2520 = vmax.f32 %v2183, 0.0
      %v2521 = vmax.f32 %v2185, 0.0
      %v2522 = vmax.f32 %v2376, 0.0
      %v2523 = vmax.f32 %v2378, 0.0
      %v2524 = vmax.f32 %v2187, 0.0
      %v2525 = vmax.f32 %v2189, 0.0
      %v2526 = vmax.f32 %v2380, 0.0
      %v2527 = vmax.f32 %v2382, 0.0
      %v2528 = vmax.f32 %v2193, 0.0
      %v2529 = vmax.f32 %v2195, 0.0
      %v2530 = vmax.f32 %v2386, 0.0
      %v2531 = vmax.f32 %v2388, 0.0
      %v2532 = vmax.f32 %v2197, 0.0
      %v2533 = vmax.f32 %v2199, 0.0
      %v2534 = vmax.f32 %v2390, 0.0
      %v2535 = vmax.f32 %v2392, 0.0
      %v2536 = vmax.f32 %v2203, 0.0
      %v2537 = vmax.f32 %v2205, 0.0
      %v2538 = vmax.f32 %v2396, 0.0
      %v2539 = vmax.f32 %v2398, 0.0
      %v2540 = vmax.f32 %v2207, 0.0
      %v2541 = vmax.f32 %v2209, 0.0
      %v2542 = vmax.f32 %v2400, 0.0
      %v2543 = vmax.f32 %v2402, 0.0
      %v2544 = vmax.f32 %v2213, 0.0
      %v2545 = vmax.f32 %v2215, 0.0
      %v2546 = vmax.f32 %v2406, 0.0
      %v2547 = vmax.f32 %v2408, 0.0
      %v2548 = vmax.f32 %v2217, 0.0
      %v2549 = vmax.f32 %v2219, 0.0
      %v2550 = vmax.f32 %v2410, 0.0
      %v2551 = vmax.f32 %v2412, 0.0
      %v2552 = vmax.f32 %v2223, 0.0
      %v2553 = vmax.f32 %v2225, 0.0
      %v2554 = vmax.f32 %v2416, 0.0
      %v2555 = vmax.f32 %v2418, 0.0
      %v2556 = vmax.f32 %v2227, 0.0
      %v2557 = vmax.f32 %v2229, 0.0
      %v2558 = vmax.f32 %v2420, 0.0
      %v2559 = vmax.f32 %v2422, 0.0
      %v2560 = vmax.f32 %v2233, 0.0
      %v2561 = vmax.f32 %v2235, 0.0
      %v2562 = vmax.f32 %v2426, 0.0
      %v2563 = vmax.f32 %v2428, 0.0
      %v2564 = vmax.f32 %v2237, 0.0
      %v2565 = vmax.f32 %v2239, 0.0
      %v2566 = vmax.f32 %v2430, 0.0
      %v2567 = vmax.f32 %v2432, 0.0
      %v2568 = vmax.f32 %v2243, 0.0
      %v2569 = vmax.f32 %v2245, 0.0
      %v2570 = vmax.f32 %v2436, 0.0
      %v2571 = vmax.f32 %v2438, 0.0
      %v2572 = vmax.f32 %v2247, 0.0
      %v2573 = vmax.f32 %v2249, 0.0
      %v2574 = vmax.f32 %v2440, 0.0
      %v2575 = vmax.f32 %v2442, 0.0
      %v2576 = vmax.f32 %v2253, 0.0
      %v2577 = vmax.f32 %v2255, 0.0
      %v2578 = vmax.f32 %v2446, 0.0
      %v2579 = vmax.f32 %v2448, 0.0
      %v2580 = vmax.f32 %v2257, 0.0
      %v2581 = vmax.f32 %v2259, 0.0
      %v2582 = vmax.f32 %v2450, 0.0
      %v2583 = vmax.f32 %v2452, 0.0
      %v2584 = vmax.f32 %v2263, 0.0
      %v2585 = vmax.f32 %v2265, 0.0
      %v2586 = vmax.f32 %v2456, 0.0
      %v2587 = vmax.f32 %v2458, 0.0
      %v2588 = vmax.f32 %v2267, 0.0
      %v2589 = vmax.f32 %v2269, 0.0
      %v2590 = vmax.f32 %v2460, 0.0
      %v2591 = vmax.f32 %v2462, 0.0
      %v2592 = vpack.c.bf16 %v2468, %v2464
      %v2593 = vpack.c.bf16 %v2469, %v2465
      %v2594 = vpack.c.bf16 %v2470, %v2466
      %v2595 = vpack.c.bf16 %v2471, %v2467
      %v2596 = vpack.c.bf16 %v2476, %v2472
      %v2597 = vpack.c.bf16 %v2477, %v2473
      %v2598 = vpack.c.bf16 %v2478, %v2474
      %v2599 = vpack.c.bf16 %v2479, %v2475
      %v2600 = vpack.c.bf16 %v2484, %v2480
      %v2601 = vpack.c.bf16 %v2485, %v2481
      %v2602 = vpack.c.bf16 %v2486, %v2482
      %v2603 = vpack.c.bf16 %v2487, %v2483
      %v2604 = vpack.c.bf16 %v2492, %v2488
      %v2605 = vpack.c.bf16 %v2493, %v2489
      %v2606 = vpack.c.bf16 %v2494, %v2490
      %v2607 = vpack.c.bf16 %v2495, %v2491
      %v2608 = vpack.c.bf16 %v2500, %v2496
      %v2609 = vpack.c.bf16 %v2501, %v2497
      %v2610 = vpack.c.bf16 %v2502, %v2498
      %v2611 = vpack.c.bf16 %v2503, %v2499
      %v2612 = vpack.c.bf16 %v2508, %v2504
      %v2613 = vpack.c.bf16 %v2509, %v2505
      %v2614 = vpack.c.bf16 %v2510, %v2506
      %v2615 = vpack.c.bf16 %v2511, %v2507
      %v2616 = vpack.c.bf16 %v2516, %v2512
      %v2617 = vpack.c.bf16 %v2517, %v2513
      %v2618 = vpack.c.bf16 %v2518, %v2514
      %v2619 = vpack.c.bf16 %v2519, %v2515
      %v2620 = vpack.c.bf16 %v2524, %v2520
      %v2621 = vpack.c.bf16 %v2525, %v2521
      %v2622 = vpack.c.bf16 %v2526, %v2522
      %v2623 = vpack.c.bf16 %v2527, %v2523
      %v2624 = vpack.c.bf16 %v2532, %v2528
      %v2625 = vpack.c.bf16 %v2533, %v2529
      %v2626 = vpack.c.bf16 %v2534, %v2530
      %v2627 = vpack.c.bf16 %v2535, %v2531
      %v2628 = vpack.c.bf16 %v2540, %v2536
      %v2629 = vpack.c.bf16 %v2541, %v2537
      %v2630 = vpack.c.bf16 %v2542, %v2538
      %v2631 = vpack.c.bf16 %v2543, %v2539
      %v2632 = vpack.c.bf16 %v2548, %v2544
      %v2633 = vpack.c.bf16 %v2549, %v2545
      %v2634 = vpack.c.bf16 %v2550, %v2546
      %v2635 = vpack.c.bf16 %v2551, %v2547
      %v2636 = vpack.c.bf16 %v2556, %v2552
      %v2637 = vpack.c.bf16 %v2557, %v2553
      %v2638 = vpack.c.bf16 %v2558, %v2554
      %v2639 = vpack.c.bf16 %v2559, %v2555
      %v2640 = vpack.c.bf16 %v2564, %v2560
      %v2641 = vpack.c.bf16 %v2565, %v2561
      %v2642 = vpack.c.bf16 %v2566, %v2562
      %v2643 = vpack.c.bf16 %v2567, %v2563
      %v2644 = vpack.c.bf16 %v2572, %v2568
      %v2645 = vpack.c.bf16 %v2573, %v2569
      %v2646 = vpack.c.bf16 %v2574, %v2570
      %v2647 = vpack.c.bf16 %v2575, %v2571
      %v2648 = vpack.c.bf16 %v2580, %v2576
      %v2649 = vpack.c.bf16 %v2581, %v2577
      %v2650 = vpack.c.bf16 %v2582, %v2578
      %v2651 = vpack.c.bf16 %v2583, %v2579
      %v2652 = vpack.c.bf16 %v2588, %v2584
      %v2653 = vpack.c.bf16 %v2589, %v2585
      %v2654 = vpack.c.bf16 %v2590, %v2586
      %v2655 = vpack.c.bf16 %v2591, %v2587
      %v2656 = vld [vmem:[%s5] sm:$0xff]
      %v2657 = vld [vmem:[%s5 + $0x8] sm:$0xff]
      %v2658 = vld [vmem:[%s5 + $0x10] sm:$0xff]
      %v2659 = vld [vmem:[%s5 + $0x18] sm:$0xff]
      %v2660 = vld [vmem:[%s5 + $0x20] sm:$0xff]
      %v2661 = vld [vmem:[%s5 + $0x28] sm:$0xff]
      %v2662 = vld [vmem:[%s5 + $0x30] sm:$0xff]
      %v2663 = vld [vmem:[%s5 + $0x38] sm:$0xff]
      %v2664 = vld [vmem:[%s5 + $0x40] sm:$0xff]
      %v2665 = vld [vmem:[%s5 + $0x48] sm:$0xff]
      %v2666 = vld [vmem:[%s5 + $0x50] sm:$0xff]
      %v2667 = vld [vmem:[%s5 + $0x58] sm:$0xff]
      %v2668 = vld [vmem:[%s5 + $0x60] sm:$0xff]
      %v2669 = vld [vmem:[%s5 + $0x68] sm:$0xff]
      %v2670 = vld [vmem:[%s5 + $0x70] sm:$0xff]
      %v2671 = vld [vmem:[%s5 + $0x78] sm:$0xff]
      %v2672 = vld [vmem:[%s5 + $0x80] sm:$0xff]
      %v2673 = vld [vmem:[%s5 + $0x88] sm:$0xff]
      %v2674 = vld [vmem:[%s5 + $0x90] sm:$0xff]
      %v2675 = vld [vmem:[%s5 + $0x98] sm:$0xff]
      %v2676 = vld [vmem:[%s5 + $0xa0] sm:$0xff]
      %v2677 = vld [vmem:[%s5 + $0xa8] sm:$0xff]
      %v2678 = vld [vmem:[%s5 + $0xb0] sm:$0xff]
      %v2679 = vld [vmem:[%s5 + $0xb8] sm:$0xff]
      %v2680 = vld [vmem:[%s5 + $0xc0] sm:$0xff]
      %v2681 = vld [vmem:[%s5 + $0xc8] sm:$0xff]
      %v2682 = vld [vmem:[%s5 + $0xd0] sm:$0xff]
      %v2683 = vld [vmem:[%s5 + $0xd8] sm:$0xff]
      %v2684 = vld [vmem:[%s5 + $0xe0] sm:$0xff]
      %v2685 = vld [vmem:[%s5 + $0xe8] sm:$0xff]
      %v2686 = vld [vmem:[%s5 + $0xf0] sm:$0xff]
      %v2687 = vld [vmem:[%s5 + $0xf8] sm:$0xff]
      %v2688 = vld [vmem:[%s6] sm:$0xff]
      %v2689 = vld [vmem:[%s6 + $0x8] sm:$0xff]
      %v2690 = vld [vmem:[%s6 + $0x10] sm:$0xff]
      %v2691 = vld [vmem:[%s6 + $0x18] sm:$0xff]
      %v2692 = vld [vmem:[%s6 + $0x20] sm:$0xff]
      %v2693 = vld [vmem:[%s6 + $0x28] sm:$0xff]
      %v2694 = vld [vmem:[%s6 + $0x30] sm:$0xff]
      %v2695 = vld [vmem:[%s6 + $0x38] sm:$0xff]
      %v2696 = vld [vmem:[%s6 + $0x40] sm:$0xff]
      %v2697 = vld [vmem:[%s6 + $0x48] sm:$0xff]
      %v2698 = vld [vmem:[%s6 + $0x50] sm:$0xff]
      %v2699 = vld [vmem:[%s6 + $0x58] sm:$0xff]
      %v2700 = vld [vmem:[%s6 + $0x60] sm:$0xff]
      %v2701 = vld [vmem:[%s6 + $0x68] sm:$0xff]
      %v2702 = vld [vmem:[%s6 + $0x70] sm:$0xff]
      %v2703 = vld [vmem:[%s6 + $0x78] sm:$0xff]
      %v2704 = vld [vmem:[%s6 + $0x80] sm:$0xff]
      %v2705 = vld [vmem:[%s6 + $0x88] sm:$0xff]
      %v2706 = vld [vmem:[%s6 + $0x90] sm:$0xff]
      %v2707 = vld [vmem:[%s6 + $0x98] sm:$0xff]
      %v2708 = vld [vmem:[%s6 + $0xa0] sm:$0xff]
      %v2709 = vld [vmem:[%s6 + $0xa8] sm:$0xff]
      %v2710 = vld [vmem:[%s6 + $0xb0] sm:$0xff]
      %v2711 = vld [vmem:[%s6 + $0xb8] sm:$0xff]
      %v2712 = vld [vmem:[%s6 + $0xc0] sm:$0xff]
      %v2713 = vld [vmem:[%s6 + $0xc8] sm:$0xff]
      %v2714 = vld [vmem:[%s6 + $0xd0] sm:$0xff]
      %v2715 = vld [vmem:[%s6 + $0xd8] sm:$0xff]
      %v2716 = vld [vmem:[%s6 + $0xe0] sm:$0xff]
      %v2717 = vld [vmem:[%s6 + $0xe8] sm:$0xff]
      %v2718 = vld [vmem:[%s6 + $0xf0] sm:$0xff]
      %v2719 = vld [vmem:[%s6 + $0xf8] sm:$0xff]
      %2721 = vset.pattern.permute.xlu0 0
      %2722 = vperm.xlu0 %2721, %v2688
      %v2723 = vpop.permute.xlu0 %2722
      %2726 = vset.pattern.permute.xlu0 0
      %2727 = vperm.xlu0 %2726, %v2689
      %v2728 = vpop.permute.xlu0 %2727
      %2731 = vset.pattern.permute.xlu0 0
      %2732 = vperm.xlu0 %2731, %v2690
      %v2733 = vpop.permute.xlu0 %2732
      %2736 = vset.pattern.permute.xlu0 0
      %2737 = vperm.xlu0 %2736, %v2691
      %v2738 = vpop.permute.xlu0 %2737
      %2741 = vset.pattern.permute.xlu0 0
      %2742 = vperm.xlu0 %2741, %v2692
      %v2743 = vpop.permute.xlu0 %2742
      %2746 = vset.pattern.permute.xlu0 0
      %2747 = vperm.xlu0 %2746, %v2693
      %v2748 = vpop.permute.xlu0 %2747
      %2751 = vset.pattern.permute.xlu0 0
      %2752 = vperm.xlu0 %2751, %v2694
      %v2753 = vpop.permute.xlu0 %2752
      %2756 = vset.pattern.permute.xlu0 0
      %2757 = vperm.xlu0 %2756, %v2695
      %v2758 = vpop.permute.xlu0 %2757
      %2761 = vset.pattern.permute.xlu0 0
      %2762 = vperm.xlu0 %2761, %v2696
      %v2763 = vpop.permute.xlu0 %2762
      %2766 = vset.pattern.permute.xlu0 0
      %2767 = vperm.xlu0 %2766, %v2697
      %v2768 = vpop.permute.xlu0 %2767
      %2771 = vset.pattern.permute.xlu0 0
      %2772 = vperm.xlu0 %2771, %v2698
      %v2773 = vpop.permute.xlu0 %2772
      %2776 = vset.pattern.permute.xlu0 0
      %2777 = vperm.xlu0 %2776, %v2699
      %v2778 = vpop.permute.xlu0 %2777
      %2781 = vset.pattern.permute.xlu0 0
      %2782 = vperm.xlu0 %2781, %v2700
      %v2783 = vpop.permute.xlu0 %2782
      %2786 = vset.pattern.permute.xlu0 0
      %2787 = vperm.xlu0 %2786, %v2701
      %v2788 = vpop.permute.xlu0 %2787
      %2791 = vset.pattern.permute.xlu0 0
      %2792 = vperm.xlu0 %2791, %v2702
      %v2793 = vpop.permute.xlu0 %2792
      %2796 = vset.pattern.permute.xlu0 0
      %2797 = vperm.xlu0 %2796, %v2703
      %v2798 = vpop.permute.xlu0 %2797
      %2801 = vset.pattern.permute.xlu0 0
      %2802 = vperm.xlu0 %2801, %v2704
      %v2803 = vpop.permute.xlu0 %2802
      %2806 = vset.pattern.permute.xlu0 0
      %2807 = vperm.xlu0 %2806, %v2705
      %v2808 = vpop.permute.xlu0 %2807
      %2811 = vset.pattern.permute.xlu0 0
      %2812 = vperm.xlu0 %2811, %v2706
      %v2813 = vpop.permute.xlu0 %2812
      %2816 = vset.pattern.permute.xlu0 0
      %2817 = vperm.xlu0 %2816, %v2707
      %v2818 = vpop.permute.xlu0 %2817
      %2821 = vset.pattern.permute.xlu0 0
      %2822 = vperm.xlu0 %2821, %v2708
      %v2823 = vpop.permute.xlu0 %2822
      %2826 = vset.pattern.permute.xlu0 0
      %2827 = vperm.xlu0 %2826, %v2709
      %v2828 = vpop.permute.xlu0 %2827
      %2831 = vset.pattern.permute.xlu0 0
      %2832 = vperm.xlu0 %2831, %v2710
      %v2833 = vpop.permute.xlu0 %2832
      %2836 = vset.pattern.permute.xlu0 0
      %2837 = vperm.xlu0 %2836, %v2711
      %v2838 = vpop.permute.xlu0 %2837
      %2841 = vset.pattern.permute.xlu0 0
      %2842 = vperm.xlu0 %2841, %v2712
      %v2843 = vpop.permute.xlu0 %2842
      %2846 = vset.pattern.permute.xlu0 0
      %2847 = vperm.xlu0 %2846, %v2713
      %v2848 = vpop.permute.xlu0 %2847
      %2851 = vset.pattern.permute.xlu0 0
      %2852 = vperm.xlu0 %2851, %v2714
      %v2853 = vpop.permute.xlu0 %2852
      %2856 = vset.pattern.permute.xlu0 0
      %2857 = vperm.xlu0 %2856, %v2715
      %v2858 = vpop.permute.xlu0 %2857
      %2861 = vset.pattern.permute.xlu0 0
      %2862 = vperm.xlu0 %2861, %v2716
      %v2863 = vpop.permute.xlu0 %2862
      %2866 = vset.pattern.permute.xlu0 0
      %2867 = vperm.xlu0 %2866, %v2717
      %v2868 = vpop.permute.xlu0 %2867
      %2871 = vset.pattern.permute.xlu0 0
      %2872 = vperm.xlu0 %2871, %v2718
      %v2873 = vpop.permute.xlu0 %2872
      %2876 = vset.pattern.permute.xlu0 0
      %2877 = vperm.xlu0 %2876, %v2719
      %v2878 = vpop.permute.xlu0 %2877
      %v2912 = vunpack.c.l.b16 %v2656
      %v2913 = vunpack.c.h.b16 %v2656
      %v2914 = vunpack.c.l.b16 %v2657
      %v2915 = vunpack.c.h.b16 %v2657
      %v2916 = vunpack.c.l.b16 %v2658
      %v2917 = vunpack.c.h.b16 %v2658
      %v2918 = vunpack.c.l.b16 %v2659
      %v2919 = vunpack.c.h.b16 %v2659
      %v2920 = vunpack.c.l.b16 %v2660
      %v2921 = vunpack.c.h.b16 %v2660
      %v2922 = vunpack.c.l.b16 %v2661
      %v2923 = vunpack.c.h.b16 %v2661
      %v2924 = vunpack.c.l.b16 %v2662
      %v2925 = vunpack.c.h.b16 %v2662
      %v2926 = vunpack.c.l.b16 %v2663
      %v2927 = vunpack.c.h.b16 %v2663
      %v2928 = vunpack.c.l.b16 %v2664
      %v2929 = vunpack.c.h.b16 %v2664
      %v2930 = vunpack.c.l.b16 %v2665
      %v2931 = vunpack.c.h.b16 %v2665
      %v2932 = vunpack.c.l.b16 %v2666
      %v2933 = vunpack.c.h.b16 %v2666
      %v2934 = vunpack.c.l.b16 %v2667
      %v2935 = vunpack.c.h.b16 %v2667
      %v2936 = vunpack.c.l.b16 %v2668
      %v2937 = vunpack.c.h.b16 %v2668
      %v2938 = vunpack.c.l.b16 %v2669
      %v2939 = vunpack.c.h.b16 %v2669
      %v2940 = vunpack.c.l.b16 %v2670
      %v2941 = vunpack.c.h.b16 %v2670
      %v2942 = vunpack.c.l.b16 %v2671
      %v2943 = vunpack.c.h.b16 %v2671
      %v2944 = vunpack.c.l.b16 %v2672
      %v2945 = vunpack.c.h.b16 %v2672
      %v2946 = vunpack.c.l.b16 %v2673
      %v2947 = vunpack.c.h.b16 %v2673
      %v2948 = vunpack.c.l.b16 %v2674
      %v2949 = vunpack.c.h.b16 %v2674
      %v2950 = vunpack.c.l.b16 %v2675
      %v2951 = vunpack.c.h.b16 %v2675
      %v2952 = vunpack.c.l.b16 %v2676
      %v2953 = vunpack.c.h.b16 %v2676
      %v2954 = vunpack.c.l.b16 %v2677
      %v2955 = vunpack.c.h.b16 %v2677
      %v2956 = vunpack.c.l.b16 %v2678
      %v2957 = vunpack.c.h.b16 %v2678
      %v2958 = vunpack.c.l.b16 %v2679
      %v2959 = vunpack.c.h.b16 %v2679
      %v2960 = vunpack.c.l.b16 %v2680
      %v2961 = vunpack.c.h.b16 %v2680
      %v2962 = vunpack.c.l.b16 %v2681
      %v2963 = vunpack.c.h.b16 %v2681
      %v2964 = vunpack.c.l.b16 %v2682
      %v2965 = vunpack.c.h.b16 %v2682
      %v2966 = vunpack.c.l.b16 %v2683
      %v2967 = vunpack.c.h.b16 %v2683
      %v2968 = vunpack.c.l.b16 %v2684
      %v2969 = vunpack.c.h.b16 %v2684
      %v2970 = vunpack.c.l.b16 %v2685
      %v2971 = vunpack.c.h.b16 %v2685
      %v2972 = vunpack.c.l.b16 %v2686
      %v2973 = vunpack.c.h.b16 %v2686
      %v2974 = vunpack.c.l.b16 %v2687
      %v2975 = vunpack.c.h.b16 %v2687
      %v2976 = vpack.c.b16 %v2914, %v2912
      %v2977 = vpack.c.b16 %v2915, %v2913
      %v2978 = vpack.c.b16 %v2918, %v2916
      %v2979 = vpack.c.b16 %v2919, %v2917
      %v2980 = vpack.c.b16 %v2922, %v2920
      %v2981 = vpack.c.b16 %v2923, %v2921
      %v2982 = vpack.c.b16 %v2926, %v2924
      %v2983 = vpack.c.b16 %v2927, %v2925
      %v2984 = vpack.c.b16 %v2930, %v2928
      %v2985 = vpack.c.b16 %v2931, %v2929
      %v2986 = vpack.c.b16 %v2934, %v2932
      %v2987 = vpack.c.b16 %v2935, %v2933
      %v2988 = vpack.c.b16 %v2938, %v2936
      %v2989 = vpack.c.b16 %v2939, %v2937
      %v2990 = vpack.c.b16 %v2942, %v2940
      %v2991 = vpack.c.b16 %v2943, %v2941
      %v2992 = vpack.c.b16 %v2946, %v2944
      %v2993 = vpack.c.b16 %v2947, %v2945
      %v2994 = vpack.c.b16 %v2950, %v2948
      %v2995 = vpack.c.b16 %v2951, %v2949
      %v2996 = vpack.c.b16 %v2954, %v2952
      %v2997 = vpack.c.b16 %v2955, %v2953
      %v2998 = vpack.c.b16 %v2958, %v2956
      %v2999 = vpack.c.b16 %v2959, %v2957
      %v3000 = vpack.c.b16 %v2962, %v2960
      %v3001 = vpack.c.b16 %v2963, %v2961
      %v3002 = vpack.c.b16 %v2966, %v2964
      %v3003 = vpack.c.b16 %v2967, %v2965
      %v3004 = vpack.c.b16 %v2970, %v2968
      %v3005 = vpack.c.b16 %v2971, %v2969
      %v3006 = vpack.c.b16 %v2974, %v2972
      %v3007 = vpack.c.b16 %v2975, %v2973
      %3040 = vmatprep.subr.bf16.mxu0 %v2621
      %3041 = vmatpush1.bf16.msra.mxu0 %v2620
      %3042 = vmatprep.subr.bf16.mxu0 %v2617
      %3043 = vmatpush1.bf16.msra.mxu0 %v2616
      %3044 = vmatprep.subr.bf16.mxu0 %v2613
      %3045 = vmatpush1.bf16.msra.mxu0 %v2612
      %3046 = vmatprep.subr.bf16.mxu0 %v2609
      %3047 = vmatpush1.bf16.msra.mxu0 %v2608
      %3048 = vmatprep.subr.bf16.mxu0 %v2605
      %3049 = vmatpush1.bf16.msra.mxu0 %v2604
      %3050 = vmatprep.subr.bf16.mxu0 %v2601
      %3051 = vmatpush1.bf16.msra.mxu0 %v2600
      %3052 = vmatprep.subr.bf16.mxu0 %v2597
      %3053 = vmatpush1.bf16.msra.mxu0 %v2596
      %3054 = vmatprep.subr.bf16.mxu0 %v2593
      %3055 = vmatpush1.bf16.msra.mxu0 %v2592
      %3056 = vmatprep.subr.bf16.mxu0 %v2653
      %3057 = vmatpush2.bf16.msra.mxu0 %v2652
      %3058 = vmatprep.subr.bf16.mxu0 %v2649
      %3059 = vmatpush2.bf16.msra.mxu0 %v2648
      %3060 = vmatprep.subr.bf16.mxu0 %v2645
      %3061 = vmatpush2.bf16.msra.mxu0 %v2644
      %3062 = vmatprep.subr.bf16.mxu0 %v2641
      %3063 = vmatpush2.bf16.msra.mxu0 %v2640
      %3064 = vmatprep.subr.bf16.mxu0 %v2637
      %3065 = vmatpush2.bf16.msra.mxu0 %v2636
      %3066 = vmatprep.subr.bf16.mxu0 %v2633
      %3067 = vmatpush2.bf16.msra.mxu0 %v2632
      %3068 = vmatprep.subr.bf16.mxu0 %v2629
      %3069 = vmatpush2.bf16.msra.mxu0 %v2628
      %3070 = vmatprep.subr.bf16.mxu0 %v2625
      %3071 = vmatpush2.bf16.msra.mxu0 %v2624
      %3072 = vmatprep.mubr.bf16.mxu0 %v2977
      %3073 = vmatmul.mubr.bf16.gmra.mxu0 %v2976
      %v3074 = vpop.f32.mrf.mxu0
      %v3075 = vadd.f32 %v2723, %v3074
      %v3076 = vpop.f32.mrf.mxu0
      %v3077 = vadd.f32 %v2723, %v3076
      %v3078 = vpop.f32.mrf.mxu0
      %v3079 = vadd.f32 %v2728, %v3078
      %v3080 = vpop.f32.mrf.mxu0
      %v3081 = vadd.f32 %v2728, %v3080
      %3082 = vmatprep.mubr.bf16.mxu0 %v2979
      %3083 = vmatmul.mubr.bf16.gmra.mxu0 %v2978
      %v3084 = vpop.f32.mrf.mxu0
      %v3085 = vadd.f32 %v2733, %v3084
      %v3086 = vpop.f32.mrf.mxu0
      %v3087 = vadd.f32 %v2733, %v3086
      %v3088 = vpop.f32.mrf.mxu0
      %v3089 = vadd.f32 %v2738, %v3088
      %v3090 = vpop.f32.mrf.mxu0
      %v3091 = vadd.f32 %v2738, %v3090
      %3092 = vmatprep.mubr.bf16.mxu0 %v2981
      %3093 = vmatmul.mubr.bf16.gmra.mxu0 %v2980
      %v3094 = vpop.f32.mrf.mxu0
      %v3095 = vadd.f32 %v2743, %v3094
      %v3096 = vpop.f32.mrf.mxu0
      %v3097 = vadd.f32 %v2743, %v3096
      %v3098 = vpop.f32.mrf.mxu0
      %v3099 = vadd.f32 %v2748, %v3098
      %v3100 = vpop.f32.mrf.mxu0
      %v3101 = vadd.f32 %v2748, %v3100
      %3102 = vmatprep.mubr.bf16.mxu0 %v2983
      %3103 = vmatmul.mubr.bf16.gmra.mxu0 %v2982
      %v3104 = vpop.f32.mrf.mxu0
      %v3105 = vadd.f32 %v2753, %v3104
      %v3106 = vpop.f32.mrf.mxu0
      %v3107 = vadd.f32 %v2753, %v3106
      %v3108 = vpop.f32.mrf.mxu0
      %v3109 = vadd.f32 %v2758, %v3108
      %v3110 = vpop.f32.mrf.mxu0
      %v3111 = vadd.f32 %v2758, %v3110
      %3112 = vmatprep.mubr.bf16.mxu0 %v2985
      %3113 = vmatmul.mubr.bf16.gmra.mxu0 %v2984
      %v3114 = vpop.f32.mrf.mxu0
      %v3115 = vadd.f32 %v2763, %v3114
      %v3116 = vpop.f32.mrf.mxu0
      %v3117 = vadd.f32 %v2763, %v3116
      %v3118 = vpop.f32.mrf.mxu0
      %v3119 = vadd.f32 %v2768, %v3118
      %v3120 = vpop.f32.mrf.mxu0
      %v3121 = vadd.f32 %v2768, %v3120
      %3122 = vmatprep.mubr.bf16.mxu0 %v2987
      %3123 = vmatmul.mubr.bf16.gmra.mxu0 %v2986
      %v3124 = vpop.f32.mrf.mxu0
      %v3125 = vadd.f32 %v2773, %v3124
      %v3126 = vpop.f32.mrf.mxu0
      %v3127 = vadd.f32 %v2773, %v3126
      %v3128 = vpop.f32.mrf.mxu0
      %v3129 = vadd.f32 %v2778, %v3128
      %v3130 = vpop.f32.mrf.mxu0
      %v3131 = vadd.f32 %v2778, %v3130
      %3132 = vmatprep.mubr.bf16.mxu0 %v2989
      %3133 = vmatmul.mubr.bf16.gmra.mxu0 %v2988
      %v3134 = vpop.f32.mrf.mxu0
      %v3135 = vadd.f32 %v2783, %v3134
      %v3136 = vpop.f32.mrf.mxu0
      %v3137 = vadd.f32 %v2783, %v3136
      %v3138 = vpop.f32.mrf.mxu0
      %v3139 = vadd.f32 %v2788, %v3138
      %v3140 = vpop.f32.mrf.mxu0
      %v3141 = vadd.f32 %v2788, %v3140
      %3142 = vmatprep.mubr.bf16.mxu0 %v2991
      %3143 = vmatmul.mubr.bf16.gmra.mxu0 %v2990
      %v3144 = vpop.f32.mrf.mxu0
      %v3145 = vadd.f32 %v2793, %v3144
      %v3146 = vpop.f32.mrf.mxu0
      %v3147 = vadd.f32 %v2793, %v3146
      %v3148 = vpop.f32.mrf.mxu0
      %v3149 = vadd.f32 %v2798, %v3148
      %v3150 = vpop.f32.mrf.mxu0
      %v3151 = vadd.f32 %v2798, %v3150
      %3152 = vmatprep.mubr.bf16.mxu0 %v2993
      %3153 = vmatmul.mubr.bf16.gmra.mxu0 %v2992
      %v3154 = vpop.f32.mrf.mxu0
      %v3155 = vadd.f32 %v2803, %v3154
      %v3156 = vpop.f32.mrf.mxu0
      %v3157 = vadd.f32 %v2803, %v3156
      %v3158 = vpop.f32.mrf.mxu0
      %v3159 = vadd.f32 %v2808, %v3158
      %v3160 = vpop.f32.mrf.mxu0
      %v3161 = vadd.f32 %v2808, %v3160
      %3162 = vmatprep.mubr.bf16.mxu0 %v2995
      %3163 = vmatmul.mubr.bf16.gmra.mxu0 %v2994
      %v3164 = vpop.f32.mrf.mxu0
      %v3165 = vadd.f32 %v2813, %v3164
      %v3166 = vpop.f32.mrf.mxu0
      %v3167 = vadd.f32 %v2813, %v3166
      %v3168 = vpop.f32.mrf.mxu0
      %v3169 = vadd.f32 %v2818, %v3168
      %v3170 = vpop.f32.mrf.mxu0
      %v3171 = vadd.f32 %v2818, %v3170
      %3172 = vmatprep.mubr.bf16.mxu0 %v2997
      %3173 = vmatmul.mubr.bf16.gmra.mxu0 %v2996
      %v3174 = vpop.f32.mrf.mxu0
      %v3175 = vadd.f32 %v2823, %v3174
      %v3176 = vpop.f32.mrf.mxu0
      %v3177 = vadd.f32 %v2823, %v3176
      %v3178 = vpop.f32.mrf.mxu0
      %v3179 = vadd.f32 %v2828, %v3178
      %v3180 = vpop.f32.mrf.mxu0
      %v3181 = vadd.f32 %v2828, %v3180
      %3182 = vmatprep.mubr.bf16.mxu0 %v2999
      %3183 = vmatmul.mubr.bf16.gmra.mxu0 %v2998
      %v3184 = vpop.f32.mrf.mxu0
      %v3185 = vadd.f32 %v2833, %v3184
      %v3186 = vpop.f32.mrf.mxu0
      %v3187 = vadd.f32 %v2833, %v3186
      %v3188 = vpop.f32.mrf.mxu0
      %v3189 = vadd.f32 %v2838, %v3188
      %v3190 = vpop.f32.mrf.mxu0
      %v3191 = vadd.f32 %v2838, %v3190
      %3192 = vmatprep.mubr.bf16.mxu0 %v3001
      %3193 = vmatmul.mubr.bf16.gmra.mxu0 %v3000
      %v3194 = vpop.f32.mrf.mxu0
      %v3195 = vadd.f32 %v2843, %v3194
      %v3196 = vpop.f32.mrf.mxu0
      %v3197 = vadd.f32 %v2843, %v3196
      %v3198 = vpop.f32.mrf.mxu0
      %v3199 = vadd.f32 %v2848, %v3198
      %v3200 = vpop.f32.mrf.mxu0
      %v3201 = vadd.f32 %v2848, %v3200
      %3202 = vmatprep.mubr.bf16.mxu0 %v3003
      %3203 = vmatmul.mubr.bf16.gmra.mxu0 %v3002
      %v3204 = vpop.f32.mrf.mxu0
      %v3205 = vadd.f32 %v2853, %v3204
      %v3206 = vpop.f32.mrf.mxu0
      %v3207 = vadd.f32 %v2853, %v3206
      %v3208 = vpop.f32.mrf.mxu0
      %v3209 = vadd.f32 %v2858, %v3208
      %v3210 = vpop.f32.mrf.mxu0
      %v3211 = vadd.f32 %v2858, %v3210
      %3212 = vmatprep.mubr.bf16.mxu0 %v3005
      %3213 = vmatmul.mubr.bf16.gmra.mxu0 %v3004
      %v3214 = vpop.f32.mrf.mxu0
      %v3215 = vadd.f32 %v2863, %v3214
      %v3216 = vpop.f32.mrf.mxu0
      %v3217 = vadd.f32 %v2863, %v3216
      %v3218 = vpop.f32.mrf.mxu0
      %v3219 = vadd.f32 %v2868, %v3218
      %v3220 = vpop.f32.mrf.mxu0
      %v3221 = vadd.f32 %v2868, %v3220
      %3222 = vmatprep.mubr.bf16.mxu0 %v3007
      %3223 = vmatmul.mubr.bf16.gmra.mxu0 %v3006
      %v3224 = vpop.f32.mrf.mxu0
      %v3225 = vadd.f32 %v2873, %v3224
      %v3226 = vpop.f32.mrf.mxu0
      %v3227 = vadd.f32 %v2873, %v3226
      %v3228 = vpop.f32.mrf.mxu0
      %v3229 = vadd.f32 %v2878, %v3228
      %v3230 = vpop.f32.mrf.mxu0
      %v3231 = vadd.f32 %v2878, %v3230
      %3232 = vdwg.mxu0
      %3233 = vmatprep.subr.bf16.mxu0 %v2623
      %3234 = vmatpush1.bf16.msra.mxu0 %v2622
      %3235 = vmatprep.subr.bf16.mxu0 %v2619
      %3236 = vmatpush1.bf16.msra.mxu0 %v2618
      %3237 = vmatprep.subr.bf16.mxu0 %v2615
      %3238 = vmatpush1.bf16.msra.mxu0 %v2614
      %3239 = vmatprep.subr.bf16.mxu0 %v2611
      %3240 = vmatpush1.bf16.msra.mxu0 %v2610
      %3241 = vmatprep.subr.bf16.mxu0 %v2607
      %3242 = vmatpush1.bf16.msra.mxu0 %v2606
      %3243 = vmatprep.subr.bf16.mxu0 %v2603
      %3244 = vmatpush1.bf16.msra.mxu0 %v2602
      %3245 = vmatprep.subr.bf16.mxu0 %v2599
      %3246 = vmatpush1.bf16.msra.mxu0 %v2598
      %3247 = vmatprep.subr.bf16.mxu0 %v2595
      %3248 = vmatpush1.bf16.msra.mxu0 %v2594
      %3249 = vmatprep.subr.bf16.mxu0 %v2655
      %3250 = vmatpush2.bf16.msra.mxu0 %v2654
      %3251 = vmatprep.subr.bf16.mxu0 %v2651
      %3252 = vmatpush2.bf16.msra.mxu0 %v2650
      %3253 = vmatprep.subr.bf16.mxu0 %v2647
      %3254 = vmatpush2.bf16.msra.mxu0 %v2646
      %3255 = vmatprep.subr.bf16.mxu0 %v2643
      %3256 = vmatpush2.bf16.msra.mxu0 %v2642
      %3257 = vmatprep.subr.bf16.mxu0 %v2639
      %3258 = vmatpush2.bf16.msra.mxu0 %v2638
      %3259 = vmatprep.subr.bf16.mxu0 %v2635
      %3260 = vmatpush2.bf16.msra.mxu0 %v2634
      %3261 = vmatprep.subr.bf16.mxu0 %v2631
      %3262 = vmatpush2.bf16.msra.mxu0 %v2630
      %3263 = vmatprep.subr.bf16.mxu0 %v2627
      %3264 = vmatpush2.bf16.msra.mxu0 %v2626
      %3265 = vmatprep.mubr.bf16.mxu0 %v2977
      %3266 = vmatmul.mubr.bf16.gmra.mxu0 %v2976
      %v3267 = vpop.f32.mrf.mxu0
      %v3268 = vadd.f32 %v2723, %v3267
      %v3269 = vpop.f32.mrf.mxu0
      %v3270 = vadd.f32 %v2723, %v3269
      %v3271 = vpop.f32.mrf.mxu0
      %v3272 = vadd.f32 %v2728, %v3271
      %v3273 = vpop.f32.mrf.mxu0
      %v3274 = vadd.f32 %v2728, %v3273
      %3275 = vmatprep.mubr.bf16.mxu0 %v2979
      %3276 = vmatmul.mubr.bf16.gmra.mxu0 %v2978
      %v3277 = vpop.f32.mrf.mxu0
      %v3278 = vadd.f32 %v2733, %v3277
      %v3279 = vpop.f32.mrf.mxu0
      %v3280 = vadd.f32 %v2733, %v3279
      %v3281 = vpop.f32.mrf.mxu0
      %v3282 = vadd.f32 %v2738, %v3281
      %v3283 = vpop.f32.mrf.mxu0
      %v3284 = vadd.f32 %v2738, %v3283
      %3285 = vmatprep.mubr.bf16.mxu0 %v2981
      %3286 = vmatmul.mubr.bf16.gmra.mxu0 %v2980
      %v3287 = vpop.f32.mrf.mxu0
      %v3288 = vadd.f32 %v2743, %v3287
      %v3289 = vpop.f32.mrf.mxu0
      %v3290 = vadd.f32 %v2743, %v3289
      %v3291 = vpop.f32.mrf.mxu0
      %v3292 = vadd.f32 %v2748, %v3291
      %v3293 = vpop.f32.mrf.mxu0
      %v3294 = vadd.f32 %v2748, %v3293
      %3295 = vmatprep.mubr.bf16.mxu0 %v2983
      %3296 = vmatmul.mubr.bf16.gmra.mxu0 %v2982
      %v3297 = vpop.f32.mrf.mxu0
      %v3298 = vadd.f32 %v2753, %v3297
      %v3299 = vpop.f32.mrf.mxu0
      %v3300 = vadd.f32 %v2753, %v3299
      %v3301 = vpop.f32.mrf.mxu0
      %v3302 = vadd.f32 %v2758, %v3301
      %v3303 = vpop.f32.mrf.mxu0
      %v3304 = vadd.f32 %v2758, %v3303
      %3305 = vmatprep.mubr.bf16.mxu0 %v2985
      %3306 = vmatmul.mubr.bf16.gmra.mxu0 %v2984
      %v3307 = vpop.f32.mrf.mxu0
      %v3308 = vadd.f32 %v2763, %v3307
      %v3309 = vpop.f32.mrf.mxu0
      %v3310 = vadd.f32 %v2763, %v3309
      %v3311 = vpop.f32.mrf.mxu0
      %v3312 = vadd.f32 %v2768, %v3311
      %v3313 = vpop.f32.mrf.mxu0
      %v3314 = vadd.f32 %v2768, %v3313
      %3315 = vmatprep.mubr.bf16.mxu0 %v2987
      %3316 = vmatmul.mubr.bf16.gmra.mxu0 %v2986
      %v3317 = vpop.f32.mrf.mxu0
      %v3318 = vadd.f32 %v2773, %v3317
      %v3319 = vpop.f32.mrf.mxu0
      %v3320 = vadd.f32 %v2773, %v3319
      %v3321 = vpop.f32.mrf.mxu0
      %v3322 = vadd.f32 %v2778, %v3321
      %v3323 = vpop.f32.mrf.mxu0
      %v3324 = vadd.f32 %v2778, %v3323
      %3325 = vmatprep.mubr.bf16.mxu0 %v2989
      %3326 = vmatmul.mubr.bf16.gmra.mxu0 %v2988
      %v3327 = vpop.f32.mrf.mxu0
      %v3328 = vadd.f32 %v2783, %v3327
      %v3329 = vpop.f32.mrf.mxu0
      %v3330 = vadd.f32 %v2783, %v3329
      %v3331 = vpop.f32.mrf.mxu0
      %v3332 = vadd.f32 %v2788, %v3331
      %v3333 = vpop.f32.mrf.mxu0
      %v3334 = vadd.f32 %v2788, %v3333
      %3335 = vmatprep.mubr.bf16.mxu0 %v2991
      %3336 = vmatmul.mubr.bf16.gmra.mxu0 %v2990
      %v3337 = vpop.f32.mrf.mxu0
      %v3338 = vadd.f32 %v2793, %v3337
      %v3339 = vpop.f32.mrf.mxu0
      %v3340 = vadd.f32 %v2793, %v3339
      %v3341 = vpop.f32.mrf.mxu0
      %v3342 = vadd.f32 %v2798, %v3341
      %v3343 = vpop.f32.mrf.mxu0
      %v3344 = vadd.f32 %v2798, %v3343
      %3345 = vmatprep.mubr.bf16.mxu0 %v2993
      %3346 = vmatmul.mubr.bf16.gmra.mxu0 %v2992
      %v3347 = vpop.f32.mrf.mxu0
      %v3348 = vadd.f32 %v2803, %v3347
      %v3349 = vpop.f32.mrf.mxu0
      %v3350 = vadd.f32 %v2803, %v3349
      %v3351 = vpop.f32.mrf.mxu0
      %v3352 = vadd.f32 %v2808, %v3351
      %v3353 = vpop.f32.mrf.mxu0
      %v3354 = vadd.f32 %v2808, %v3353
      %3355 = vmatprep.mubr.bf16.mxu0 %v2995
      %3356 = vmatmul.mubr.bf16.gmra.mxu0 %v2994
      %v3357 = vpop.f32.mrf.mxu0
      %v3358 = vadd.f32 %v2813, %v3357
      %v3359 = vpop.f32.mrf.mxu0
      %v3360 = vadd.f32 %v2813, %v3359
      %v3361 = vpop.f32.mrf.mxu0
      %v3362 = vadd.f32 %v2818, %v3361
      %v3363 = vpop.f32.mrf.mxu0
      %v3364 = vadd.f32 %v2818, %v3363
      %3365 = vmatprep.mubr.bf16.mxu0 %v2997
      %3366 = vmatmul.mubr.bf16.gmra.mxu0 %v2996
      %v3367 = vpop.f32.mrf.mxu0
      %v3368 = vadd.f32 %v2823, %v3367
      %v3369 = vpop.f32.mrf.mxu0
      %v3370 = vadd.f32 %v2823, %v3369
      %v3371 = vpop.f32.mrf.mxu0
      %v3372 = vadd.f32 %v2828, %v3371
      %v3373 = vpop.f32.mrf.mxu0
      %v3374 = vadd.f32 %v2828, %v3373
      %3375 = vmatprep.mubr.bf16.mxu0 %v2999
      %3376 = vmatmul.mubr.bf16.gmra.mxu0 %v2998
      %v3377 = vpop.f32.mrf.mxu0
      %v3378 = vadd.f32 %v2833, %v3377
      %v3379 = vpop.f32.mrf.mxu0
      %v3380 = vadd.f32 %v2833, %v3379
      %v3381 = vpop.f32.mrf.mxu0
      %v3382 = vadd.f32 %v2838, %v3381
      %v3383 = vpop.f32.mrf.mxu0
      %v3384 = vadd.f32 %v2838, %v3383
      %3385 = vmatprep.mubr.bf16.mxu0 %v3001
      %3386 = vmatmul.mubr.bf16.gmra.mxu0 %v3000
      %v3387 = vpop.f32.mrf.mxu0
      %v3388 = vadd.f32 %v2843, %v3387
      %v3389 = vpop.f32.mrf.mxu0
      %v3390 = vadd.f32 %v2843, %v3389
      %v3391 = vpop.f32.mrf.mxu0
      %v3392 = vadd.f32 %v2848, %v3391
      %v3393 = vpop.f32.mrf.mxu0
      %v3394 = vadd.f32 %v2848, %v3393
      %3395 = vmatprep.mubr.bf16.mxu0 %v3003
      %3396 = vmatmul.mubr.bf16.gmra.mxu0 %v3002
      %v3397 = vpop.f32.mrf.mxu0
      %v3398 = vadd.f32 %v2853, %v3397
      %v3399 = vpop.f32.mrf.mxu0
      %v3400 = vadd.f32 %v2853, %v3399
      %v3401 = vpop.f32.mrf.mxu0
      %v3402 = vadd.f32 %v2858, %v3401
      %v3403 = vpop.f32.mrf.mxu0
      %v3404 = vadd.f32 %v2858, %v3403
      %3405 = vmatprep.mubr.bf16.mxu0 %v3005
      %3406 = vmatmul.mubr.bf16.gmra.mxu0 %v3004
      %v3407 = vpop.f32.mrf.mxu0
      %v3408 = vadd.f32 %v2863, %v3407
      %v3409 = vpop.f32.mrf.mxu0
      %v3410 = vadd.f32 %v2863, %v3409
      %v3411 = vpop.f32.mrf.mxu0
      %v3412 = vadd.f32 %v2868, %v3411
      %v3413 = vpop.f32.mrf.mxu0
      %v3414 = vadd.f32 %v2868, %v3413
      %3415 = vmatprep.mubr.bf16.mxu0 %v3007
      %3416 = vmatmul.mubr.bf16.gmra.mxu0 %v3006
      %v3417 = vpop.f32.mrf.mxu0
      %v3418 = vadd.f32 %v2873, %v3417
      %v3419 = vpop.f32.mrf.mxu0
      %v3420 = vadd.f32 %v2873, %v3419
      %v3421 = vpop.f32.mrf.mxu0
      %v3422 = vadd.f32 %v2878, %v3421
      %v3423 = vpop.f32.mrf.mxu0
      %v3424 = vadd.f32 %v2878, %v3423
      %3425 = vdwg.mxu0
      %v3426 = vmax.f32 %v3075, 0.0
      %v3427 = vmax.f32 %v3077, 0.0
      %v3428 = vmax.f32 %v3268, 0.0
      %v3429 = vmax.f32 %v3270, 0.0
      %v3430 = vmax.f32 %v3079, 0.0
      %v3431 = vmax.f32 %v3081, 0.0
      %v3432 = vmax.f32 %v3272, 0.0
      %v3433 = vmax.f32 %v3274, 0.0
      %v3434 = vmax.f32 %v3085, 0.0
      %v3435 = vmax.f32 %v3087, 0.0
      %v3436 = vmax.f32 %v3278, 0.0
      %v3437 = vmax.f32 %v3280, 0.0
      %v3438 = vmax.f32 %v3089, 0.0
      %v3439 = vmax.f32 %v3091, 0.0
      %v3440 = vmax.f32 %v3282, 0.0
      %v3441 = vmax.f32 %v3284, 0.0
      %v3442 = vmax.f32 %v3095, 0.0
      %v3443 = vmax.f32 %v3097, 0.0
      %v3444 = vmax.f32 %v3288, 0.0
      %v3445 = vmax.f32 %v3290, 0.0
      %v3446 = vmax.f32 %v3099, 0.0
      %v3447 = vmax.f32 %v3101, 0.0
      %v3448 = vmax.f32 %v3292, 0.0
      %v3449 = vmax.f32 %v3294, 0.0
      %v3450 = vmax.f32 %v3105, 0.0
      %v3451 = vmax.f32 %v3107, 0.0
      %v3452 = vmax.f32 %v3298, 0.0
      %v3453 = vmax.f32 %v3300, 0.0
      %v3454 = vmax.f32 %v3109, 0.0
      %v3455 = vmax.f32 %v3111, 0.0
      %v3456 = vmax.f32 %v3302, 0.0
      %v3457 = vmax.f32 %v3304, 0.0
      %v3458 = vmax.f32 %v3115, 0.0
      %v3459 = vmax.f32 %v3117, 0.0
      %v3460 = vmax.f32 %v3308, 0.0
      %v3461 = vmax.f32 %v3310, 0.0
      %v3462 = vmax.f32 %v3119, 0.0
      %v3463 = vmax.f32 %v3121, 0.0
      %v3464 = vmax.f32 %v3312, 0.0
      %v3465 = vmax.f32 %v3314, 0.0
      %v3466 = vmax.f32 %v3125, 0.0
      %v3467 = vmax.f32 %v3127, 0.0
      %v3468 = vmax.f32 %v3318, 0.0
      %v3469 = vmax.f32 %v3320, 0.0
      %v3470 = vmax.f32 %v3129, 0.0
      %v3471 = vmax.f32 %v3131, 0.0
      %v3472 = vmax.f32 %v3322, 0.0
      %v3473 = vmax.f32 %v3324, 0.0
      %v3474 = vmax.f32 %v3135, 0.0
      %v3475 = vmax.f32 %v3137, 0.0
      %v3476 = vmax.f32 %v3328, 0.0
      %v3477 = vmax.f32 %v3330, 0.0
      %v3478 = vmax.f32 %v3139, 0.0
      %v3479 = vmax.f32 %v3141, 0.0
      %v3480 = vmax.f32 %v3332, 0.0
      %v3481 = vmax.f32 %v3334, 0.0
      %v3482 = vmax.f32 %v3145, 0.0
      %v3483 = vmax.f32 %v3147, 0.0
      %v3484 = vmax.f32 %v3338, 0.0
      %v3485 = vmax.f32 %v3340, 0.0
      %v3486 = vmax.f32 %v3149, 0.0
      %v3487 = vmax.f32 %v3151, 0.0
      %v3488 = vmax.f32 %v3342, 0.0
      %v3489 = vmax.f32 %v3344, 0.0
      %v3490 = vmax.f32 %v3155, 0.0
      %v3491 = vmax.f32 %v3157, 0.0
      %v3492 = vmax.f32 %v3348, 0.0
      %v3493 = vmax.f32 %v3350, 0.0
      %v3494 = vmax.f32 %v3159, 0.0
      %v3495 = vmax.f32 %v3161, 0.0
      %v3496 = vmax.f32 %v3352, 0.0
      %v3497 = vmax.f32 %v3354, 0.0
      %v3498 = vmax.f32 %v3165, 0.0
      %v3499 = vmax.f32 %v3167, 0.0
      %v3500 = vmax.f32 %v3358, 0.0
      %v3501 = vmax.f32 %v3360, 0.0
      %v3502 = vmax.f32 %v3169, 0.0
      %v3503 = vmax.f32 %v3171, 0.0
      %v3504 = vmax.f32 %v3362, 0.0
      %v3505 = vmax.f32 %v3364, 0.0
      %v3506 = vmax.f32 %v3175, 0.0
      %v3507 = vmax.f32 %v3177, 0.0
      %v3508 = vmax.f32 %v3368, 0.0
      %v3509 = vmax.f32 %v3370, 0.0
      %v3510 = vmax.f32 %v3179, 0.0
      %v3511 = vmax.f32 %v3181, 0.0
      %v3512 = vmax.f32 %v3372, 0.0
      %v3513 = vmax.f32 %v3374, 0.0
      %v3514 = vmax.f32 %v3185, 0.0
      %v3515 = vmax.f32 %v3187, 0.0
      %v3516 = vmax.f32 %v3378, 0.0
      %v3517 = vmax.f32 %v3380, 0.0
      %v3518 = vmax.f32 %v3189, 0.0
      %v3519 = vmax.f32 %v3191, 0.0
      %v3520 = vmax.f32 %v3382, 0.0
      %v3521 = vmax.f32 %v3384, 0.0
      %v3522 = vmax.f32 %v3195, 0.0
      %v3523 = vmax.f32 %v3197, 0.0
      %v3524 = vmax.f32 %v3388, 0.0
      %v3525 = vmax.f32 %v3390, 0.0
      %v3526 = vmax.f32 %v3199, 0.0
      %v3527 = vmax.f32 %v3201, 0.0
      %v3528 = vmax.f32 %v3392, 0.0
      %v3529 = vmax.f32 %v3394, 0.0
      %v3530 = vmax.f32 %v3205, 0.0
      %v3531 = vmax.f32 %v3207, 0.0
      %v3532 = vmax.f32 %v3398, 0.0
      %v3533 = vmax.f32 %v3400, 0.0
      %v3534 = vmax.f32 %v3209, 0.0
      %v3535 = vmax.f32 %v3211, 0.0
      %v3536 = vmax.f32 %v3402, 0.0
      %v3537 = vmax.f32 %v3404, 0.0
      %v3538 = vmax.f32 %v3215, 0.0
      %v3539 = vmax.f32 %v3217, 0.0
      %v3540 = vmax.f32 %v3408, 0.0
      %v3541 = vmax.f32 %v3410, 0.0
      %v3542 = vmax.f32 %v3219, 0.0
      %v3543 = vmax.f32 %v3221, 0.0
      %v3544 = vmax.f32 %v3412, 0.0
      %v3545 = vmax.f32 %v3414, 0.0
      %v3546 = vmax.f32 %v3225, 0.0
      %v3547 = vmax.f32 %v3227, 0.0
      %v3548 = vmax.f32 %v3418, 0.0
      %v3549 = vmax.f32 %v3420, 0.0
      %v3550 = vmax.f32 %v3229, 0.0
      %v3551 = vmax.f32 %v3231, 0.0
      %v3552 = vmax.f32 %v3422, 0.0
      %v3553 = vmax.f32 %v3424, 0.0
      %v3554 = vpack.c.bf16 %v3430, %v3426
      %v3555 = vpack.c.bf16 %v3431, %v3427
      %v3556 = vpack.c.bf16 %v3432, %v3428
      %v3557 = vpack.c.bf16 %v3433, %v3429
      %v3558 = vpack.c.bf16 %v3438, %v3434
      %v3559 = vpack.c.bf16 %v3439, %v3435
      %v3560 = vpack.c.bf16 %v3440, %v3436
      %v3561 = vpack.c.bf16 %v3441, %v3437
      %v3562 = vpack.c.bf16 %v3446, %v3442
      %v3563 = vpack.c.bf16 %v3447, %v3443
      %v3564 = vpack.c.bf16 %v3448, %v3444
      %v3565 = vpack.c.bf16 %v3449, %v3445
      %v3566 = vpack.c.bf16 %v3454, %v3450
      %v3567 = vpack.c.bf16 %v3455, %v3451
      %v3568 = vpack.c.bf16 %v3456, %v3452
      %v3569 = vpack.c.bf16 %v3457, %v3453
      %v3570 = vpack.c.bf16 %v3462, %v3458
      %v3571 = vpack.c.bf16 %v3463, %v3459
      %v3572 = vpack.c.bf16 %v3464, %v3460
      %v3573 = vpack.c.bf16 %v3465, %v3461
      %v3574 = vpack.c.bf16 %v3470, %v3466
      %v3575 = vpack.c.bf16 %v3471, %v3467
      %v3576 = vpack.c.bf16 %v3472, %v3468
      %v3577 = vpack.c.bf16 %v3473, %v3469
      %v3578 = vpack.c.bf16 %v3478, %v3474
      %v3579 = vpack.c.bf16 %v3479, %v3475
      %v3580 = vpack.c.bf16 %v3480, %v3476
      %v3581 = vpack.c.bf16 %v3481, %v3477
      %v3582 = vpack.c.bf16 %v3486, %v3482
      %v3583 = vpack.c.bf16 %v3487, %v3483
      %v3584 = vpack.c.bf16 %v3488, %v3484
      %v3585 = vpack.c.bf16 %v3489, %v3485
      %v3586 = vpack.c.bf16 %v3494, %v3490
      %v3587 = vpack.c.bf16 %v3495, %v3491
      %v3588 = vpack.c.bf16 %v3496, %v3492
      %v3589 = vpack.c.bf16 %v3497, %v3493
      %v3590 = vpack.c.bf16 %v3502, %v3498
      %v3591 = vpack.c.bf16 %v3503, %v3499
      %v3592 = vpack.c.bf16 %v3504, %v3500
      %v3593 = vpack.c.bf16 %v3505, %v3501
      %v3594 = vpack.c.bf16 %v3510, %v3506
      %v3595 = vpack.c.bf16 %v3511, %v3507
      %v3596 = vpack.c.bf16 %v3512, %v3508
      %v3597 = vpack.c.bf16 %v3513, %v3509
      %v3598 = vpack.c.bf16 %v3518, %v3514
      %v3599 = vpack.c.bf16 %v3519, %v3515
      %v3600 = vpack.c.bf16 %v3520, %v3516
      %v3601 = vpack.c.bf16 %v3521, %v3517
      %v3602 = vpack.c.bf16 %v3526, %v3522
      %v3603 = vpack.c.bf16 %v3527, %v3523
      %v3604 = vpack.c.bf16 %v3528, %v3524
      %v3605 = vpack.c.bf16 %v3529, %v3525
      %v3606 = vpack.c.bf16 %v3534, %v3530
      %v3607 = vpack.c.bf16 %v3535, %v3531
      %v3608 = vpack.c.bf16 %v3536, %v3532
      %v3609 = vpack.c.bf16 %v3537, %v3533
      %v3610 = vpack.c.bf16 %v3542, %v3538
      %v3611 = vpack.c.bf16 %v3543, %v3539
      %v3612 = vpack.c.bf16 %v3544, %v3540
      %v3613 = vpack.c.bf16 %v3545, %v3541
      %v3614 = vpack.c.bf16 %v3550, %v3546
      %v3615 = vpack.c.bf16 %v3551, %v3547
      %v3616 = vpack.c.bf16 %v3552, %v3548
      %v3617 = vpack.c.bf16 %v3553, %v3549
      %v3618 = vld [vmem:[%s7] sm:$0xff]
      %v3619 = vld [vmem:[%s7 + $0x8] sm:$0xff]
      %v3620 = vld [vmem:[%s7 + $0x10] sm:$0xff]
      %v3621 = vld [vmem:[%s7 + $0x18] sm:$0xff]
      %v3622 = vld [vmem:[%s7 + $0x20] sm:$0xff]
      %v3623 = vld [vmem:[%s7 + $0x28] sm:$0xff]
      %v3624 = vld [vmem:[%s7 + $0x30] sm:$0xff]
      %v3625 = vld [vmem:[%s7 + $0x38] sm:$0xff]
      %v3626 = vld [vmem:[%s7 + $0x40] sm:$0xff]
      %v3627 = vld [vmem:[%s7 + $0x48] sm:$0xff]
      %v3628 = vld [vmem:[%s7 + $0x50] sm:$0xff]
      %v3629 = vld [vmem:[%s7 + $0x58] sm:$0xff]
      %v3630 = vld [vmem:[%s7 + $0x60] sm:$0xff]
      %v3631 = vld [vmem:[%s7 + $0x68] sm:$0xff]
      %v3632 = vld [vmem:[%s7 + $0x70] sm:$0xff]
      %v3633 = vld [vmem:[%s7 + $0x78] sm:$0xff]
      %v3634 = vld [vmem:[%s7 + $0x80] sm:$0xff]
      %v3635 = vld [vmem:[%s7 + $0x88] sm:$0xff]
      %v3636 = vld [vmem:[%s7 + $0x90] sm:$0xff]
      %v3637 = vld [vmem:[%s7 + $0x98] sm:$0xff]
      %v3638 = vld [vmem:[%s7 + $0xa0] sm:$0xff]
      %v3639 = vld [vmem:[%s7 + $0xa8] sm:$0xff]
      %v3640 = vld [vmem:[%s7 + $0xb0] sm:$0xff]
      %v3641 = vld [vmem:[%s7 + $0xb8] sm:$0xff]
      %v3642 = vld [vmem:[%s7 + $0xc0] sm:$0xff]
      %v3643 = vld [vmem:[%s7 + $0xc8] sm:$0xff]
      %v3644 = vld [vmem:[%s7 + $0xd0] sm:$0xff]
      %v3645 = vld [vmem:[%s7 + $0xd8] sm:$0xff]
      %v3646 = vld [vmem:[%s7 + $0xe0] sm:$0xff]
      %v3647 = vld [vmem:[%s7 + $0xe8] sm:$0xff]
      %v3648 = vld [vmem:[%s7 + $0xf0] sm:$0xff]
      %v3649 = vld [vmem:[%s7 + $0xf8] sm:$0xff]
      %v3650 = vld [vmem:[%s8] sm:$0xff]
      %v3651 = vld [vmem:[%s8 + $0x8] sm:$0xff]
      %v3652 = vld [vmem:[%s8 + $0x10] sm:$0xff]
      %v3653 = vld [vmem:[%s8 + $0x18] sm:$0xff]
      %v3654 = vld [vmem:[%s8 + $0x20] sm:$0xff]
      %v3655 = vld [vmem:[%s8 + $0x28] sm:$0xff]
      %v3656 = vld [vmem:[%s8 + $0x30] sm:$0xff]
      %v3657 = vld [vmem:[%s8 + $0x38] sm:$0xff]
      %v3658 = vld [vmem:[%s8 + $0x40] sm:$0xff]
      %v3659 = vld [vmem:[%s8 + $0x48] sm:$0xff]
      %v3660 = vld [vmem:[%s8 + $0x50] sm:$0xff]
      %v3661 = vld [vmem:[%s8 + $0x58] sm:$0xff]
      %v3662 = vld [vmem:[%s8 + $0x60] sm:$0xff]
      %v3663 = vld [vmem:[%s8 + $0x68] sm:$0xff]
      %v3664 = vld [vmem:[%s8 + $0x70] sm:$0xff]
      %v3665 = vld [vmem:[%s8 + $0x78] sm:$0xff]
      %v3666 = vld [vmem:[%s8 + $0x80] sm:$0xff]
      %v3667 = vld [vmem:[%s8 + $0x88] sm:$0xff]
      %v3668 = vld [vmem:[%s8 + $0x90] sm:$0xff]
      %v3669 = vld [vmem:[%s8 + $0x98] sm:$0xff]
      %v3670 = vld [vmem:[%s8 + $0xa0] sm:$0xff]
      %v3671 = vld [vmem:[%s8 + $0xa8] sm:$0xff]
      %v3672 = vld [vmem:[%s8 + $0xb0] sm:$0xff]
      %v3673 = vld [vmem:[%s8 + $0xb8] sm:$0xff]
      %v3674 = vld [vmem:[%s8 + $0xc0] sm:$0xff]
      %v3675 = vld [vmem:[%s8 + $0xc8] sm:$0xff]
      %v3676 = vld [vmem:[%s8 + $0xd0] sm:$0xff]
      %v3677 = vld [vmem:[%s8 + $0xd8] sm:$0xff]
      %v3678 = vld [vmem:[%s8 + $0xe0] sm:$0xff]
      %v3679 = vld [vmem:[%s8 + $0xe8] sm:$0xff]
      %v3680 = vld [vmem:[%s8 + $0xf0] sm:$0xff]
      %v3681 = vld [vmem:[%s8 + $0xf8] sm:$0xff]
      %3683 = vset.pattern.permute.xlu0 0
      %3684 = vperm.xlu0 %3683, %v3650
      %v3685 = vpop.permute.xlu0 %3684
      %3688 = vset.pattern.permute.xlu0 0
      %3689 = vperm.xlu0 %3688, %v3651
      %v3690 = vpop.permute.xlu0 %3689
      %3693 = vset.pattern.permute.xlu0 0
      %3694 = vperm.xlu0 %3693, %v3652
      %v3695 = vpop.permute.xlu0 %3694
      %3698 = vset.pattern.permute.xlu0 0
      %3699 = vperm.xlu0 %3698, %v3653
      %v3700 = vpop.permute.xlu0 %3699
      %3703 = vset.pattern.permute.xlu0 0
      %3704 = vperm.xlu0 %3703, %v3654
      %v3705 = vpop.permute.xlu0 %3704
      %3708 = vset.pattern.permute.xlu0 0
      %3709 = vperm.xlu0 %3708, %v3655
      %v3710 = vpop.permute.xlu0 %3709
      %3713 = vset.pattern.permute.xlu0 0
      %3714 = vperm.xlu0 %3713, %v3656
      %v3715 = vpop.permute.xlu0 %3714
      %3718 = vset.pattern.permute.xlu0 0
      %3719 = vperm.xlu0 %3718, %v3657
      %v3720 = vpop.permute.xlu0 %3719
      %3723 = vset.pattern.permute.xlu0 0
      %3724 = vperm.xlu0 %3723, %v3658
      %v3725 = vpop.permute.xlu0 %3724
      %3728 = vset.pattern.permute.xlu0 0
      %3729 = vperm.xlu0 %3728, %v3659
      %v3730 = vpop.permute.xlu0 %3729
      %3733 = vset.pattern.permute.xlu0 0
      %3734 = vperm.xlu0 %3733, %v3660
      %v3735 = vpop.permute.xlu0 %3734
      %3738 = vset.pattern.permute.xlu0 0
      %3739 = vperm.xlu0 %3738, %v3661
      %v3740 = vpop.permute.xlu0 %3739
      %3743 = vset.pattern.permute.xlu0 0
      %3744 = vperm.xlu0 %3743, %v3662
      %v3745 = vpop.permute.xlu0 %3744
      %3748 = vset.pattern.permute.xlu0 0
      %3749 = vperm.xlu0 %3748, %v3663
      %v3750 = vpop.permute.xlu0 %3749
      %3753 = vset.pattern.permute.xlu0 0
      %3754 = vperm.xlu0 %3753, %v3664
      %v3755 = vpop.permute.xlu0 %3754
      %3758 = vset.pattern.permute.xlu0 0
      %3759 = vperm.xlu0 %3758, %v3665
      %v3760 = vpop.permute.xlu0 %3759
      %3763 = vset.pattern.permute.xlu0 0
      %3764 = vperm.xlu0 %3763, %v3666
      %v3765 = vpop.permute.xlu0 %3764
      %3768 = vset.pattern.permute.xlu0 0
      %3769 = vperm.xlu0 %3768, %v3667
      %v3770 = vpop.permute.xlu0 %3769
      %3773 = vset.pattern.permute.xlu0 0
      %3774 = vperm.xlu0 %3773, %v3668
      %v3775 = vpop.permute.xlu0 %3774
      %3778 = vset.pattern.permute.xlu0 0
      %3779 = vperm.xlu0 %3778, %v3669
      %v3780 = vpop.permute.xlu0 %3779
      %3783 = vset.pattern.permute.xlu0 0
      %3784 = vperm.xlu0 %3783, %v3670
      %v3785 = vpop.permute.xlu0 %3784
      %3788 = vset.pattern.permute.xlu0 0
      %3789 = vperm.xlu0 %3788, %v3671
      %v3790 = vpop.permute.xlu0 %3789
      %3793 = vset.pattern.permute.xlu0 0
      %3794 = vperm.xlu0 %3793, %v3672
      %v3795 = vpop.permute.xlu0 %3794
      %3798 = vset.pattern.permute.xlu0 0
      %3799 = vperm.xlu0 %3798, %v3673
      %v3800 = vpop.permute.xlu0 %3799
      %3803 = vset.pattern.permute.xlu0 0
      %3804 = vperm.xlu0 %3803, %v3674
      %v3805 = vpop.permute.xlu0 %3804
      %3808 = vset.pattern.permute.xlu0 0
      %3809 = vperm.xlu0 %3808, %v3675
      %v3810 = vpop.permute.xlu0 %3809
      %3813 = vset.pattern.permute.xlu0 0
      %3814 = vperm.xlu0 %3813, %v3676
      %v3815 = vpop.permute.xlu0 %3814
      %3818 = vset.pattern.permute.xlu0 0
      %3819 = vperm.xlu0 %3818, %v3677
      %v3820 = vpop.permute.xlu0 %3819
      %3823 = vset.pattern.permute.xlu0 0
      %3824 = vperm.xlu0 %3823, %v3678
      %v3825 = vpop.permute.xlu0 %3824
      %3828 = vset.pattern.permute.xlu0 0
      %3829 = vperm.xlu0 %3828, %v3679
      %v3830 = vpop.permute.xlu0 %3829
      %3833 = vset.pattern.permute.xlu0 0
      %3834 = vperm.xlu0 %3833, %v3680
      %v3835 = vpop.permute.xlu0 %3834
      %3838 = vset.pattern.permute.xlu0 0
      %3839 = vperm.xlu0 %3838, %v3681
      %v3840 = vpop.permute.xlu0 %3839
      %v3874 = vunpack.c.l.b16 %v3618
      %v3875 = vunpack.c.h.b16 %v3618
      %v3876 = vunpack.c.l.b16 %v3619
      %v3877 = vunpack.c.h.b16 %v3619
      %v3878 = vunpack.c.l.b16 %v3620
      %v3879 = vunpack.c.h.b16 %v3620
      %v3880 = vunpack.c.l.b16 %v3621
      %v3881 = vunpack.c.h.b16 %v3621
      %v3882 = vunpack.c.l.b16 %v3622
      %v3883 = vunpack.c.h.b16 %v3622
      %v3884 = vunpack.c.l.b16 %v3623
      %v3885 = vunpack.c.h.b16 %v3623
      %v3886 = vunpack.c.l.b16 %v3624
      %v3887 = vunpack.c.h.b16 %v3624
      %v3888 = vunpack.c.l.b16 %v3625
      %v3889 = vunpack.c.h.b16 %v3625
      %v3890 = vunpack.c.l.b16 %v3626
      %v3891 = vunpack.c.h.b16 %v3626
      %v3892 = vunpack.c.l.b16 %v3627
      %v3893 = vunpack.c.h.b16 %v3627
      %v3894 = vunpack.c.l.b16 %v3628
      %v3895 = vunpack.c.h.b16 %v3628
      %v3896 = vunpack.c.l.b16 %v3629
      %v3897 = vunpack.c.h.b16 %v3629
      %v3898 = vunpack.c.l.b16 %v3630
      %v3899 = vunpack.c.h.b16 %v3630
      %v3900 = vunpack.c.l.b16 %v3631
      %v3901 = vunpack.c.h.b16 %v3631
      %v3902 = vunpack.c.l.b16 %v3632
      %v3903 = vunpack.c.h.b16 %v3632
      %v3904 = vunpack.c.l.b16 %v3633
      %v3905 = vunpack.c.h.b16 %v3633
      %v3906 = vunpack.c.l.b16 %v3634
      %v3907 = vunpack.c.h.b16 %v3634
      %v3908 = vunpack.c.l.b16 %v3635
      %v3909 = vunpack.c.h.b16 %v3635
      %v3910 = vunpack.c.l.b16 %v3636
      %v3911 = vunpack.c.h.b16 %v3636
      %v3912 = vunpack.c.l.b16 %v3637
      %v3913 = vunpack.c.h.b16 %v3637
      %v3914 = vunpack.c.l.b16 %v3638
      %v3915 = vunpack.c.h.b16 %v3638
      %v3916 = vunpack.c.l.b16 %v3639
      %v3917 = vunpack.c.h.b16 %v3639
      %v3918 = vunpack.c.l.b16 %v3640
      %v3919 = vunpack.c.h.b16 %v3640
      %v3920 = vunpack.c.l.b16 %v3641
      %v3921 = vunpack.c.h.b16 %v3641
      %v3922 = vunpack.c.l.b16 %v3642
      %v3923 = vunpack.c.h.b16 %v3642
      %v3924 = vunpack.c.l.b16 %v3643
      %v3925 = vunpack.c.h.b16 %v3643
      %v3926 = vunpack.c.l.b16 %v3644
      %v3927 = vunpack.c.h.b16 %v3644
      %v3928 = vunpack.c.l.b16 %v3645
      %v3929 = vunpack.c.h.b16 %v3645
      %v3930 = vunpack.c.l.b16 %v3646
      %v3931 = vunpack.c.h.b16 %v3646
      %v3932 = vunpack.c.l.b16 %v3647
      %v3933 = vunpack.c.h.b16 %v3647
      %v3934 = vunpack.c.l.b16 %v3648
      %v3935 = vunpack.c.h.b16 %v3648
      %v3936 = vunpack.c.l.b16 %v3649
      %v3937 = vunpack.c.h.b16 %v3649
      %v3938 = vpack.c.b16 %v3876, %v3874
      %v3939 = vpack.c.b16 %v3877, %v3875
      %v3940 = vpack.c.b16 %v3880, %v3878
      %v3941 = vpack.c.b16 %v3881, %v3879
      %v3942 = vpack.c.b16 %v3884, %v3882
      %v3943 = vpack.c.b16 %v3885, %v3883
      %v3944 = vpack.c.b16 %v3888, %v3886
      %v3945 = vpack.c.b16 %v3889, %v3887
      %v3946 = vpack.c.b16 %v3892, %v3890
      %v3947 = vpack.c.b16 %v3893, %v3891
      %v3948 = vpack.c.b16 %v3896, %v3894
      %v3949 = vpack.c.b16 %v3897, %v3895
      %v3950 = vpack.c.b16 %v3900, %v3898
      %v3951 = vpack.c.b16 %v3901, %v3899
      %v3952 = vpack.c.b16 %v3904, %v3902
      %v3953 = vpack.c.b16 %v3905, %v3903
      %v3954 = vpack.c.b16 %v3908, %v3906
      %v3955 = vpack.c.b16 %v3909, %v3907
      %v3956 = vpack.c.b16 %v3912, %v3910
      %v3957 = vpack.c.b16 %v3913, %v3911
      %v3958 = vpack.c.b16 %v3916, %v3914
      %v3959 = vpack.c.b16 %v3917, %v3915
      %v3960 = vpack.c.b16 %v3920, %v3918
      %v3961 = vpack.c.b16 %v3921, %v3919
      %v3962 = vpack.c.b16 %v3924, %v3922
      %v3963 = vpack.c.b16 %v3925, %v3923
      %v3964 = vpack.c.b16 %v3928, %v3926
      %v3965 = vpack.c.b16 %v3929, %v3927
      %v3966 = vpack.c.b16 %v3932, %v3930
      %v3967 = vpack.c.b16 %v3933, %v3931
      %v3968 = vpack.c.b16 %v3936, %v3934
      %v3969 = vpack.c.b16 %v3937, %v3935
      %4002 = vmatprep.subr.bf16.mxu0 %v3583
      %4003 = vmatpush1.bf16.msra.mxu0 %v3582
      %4004 = vmatprep.subr.bf16.mxu0 %v3579
      %4005 = vmatpush1.bf16.msra.mxu0 %v3578
      %4006 = vmatprep.subr.bf16.mxu0 %v3575
      %4007 = vmatpush1.bf16.msra.mxu0 %v3574
      %4008 = vmatprep.subr.bf16.mxu0 %v3571
      %4009 = vmatpush1.bf16.msra.mxu0 %v3570
      %4010 = vmatprep.subr.bf16.mxu0 %v3567
      %4011 = vmatpush1.bf16.msra.mxu0 %v3566
      %4012 = vmatprep.subr.bf16.mxu0 %v3563
      %4013 = vmatpush1.bf16.msra.mxu0 %v3562
      %4014 = vmatprep.subr.bf16.mxu0 %v3559
      %4015 = vmatpush1.bf16.msra.mxu0 %v3558
      %4016 = vmatprep.subr.bf16.mxu0 %v3555
      %4017 = vmatpush1.bf16.msra.mxu0 %v3554
      %4018 = vmatprep.subr.bf16.mxu0 %v3615
      %4019 = vmatpush2.bf16.msra.mxu0 %v3614
      %4020 = vmatprep.subr.bf16.mxu0 %v3611
      %4021 = vmatpush2.bf16.msra.mxu0 %v3610
      %4022 = vmatprep.subr.bf16.mxu0 %v3607
      %4023 = vmatpush2.bf16.msra.mxu0 %v3606
      %4024 = vmatprep.subr.bf16.mxu0 %v3603
      %4025 = vmatpush2.bf16.msra.mxu0 %v3602
      %4026 = vmatprep.subr.bf16.mxu0 %v3599
      %4027 = vmatpush2.bf16.msra.mxu0 %v3598
      %4028 = vmatprep.subr.bf16.mxu0 %v3595
      %4029 = vmatpush2.bf16.msra.mxu0 %v3594
      %4030 = vmatprep.subr.bf16.mxu0 %v3591
      %4031 = vmatpush2.bf16.msra.mxu0 %v3590
      %4032 = vmatprep.subr.bf16.mxu0 %v3587
      %4033 = vmatpush2.bf16.msra.mxu0 %v3586
      %4034 = vmatprep.mubr.bf16.mxu0 %v3939
      %4035 = vmatmul.mubr.bf16.gmra.mxu0 %v3938
      %v4036 = vpop.f32.mrf.mxu0
      %v4037 = vadd.f32 %v3685, %v4036
      %v4038 = vpop.f32.mrf.mxu0
      %v4039 = vadd.f32 %v3685, %v4038
      %v4040 = vpop.f32.mrf.mxu0
      %v4041 = vadd.f32 %v3690, %v4040
      %v4042 = vpop.f32.mrf.mxu0
      %v4043 = vadd.f32 %v3690, %v4042
      %4044 = vmatprep.mubr.bf16.mxu0 %v3941
      %4045 = vmatmul.mubr.bf16.gmra.mxu0 %v3940
      %v4046 = vpop.f32.mrf.mxu0
      %v4047 = vadd.f32 %v3695, %v4046
      %v4048 = vpop.f32.mrf.mxu0
      %v4049 = vadd.f32 %v3695, %v4048
      %v4050 = vpop.f32.mrf.mxu0
      %v4051 = vadd.f32 %v3700, %v4050
      %v4052 = vpop.f32.mrf.mxu0
      %v4053 = vadd.f32 %v3700, %v4052
      %4054 = vmatprep.mubr.bf16.mxu0 %v3943
      %4055 = vmatmul.mubr.bf16.gmra.mxu0 %v3942
      %v4056 = vpop.f32.mrf.mxu0
      %v4057 = vadd.f32 %v3705, %v4056
      %v4058 = vpop.f32.mrf.mxu0
      %v4059 = vadd.f32 %v3705, %v4058
      %v4060 = vpop.f32.mrf.mxu0
      %v4061 = vadd.f32 %v3710, %v4060
      %v4062 = vpop.f32.mrf.mxu0
      %v4063 = vadd.f32 %v3710, %v4062
      %4064 = vmatprep.mubr.bf16.mxu0 %v3945
      %4065 = vmatmul.mubr.bf16.gmra.mxu0 %v3944
      %v4066 = vpop.f32.mrf.mxu0
      %v4067 = vadd.f32 %v3715, %v4066
      %v4068 = vpop.f32.mrf.mxu0
      %v4069 = vadd.f32 %v3715, %v4068
      %v4070 = vpop.f32.mrf.mxu0
      %v4071 = vadd.f32 %v3720, %v4070
      %v4072 = vpop.f32.mrf.mxu0
      %v4073 = vadd.f32 %v3720, %v4072
      %4074 = vmatprep.mubr.bf16.mxu0 %v3947
      %4075 = vmatmul.mubr.bf16.gmra.mxu0 %v3946
      %v4076 = vpop.f32.mrf.mxu0
      %v4077 = vadd.f32 %v3725, %v4076
      %v4078 = vpop.f32.mrf.mxu0
      %v4079 = vadd.f32 %v3725, %v4078
      %v4080 = vpop.f32.mrf.mxu0
      %v4081 = vadd.f32 %v3730, %v4080
      %v4082 = vpop.f32.mrf.mxu0
      %v4083 = vadd.f32 %v3730, %v4082
      %4084 = vmatprep.mubr.bf16.mxu0 %v3949
      %4085 = vmatmul.mubr.bf16.gmra.mxu0 %v3948
      %v4086 = vpop.f32.mrf.mxu0
      %v4087 = vadd.f32 %v3735, %v4086
      %v4088 = vpop.f32.mrf.mxu0
      %v4089 = vadd.f32 %v3735, %v4088
      %v4090 = vpop.f32.mrf.mxu0
      %v4091 = vadd.f32 %v3740, %v4090
      %v4092 = vpop.f32.mrf.mxu0
      %v4093 = vadd.f32 %v3740, %v4092
      %4094 = vmatprep.mubr.bf16.mxu0 %v3951
      %4095 = vmatmul.mubr.bf16.gmra.mxu0 %v3950
      %v4096 = vpop.f32.mrf.mxu0
      %v4097 = vadd.f32 %v3745, %v4096
      %v4098 = vpop.f32.mrf.mxu0
      %v4099 = vadd.f32 %v3745, %v4098
      %v4100 = vpop.f32.mrf.mxu0
      %v4101 = vadd.f32 %v3750, %v4100
      %v4102 = vpop.f32.mrf.mxu0
      %v4103 = vadd.f32 %v3750, %v4102
      %4104 = vmatprep.mubr.bf16.mxu0 %v3953
      %4105 = vmatmul.mubr.bf16.gmra.mxu0 %v3952
      %v4106 = vpop.f32.mrf.mxu0
      %v4107 = vadd.f32 %v3755, %v4106
      %v4108 = vpop.f32.mrf.mxu0
      %v4109 = vadd.f32 %v3755, %v4108
      %v4110 = vpop.f32.mrf.mxu0
      %v4111 = vadd.f32 %v3760, %v4110
      %v4112 = vpop.f32.mrf.mxu0
      %v4113 = vadd.f32 %v3760, %v4112
      %4114 = vmatprep.mubr.bf16.mxu0 %v3955
      %4115 = vmatmul.mubr.bf16.gmra.mxu0 %v3954
      %v4116 = vpop.f32.mrf.mxu0
      %v4117 = vadd.f32 %v3765, %v4116
      %v4118 = vpop.f32.mrf.mxu0
      %v4119 = vadd.f32 %v3765, %v4118
      %v4120 = vpop.f32.mrf.mxu0
      %v4121 = vadd.f32 %v3770, %v4120
      %v4122 = vpop.f32.mrf.mxu0
      %v4123 = vadd.f32 %v3770, %v4122
      %4124 = vmatprep.mubr.bf16.mxu0 %v3957
      %4125 = vmatmul.mubr.bf16.gmra.mxu0 %v3956
      %v4126 = vpop.f32.mrf.mxu0
      %v4127 = vadd.f32 %v3775, %v4126
      %v4128 = vpop.f32.mrf.mxu0
      %v4129 = vadd.f32 %v3775, %v4128
      %v4130 = vpop.f32.mrf.mxu0
      %v4131 = vadd.f32 %v3780, %v4130
      %v4132 = vpop.f32.mrf.mxu0
      %v4133 = vadd.f32 %v3780, %v4132
      %4134 = vmatprep.mubr.bf16.mxu0 %v3959
      %4135 = vmatmul.mubr.bf16.gmra.mxu0 %v3958
      %v4136 = vpop.f32.mrf.mxu0
      %v4137 = vadd.f32 %v3785, %v4136
      %v4138 = vpop.f32.mrf.mxu0
      %v4139 = vadd.f32 %v3785, %v4138
      %v4140 = vpop.f32.mrf.mxu0
      %v4141 = vadd.f32 %v3790, %v4140
      %v4142 = vpop.f32.mrf.mxu0
      %v4143 = vadd.f32 %v3790, %v4142
      %4144 = vmatprep.mubr.bf16.mxu0 %v3961
      %4145 = vmatmul.mubr.bf16.gmra.mxu0 %v3960
      %v4146 = vpop.f32.mrf.mxu0
      %v4147 = vadd.f32 %v3795, %v4146
      %v4148 = vpop.f32.mrf.mxu0
      %v4149 = vadd.f32 %v3795, %v4148
      %v4150 = vpop.f32.mrf.mxu0
      %v4151 = vadd.f32 %v3800, %v4150
      %v4152 = vpop.f32.mrf.mxu0
      %v4153 = vadd.f32 %v3800, %v4152
      %4154 = vmatprep.mubr.bf16.mxu0 %v3963
      %4155 = vmatmul.mubr.bf16.gmra.mxu0 %v3962
      %v4156 = vpop.f32.mrf.mxu0
      %v4157 = vadd.f32 %v3805, %v4156
      %v4158 = vpop.f32.mrf.mxu0
      %v4159 = vadd.f32 %v3805, %v4158
      %v4160 = vpop.f32.mrf.mxu0
      %v4161 = vadd.f32 %v3810, %v4160
      %v4162 = vpop.f32.mrf.mxu0
      %v4163 = vadd.f32 %v3810, %v4162
      %4164 = vmatprep.mubr.bf16.mxu0 %v3965
      %4165 = vmatmul.mubr.bf16.gmra.mxu0 %v3964
      %v4166 = vpop.f32.mrf.mxu0
      %v4167 = vadd.f32 %v3815, %v4166
      %v4168 = vpop.f32.mrf.mxu0
      %v4169 = vadd.f32 %v3815, %v4168
      %v4170 = vpop.f32.mrf.mxu0
      %v4171 = vadd.f32 %v3820, %v4170
      %v4172 = vpop.f32.mrf.mxu0
      %v4173 = vadd.f32 %v3820, %v4172
      %4174 = vmatprep.mubr.bf16.mxu0 %v3967
      %4175 = vmatmul.mubr.bf16.gmra.mxu0 %v3966
      %v4176 = vpop.f32.mrf.mxu0
      %v4177 = vadd.f32 %v3825, %v4176
      %v4178 = vpop.f32.mrf.mxu0
      %v4179 = vadd.f32 %v3825, %v4178
      %v4180 = vpop.f32.mrf.mxu0
      %v4181 = vadd.f32 %v3830, %v4180
      %v4182 = vpop.f32.mrf.mxu0
      %v4183 = vadd.f32 %v3830, %v4182
      %4184 = vmatprep.mubr.bf16.mxu0 %v3969
      %4185 = vmatmul.mubr.bf16.gmra.mxu0 %v3968
      %v4186 = vpop.f32.mrf.mxu0
      %v4187 = vadd.f32 %v3835, %v4186
      %v4188 = vpop.f32.mrf.mxu0
      %v4189 = vadd.f32 %v3835, %v4188
      %v4190 = vpop.f32.mrf.mxu0
      %v4191 = vadd.f32 %v3840, %v4190
      %v4192 = vpop.f32.mrf.mxu0
      %v4193 = vadd.f32 %v3840, %v4192
      %4194 = vdwg.mxu0
      %4195 = vmatprep.subr.bf16.mxu0 %v3585
      %4196 = vmatpush1.bf16.msra.mxu0 %v3584
      %4197 = vmatprep.subr.bf16.mxu0 %v3581
      %4198 = vmatpush1.bf16.msra.mxu0 %v3580
      %4199 = vmatprep.subr.bf16.mxu0 %v3577
      %4200 = vmatpush1.bf16.msra.mxu0 %v3576
      %4201 = vmatprep.subr.bf16.mxu0 %v3573
      %4202 = vmatpush1.bf16.msra.mxu0 %v3572
      %4203 = vmatprep.subr.bf16.mxu0 %v3569
      %4204 = vmatpush1.bf16.msra.mxu0 %v3568
      %4205 = vmatprep.subr.bf16.mxu0 %v3565
      %4206 = vmatpush1.bf16.msra.mxu0 %v3564
      %4207 = vmatprep.subr.bf16.mxu0 %v3561
      %4208 = vmatpush1.bf16.msra.mxu0 %v3560
      %4209 = vmatprep.subr.bf16.mxu0 %v3557
      %4210 = vmatpush1.bf16.msra.mxu0 %v3556
      %4211 = vmatprep.subr.bf16.mxu0 %v3617
      %4212 = vmatpush2.bf16.msra.mxu0 %v3616
      %4213 = vmatprep.subr.bf16.mxu0 %v3613
      %4214 = vmatpush2.bf16.msra.mxu0 %v3612
      %4215 = vmatprep.subr.bf16.mxu0 %v3609
      %4216 = vmatpush2.bf16.msra.mxu0 %v3608
      %4217 = vmatprep.subr.bf16.mxu0 %v3605
      %4218 = vmatpush2.bf16.msra.mxu0 %v3604
      %4219 = vmatprep.subr.bf16.mxu0 %v3601
      %4220 = vmatpush2.bf16.msra.mxu0 %v3600
      %4221 = vmatprep.subr.bf16.mxu0 %v3597
      %4222 = vmatpush2.bf16.msra.mxu0 %v3596
      %4223 = vmatprep.subr.bf16.mxu0 %v3593
      %4224 = vmatpush2.bf16.msra.mxu0 %v3592
      %4225 = vmatprep.subr.bf16.mxu0 %v3589
      %4226 = vmatpush2.bf16.msra.mxu0 %v3588
      %4227 = vmatprep.mubr.bf16.mxu0 %v3939
      %4228 = vmatmul.mubr.bf16.gmra.mxu0 %v3938
      %v4229 = vpop.f32.mrf.mxu0
      %v4230 = vadd.f32 %v3685, %v4229
      %v4231 = vpop.f32.mrf.mxu0
      %v4232 = vadd.f32 %v3685, %v4231
      %v4233 = vpop.f32.mrf.mxu0
      %v4234 = vadd.f32 %v3690, %v4233
      %v4235 = vpop.f32.mrf.mxu0
      %v4236 = vadd.f32 %v3690, %v4235
      %4237 = vmatprep.mubr.bf16.mxu0 %v3941
      %4238 = vmatmul.mubr.bf16.gmra.mxu0 %v3940
      %v4239 = vpop.f32.mrf.mxu0
      %v4240 = vadd.f32 %v3695, %v4239
      %v4241 = vpop.f32.mrf.mxu0
      %v4242 = vadd.f32 %v3695, %v4241
      %v4243 = vpop.f32.mrf.mxu0
      %v4244 = vadd.f32 %v3700, %v4243
      %v4245 = vpop.f32.mrf.mxu0
      %v4246 = vadd.f32 %v3700, %v4245
      %4247 = vmatprep.mubr.bf16.mxu0 %v3943
      %4248 = vmatmul.mubr.bf16.gmra.mxu0 %v3942
      %v4249 = vpop.f32.mrf.mxu0
      %v4250 = vadd.f32 %v3705, %v4249
      %v4251 = vpop.f32.mrf.mxu0
      %v4252 = vadd.f32 %v3705, %v4251
      %v4253 = vpop.f32.mrf.mxu0
      %v4254 = vadd.f32 %v3710, %v4253
      %v4255 = vpop.f32.mrf.mxu0
      %v4256 = vadd.f32 %v3710, %v4255
      %4257 = vmatprep.mubr.bf16.mxu0 %v3945
      %4258 = vmatmul.mubr.bf16.gmra.mxu0 %v3944
      %v4259 = vpop.f32.mrf.mxu0
      %v4260 = vadd.f32 %v3715, %v4259
      %v4261 = vpop.f32.mrf.mxu0
      %v4262 = vadd.f32 %v3715, %v4261
      %v4263 = vpop.f32.mrf.mxu0
      %v4264 = vadd.f32 %v3720, %v4263
      %v4265 = vpop.f32.mrf.mxu0
      %v4266 = vadd.f32 %v3720, %v4265
      %4267 = vmatprep.mubr.bf16.mxu0 %v3947
      %4268 = vmatmul.mubr.bf16.gmra.mxu0 %v3946
      %v4269 = vpop.f32.mrf.mxu0
      %v4270 = vadd.f32 %v3725, %v4269
      %v4271 = vpop.f32.mrf.mxu0
      %v4272 = vadd.f32 %v3725, %v4271
      %v4273 = vpop.f32.mrf.mxu0
      %v4274 = vadd.f32 %v3730, %v4273
      %v4275 = vpop.f32.mrf.mxu0
      %v4276 = vadd.f32 %v3730, %v4275
      %4277 = vmatprep.mubr.bf16.mxu0 %v3949
      %4278 = vmatmul.mubr.bf16.gmra.mxu0 %v3948
      %v4279 = vpop.f32.mrf.mxu0
      %v4280 = vadd.f32 %v3735, %v4279
      %v4281 = vpop.f32.mrf.mxu0
      %v4282 = vadd.f32 %v3735, %v4281
      %v4283 = vpop.f32.mrf.mxu0
      %v4284 = vadd.f32 %v3740, %v4283
      %v4285 = vpop.f32.mrf.mxu0
      %v4286 = vadd.f32 %v3740, %v4285
      %4287 = vmatprep.mubr.bf16.mxu0 %v3951
      %4288 = vmatmul.mubr.bf16.gmra.mxu0 %v3950
      %v4289 = vpop.f32.mrf.mxu0
      %v4290 = vadd.f32 %v3745, %v4289
      %v4291 = vpop.f32.mrf.mxu0
      %v4292 = vadd.f32 %v3745, %v4291
      %v4293 = vpop.f32.mrf.mxu0
      %v4294 = vadd.f32 %v3750, %v4293
      %v4295 = vpop.f32.mrf.mxu0
      %v4296 = vadd.f32 %v3750, %v4295
      %4297 = vmatprep.mubr.bf16.mxu0 %v3953
      %4298 = vmatmul.mubr.bf16.gmra.mxu0 %v3952
      %v4299 = vpop.f32.mrf.mxu0
      %v4300 = vadd.f32 %v3755, %v4299
      %v4301 = vpop.f32.mrf.mxu0
      %v4302 = vadd.f32 %v3755, %v4301
      %v4303 = vpop.f32.mrf.mxu0
      %v4304 = vadd.f32 %v3760, %v4303
      %v4305 = vpop.f32.mrf.mxu0
      %v4306 = vadd.f32 %v3760, %v4305
      %4307 = vmatprep.mubr.bf16.mxu0 %v3955
      %4308 = vmatmul.mubr.bf16.gmra.mxu0 %v3954
      %v4309 = vpop.f32.mrf.mxu0
      %v4310 = vadd.f32 %v3765, %v4309
      %v4311 = vpop.f32.mrf.mxu0
      %v4312 = vadd.f32 %v3765, %v4311
      %v4313 = vpop.f32.mrf.mxu0
      %v4314 = vadd.f32 %v3770, %v4313
      %v4315 = vpop.f32.mrf.mxu0
      %v4316 = vadd.f32 %v3770, %v4315
      %4317 = vmatprep.mubr.bf16.mxu0 %v3957
      %4318 = vmatmul.mubr.bf16.gmra.mxu0 %v3956
      %v4319 = vpop.f32.mrf.mxu0
      %v4320 = vadd.f32 %v3775, %v4319
      %v4321 = vpop.f32.mrf.mxu0
      %v4322 = vadd.f32 %v3775, %v4321
      %v4323 = vpop.f32.mrf.mxu0
      %v4324 = vadd.f32 %v3780, %v4323
      %v4325 = vpop.f32.mrf.mxu0
      %v4326 = vadd.f32 %v3780, %v4325
      %4327 = vmatprep.mubr.bf16.mxu0 %v3959
      %4328 = vmatmul.mubr.bf16.gmra.mxu0 %v3958
      %v4329 = vpop.f32.mrf.mxu0
      %v4330 = vadd.f32 %v3785, %v4329
      %v4331 = vpop.f32.mrf.mxu0
      %v4332 = vadd.f32 %v3785, %v4331
      %v4333 = vpop.f32.mrf.mxu0
      %v4334 = vadd.f32 %v3790, %v4333
      %v4335 = vpop.f32.mrf.mxu0
      %v4336 = vadd.f32 %v3790, %v4335
      %4337 = vmatprep.mubr.bf16.mxu0 %v3961
      %4338 = vmatmul.mubr.bf16.gmra.mxu0 %v3960
      %v4339 = vpop.f32.mrf.mxu0
      %v4340 = vadd.f32 %v3795, %v4339
      %v4341 = vpop.f32.mrf.mxu0
      %v4342 = vadd.f32 %v3795, %v4341
      %v4343 = vpop.f32.mrf.mxu0
      %v4344 = vadd.f32 %v3800, %v4343
      %v4345 = vpop.f32.mrf.mxu0
      %v4346 = vadd.f32 %v3800, %v4345
      %4347 = vmatprep.mubr.bf16.mxu0 %v3963
      %4348 = vmatmul.mubr.bf16.gmra.mxu0 %v3962
      %v4349 = vpop.f32.mrf.mxu0
      %v4350 = vadd.f32 %v3805, %v4349
      %v4351 = vpop.f32.mrf.mxu0
      %v4352 = vadd.f32 %v3805, %v4351
      %v4353 = vpop.f32.mrf.mxu0
      %v4354 = vadd.f32 %v3810, %v4353
      %v4355 = vpop.f32.mrf.mxu0
      %v4356 = vadd.f32 %v3810, %v4355
      %4357 = vmatprep.mubr.bf16.mxu0 %v3965
      %4358 = vmatmul.mubr.bf16.gmra.mxu0 %v3964
      %v4359 = vpop.f32.mrf.mxu0
      %v4360 = vadd.f32 %v3815, %v4359
      %v4361 = vpop.f32.mrf.mxu0
      %v4362 = vadd.f32 %v3815, %v4361
      %v4363 = vpop.f32.mrf.mxu0
      %v4364 = vadd.f32 %v3820, %v4363
      %v4365 = vpop.f32.mrf.mxu0
      %v4366 = vadd.f32 %v3820, %v4365
      %4367 = vmatprep.mubr.bf16.mxu0 %v3967
      %4368 = vmatmul.mubr.bf16.gmra.mxu0 %v3966
      %v4369 = vpop.f32.mrf.mxu0
      %v4370 = vadd.f32 %v3825, %v4369
      %v4371 = vpop.f32.mrf.mxu0
      %v4372 = vadd.f32 %v3825, %v4371
      %v4373 = vpop.f32.mrf.mxu0
      %v4374 = vadd.f32 %v3830, %v4373
      %v4375 = vpop.f32.mrf.mxu0
      %v4376 = vadd.f32 %v3830, %v4375
      %4377 = vmatprep.mubr.bf16.mxu0 %v3969
      %4378 = vmatmul.mubr.bf16.gmra.mxu0 %v3968
      %v4379 = vpop.f32.mrf.mxu0
      %v4380 = vadd.f32 %v3835, %v4379
      %v4381 = vpop.f32.mrf.mxu0
      %v4382 = vadd.f32 %v3835, %v4381
      %v4383 = vpop.f32.mrf.mxu0
      %v4384 = vadd.f32 %v3840, %v4383
      %v4385 = vpop.f32.mrf.mxu0
      %v4386 = vadd.f32 %v3840, %v4385
      %4387 = vdwg.mxu0
      %v4388 = vmax.f32 %v4037, 0.0
      %v4389 = vmax.f32 %v4039, 0.0
      %v4390 = vmax.f32 %v4230, 0.0
      %v4391 = vmax.f32 %v4232, 0.0
      %v4392 = vmax.f32 %v4041, 0.0
      %v4393 = vmax.f32 %v4043, 0.0
      %v4394 = vmax.f32 %v4234, 0.0
      %v4395 = vmax.f32 %v4236, 0.0
      %v4396 = vmax.f32 %v4047, 0.0
      %v4397 = vmax.f32 %v4049, 0.0
      %v4398 = vmax.f32 %v4240, 0.0
      %v4399 = vmax.f32 %v4242, 0.0
      %v4400 = vmax.f32 %v4051, 0.0
      %v4401 = vmax.f32 %v4053, 0.0
      %v4402 = vmax.f32 %v4244, 0.0
      %v4403 = vmax.f32 %v4246, 0.0
      %v4404 = vmax.f32 %v4057, 0.0
      %v4405 = vmax.f32 %v4059, 0.0
      %v4406 = vmax.f32 %v4250, 0.0
      %v4407 = vmax.f32 %v4252, 0.0
      %v4408 = vmax.f32 %v4061, 0.0
      %v4409 = vmax.f32 %v4063, 0.0
      %v4410 = vmax.f32 %v4254, 0.0
      %v4411 = vmax.f32 %v4256, 0.0
      %v4412 = vmax.f32 %v4067, 0.0
      %v4413 = vmax.f32 %v4069, 0.0
      %v4414 = vmax.f32 %v4260, 0.0
      %v4415 = vmax.f32 %v4262, 0.0
      %v4416 = vmax.f32 %v4071, 0.0
      %v4417 = vmax.f32 %v4073, 0.0
      %v4418 = vmax.f32 %v4264, 0.0
      %v4419 = vmax.f32 %v4266, 0.0
      %v4420 = vmax.f32 %v4077, 0.0
      %v4421 = vmax.f32 %v4079, 0.0
      %v4422 = vmax.f32 %v4270, 0.0
      %v4423 = vmax.f32 %v4272, 0.0
      %v4424 = vmax.f32 %v4081, 0.0
      %v4425 = vmax.f32 %v4083, 0.0
      %v4426 = vmax.f32 %v4274, 0.0
      %v4427 = vmax.f32 %v4276, 0.0
      %v4428 = vmax.f32 %v4087, 0.0
      %v4429 = vmax.f32 %v4089, 0.0
      %v4430 = vmax.f32 %v4280, 0.0
      %v4431 = vmax.f32 %v4282, 0.0
      %v4432 = vmax.f32 %v4091, 0.0
      %v4433 = vmax.f32 %v4093, 0.0
      %v4434 = vmax.f32 %v4284, 0.0
      %v4435 = vmax.f32 %v4286, 0.0
      %v4436 = vmax.f32 %v4097, 0.0
      %v4437 = vmax.f32 %v4099, 0.0
      %v4438 = vmax.f32 %v4290, 0.0
      %v4439 = vmax.f32 %v4292, 0.0
      %v4440 = vmax.f32 %v4101, 0.0
      %v4441 = vmax.f32 %v4103, 0.0
      %v4442 = vmax.f32 %v4294, 0.0
      %v4443 = vmax.f32 %v4296, 0.0
      %v4444 = vmax.f32 %v4107, 0.0
      %v4445 = vmax.f32 %v4109, 0.0
      %v4446 = vmax.f32 %v4300, 0.0
      %v4447 = vmax.f32 %v4302, 0.0
      %v4448 = vmax.f32 %v4111, 0.0
      %v4449 = vmax.f32 %v4113, 0.0
      %v4450 = vmax.f32 %v4304, 0.0
      %v4451 = vmax.f32 %v4306, 0.0
      %v4452 = vmax.f32 %v4117, 0.0
      %v4453 = vmax.f32 %v4119, 0.0
      %v4454 = vmax.f32 %v4310, 0.0
      %v4455 = vmax.f32 %v4312, 0.0
      %v4456 = vmax.f32 %v4121, 0.0
      %v4457 = vmax.f32 %v4123, 0.0
      %v4458 = vmax.f32 %v4314, 0.0
      %v4459 = vmax.f32 %v4316, 0.0
      %v4460 = vmax.f32 %v4127, 0.0
      %v4461 = vmax.f32 %v4129, 0.0
      %v4462 = vmax.f32 %v4320, 0.0
      %v4463 = vmax.f32 %v4322, 0.0
      %v4464 = vmax.f32 %v4131, 0.0
      %v4465 = vmax.f32 %v4133, 0.0
      %v4466 = vmax.f32 %v4324, 0.0
      %v4467 = vmax.f32 %v4326, 0.0
      %v4468 = vmax.f32 %v4137, 0.0
      %v4469 = vmax.f32 %v4139, 0.0
      %v4470 = vmax.f32 %v4330, 0.0
      %v4471 = vmax.f32 %v4332, 0.0
      %v4472 = vmax.f32 %v4141, 0.0
      %v4473 = vmax.f32 %v4143, 0.0
      %v4474 = vmax.f32 %v4334, 0.0
      %v4475 = vmax.f32 %v4336, 0.0
      %v4476 = vmax.f32 %v4147, 0.0
      %v4477 = vmax.f32 %v4149, 0.0
      %v4478 = vmax.f32 %v4340, 0.0
      %v4479 = vmax.f32 %v4342, 0.0
      %v4480 = vmax.f32 %v4151, 0.0
      %v4481 = vmax.f32 %v4153, 0.0
      %v4482 = vmax.f32 %v4344, 0.0
      %v4483 = vmax.f32 %v4346, 0.0
      %v4484 = vmax.f32 %v4157, 0.0
      %v4485 = vmax.f32 %v4159, 0.0
      %v4486 = vmax.f32 %v4350, 0.0
      %v4487 = vmax.f32 %v4352, 0.0
      %v4488 = vmax.f32 %v4161, 0.0
      %v4489 = vmax.f32 %v4163, 0.0
      %v4490 = vmax.f32 %v4354, 0.0
      %v4491 = vmax.f32 %v4356, 0.0
      %v4492 = vmax.f32 %v4167, 0.0
      %v4493 = vmax.f32 %v4169, 0.0
      %v4494 = vmax.f32 %v4360, 0.0
      %v4495 = vmax.f32 %v4362, 0.0
      %v4496 = vmax.f32 %v4171, 0.0
      %v4497 = vmax.f32 %v4173, 0.0
      %v4498 = vmax.f32 %v4364, 0.0
      %v4499 = vmax.f32 %v4366, 0.0
      %v4500 = vmax.f32 %v4177, 0.0
      %v4501 = vmax.f32 %v4179, 0.0
      %v4502 = vmax.f32 %v4370, 0.0
      %v4503 = vmax.f32 %v4372, 0.0
      %v4504 = vmax.f32 %v4181, 0.0
      %v4505 = vmax.f32 %v4183, 0.0
      %v4506 = vmax.f32 %v4374, 0.0
      %v4507 = vmax.f32 %v4376, 0.0
      %v4508 = vmax.f32 %v4187, 0.0
      %v4509 = vmax.f32 %v4189, 0.0
      %v4510 = vmax.f32 %v4380, 0.0
      %v4511 = vmax.f32 %v4382, 0.0
      %v4512 = vmax.f32 %v4191, 0.0
      %v4513 = vmax.f32 %v4193, 0.0
      %v4514 = vmax.f32 %v4384, 0.0
      %v4515 = vmax.f32 %v4386, 0.0
      %v4516 = vpack.c.bf16 %v4392, %v4388
      %v4517 = vpack.c.bf16 %v4393, %v4389
      %v4518 = vpack.c.bf16 %v4394, %v4390
      %v4519 = vpack.c.bf16 %v4395, %v4391
      %v4520 = vpack.c.bf16 %v4400, %v4396
      %v4521 = vpack.c.bf16 %v4401, %v4397
      %v4522 = vpack.c.bf16 %v4402, %v4398
      %v4523 = vpack.c.bf16 %v4403, %v4399
      %v4524 = vpack.c.bf16 %v4408, %v4404
      %v4525 = vpack.c.bf16 %v4409, %v4405
      %v4526 = vpack.c.bf16 %v4410, %v4406
      %v4527 = vpack.c.bf16 %v4411, %v4407
      %v4528 = vpack.c.bf16 %v4416, %v4412
      %v4529 = vpack.c.bf16 %v4417, %v4413
      %v4530 = vpack.c.bf16 %v4418, %v4414
      %v4531 = vpack.c.bf16 %v4419, %v4415
      %v4532 = vpack.c.bf16 %v4424, %v4420
      %v4533 = vpack.c.bf16 %v4425, %v4421
      %v4534 = vpack.c.bf16 %v4426, %v4422
      %v4535 = vpack.c.bf16 %v4427, %v4423
      %v4536 = vpack.c.bf16 %v4432, %v4428
      %v4537 = vpack.c.bf16 %v4433, %v4429
      %v4538 = vpack.c.bf16 %v4434, %v4430
      %v4539 = vpack.c.bf16 %v4435, %v4431
      %v4540 = vpack.c.bf16 %v4440, %v4436
      %v4541 = vpack.c.bf16 %v4441, %v4437
      %v4542 = vpack.c.bf16 %v4442, %v4438
      %v4543 = vpack.c.bf16 %v4443, %v4439
      %v4544 = vpack.c.bf16 %v4448, %v4444
      %v4545 = vpack.c.bf16 %v4449, %v4445
      %v4546 = vpack.c.bf16 %v4450, %v4446
      %v4547 = vpack.c.bf16 %v4451, %v4447
      %v4548 = vpack.c.bf16 %v4456, %v4452
      %v4549 = vpack.c.bf16 %v4457, %v4453
      %v4550 = vpack.c.bf16 %v4458, %v4454
      %v4551 = vpack.c.bf16 %v4459, %v4455
      %v4552 = vpack.c.bf16 %v4464, %v4460
      %v4553 = vpack.c.bf16 %v4465, %v4461
      %v4554 = vpack.c.bf16 %v4466, %v4462
      %v4555 = vpack.c.bf16 %v4467, %v4463
      %v4556 = vpack.c.bf16 %v4472, %v4468
      %v4557 = vpack.c.bf16 %v4473, %v4469
      %v4558 = vpack.c.bf16 %v4474, %v4470
      %v4559 = vpack.c.bf16 %v4475, %v4471
      %v4560 = vpack.c.bf16 %v4480, %v4476
      %v4561 = vpack.c.bf16 %v4481, %v4477
      %v4562 = vpack.c.bf16 %v4482, %v4478
      %v4563 = vpack.c.bf16 %v4483, %v4479
      %v4564 = vpack.c.bf16 %v4488, %v4484
      %v4565 = vpack.c.bf16 %v4489, %v4485
      %v4566 = vpack.c.bf16 %v4490, %v4486
      %v4567 = vpack.c.bf16 %v4491, %v4487
      %v4568 = vpack.c.bf16 %v4496, %v4492
      %v4569 = vpack.c.bf16 %v4497, %v4493
      %v4570 = vpack.c.bf16 %v4498, %v4494
      %v4571 = vpack.c.bf16 %v4499, %v4495
      %v4572 = vpack.c.bf16 %v4504, %v4500
      %v4573 = vpack.c.bf16 %v4505, %v4501
      %v4574 = vpack.c.bf16 %v4506, %v4502
      %v4575 = vpack.c.bf16 %v4507, %v4503
      %v4576 = vpack.c.bf16 %v4512, %v4508
      %v4577 = vpack.c.bf16 %v4513, %v4509
      %v4578 = vpack.c.bf16 %v4514, %v4510
      %v4579 = vpack.c.bf16 %v4515, %v4511
      %v4580 = vld [vmem:[%s9] sm:$0xff]
      %v4581 = vld [vmem:[%s9 + $0x8] sm:$0xff]
      %v4582 = vld [vmem:[%s9 + $0x10] sm:$0xff]
      %v4583 = vld [vmem:[%s9 + $0x18] sm:$0xff]
      %v4584 = vld [vmem:[%s9 + $0x20] sm:$0xff]
      %v4585 = vld [vmem:[%s9 + $0x28] sm:$0xff]
      %v4586 = vld [vmem:[%s9 + $0x30] sm:$0xff]
      %v4587 = vld [vmem:[%s9 + $0x38] sm:$0xff]
      %v4588 = vld [vmem:[%s9 + $0x40] sm:$0xff]
      %v4589 = vld [vmem:[%s9 + $0x48] sm:$0xff]
      %v4590 = vld [vmem:[%s9 + $0x50] sm:$0xff]
      %v4591 = vld [vmem:[%s9 + $0x58] sm:$0xff]
      %v4592 = vld [vmem:[%s9 + $0x60] sm:$0xff]
      %v4593 = vld [vmem:[%s9 + $0x68] sm:$0xff]
      %v4594 = vld [vmem:[%s9 + $0x70] sm:$0xff]
      %v4595 = vld [vmem:[%s9 + $0x78] sm:$0xff]
      %v4596 = vld [vmem:[%s9 + $0x80] sm:$0xff]
      %v4597 = vld [vmem:[%s9 + $0x88] sm:$0xff]
      %v4598 = vld [vmem:[%s9 + $0x90] sm:$0xff]
      %v4599 = vld [vmem:[%s9 + $0x98] sm:$0xff]
      %v4600 = vld [vmem:[%s9 + $0xa0] sm:$0xff]
      %v4601 = vld [vmem:[%s9 + $0xa8] sm:$0xff]
      %v4602 = vld [vmem:[%s9 + $0xb0] sm:$0xff]
      %v4603 = vld [vmem:[%s9 + $0xb8] sm:$0xff]
      %v4604 = vld [vmem:[%s9 + $0xc0] sm:$0xff]
      %v4605 = vld [vmem:[%s9 + $0xc8] sm:$0xff]
      %v4606 = vld [vmem:[%s9 + $0xd0] sm:$0xff]
      %v4607 = vld [vmem:[%s9 + $0xd8] sm:$0xff]
      %v4608 = vld [vmem:[%s9 + $0xe0] sm:$0xff]
      %v4609 = vld [vmem:[%s9 + $0xe8] sm:$0xff]
      %v4610 = vld [vmem:[%s9 + $0xf0] sm:$0xff]
      %v4611 = vld [vmem:[%s9 + $0xf8] sm:$0xff]
      %v4612 = vld [vmem:[%s10] sm:$0xff]
      %v4613 = vld [vmem:[%s10 + $0x8] sm:$0xff]
      %v4614 = vld [vmem:[%s10 + $0x10] sm:$0xff]
      %v4615 = vld [vmem:[%s10 + $0x18] sm:$0xff]
      %v4616 = vld [vmem:[%s10 + $0x20] sm:$0xff]
      %v4617 = vld [vmem:[%s10 + $0x28] sm:$0xff]
      %v4618 = vld [vmem:[%s10 + $0x30] sm:$0xff]
      %v4619 = vld [vmem:[%s10 + $0x38] sm:$0xff]
      %v4620 = vld [vmem:[%s10 + $0x40] sm:$0xff]
      %v4621 = vld [vmem:[%s10 + $0x48] sm:$0xff]
      %v4622 = vld [vmem:[%s10 + $0x50] sm:$0xff]
      %v4623 = vld [vmem:[%s10 + $0x58] sm:$0xff]
      %v4624 = vld [vmem:[%s10 + $0x60] sm:$0xff]
      %v4625 = vld [vmem:[%s10 + $0x68] sm:$0xff]
      %v4626 = vld [vmem:[%s10 + $0x70] sm:$0xff]
      %v4627 = vld [vmem:[%s10 + $0x78] sm:$0xff]
      %v4628 = vld [vmem:[%s10 + $0x80] sm:$0xff]
      %v4629 = vld [vmem:[%s10 + $0x88] sm:$0xff]
      %v4630 = vld [vmem:[%s10 + $0x90] sm:$0xff]
      %v4631 = vld [vmem:[%s10 + $0x98] sm:$0xff]
      %v4632 = vld [vmem:[%s10 + $0xa0] sm:$0xff]
      %v4633 = vld [vmem:[%s10 + $0xa8] sm:$0xff]
      %v4634 = vld [vmem:[%s10 + $0xb0] sm:$0xff]
      %v4635 = vld [vmem:[%s10 + $0xb8] sm:$0xff]
      %v4636 = vld [vmem:[%s10 + $0xc0] sm:$0xff]
      %v4637 = vld [vmem:[%s10 + $0xc8] sm:$0xff]
      %v4638 = vld [vmem:[%s10 + $0xd0] sm:$0xff]
      %v4639 = vld [vmem:[%s10 + $0xd8] sm:$0xff]
      %v4640 = vld [vmem:[%s10 + $0xe0] sm:$0xff]
      %v4641 = vld [vmem:[%s10 + $0xe8] sm:$0xff]
      %v4642 = vld [vmem:[%s10 + $0xf0] sm:$0xff]
      %v4643 = vld [vmem:[%s10 + $0xf8] sm:$0xff]
      %4645 = vset.pattern.permute.xlu0 0
      %4646 = vperm.xlu0 %4645, %v4612
      %v4647 = vpop.permute.xlu0 %4646
      %4650 = vset.pattern.permute.xlu0 0
      %4651 = vperm.xlu0 %4650, %v4613
      %v4652 = vpop.permute.xlu0 %4651
      %4655 = vset.pattern.permute.xlu0 0
      %4656 = vperm.xlu0 %4655, %v4614
      %v4657 = vpop.permute.xlu0 %4656
      %4660 = vset.pattern.permute.xlu0 0
      %4661 = vperm.xlu0 %4660, %v4615
      %v4662 = vpop.permute.xlu0 %4661
      %4665 = vset.pattern.permute.xlu0 0
      %4666 = vperm.xlu0 %4665, %v4616
      %v4667 = vpop.permute.xlu0 %4666
      %4670 = vset.pattern.permute.xlu0 0
      %4671 = vperm.xlu0 %4670, %v4617
      %v4672 = vpop.permute.xlu0 %4671
      %4675 = vset.pattern.permute.xlu0 0
      %4676 = vperm.xlu0 %4675, %v4618
      %v4677 = vpop.permute.xlu0 %4676
      %4680 = vset.pattern.permute.xlu0 0
      %4681 = vperm.xlu0 %4680, %v4619
      %v4682 = vpop.permute.xlu0 %4681
      %4685 = vset.pattern.permute.xlu0 0
      %4686 = vperm.xlu0 %4685, %v4620
      %v4687 = vpop.permute.xlu0 %4686
      %4690 = vset.pattern.permute.xlu0 0
      %4691 = vperm.xlu0 %4690, %v4621
      %v4692 = vpop.permute.xlu0 %4691
      %4695 = vset.pattern.permute.xlu0 0
      %4696 = vperm.xlu0 %4695, %v4622
      %v4697 = vpop.permute.xlu0 %4696
      %4700 = vset.pattern.permute.xlu0 0
      %4701 = vperm.xlu0 %4700, %v4623
      %v4702 = vpop.permute.xlu0 %4701
      %4705 = vset.pattern.permute.xlu0 0
      %4706 = vperm.xlu0 %4705, %v4624
      %v4707 = vpop.permute.xlu0 %4706
      %4710 = vset.pattern.permute.xlu0 0
      %4711 = vperm.xlu0 %4710, %v4625
      %v4712 = vpop.permute.xlu0 %4711
      %4715 = vset.pattern.permute.xlu0 0
      %4716 = vperm.xlu0 %4715, %v4626
      %v4717 = vpop.permute.xlu0 %4716
      %4720 = vset.pattern.permute.xlu0 0
      %4721 = vperm.xlu0 %4720, %v4627
      %v4722 = vpop.permute.xlu0 %4721
      %4725 = vset.pattern.permute.xlu0 0
      %4726 = vperm.xlu0 %4725, %v4628
      %v4727 = vpop.permute.xlu0 %4726
      %4730 = vset.pattern.permute.xlu0 0
      %4731 = vperm.xlu0 %4730, %v4629
      %v4732 = vpop.permute.xlu0 %4731
      %4735 = vset.pattern.permute.xlu0 0
      %4736 = vperm.xlu0 %4735, %v4630
      %v4737 = vpop.permute.xlu0 %4736
      %4740 = vset.pattern.permute.xlu0 0
      %4741 = vperm.xlu0 %4740, %v4631
      %v4742 = vpop.permute.xlu0 %4741
      %4745 = vset.pattern.permute.xlu0 0
      %4746 = vperm.xlu0 %4745, %v4632
      %v4747 = vpop.permute.xlu0 %4746
      %4750 = vset.pattern.permute.xlu0 0
      %4751 = vperm.xlu0 %4750, %v4633
      %v4752 = vpop.permute.xlu0 %4751
      %4755 = vset.pattern.permute.xlu0 0
      %4756 = vperm.xlu0 %4755, %v4634
      %v4757 = vpop.permute.xlu0 %4756
      %4760 = vset.pattern.permute.xlu0 0
      %4761 = vperm.xlu0 %4760, %v4635
      %v4762 = vpop.permute.xlu0 %4761
      %4765 = vset.pattern.permute.xlu0 0
      %4766 = vperm.xlu0 %4765, %v4636
      %v4767 = vpop.permute.xlu0 %4766
      %4770 = vset.pattern.permute.xlu0 0
      %4771 = vperm.xlu0 %4770, %v4637
      %v4772 = vpop.permute.xlu0 %4771
      %4775 = vset.pattern.permute.xlu0 0
      %4776 = vperm.xlu0 %4775, %v4638
      %v4777 = vpop.permute.xlu0 %4776
      %4780 = vset.pattern.permute.xlu0 0
      %4781 = vperm.xlu0 %4780, %v4639
      %v4782 = vpop.permute.xlu0 %4781
      %4785 = vset.pattern.permute.xlu0 0
      %4786 = vperm.xlu0 %4785, %v4640
      %v4787 = vpop.permute.xlu0 %4786
      %4790 = vset.pattern.permute.xlu0 0
      %4791 = vperm.xlu0 %4790, %v4641
      %v4792 = vpop.permute.xlu0 %4791
      %4795 = vset.pattern.permute.xlu0 0
      %4796 = vperm.xlu0 %4795, %v4642
      %v4797 = vpop.permute.xlu0 %4796
      %4800 = vset.pattern.permute.xlu0 0
      %4801 = vperm.xlu0 %4800, %v4643
      %v4802 = vpop.permute.xlu0 %4801
      %v4836 = vunpack.c.l.b16 %v4580
      %v4837 = vunpack.c.h.b16 %v4580
      %v4838 = vunpack.c.l.b16 %v4581
      %v4839 = vunpack.c.h.b16 %v4581
      %v4840 = vunpack.c.l.b16 %v4582
      %v4841 = vunpack.c.h.b16 %v4582
      %v4842 = vunpack.c.l.b16 %v4583
      %v4843 = vunpack.c.h.b16 %v4583
      %v4844 = vunpack.c.l.b16 %v4584
      %v4845 = vunpack.c.h.b16 %v4584
      %v4846 = vunpack.c.l.b16 %v4585
      %v4847 = vunpack.c.h.b16 %v4585
      %v4848 = vunpack.c.l.b16 %v4586
      %v4849 = vunpack.c.h.b16 %v4586
      %v4850 = vunpack.c.l.b16 %v4587
      %v4851 = vunpack.c.h.b16 %v4587
      %v4852 = vunpack.c.l.b16 %v4588
      %v4853 = vunpack.c.h.b16 %v4588
      %v4854 = vunpack.c.l.b16 %v4589
      %v4855 = vunpack.c.h.b16 %v4589
      %v4856 = vunpack.c.l.b16 %v4590
      %v4857 = vunpack.c.h.b16 %v4590
      %v4858 = vunpack.c.l.b16 %v4591
      %v4859 = vunpack.c.h.b16 %v4591
      %v4860 = vunpack.c.l.b16 %v4592
      %v4861 = vunpack.c.h.b16 %v4592
      %v4862 = vunpack.c.l.b16 %v4593
      %v4863 = vunpack.c.h.b16 %v4593
      %v4864 = vunpack.c.l.b16 %v4594
      %v4865 = vunpack.c.h.b16 %v4594
      %v4866 = vunpack.c.l.b16 %v4595
      %v4867 = vunpack.c.h.b16 %v4595
      %v4868 = vunpack.c.l.b16 %v4596
      %v4869 = vunpack.c.h.b16 %v4596
      %v4870 = vunpack.c.l.b16 %v4597
      %v4871 = vunpack.c.h.b16 %v4597
      %v4872 = vunpack.c.l.b16 %v4598
      %v4873 = vunpack.c.h.b16 %v4598
      %v4874 = vunpack.c.l.b16 %v4599
      %v4875 = vunpack.c.h.b16 %v4599
      %v4876 = vunpack.c.l.b16 %v4600
      %v4877 = vunpack.c.h.b16 %v4600
      %v4878 = vunpack.c.l.b16 %v4601
      %v4879 = vunpack.c.h.b16 %v4601
      %v4880 = vunpack.c.l.b16 %v4602
      %v4881 = vunpack.c.h.b16 %v4602
      %v4882 = vunpack.c.l.b16 %v4603
      %v4883 = vunpack.c.h.b16 %v4603
      %v4884 = vunpack.c.l.b16 %v4604
      %v4885 = vunpack.c.h.b16 %v4604
      %v4886 = vunpack.c.l.b16 %v4605
      %v4887 = vunpack.c.h.b16 %v4605
      %v4888 = vunpack.c.l.b16 %v4606
      %v4889 = vunpack.c.h.b16 %v4606
      %v4890 = vunpack.c.l.b16 %v4607
      %v4891 = vunpack.c.h.b16 %v4607
      %v4892 = vunpack.c.l.b16 %v4608
      %v4893 = vunpack.c.h.b16 %v4608
      %v4894 = vunpack.c.l.b16 %v4609
      %v4895 = vunpack.c.h.b16 %v4609
      %v4896 = vunpack.c.l.b16 %v4610
      %v4897 = vunpack.c.h.b16 %v4610
      %v4898 = vunpack.c.l.b16 %v4611
      %v4899 = vunpack.c.h.b16 %v4611
      %v4900 = vpack.c.b16 %v4838, %v4836
      %v4901 = vpack.c.b16 %v4839, %v4837
      %v4902 = vpack.c.b16 %v4842, %v4840
      %v4903 = vpack.c.b16 %v4843, %v4841
      %v4904 = vpack.c.b16 %v4846, %v4844
      %v4905 = vpack.c.b16 %v4847, %v4845
      %v4906 = vpack.c.b16 %v4850, %v4848
      %v4907 = vpack.c.b16 %v4851, %v4849
      %v4908 = vpack.c.b16 %v4854, %v4852
      %v4909 = vpack.c.b16 %v4855, %v4853
      %v4910 = vpack.c.b16 %v4858, %v4856
      %v4911 = vpack.c.b16 %v4859, %v4857
      %v4912 = vpack.c.b16 %v4862, %v4860
      %v4913 = vpack.c.b16 %v4863, %v4861
      %v4914 = vpack.c.b16 %v4866, %v4864
      %v4915 = vpack.c.b16 %v4867, %v4865
      %v4916 = vpack.c.b16 %v4870, %v4868
      %v4917 = vpack.c.b16 %v4871, %v4869
      %v4918 = vpack.c.b16 %v4874, %v4872
      %v4919 = vpack.c.b16 %v4875, %v4873
      %v4920 = vpack.c.b16 %v4878, %v4876
      %v4921 = vpack.c.b16 %v4879, %v4877
      %v4922 = vpack.c.b16 %v4882, %v4880
      %v4923 = vpack.c.b16 %v4883, %v4881
      %v4924 = vpack.c.b16 %v4886, %v4884
      %v4925 = vpack.c.b16 %v4887, %v4885
      %v4926 = vpack.c.b16 %v4890, %v4888
      %v4927 = vpack.c.b16 %v4891, %v4889
      %v4928 = vpack.c.b16 %v4894, %v4892
      %v4929 = vpack.c.b16 %v4895, %v4893
      %v4930 = vpack.c.b16 %v4898, %v4896
      %v4931 = vpack.c.b16 %v4899, %v4897
      %4964 = vmatprep.subr.bf16.mxu0 %v4545
      %4965 = vmatpush1.bf16.msra.mxu0 %v4544
      %4966 = vmatprep.subr.bf16.mxu0 %v4541
      %4967 = vmatpush1.bf16.msra.mxu0 %v4540
      %4968 = vmatprep.subr.bf16.mxu0 %v4537
      %4969 = vmatpush1.bf16.msra.mxu0 %v4536
      %4970 = vmatprep.subr.bf16.mxu0 %v4533
      %4971 = vmatpush1.bf16.msra.mxu0 %v4532
      %4972 = vmatprep.subr.bf16.mxu0 %v4529
      %4973 = vmatpush1.bf16.msra.mxu0 %v4528
      %4974 = vmatprep.subr.bf16.mxu0 %v4525
      %4975 = vmatpush1.bf16.msra.mxu0 %v4524
      %4976 = vmatprep.subr.bf16.mxu0 %v4521
      %4977 = vmatpush1.bf16.msra.mxu0 %v4520
      %4978 = vmatprep.subr.bf16.mxu0 %v4517
      %4979 = vmatpush1.bf16.msra.mxu0 %v4516
      %4980 = vmatprep.subr.bf16.mxu0 %v4577
      %4981 = vmatpush2.bf16.msra.mxu0 %v4576
      %4982 = vmatprep.subr.bf16.mxu0 %v4573
      %4983 = vmatpush2.bf16.msra.mxu0 %v4572
      %4984 = vmatprep.subr.bf16.mxu0 %v4569
      %4985 = vmatpush2.bf16.msra.mxu0 %v4568
      %4986 = vmatprep.subr.bf16.mxu0 %v4565
      %4987 = vmatpush2.bf16.msra.mxu0 %v4564
      %4988 = vmatprep.subr.bf16.mxu0 %v4561
      %4989 = vmatpush2.bf16.msra.mxu0 %v4560
      %4990 = vmatprep.subr.bf16.mxu0 %v4557
      %4991 = vmatpush2.bf16.msra.mxu0 %v4556
      %4992 = vmatprep.subr.bf16.mxu0 %v4553
      %4993 = vmatpush2.bf16.msra.mxu0 %v4552
      %4994 = vmatprep.subr.bf16.mxu0 %v4549
      %4995 = vmatpush2.bf16.msra.mxu0 %v4548
      %4996 = vmatprep.mubr.bf16.mxu0 %v4901
      %4997 = vmatmul.mubr.bf16.gmra.mxu0 %v4900
      %v4998 = vpop.f32.mrf.mxu0
      %v4999 = vadd.f32 %v4647, %v4998
      %v5000 = vpop.f32.mrf.mxu0
      %v5001 = vadd.f32 %v4647, %v5000
      %v5002 = vpop.f32.mrf.mxu0
      %v5003 = vadd.f32 %v4652, %v5002
      %v5004 = vpop.f32.mrf.mxu0
      %v5005 = vadd.f32 %v4652, %v5004
      %5006 = vmatprep.mubr.bf16.mxu0 %v4903
      %5007 = vmatmul.mubr.bf16.gmra.mxu0 %v4902
      %v5008 = vpop.f32.mrf.mxu0
      %v5009 = vadd.f32 %v4657, %v5008
      %v5010 = vpop.f32.mrf.mxu0
      %v5011 = vadd.f32 %v4657, %v5010
      %v5012 = vpop.f32.mrf.mxu0
      %v5013 = vadd.f32 %v4662, %v5012
      %v5014 = vpop.f32.mrf.mxu0
      %v5015 = vadd.f32 %v4662, %v5014
      %5016 = vmatprep.mubr.bf16.mxu0 %v4905
      %5017 = vmatmul.mubr.bf16.gmra.mxu0 %v4904
      %v5018 = vpop.f32.mrf.mxu0
      %v5019 = vadd.f32 %v4667, %v5018
      %v5020 = vpop.f32.mrf.mxu0
      %v5021 = vadd.f32 %v4667, %v5020
      %v5022 = vpop.f32.mrf.mxu0
      %v5023 = vadd.f32 %v4672, %v5022
      %v5024 = vpop.f32.mrf.mxu0
      %v5025 = vadd.f32 %v4672, %v5024
      %5026 = vmatprep.mubr.bf16.mxu0 %v4907
      %5027 = vmatmul.mubr.bf16.gmra.mxu0 %v4906
      %v5028 = vpop.f32.mrf.mxu0
      %v5029 = vadd.f32 %v4677, %v5028
      %v5030 = vpop.f32.mrf.mxu0
      %v5031 = vadd.f32 %v4677, %v5030
      %v5032 = vpop.f32.mrf.mxu0
      %v5033 = vadd.f32 %v4682, %v5032
      %v5034 = vpop.f32.mrf.mxu0
      %v5035 = vadd.f32 %v4682, %v5034
      %5036 = vmatprep.mubr.bf16.mxu0 %v4909
      %5037 = vmatmul.mubr.bf16.gmra.mxu0 %v4908
      %v5038 = vpop.f32.mrf.mxu0
      %v5039 = vadd.f32 %v4687, %v5038
      %v5040 = vpop.f32.mrf.mxu0
      %v5041 = vadd.f32 %v4687, %v5040
      %v5042 = vpop.f32.mrf.mxu0
      %v5043 = vadd.f32 %v4692, %v5042
      %v5044 = vpop.f32.mrf.mxu0
      %v5045 = vadd.f32 %v4692, %v5044
      %5046 = vmatprep.mubr.bf16.mxu0 %v4911
      %5047 = vmatmul.mubr.bf16.gmra.mxu0 %v4910
      %v5048 = vpop.f32.mrf.mxu0
      %v5049 = vadd.f32 %v4697, %v5048
      %v5050 = vpop.f32.mrf.mxu0
      %v5051 = vadd.f32 %v4697, %v5050
      %v5052 = vpop.f32.mrf.mxu0
      %v5053 = vadd.f32 %v4702, %v5052
      %v5054 = vpop.f32.mrf.mxu0
      %v5055 = vadd.f32 %v4702, %v5054
      %5056 = vmatprep.mubr.bf16.mxu0 %v4913
      %5057 = vmatmul.mubr.bf16.gmra.mxu0 %v4912
      %v5058 = vpop.f32.mrf.mxu0
      %v5059 = vadd.f32 %v4707, %v5058
      %v5060 = vpop.f32.mrf.mxu0
      %v5061 = vadd.f32 %v4707, %v5060
      %v5062 = vpop.f32.mrf.mxu0
      %v5063 = vadd.f32 %v4712, %v5062
      %v5064 = vpop.f32.mrf.mxu0
      %v5065 = vadd.f32 %v4712, %v5064
      %5066 = vmatprep.mubr.bf16.mxu0 %v4915
      %5067 = vmatmul.mubr.bf16.gmra.mxu0 %v4914
      %v5068 = vpop.f32.mrf.mxu0
      %v5069 = vadd.f32 %v4717, %v5068
      %v5070 = vpop.f32.mrf.mxu0
      %v5071 = vadd.f32 %v4717, %v5070
      %v5072 = vpop.f32.mrf.mxu0
      %v5073 = vadd.f32 %v4722, %v5072
      %v5074 = vpop.f32.mrf.mxu0
      %v5075 = vadd.f32 %v4722, %v5074
      %5076 = vmatprep.mubr.bf16.mxu0 %v4917
      %5077 = vmatmul.mubr.bf16.gmra.mxu0 %v4916
      %v5078 = vpop.f32.mrf.mxu0
      %v5079 = vadd.f32 %v4727, %v5078
      %v5080 = vpop.f32.mrf.mxu0
      %v5081 = vadd.f32 %v4727, %v5080
      %v5082 = vpop.f32.mrf.mxu0
      %v5083 = vadd.f32 %v4732, %v5082
      %v5084 = vpop.f32.mrf.mxu0
      %v5085 = vadd.f32 %v4732, %v5084
      %5086 = vmatprep.mubr.bf16.mxu0 %v4919
      %5087 = vmatmul.mubr.bf16.gmra.mxu0 %v4918
      %v5088 = vpop.f32.mrf.mxu0
      %v5089 = vadd.f32 %v4737, %v5088
      %v5090 = vpop.f32.mrf.mxu0
      %v5091 = vadd.f32 %v4737, %v5090
      %v5092 = vpop.f32.mrf.mxu0
      %v5093 = vadd.f32 %v4742, %v5092
      %v5094 = vpop.f32.mrf.mxu0
      %v5095 = vadd.f32 %v4742, %v5094
      %5096 = vmatprep.mubr.bf16.mxu0 %v4921
      %5097 = vmatmul.mubr.bf16.gmra.mxu0 %v4920
      %v5098 = vpop.f32.mrf.mxu0
      %v5099 = vadd.f32 %v4747, %v5098
      %v5100 = vpop.f32.mrf.mxu0
      %v5101 = vadd.f32 %v4747, %v5100
      %v5102 = vpop.f32.mrf.mxu0
      %v5103 = vadd.f32 %v4752, %v5102
      %v5104 = vpop.f32.mrf.mxu0
      %v5105 = vadd.f32 %v4752, %v5104
      %5106 = vmatprep.mubr.bf16.mxu0 %v4923
      %5107 = vmatmul.mubr.bf16.gmra.mxu0 %v4922
      %v5108 = vpop.f32.mrf.mxu0
      %v5109 = vadd.f32 %v4757, %v5108
      %v5110 = vpop.f32.mrf.mxu0
      %v5111 = vadd.f32 %v4757, %v5110
      %v5112 = vpop.f32.mrf.mxu0
      %v5113 = vadd.f32 %v4762, %v5112
      %v5114 = vpop.f32.mrf.mxu0
      %v5115 = vadd.f32 %v4762, %v5114
      %5116 = vmatprep.mubr.bf16.mxu0 %v4925
      %5117 = vmatmul.mubr.bf16.gmra.mxu0 %v4924
      %v5118 = vpop.f32.mrf.mxu0
      %v5119 = vadd.f32 %v4767, %v5118
      %v5120 = vpop.f32.mrf.mxu0
      %v5121 = vadd.f32 %v4767, %v5120
      %v5122 = vpop.f32.mrf.mxu0
      %v5123 = vadd.f32 %v4772, %v5122
      %v5124 = vpop.f32.mrf.mxu0
      %v5125 = vadd.f32 %v4772, %v5124
      %5126 = vmatprep.mubr.bf16.mxu0 %v4927
      %5127 = vmatmul.mubr.bf16.gmra.mxu0 %v4926
      %v5128 = vpop.f32.mrf.mxu0
      %v5129 = vadd.f32 %v4777, %v5128
      %v5130 = vpop.f32.mrf.mxu0
      %v5131 = vadd.f32 %v4777, %v5130
      %v5132 = vpop.f32.mrf.mxu0
      %v5133 = vadd.f32 %v4782, %v5132
      %v5134 = vpop.f32.mrf.mxu0
      %v5135 = vadd.f32 %v4782, %v5134
      %5136 = vmatprep.mubr.bf16.mxu0 %v4929
      %5137 = vmatmul.mubr.bf16.gmra.mxu0 %v4928
      %v5138 = vpop.f32.mrf.mxu0
      %v5139 = vadd.f32 %v4787, %v5138
      %v5140 = vpop.f32.mrf.mxu0
      %v5141 = vadd.f32 %v4787, %v5140
      %v5142 = vpop.f32.mrf.mxu0
      %v5143 = vadd.f32 %v4792, %v5142
      %v5144 = vpop.f32.mrf.mxu0
      %v5145 = vadd.f32 %v4792, %v5144
      %5146 = vmatprep.mubr.bf16.mxu0 %v4931
      %5147 = vmatmul.mubr.bf16.gmra.mxu0 %v4930
      %v5148 = vpop.f32.mrf.mxu0
      %v5149 = vadd.f32 %v4797, %v5148
      %v5150 = vpop.f32.mrf.mxu0
      %v5151 = vadd.f32 %v4797, %v5150
      %v5152 = vpop.f32.mrf.mxu0
      %v5153 = vadd.f32 %v4802, %v5152
      %v5154 = vpop.f32.mrf.mxu0
      %v5155 = vadd.f32 %v4802, %v5154
      %5156 = vdwg.mxu0
      %5157 = vmatprep.subr.bf16.mxu0 %v4547
      %5158 = vmatpush1.bf16.msra.mxu0 %v4546
      %5159 = vmatprep.subr.bf16.mxu0 %v4543
      %5160 = vmatpush1.bf16.msra.mxu0 %v4542
      %5161 = vmatprep.subr.bf16.mxu0 %v4539
      %5162 = vmatpush1.bf16.msra.mxu0 %v4538
      %5163 = vmatprep.subr.bf16.mxu0 %v4535
      %5164 = vmatpush1.bf16.msra.mxu0 %v4534
      %5165 = vmatprep.subr.bf16.mxu0 %v4531
      %5166 = vmatpush1.bf16.msra.mxu0 %v4530
      %5167 = vmatprep.subr.bf16.mxu0 %v4527
      %5168 = vmatpush1.bf16.msra.mxu0 %v4526
      %5169 = vmatprep.subr.bf16.mxu0 %v4523
      %5170 = vmatpush1.bf16.msra.mxu0 %v4522
      %5171 = vmatprep.subr.bf16.mxu0 %v4519
      %5172 = vmatpush1.bf16.msra.mxu0 %v4518
      %5173 = vmatprep.subr.bf16.mxu0 %v4579
      %5174 = vmatpush2.bf16.msra.mxu0 %v4578
      %5175 = vmatprep.subr.bf16.mxu0 %v4575
      %5176 = vmatpush2.bf16.msra.mxu0 %v4574
      %5177 = vmatprep.subr.bf16.mxu0 %v4571
      %5178 = vmatpush2.bf16.msra.mxu0 %v4570
      %5179 = vmatprep.subr.bf16.mxu0 %v4567
      %5180 = vmatpush2.bf16.msra.mxu0 %v4566
      %5181 = vmatprep.subr.bf16.mxu0 %v4563
      %5182 = vmatpush2.bf16.msra.mxu0 %v4562
      %5183 = vmatprep.subr.bf16.mxu0 %v4559
      %5184 = vmatpush2.bf16.msra.mxu0 %v4558
      %5185 = vmatprep.subr.bf16.mxu0 %v4555
      %5186 = vmatpush2.bf16.msra.mxu0 %v4554
      %5187 = vmatprep.subr.bf16.mxu0 %v4551
      %5188 = vmatpush2.bf16.msra.mxu0 %v4550
      %5189 = vmatprep.mubr.bf16.mxu0 %v4901
      %5190 = vmatmul.mubr.bf16.gmra.mxu0 %v4900
      %v5191 = vpop.f32.mrf.mxu0
      %v5192 = vadd.f32 %v4647, %v5191
      %v5193 = vpop.f32.mrf.mxu0
      %v5194 = vadd.f32 %v4647, %v5193
      %v5195 = vpop.f32.mrf.mxu0
      %v5196 = vadd.f32 %v4652, %v5195
      %v5197 = vpop.f32.mrf.mxu0
      %v5198 = vadd.f32 %v4652, %v5197
      %5199 = vmatprep.mubr.bf16.mxu0 %v4903
      %5200 = vmatmul.mubr.bf16.gmra.mxu0 %v4902
      %v5201 = vpop.f32.mrf.mxu0
      %v5202 = vadd.f32 %v4657, %v5201
      %v5203 = vpop.f32.mrf.mxu0
      %v5204 = vadd.f32 %v4657, %v5203
      %v5205 = vpop.f32.mrf.mxu0
      %v5206 = vadd.f32 %v4662, %v5205
      %v5207 = vpop.f32.mrf.mxu0
      %v5208 = vadd.f32 %v4662, %v5207
      %5209 = vmatprep.mubr.bf16.mxu0 %v4905
      %5210 = vmatmul.mubr.bf16.gmra.mxu0 %v4904
      %v5211 = vpop.f32.mrf.mxu0
      %v5212 = vadd.f32 %v4667, %v5211
      %v5213 = vpop.f32.mrf.mxu0
      %v5214 = vadd.f32 %v4667, %v5213
      %v5215 = vpop.f32.mrf.mxu0
      %v5216 = vadd.f32 %v4672, %v5215
      %v5217 = vpop.f32.mrf.mxu0
      %v5218 = vadd.f32 %v4672, %v5217
      %5219 = vmatprep.mubr.bf16.mxu0 %v4907
      %5220 = vmatmul.mubr.bf16.gmra.mxu0 %v4906
      %v5221 = vpop.f32.mrf.mxu0
      %v5222 = vadd.f32 %v4677, %v5221
      %v5223 = vpop.f32.mrf.mxu0
      %v5224 = vadd.f32 %v4677, %v5223
      %v5225 = vpop.f32.mrf.mxu0
      %v5226 = vadd.f32 %v4682, %v5225
      %v5227 = vpop.f32.mrf.mxu0
      %v5228 = vadd.f32 %v4682, %v5227
      %5229 = vmatprep.mubr.bf16.mxu0 %v4909
      %5230 = vmatmul.mubr.bf16.gmra.mxu0 %v4908
      %v5231 = vpop.f32.mrf.mxu0
      %v5232 = vadd.f32 %v4687, %v5231
      %v5233 = vpop.f32.mrf.mxu0
      %v5234 = vadd.f32 %v4687, %v5233
      %v5235 = vpop.f32.mrf.mxu0
      %v5236 = vadd.f32 %v4692, %v5235
      %v5237 = vpop.f32.mrf.mxu0
      %v5238 = vadd.f32 %v4692, %v5237
      %5239 = vmatprep.mubr.bf16.mxu0 %v4911
      %5240 = vmatmul.mubr.bf16.gmra.mxu0 %v4910
      %v5241 = vpop.f32.mrf.mxu0
      %v5242 = vadd.f32 %v4697, %v5241
      %v5243 = vpop.f32.mrf.mxu0
      %v5244 = vadd.f32 %v4697, %v5243
      %v5245 = vpop.f32.mrf.mxu0
      %v5246 = vadd.f32 %v4702, %v5245
      %v5247 = vpop.f32.mrf.mxu0
      %v5248 = vadd.f32 %v4702, %v5247
      %5249 = vmatprep.mubr.bf16.mxu0 %v4913
      %5250 = vmatmul.mubr.bf16.gmra.mxu0 %v4912
      %v5251 = vpop.f32.mrf.mxu0
      %v5252 = vadd.f32 %v4707, %v5251
      %v5253 = vpop.f32.mrf.mxu0
      %v5254 = vadd.f32 %v4707, %v5253
      %v5255 = vpop.f32.mrf.mxu0
      %v5256 = vadd.f32 %v4712, %v5255
      %v5257 = vpop.f32.mrf.mxu0
      %v5258 = vadd.f32 %v4712, %v5257
      %5259 = vmatprep.mubr.bf16.mxu0 %v4915
      %5260 = vmatmul.mubr.bf16.gmra.mxu0 %v4914
      %v5261 = vpop.f32.mrf.mxu0
      %v5262 = vadd.f32 %v4717, %v5261
      %v5263 = vpop.f32.mrf.mxu0
      %v5264 = vadd.f32 %v4717, %v5263
      %v5265 = vpop.f32.mrf.mxu0
      %v5266 = vadd.f32 %v4722, %v5265
      %v5267 = vpop.f32.mrf.mxu0
      %v5268 = vadd.f32 %v4722, %v5267
      %5269 = vmatprep.mubr.bf16.mxu0 %v4917
      %5270 = vmatmul.mubr.bf16.gmra.mxu0 %v4916
      %v5271 = vpop.f32.mrf.mxu0
      %v5272 = vadd.f32 %v4727, %v5271
      %v5273 = vpop.f32.mrf.mxu0
      %v5274 = vadd.f32 %v4727, %v5273
      %v5275 = vpop.f32.mrf.mxu0
      %v5276 = vadd.f32 %v4732, %v5275
      %v5277 = vpop.f32.mrf.mxu0
      %v5278 = vadd.f32 %v4732, %v5277
      %5279 = vmatprep.mubr.bf16.mxu0 %v4919
      %5280 = vmatmul.mubr.bf16.gmra.mxu0 %v4918
      %v5281 = vpop.f32.mrf.mxu0
      %v5282 = vadd.f32 %v4737, %v5281
      %v5283 = vpop.f32.mrf.mxu0
      %v5284 = vadd.f32 %v4737, %v5283
      %v5285 = vpop.f32.mrf.mxu0
      %v5286 = vadd.f32 %v4742, %v5285
      %v5287 = vpop.f32.mrf.mxu0
      %v5288 = vadd.f32 %v4742, %v5287
      %5289 = vmatprep.mubr.bf16.mxu0 %v4921
      %5290 = vmatmul.mubr.bf16.gmra.mxu0 %v4920
      %v5291 = vpop.f32.mrf.mxu0
      %v5292 = vadd.f32 %v4747, %v5291
      %v5293 = vpop.f32.mrf.mxu0
      %v5294 = vadd.f32 %v4747, %v5293
      %v5295 = vpop.f32.mrf.mxu0
      %v5296 = vadd.f32 %v4752, %v5295
      %v5297 = vpop.f32.mrf.mxu0
      %v5298 = vadd.f32 %v4752, %v5297
      %5299 = vmatprep.mubr.bf16.mxu0 %v4923
      %5300 = vmatmul.mubr.bf16.gmra.mxu0 %v4922
      %v5301 = vpop.f32.mrf.mxu0
      %v5302 = vadd.f32 %v4757, %v5301
      %v5303 = vpop.f32.mrf.mxu0
      %v5304 = vadd.f32 %v4757, %v5303
      %v5305 = vpop.f32.mrf.mxu0
      %v5306 = vadd.f32 %v4762, %v5305
      %v5307 = vpop.f32.mrf.mxu0
      %v5308 = vadd.f32 %v4762, %v5307
      %5309 = vmatprep.mubr.bf16.mxu0 %v4925
      %5310 = vmatmul.mubr.bf16.gmra.mxu0 %v4924
      %v5311 = vpop.f32.mrf.mxu0
      %v5312 = vadd.f32 %v4767, %v5311
      %v5313 = vpop.f32.mrf.mxu0
      %v5314 = vadd.f32 %v4767, %v5313
      %v5315 = vpop.f32.mrf.mxu0
      %v5316 = vadd.f32 %v4772, %v5315
      %v5317 = vpop.f32.mrf.mxu0
      %v5318 = vadd.f32 %v4772, %v5317
      %5319 = vmatprep.mubr.bf16.mxu0 %v4927
      %5320 = vmatmul.mubr.bf16.gmra.mxu0 %v4926
      %v5321 = vpop.f32.mrf.mxu0
      %v5322 = vadd.f32 %v4777, %v5321
      %v5323 = vpop.f32.mrf.mxu0
      %v5324 = vadd.f32 %v4777, %v5323
      %v5325 = vpop.f32.mrf.mxu0
      %v5326 = vadd.f32 %v4782, %v5325
      %v5327 = vpop.f32.mrf.mxu0
      %v5328 = vadd.f32 %v4782, %v5327
      %5329 = vmatprep.mubr.bf16.mxu0 %v4929
      %5330 = vmatmul.mubr.bf16.gmra.mxu0 %v4928
      %v5331 = vpop.f32.mrf.mxu0
      %v5332 = vadd.f32 %v4787, %v5331
      %v5333 = vpop.f32.mrf.mxu0
      %v5334 = vadd.f32 %v4787, %v5333
      %v5335 = vpop.f32.mrf.mxu0
      %v5336 = vadd.f32 %v4792, %v5335
      %v5337 = vpop.f32.mrf.mxu0
      %v5338 = vadd.f32 %v4792, %v5337
      %5339 = vmatprep.mubr.bf16.mxu0 %v4931
      %5340 = vmatmul.mubr.bf16.gmra.mxu0 %v4930
      %v5341 = vpop.f32.mrf.mxu0
      %v5342 = vadd.f32 %v4797, %v5341
      %v5343 = vpop.f32.mrf.mxu0
      %v5344 = vadd.f32 %v4797, %v5343
      %v5345 = vpop.f32.mrf.mxu0
      %v5346 = vadd.f32 %v4802, %v5345
      %v5347 = vpop.f32.mrf.mxu0
      %v5348 = vadd.f32 %v4802, %v5347
      %5349 = vdwg.mxu0
      %v5350 = vmax.f32 %v4999, 0.0
      %v5351 = vmax.f32 %v5001, 0.0
      %v5352 = vmax.f32 %v5192, 0.0
      %v5353 = vmax.f32 %v5194, 0.0
      %v5354 = vmax.f32 %v5003, 0.0
      %v5355 = vmax.f32 %v5005, 0.0
      %v5356 = vmax.f32 %v5196, 0.0
      %v5357 = vmax.f32 %v5198, 0.0
      %v5358 = vmax.f32 %v5009, 0.0
      %v5359 = vmax.f32 %v5011, 0.0
      %v5360 = vmax.f32 %v5202, 0.0
      %v5361 = vmax.f32 %v5204, 0.0
      %v5362 = vmax.f32 %v5013, 0.0
      %v5363 = vmax.f32 %v5015, 0.0
      %v5364 = vmax.f32 %v5206, 0.0
      %v5365 = vmax.f32 %v5208, 0.0
      %v5366 = vmax.f32 %v5019, 0.0
      %v5367 = vmax.f32 %v5021, 0.0
      %v5368 = vmax.f32 %v5212, 0.0
      %v5369 = vmax.f32 %v5214, 0.0
      %v5370 = vmax.f32 %v5023, 0.0
      %v5371 = vmax.f32 %v5025, 0.0
      %v5372 = vmax.f32 %v5216, 0.0
      %v5373 = vmax.f32 %v5218, 0.0
      %v5374 = vmax.f32 %v5029, 0.0
      %v5375 = vmax.f32 %v5031, 0.0
      %v5376 = vmax.f32 %v5222, 0.0
      %v5377 = vmax.f32 %v5224, 0.0
      %v5378 = vmax.f32 %v5033, 0.0
      %v5379 = vmax.f32 %v5035, 0.0
      %v5380 = vmax.f32 %v5226, 0.0
      %v5381 = vmax.f32 %v5228, 0.0
      %v5382 = vmax.f32 %v5039, 0.0
      %v5383 = vmax.f32 %v5041, 0.0
      %v5384 = vmax.f32 %v5232, 0.0
      %v5385 = vmax.f32 %v5234, 0.0
      %v5386 = vmax.f32 %v5043, 0.0
      %v5387 = vmax.f32 %v5045, 0.0
      %v5388 = vmax.f32 %v5236, 0.0
      %v5389 = vmax.f32 %v5238, 0.0
      %v5390 = vmax.f32 %v5049, 0.0
      %v5391 = vmax.f32 %v5051, 0.0
      %v5392 = vmax.f32 %v5242, 0.0
      %v5393 = vmax.f32 %v5244, 0.0
      %v5394 = vmax.f32 %v5053, 0.0
      %v5395 = vmax.f32 %v5055, 0.0
      %v5396 = vmax.f32 %v5246, 0.0
      %v5397 = vmax.f32 %v5248, 0.0
      %v5398 = vmax.f32 %v5059, 0.0
      %v5399 = vmax.f32 %v5061, 0.0
      %v5400 = vmax.f32 %v5252, 0.0
      %v5401 = vmax.f32 %v5254, 0.0
      %v5402 = vmax.f32 %v5063, 0.0
      %v5403 = vmax.f32 %v5065, 0.0
      %v5404 = vmax.f32 %v5256, 0.0
      %v5405 = vmax.f32 %v5258, 0.0
      %v5406 = vmax.f32 %v5069, 0.0
      %v5407 = vmax.f32 %v5071, 0.0
      %v5408 = vmax.f32 %v5262, 0.0
      %v5409 = vmax.f32 %v5264, 0.0
      %v5410 = vmax.f32 %v5073, 0.0
      %v5411 = vmax.f32 %v5075, 0.0
      %v5412 = vmax.f32 %v5266, 0.0
      %v5413 = vmax.f32 %v5268, 0.0
      %v5414 = vmax.f32 %v5079, 0.0
      %v5415 = vmax.f32 %v5081, 0.0
      %v5416 = vmax.f32 %v5272, 0.0
      %v5417 = vmax.f32 %v5274, 0.0
      %v5418 = vmax.f32 %v5083, 0.0
      %v5419 = vmax.f32 %v5085, 0.0
      %v5420 = vmax.f32 %v5276, 0.0
      %v5421 = vmax.f32 %v5278, 0.0
      %v5422 = vmax.f32 %v5089, 0.0
      %v5423 = vmax.f32 %v5091, 0.0
      %v5424 = vmax.f32 %v5282, 0.0
      %v5425 = vmax.f32 %v5284, 0.0
      %v5426 = vmax.f32 %v5093, 0.0
      %v5427 = vmax.f32 %v5095, 0.0
      %v5428 = vmax.f32 %v5286, 0.0
      %v5429 = vmax.f32 %v5288, 0.0
      %v5430 = vmax.f32 %v5099, 0.0
      %v5431 = vmax.f32 %v5101, 0.0
      %v5432 = vmax.f32 %v5292, 0.0
      %v5433 = vmax.f32 %v5294, 0.0
      %v5434 = vmax.f32 %v5103, 0.0
      %v5435 = vmax.f32 %v5105, 0.0
      %v5436 = vmax.f32 %v5296, 0.0
      %v5437 = vmax.f32 %v5298, 0.0
      %v5438 = vmax.f32 %v5109, 0.0
      %v5439 = vmax.f32 %v5111, 0.0
      %v5440 = vmax.f32 %v5302, 0.0
      %v5441 = vmax.f32 %v5304, 0.0
      %v5442 = vmax.f32 %v5113, 0.0
      %v5443 = vmax.f32 %v5115, 0.0
      %v5444 = vmax.f32 %v5306, 0.0
      %v5445 = vmax.f32 %v5308, 0.0
      %v5446 = vmax.f32 %v5119, 0.0
      %v5447 = vmax.f32 %v5121, 0.0
      %v5448 = vmax.f32 %v5312, 0.0
      %v5449 = vmax.f32 %v5314, 0.0
      %v5450 = vmax.f32 %v5123, 0.0
      %v5451 = vmax.f32 %v5125, 0.0
      %v5452 = vmax.f32 %v5316, 0.0
      %v5453 = vmax.f32 %v5318, 0.0
      %v5454 = vmax.f32 %v5129, 0.0
      %v5455 = vmax.f32 %v5131, 0.0
      %v5456 = vmax.f32 %v5322, 0.0
      %v5457 = vmax.f32 %v5324, 0.0
      %v5458 = vmax.f32 %v5133, 0.0
      %v5459 = vmax.f32 %v5135, 0.0
      %v5460 = vmax.f32 %v5326, 0.0
      %v5461 = vmax.f32 %v5328, 0.0
      %v5462 = vmax.f32 %v5139, 0.0
      %v5463 = vmax.f32 %v5141, 0.0
      %v5464 = vmax.f32 %v5332, 0.0
      %v5465 = vmax.f32 %v5334, 0.0
      %v5466 = vmax.f32 %v5143, 0.0
      %v5467 = vmax.f32 %v5145, 0.0
      %v5468 = vmax.f32 %v5336, 0.0
      %v5469 = vmax.f32 %v5338, 0.0
      %v5470 = vmax.f32 %v5149, 0.0
      %v5471 = vmax.f32 %v5151, 0.0
      %v5472 = vmax.f32 %v5342, 0.0
      %v5473 = vmax.f32 %v5344, 0.0
      %v5474 = vmax.f32 %v5153, 0.0
      %v5475 = vmax.f32 %v5155, 0.0
      %v5476 = vmax.f32 %v5346, 0.0
      %v5477 = vmax.f32 %v5348, 0.0
      %v5478 = vpack.c.bf16 %v5354, %v5350
      %v5479 = vpack.c.bf16 %v5355, %v5351
      %v5480 = vpack.c.bf16 %v5356, %v5352
      %v5481 = vpack.c.bf16 %v5357, %v5353
      %v5482 = vpack.c.bf16 %v5362, %v5358
      %v5483 = vpack.c.bf16 %v5363, %v5359
      %v5484 = vpack.c.bf16 %v5364, %v5360
      %v5485 = vpack.c.bf16 %v5365, %v5361
      %v5486 = vpack.c.bf16 %v5370, %v5366
      %v5487 = vpack.c.bf16 %v5371, %v5367
      %v5488 = vpack.c.bf16 %v5372, %v5368
      %v5489 = vpack.c.bf16 %v5373, %v5369
      %v5490 = vpack.c.bf16 %v5378, %v5374
      %v5491 = vpack.c.bf16 %v5379, %v5375
      %v5492 = vpack.c.bf16 %v5380, %v5376
      %v5493 = vpack.c.bf16 %v5381, %v5377
      %v5494 = vpack.c.bf16 %v5386, %v5382
      %v5495 = vpack.c.bf16 %v5387, %v5383
      %v5496 = vpack.c.bf16 %v5388, %v5384
      %v5497 = vpack.c.bf16 %v5389, %v5385
      %v5498 = vpack.c.bf16 %v5394, %v5390
      %v5499 = vpack.c.bf16 %v5395, %v5391
      %v5500 = vpack.c.bf16 %v5396, %v5392
      %v5501 = vpack.c.bf16 %v5397, %v5393
      %v5502 = vpack.c.bf16 %v5402, %v5398
      %v5503 = vpack.c.bf16 %v5403, %v5399
      %v5504 = vpack.c.bf16 %v5404, %v5400
      %v5505 = vpack.c.bf16 %v5405, %v5401
      %v5506 = vpack.c.bf16 %v5410, %v5406
      %v5507 = vpack.c.bf16 %v5411, %v5407
      %v5508 = vpack.c.bf16 %v5412, %v5408
      %v5509 = vpack.c.bf16 %v5413, %v5409
      %v5510 = vpack.c.bf16 %v5418, %v5414
      %v5511 = vpack.c.bf16 %v5419, %v5415
      %v5512 = vpack.c.bf16 %v5420, %v5416
      %v5513 = vpack.c.bf16 %v5421, %v5417
      %v5514 = vpack.c.bf16 %v5426, %v5422
      %v5515 = vpack.c.bf16 %v5427, %v5423
      %v5516 = vpack.c.bf16 %v5428, %v5424
      %v5517 = vpack.c.bf16 %v5429, %v5425
      %v5518 = vpack.c.bf16 %v5434, %v5430
      %v5519 = vpack.c.bf16 %v5435, %v5431
      %v5520 = vpack.c.bf16 %v5436, %v5432
      %v5521 = vpack.c.bf16 %v5437, %v5433
      %v5522 = vpack.c.bf16 %v5442, %v5438
      %v5523 = vpack.c.bf16 %v5443, %v5439
      %v5524 = vpack.c.bf16 %v5444, %v5440
      %v5525 = vpack.c.bf16 %v5445, %v5441
      %v5526 = vpack.c.bf16 %v5450, %v5446
      %v5527 = vpack.c.bf16 %v5451, %v5447
      %v5528 = vpack.c.bf16 %v5452, %v5448
      %v5529 = vpack.c.bf16 %v5453, %v5449
      %v5530 = vpack.c.bf16 %v5458, %v5454
      %v5531 = vpack.c.bf16 %v5459, %v5455
      %v5532 = vpack.c.bf16 %v5460, %v5456
      %v5533 = vpack.c.bf16 %v5461, %v5457
      %v5534 = vpack.c.bf16 %v5466, %v5462
      %v5535 = vpack.c.bf16 %v5467, %v5463
      %v5536 = vpack.c.bf16 %v5468, %v5464
      %v5537 = vpack.c.bf16 %v5469, %v5465
      %v5538 = vpack.c.bf16 %v5474, %v5470
      %v5539 = vpack.c.bf16 %v5475, %v5471
      %v5540 = vpack.c.bf16 %v5476, %v5472
      %v5541 = vpack.c.bf16 %v5477, %v5473
      %v5542 = vld [vmem:[%s11] sm:$0xf]
      %v5543 = vld [vmem:[%s11 + $0x4] sm:$0xf]
      %v5544 = vld [vmem:[%s11 + $0x8] sm:$0xf]
      %v5545 = vld [vmem:[%s11 + $0xc] sm:$0xf]
      %v5546 = vld [vmem:[%s11 + $0x10] sm:$0xf]
      %v5547 = vld [vmem:[%s11 + $0x14] sm:$0xf]
      %v5548 = vld [vmem:[%s11 + $0x18] sm:$0xf]
      %v5549 = vld [vmem:[%s11 + $0x1c] sm:$0xf]
      %v5550 = vld [vmem:[%s11 + $0x20] sm:$0xf]
      %v5551 = vld [vmem:[%s11 + $0x24] sm:$0xf]
      %v5552 = vld [vmem:[%s11 + $0x28] sm:$0xf]
      %v5553 = vld [vmem:[%s11 + $0x2c] sm:$0xf]
      %v5554 = vld [vmem:[%s11 + $0x30] sm:$0xf]
      %v5555 = vld [vmem:[%s11 + $0x34] sm:$0xf]
      %v5556 = vld [vmem:[%s11 + $0x38] sm:$0xf]
      %v5557 = vld [vmem:[%s11 + $0x3c] sm:$0xf]
      %v5558 = vld [vmem:[%s11 + $0x40] sm:$0xf]
      %v5559 = vld [vmem:[%s11 + $0x44] sm:$0xf]
      %v5560 = vld [vmem:[%s11 + $0x48] sm:$0xf]
      %v5561 = vld [vmem:[%s11 + $0x4c] sm:$0xf]
      %v5562 = vld [vmem:[%s11 + $0x50] sm:$0xf]
      %v5563 = vld [vmem:[%s11 + $0x54] sm:$0xf]
      %v5564 = vld [vmem:[%s11 + $0x58] sm:$0xf]
      %v5565 = vld [vmem:[%s11 + $0x5c] sm:$0xf]
      %v5566 = vld [vmem:[%s11 + $0x60] sm:$0xf]
      %v5567 = vld [vmem:[%s11 + $0x64] sm:$0xf]
      %v5568 = vld [vmem:[%s11 + $0x68] sm:$0xf]
      %v5569 = vld [vmem:[%s11 + $0x6c] sm:$0xf]
      %v5570 = vld [vmem:[%s11 + $0x70] sm:$0xf]
      %v5571 = vld [vmem:[%s11 + $0x74] sm:$0xf]
      %v5572 = vld [vmem:[%s11 + $0x78] sm:$0xf]
      %v5573 = vld [vmem:[%s11 + $0x7c] sm:$0xf]
      %v5574 = vld [vmem:[%s12] sm:$0xff]
      %v5575 = vld [vmem:[%s12 + $0x8] sm:$0xff]
      %v5576 = vld [vmem:[%s12 + $0x10] sm:$0xff]
      %v5577 = vld [vmem:[%s12 + $0x18] sm:$0xff]
      %v5578 = vld [vmem:[%s12 + $0x20] sm:$0xff]
      %v5579 = vld [vmem:[%s12 + $0x28] sm:$0xff]
      %v5580 = vld [vmem:[%s12 + $0x30] sm:$0xff]
      %v5581 = vld [vmem:[%s12 + $0x38] sm:$0xff]
      %v5582 = vld [vmem:[%s12 + $0x40] sm:$0xff]
      %v5583 = vld [vmem:[%s12 + $0x48] sm:$0xff]
      %v5584 = vld [vmem:[%s12 + $0x50] sm:$0xff]
      %v5585 = vld [vmem:[%s12 + $0x58] sm:$0xff]
      %v5586 = vld [vmem:[%s12 + $0x60] sm:$0xff]
      %v5587 = vld [vmem:[%s12 + $0x68] sm:$0xff]
      %v5588 = vld [vmem:[%s12 + $0x70] sm:$0xff]
      %v5589 = vld [vmem:[%s12 + $0x78] sm:$0xff]
      %v5590 = vld [vmem:[%s12 + $0x80] sm:$0xff]
      %v5591 = vld [vmem:[%s12 + $0x88] sm:$0xff]
      %v5592 = vld [vmem:[%s12 + $0x90] sm:$0xff]
      %v5593 = vld [vmem:[%s12 + $0x98] sm:$0xff]
      %v5594 = vld [vmem:[%s12 + $0xa0] sm:$0xff]
      %v5595 = vld [vmem:[%s12 + $0xa8] sm:$0xff]
      %v5596 = vld [vmem:[%s12 + $0xb0] sm:$0xff]
      %v5597 = vld [vmem:[%s12 + $0xb8] sm:$0xff]
      %v5598 = vld [vmem:[%s12 + $0xc0] sm:$0xff]
      %v5599 = vld [vmem:[%s12 + $0xc8] sm:$0xff]
      %v5600 = vld [vmem:[%s12 + $0xd0] sm:$0xff]
      %v5601 = vld [vmem:[%s12 + $0xd8] sm:$0xff]
      %v5602 = vld [vmem:[%s12 + $0xe0] sm:$0xff]
      %v5603 = vld [vmem:[%s12 + $0xe8] sm:$0xff]
      %v5604 = vld [vmem:[%s12 + $0xf0] sm:$0xff]
      %v5605 = vld [vmem:[%s12 + $0xf8] sm:$0xff]
      %v5638 = vunpack.c.l.b16 %v5574
      %v5639 = vunpack.c.h.b16 %v5574
      %v5640 = vunpack.c.l.b16 %v5575
      %v5641 = vunpack.c.h.b16 %v5575
      %v5642 = vunpack.c.l.b16 %v5576
      %v5643 = vunpack.c.h.b16 %v5576
      %v5644 = vunpack.c.l.b16 %v5577
      %v5645 = vunpack.c.h.b16 %v5577
      %v5646 = vunpack.c.l.b16 %v5578
      %v5647 = vunpack.c.h.b16 %v5578
      %v5648 = vunpack.c.l.b16 %v5579
      %v5649 = vunpack.c.h.b16 %v5579
      %v5650 = vunpack.c.l.b16 %v5580
      %v5651 = vunpack.c.h.b16 %v5580
      %v5652 = vunpack.c.l.b16 %v5581
      %v5653 = vunpack.c.h.b16 %v5581
      %v5654 = vunpack.c.l.b16 %v5582
      %v5655 = vunpack.c.h.b16 %v5582
      %v5656 = vunpack.c.l.b16 %v5583
      %v5657 = vunpack.c.h.b16 %v5583
      %v5658 = vunpack.c.l.b16 %v5584
      %v5659 = vunpack.c.h.b16 %v5584
      %v5660 = vunpack.c.l.b16 %v5585
      %v5661 = vunpack.c.h.b16 %v5585
      %v5662 = vunpack.c.l.b16 %v5586
      %v5663 = vunpack.c.h.b16 %v5586
      %v5664 = vunpack.c.l.b16 %v5587
      %v5665 = vunpack.c.h.b16 %v5587
      %v5666 = vunpack.c.l.b16 %v5588
      %v5667 = vunpack.c.h.b16 %v5588
      %v5668 = vunpack.c.l.b16 %v5589
      %v5669 = vunpack.c.h.b16 %v5589
      %v5670 = vunpack.c.l.b16 %v5590
      %v5671 = vunpack.c.h.b16 %v5590
      %v5672 = vunpack.c.l.b16 %v5591
      %v5673 = vunpack.c.h.b16 %v5591
      %v5674 = vunpack.c.l.b16 %v5592
      %v5675 = vunpack.c.h.b16 %v5592
      %v5676 = vunpack.c.l.b16 %v5593
      %v5677 = vunpack.c.h.b16 %v5593
      %v5678 = vunpack.c.l.b16 %v5594
      %v5679 = vunpack.c.h.b16 %v5594
      %v5680 = vunpack.c.l.b16 %v5595
      %v5681 = vunpack.c.h.b16 %v5595
      %v5682 = vunpack.c.l.b16 %v5596
      %v5683 = vunpack.c.h.b16 %v5596
      %v5684 = vunpack.c.l.b16 %v5597
      %v5685 = vunpack.c.h.b16 %v5597
      %v5686 = vunpack.c.l.b16 %v5598
      %v5687 = vunpack.c.h.b16 %v5598
      %v5688 = vunpack.c.l.b16 %v5599
      %v5689 = vunpack.c.h.b16 %v5599
      %v5690 = vunpack.c.l.b16 %v5600
      %v5691 = vunpack.c.h.b16 %v5600
      %v5692 = vunpack.c.l.b16 %v5601
      %v5693 = vunpack.c.h.b16 %v5601
      %v5694 = vunpack.c.l.b16 %v5602
      %v5695 = vunpack.c.h.b16 %v5602
      %v5696 = vunpack.c.l.b16 %v5603
      %v5697 = vunpack.c.h.b16 %v5603
      %v5698 = vunpack.c.l.b16 %v5604
      %v5699 = vunpack.c.h.b16 %v5604
      %v5700 = vunpack.c.l.b16 %v5605
      %v5701 = vunpack.c.h.b16 %v5605
      %v5702 = vpack.c.b16 %v5640, %v5638
      %v5703 = vpack.c.b16 %v5641, %v5639
      %v5704 = vpack.c.b16 %v5644, %v5642
      %v5705 = vpack.c.b16 %v5645, %v5643
      %v5706 = vpack.c.b16 %v5648, %v5646
      %v5707 = vpack.c.b16 %v5649, %v5647
      %v5708 = vpack.c.b16 %v5652, %v5650
      %v5709 = vpack.c.b16 %v5653, %v5651
      %v5710 = vpack.c.b16 %v5656, %v5654
      %v5711 = vpack.c.b16 %v5657, %v5655
      %v5712 = vpack.c.b16 %v5660, %v5658
      %v5713 = vpack.c.b16 %v5661, %v5659
      %v5714 = vpack.c.b16 %v5664, %v5662
      %v5715 = vpack.c.b16 %v5665, %v5663
      %v5716 = vpack.c.b16 %v5668, %v5666
      %v5717 = vpack.c.b16 %v5669, %v5667
      %v5718 = vpack.c.b16 %v5672, %v5670
      %v5719 = vpack.c.b16 %v5673, %v5671
      %v5720 = vpack.c.b16 %v5676, %v5674
      %v5721 = vpack.c.b16 %v5677, %v5675
      %v5722 = vpack.c.b16 %v5680, %v5678
      %v5723 = vpack.c.b16 %v5681, %v5679
      %v5724 = vpack.c.b16 %v5684, %v5682
      %v5725 = vpack.c.b16 %v5685, %v5683
      %v5726 = vpack.c.b16 %v5688, %v5686
      %v5727 = vpack.c.b16 %v5689, %v5687
      %v5728 = vpack.c.b16 %v5692, %v5690
      %v5729 = vpack.c.b16 %v5693, %v5691
      %v5730 = vpack.c.b16 %v5696, %v5694
      %v5731 = vpack.c.b16 %v5697, %v5695
      %v5732 = vpack.c.b16 %v5700, %v5698
      %v5733 = vpack.c.b16 %v5701, %v5699
      %5766 = vmatprep.subr.bf16.mxu0 %v5507
      %5767 = vmatpush1.bf16.msra.mxu0 %v5506
      %5768 = vmatprep.subr.bf16.mxu0 %v5503
      %5769 = vmatpush1.bf16.msra.mxu0 %v5502
      %5770 = vmatprep.subr.bf16.mxu0 %v5499
      %5771 = vmatpush1.bf16.msra.mxu0 %v5498
      %5772 = vmatprep.subr.bf16.mxu0 %v5495
      %5773 = vmatpush1.bf16.msra.mxu0 %v5494
      %5774 = vmatprep.subr.bf16.mxu0 %v5491
      %5775 = vmatpush1.bf16.msra.mxu0 %v5490
      %5776 = vmatprep.subr.bf16.mxu0 %v5487
      %5777 = vmatpush1.bf16.msra.mxu0 %v5486
      %5778 = vmatprep.subr.bf16.mxu0 %v5483
      %5779 = vmatpush1.bf16.msra.mxu0 %v5482
      %5780 = vmatprep.subr.bf16.mxu0 %v5479
      %5781 = vmatpush1.bf16.msra.mxu0 %v5478
      %5782 = vmatprep.subr.bf16.mxu0 %v5539
      %5783 = vmatpush2.bf16.msra.mxu0 %v5538
      %5784 = vmatprep.subr.bf16.mxu0 %v5535
      %5785 = vmatpush2.bf16.msra.mxu0 %v5534
      %5786 = vmatprep.subr.bf16.mxu0 %v5531
      %5787 = vmatpush2.bf16.msra.mxu0 %v5530
      %5788 = vmatprep.subr.bf16.mxu0 %v5527
      %5789 = vmatpush2.bf16.msra.mxu0 %v5526
      %5790 = vmatprep.subr.bf16.mxu0 %v5523
      %5791 = vmatpush2.bf16.msra.mxu0 %v5522
      %5792 = vmatprep.subr.bf16.mxu0 %v5519
      %5793 = vmatpush2.bf16.msra.mxu0 %v5518
      %5794 = vmatprep.subr.bf16.mxu0 %v5515
      %5795 = vmatpush2.bf16.msra.mxu0 %v5514
      %5796 = vmatprep.subr.bf16.mxu0 %v5511
      %5797 = vmatpush2.bf16.msra.mxu0 %v5510
      %5798 = vmatprep.mubr.bf16.mxu0 %v5703
      %5799 = vmatmul.mubr.bf16.gmra.mxu0 %v5702
      %v5800 = vpop.f32.mrf.mxu0
      %v5801 = vadd.f32 0.0, %v5800
      %v5802 = vpop.f32.mrf.mxu0
      %v5803 = vadd.f32 0.0, %v5802
      %v5804 = vpop.f32.mrf.mxu0
      %v5805 = vadd.f32 0.0, %v5804
      %v5806 = vpop.f32.mrf.mxu0
      %v5807 = vadd.f32 0.0, %v5806
      %5808 = vmatprep.mubr.bf16.mxu0 %v5705
      %5809 = vmatmul.mubr.bf16.gmra.mxu0 %v5704
      %v5810 = vpop.f32.mrf.mxu0
      %v5811 = vadd.f32 0.0, %v5810
      %v5812 = vpop.f32.mrf.mxu0
      %v5813 = vadd.f32 0.0, %v5812
      %v5814 = vpop.f32.mrf.mxu0
      %v5815 = vadd.f32 0.0, %v5814
      %v5816 = vpop.f32.mrf.mxu0
      %v5817 = vadd.f32 0.0, %v5816
      %5818 = vmatprep.mubr.bf16.mxu0 %v5707
      %5819 = vmatmul.mubr.bf16.gmra.mxu0 %v5706
      %v5820 = vpop.f32.mrf.mxu0
      %v5821 = vadd.f32 0.0, %v5820
      %v5822 = vpop.f32.mrf.mxu0
      %v5823 = vadd.f32 0.0, %v5822
      %v5824 = vpop.f32.mrf.mxu0
      %v5825 = vadd.f32 0.0, %v5824
      %v5826 = vpop.f32.mrf.mxu0
      %v5827 = vadd.f32 0.0, %v5826
      %5828 = vmatprep.mubr.bf16.mxu0 %v5709
      %5829 = vmatmul.mubr.bf16.gmra.mxu0 %v5708
      %v5830 = vpop.f32.mrf.mxu0
      %v5831 = vadd.f32 0.0, %v5830
      %v5832 = vpop.f32.mrf.mxu0
      %v5833 = vadd.f32 0.0, %v5832
      %v5834 = vpop.f32.mrf.mxu0
      %v5835 = vadd.f32 0.0, %v5834
      %v5836 = vpop.f32.mrf.mxu0
      %v5837 = vadd.f32 0.0, %v5836
      %5838 = vmatprep.mubr.bf16.mxu0 %v5711
      %5839 = vmatmul.mubr.bf16.gmra.mxu0 %v5710
      %v5840 = vpop.f32.mrf.mxu0
      %v5841 = vadd.f32 0.0, %v5840
      %v5842 = vpop.f32.mrf.mxu0
      %v5843 = vadd.f32 0.0, %v5842
      %v5844 = vpop.f32.mrf.mxu0
      %v5845 = vadd.f32 0.0, %v5844
      %v5846 = vpop.f32.mrf.mxu0
      %v5847 = vadd.f32 0.0, %v5846
      %5848 = vmatprep.mubr.bf16.mxu0 %v5713
      %5849 = vmatmul.mubr.bf16.gmra.mxu0 %v5712
      %v5850 = vpop.f32.mrf.mxu0
      %v5851 = vadd.f32 0.0, %v5850
      %v5852 = vpop.f32.mrf.mxu0
      %v5853 = vadd.f32 0.0, %v5852
      %v5854 = vpop.f32.mrf.mxu0
      %v5855 = vadd.f32 0.0, %v5854
      %v5856 = vpop.f32.mrf.mxu0
      %v5857 = vadd.f32 0.0, %v5856
      %5858 = vmatprep.mubr.bf16.mxu0 %v5715
      %5859 = vmatmul.mubr.bf16.gmra.mxu0 %v5714
      %v5860 = vpop.f32.mrf.mxu0
      %v5861 = vadd.f32 0.0, %v5860
      %v5862 = vpop.f32.mrf.mxu0
      %v5863 = vadd.f32 0.0, %v5862
      %v5864 = vpop.f32.mrf.mxu0
      %v5865 = vadd.f32 0.0, %v5864
      %v5866 = vpop.f32.mrf.mxu0
      %v5867 = vadd.f32 0.0, %v5866
      %5868 = vmatprep.mubr.bf16.mxu0 %v5717
      %5869 = vmatmul.mubr.bf16.gmra.mxu0 %v5716
      %v5870 = vpop.f32.mrf.mxu0
      %v5871 = vadd.f32 0.0, %v5870
      %v5872 = vpop.f32.mrf.mxu0
      %v5873 = vadd.f32 0.0, %v5872
      %v5874 = vpop.f32.mrf.mxu0
      %v5875 = vadd.f32 0.0, %v5874
      %v5876 = vpop.f32.mrf.mxu0
      %v5877 = vadd.f32 0.0, %v5876
      %5878 = vmatprep.mubr.bf16.mxu0 %v5719
      %5879 = vmatmul.mubr.bf16.gmra.mxu0 %v5718
      %v5880 = vpop.f32.mrf.mxu0
      %v5881 = vadd.f32 0.0, %v5880
      %v5882 = vpop.f32.mrf.mxu0
      %v5883 = vadd.f32 0.0, %v5882
      %v5884 = vpop.f32.mrf.mxu0
      %v5885 = vadd.f32 0.0, %v5884
      %v5886 = vpop.f32.mrf.mxu0
      %v5887 = vadd.f32 0.0, %v5886
      %5888 = vmatprep.mubr.bf16.mxu0 %v5721
      %5889 = vmatmul.mubr.bf16.gmra.mxu0 %v5720
      %v5890 = vpop.f32.mrf.mxu0
      %v5891 = vadd.f32 0.0, %v5890
      %v5892 = vpop.f32.mrf.mxu0
      %v5893 = vadd.f32 0.0, %v5892
      %v5894 = vpop.f32.mrf.mxu0
      %v5895 = vadd.f32 0.0, %v5894
      %v5896 = vpop.f32.mrf.mxu0
      %v5897 = vadd.f32 0.0, %v5896
      %5898 = vmatprep.mubr.bf16.mxu0 %v5723
      %5899 = vmatmul.mubr.bf16.gmra.mxu0 %v5722
      %v5900 = vpop.f32.mrf.mxu0
      %v5901 = vadd.f32 0.0, %v5900
      %v5902 = vpop.f32.mrf.mxu0
      %v5903 = vadd.f32 0.0, %v5902
      %v5904 = vpop.f32.mrf.mxu0
      %v5905 = vadd.f32 0.0, %v5904
      %v5906 = vpop.f32.mrf.mxu0
      %v5907 = vadd.f32 0.0, %v5906
      %5908 = vmatprep.mubr.bf16.mxu0 %v5725
      %5909 = vmatmul.mubr.bf16.gmra.mxu0 %v5724
      %v5910 = vpop.f32.mrf.mxu0
      %v5911 = vadd.f32 0.0, %v5910
      %v5912 = vpop.f32.mrf.mxu0
      %v5913 = vadd.f32 0.0, %v5912
      %v5914 = vpop.f32.mrf.mxu0
      %v5915 = vadd.f32 0.0, %v5914
      %v5916 = vpop.f32.mrf.mxu0
      %v5917 = vadd.f32 0.0, %v5916
      %5918 = vmatprep.mubr.bf16.mxu0 %v5727
      %5919 = vmatmul.mubr.bf16.gmra.mxu0 %v5726
      %v5920 = vpop.f32.mrf.mxu0
      %v5921 = vadd.f32 0.0, %v5920
      %v5922 = vpop.f32.mrf.mxu0
      %v5923 = vadd.f32 0.0, %v5922
      %v5924 = vpop.f32.mrf.mxu0
      %v5925 = vadd.f32 0.0, %v5924
      %v5926 = vpop.f32.mrf.mxu0
      %v5927 = vadd.f32 0.0, %v5926
      %5928 = vmatprep.mubr.bf16.mxu0 %v5729
      %5929 = vmatmul.mubr.bf16.gmra.mxu0 %v5728
      %v5930 = vpop.f32.mrf.mxu0
      %v5931 = vadd.f32 0.0, %v5930
      %v5932 = vpop.f32.mrf.mxu0
      %v5933 = vadd.f32 0.0, %v5932
      %v5934 = vpop.f32.mrf.mxu0
      %v5935 = vadd.f32 0.0, %v5934
      %v5936 = vpop.f32.mrf.mxu0
      %v5937 = vadd.f32 0.0, %v5936
      %5938 = vmatprep.mubr.bf16.mxu0 %v5731
      %5939 = vmatmul.mubr.bf16.gmra.mxu0 %v5730
      %v5940 = vpop.f32.mrf.mxu0
      %v5941 = vadd.f32 0.0, %v5940
      %v5942 = vpop.f32.mrf.mxu0
      %v5943 = vadd.f32 0.0, %v5942
      %v5944 = vpop.f32.mrf.mxu0
      %v5945 = vadd.f32 0.0, %v5944
      %v5946 = vpop.f32.mrf.mxu0
      %v5947 = vadd.f32 0.0, %v5946
      %5948 = vmatprep.mubr.bf16.mxu0 %v5733
      %5949 = vmatmul.mubr.bf16.gmra.mxu0 %v5732
      %v5950 = vpop.f32.mrf.mxu0
      %v5951 = vadd.f32 0.0, %v5950
      %v5952 = vpop.f32.mrf.mxu0
      %v5953 = vadd.f32 0.0, %v5952
      %v5954 = vpop.f32.mrf.mxu0
      %v5955 = vadd.f32 0.0, %v5954
      %v5956 = vpop.f32.mrf.mxu0
      %v5957 = vadd.f32 0.0, %v5956
      %5958 = vdwg.mxu0
      %5959 = vmatprep.subr.bf16.mxu0 %v5509
      %5960 = vmatpush1.bf16.msra.mxu0 %v5508
      %5961 = vmatprep.subr.bf16.mxu0 %v5505
      %5962 = vmatpush1.bf16.msra.mxu0 %v5504
      %5963 = vmatprep.subr.bf16.mxu0 %v5501
      %5964 = vmatpush1.bf16.msra.mxu0 %v5500
      %5965 = vmatprep.subr.bf16.mxu0 %v5497
      %5966 = vmatpush1.bf16.msra.mxu0 %v5496
      %5967 = vmatprep.subr.bf16.mxu0 %v5493
      %5968 = vmatpush1.bf16.msra.mxu0 %v5492
      %5969 = vmatprep.subr.bf16.mxu0 %v5489
      %5970 = vmatpush1.bf16.msra.mxu0 %v5488
      %5971 = vmatprep.subr.bf16.mxu0 %v5485
      %5972 = vmatpush1.bf16.msra.mxu0 %v5484
      %5973 = vmatprep.subr.bf16.mxu0 %v5481
      %5974 = vmatpush1.bf16.msra.mxu0 %v5480
      %5975 = vmatprep.subr.bf16.mxu0 %v5541
      %5976 = vmatpush2.bf16.msra.mxu0 %v5540
      %5977 = vmatprep.subr.bf16.mxu0 %v5537
      %5978 = vmatpush2.bf16.msra.mxu0 %v5536
      %5979 = vmatprep.subr.bf16.mxu0 %v5533
      %5980 = vmatpush2.bf16.msra.mxu0 %v5532
      %5981 = vmatprep.subr.bf16.mxu0 %v5529
      %5982 = vmatpush2.bf16.msra.mxu0 %v5528
      %5983 = vmatprep.subr.bf16.mxu0 %v5525
      %5984 = vmatpush2.bf16.msra.mxu0 %v5524
      %5985 = vmatprep.subr.bf16.mxu0 %v5521
      %5986 = vmatpush2.bf16.msra.mxu0 %v5520
      %5987 = vmatprep.subr.bf16.mxu0 %v5517
      %5988 = vmatpush2.bf16.msra.mxu0 %v5516
      %5989 = vmatprep.subr.bf16.mxu0 %v5513
      %5990 = vmatpush2.bf16.msra.mxu0 %v5512
      %5991 = vmatprep.mubr.bf16.mxu0 %v5703
      %5992 = vmatmul.mubr.bf16.gmra.mxu0 %v5702
      %v5993 = vpop.f32.mrf.mxu0
      %v5994 = vadd.f32 0.0, %v5993
      %v5995 = vpop.f32.mrf.mxu0
      %v5996 = vadd.f32 0.0, %v5995
      %v5997 = vpop.f32.mrf.mxu0
      %v5998 = vadd.f32 0.0, %v5997
      %v5999 = vpop.f32.mrf.mxu0
      %v6000 = vadd.f32 0.0, %v5999
      %6001 = vmatprep.mubr.bf16.mxu0 %v5705
      %6002 = vmatmul.mubr.bf16.gmra.mxu0 %v5704
      %v6003 = vpop.f32.mrf.mxu0
      %v6004 = vadd.f32 0.0, %v6003
      %v6005 = vpop.f32.mrf.mxu0
      %v6006 = vadd.f32 0.0, %v6005
      %v6007 = vpop.f32.mrf.mxu0
      %v6008 = vadd.f32 0.0, %v6007
      %v6009 = vpop.f32.mrf.mxu0
      %v6010 = vadd.f32 0.0, %v6009
      %6011 = vmatprep.mubr.bf16.mxu0 %v5707
      %6012 = vmatmul.mubr.bf16.gmra.mxu0 %v5706
      %v6013 = vpop.f32.mrf.mxu0
      %v6014 = vadd.f32 0.0, %v6013
      %v6015 = vpop.f32.mrf.mxu0
      %v6016 = vadd.f32 0.0, %v6015
      %v6017 = vpop.f32.mrf.mxu0
      %v6018 = vadd.f32 0.0, %v6017
      %v6019 = vpop.f32.mrf.mxu0
      %v6020 = vadd.f32 0.0, %v6019
      %6021 = vmatprep.mubr.bf16.mxu0 %v5709
      %6022 = vmatmul.mubr.bf16.gmra.mxu0 %v5708
      %v6023 = vpop.f32.mrf.mxu0
      %v6024 = vadd.f32 0.0, %v6023
      %v6025 = vpop.f32.mrf.mxu0
      %v6026 = vadd.f32 0.0, %v6025
      %v6027 = vpop.f32.mrf.mxu0
      %v6028 = vadd.f32 0.0, %v6027
      %v6029 = vpop.f32.mrf.mxu0
      %v6030 = vadd.f32 0.0, %v6029
      %6031 = vmatprep.mubr.bf16.mxu0 %v5711
      %6032 = vmatmul.mubr.bf16.gmra.mxu0 %v5710
      %v6033 = vpop.f32.mrf.mxu0
      %v6034 = vadd.f32 0.0, %v6033
      %v6035 = vpop.f32.mrf.mxu0
      %v6036 = vadd.f32 0.0, %v6035
      %v6037 = vpop.f32.mrf.mxu0
      %v6038 = vadd.f32 0.0, %v6037
      %v6039 = vpop.f32.mrf.mxu0
      %v6040 = vadd.f32 0.0, %v6039
      %6041 = vmatprep.mubr.bf16.mxu0 %v5713
      %6042 = vmatmul.mubr.bf16.gmra.mxu0 %v5712
      %v6043 = vpop.f32.mrf.mxu0
      %v6044 = vadd.f32 0.0, %v6043
      %v6045 = vpop.f32.mrf.mxu0
      %v6046 = vadd.f32 0.0, %v6045
      %v6047 = vpop.f32.mrf.mxu0
      %v6048 = vadd.f32 0.0, %v6047
      %v6049 = vpop.f32.mrf.mxu0
      %v6050 = vadd.f32 0.0, %v6049
      %6051 = vmatprep.mubr.bf16.mxu0 %v5715
      %6052 = vmatmul.mubr.bf16.gmra.mxu0 %v5714
      %v6053 = vpop.f32.mrf.mxu0
      %v6054 = vadd.f32 0.0, %v6053
      %v6055 = vpop.f32.mrf.mxu0
      %v6056 = vadd.f32 0.0, %v6055
      %v6057 = vpop.f32.mrf.mxu0
      %v6058 = vadd.f32 0.0, %v6057
      %v6059 = vpop.f32.mrf.mxu0
      %v6060 = vadd.f32 0.0, %v6059
      %6061 = vmatprep.mubr.bf16.mxu0 %v5717
      %6062 = vmatmul.mubr.bf16.gmra.mxu0 %v5716
      %v6063 = vpop.f32.mrf.mxu0
      %v6064 = vadd.f32 0.0, %v6063
      %v6065 = vpop.f32.mrf.mxu0
      %v6066 = vadd.f32 0.0, %v6065
      %v6067 = vpop.f32.mrf.mxu0
      %v6068 = vadd.f32 0.0, %v6067
      %v6069 = vpop.f32.mrf.mxu0
      %v6070 = vadd.f32 0.0, %v6069
      %6071 = vmatprep.mubr.bf16.mxu0 %v5719
      %6072 = vmatmul.mubr.bf16.gmra.mxu0 %v5718
      %v6073 = vpop.f32.mrf.mxu0
      %v6074 = vadd.f32 0.0, %v6073
      %v6075 = vpop.f32.mrf.mxu0
      %v6076 = vadd.f32 0.0, %v6075
      %v6077 = vpop.f32.mrf.mxu0
      %v6078 = vadd.f32 0.0, %v6077
      %v6079 = vpop.f32.mrf.mxu0
      %v6080 = vadd.f32 0.0, %v6079
      %6081 = vmatprep.mubr.bf16.mxu0 %v5721
      %6082 = vmatmul.mubr.bf16.gmra.mxu0 %v5720
      %v6083 = vpop.f32.mrf.mxu0
      %v6084 = vadd.f32 0.0, %v6083
      %v6085 = vpop.f32.mrf.mxu0
      %v6086 = vadd.f32 0.0, %v6085
      %v6087 = vpop.f32.mrf.mxu0
      %v6088 = vadd.f32 0.0, %v6087
      %v6089 = vpop.f32.mrf.mxu0
      %v6090 = vadd.f32 0.0, %v6089
      %6091 = vmatprep.mubr.bf16.mxu0 %v5723
      %6092 = vmatmul.mubr.bf16.gmra.mxu0 %v5722
      %v6093 = vpop.f32.mrf.mxu0
      %v6094 = vadd.f32 0.0, %v6093
      %v6095 = vpop.f32.mrf.mxu0
      %v6096 = vadd.f32 0.0, %v6095
      %v6097 = vpop.f32.mrf.mxu0
      %v6098 = vadd.f32 0.0, %v6097
      %v6099 = vpop.f32.mrf.mxu0
      %v6100 = vadd.f32 0.0, %v6099
      %6101 = vmatprep.mubr.bf16.mxu0 %v5725
      %6102 = vmatmul.mubr.bf16.gmra.mxu0 %v5724
      %v6103 = vpop.f32.mrf.mxu0
      %v6104 = vadd.f32 0.0, %v6103
      %v6105 = vpop.f32.mrf.mxu0
      %v6106 = vadd.f32 0.0, %v6105
      %v6107 = vpop.f32.mrf.mxu0
      %v6108 = vadd.f32 0.0, %v6107
      %v6109 = vpop.f32.mrf.mxu0
      %v6110 = vadd.f32 0.0, %v6109
      %6111 = vmatprep.mubr.bf16.mxu0 %v5727
      %6112 = vmatmul.mubr.bf16.gmra.mxu0 %v5726
      %v6113 = vpop.f32.mrf.mxu0
      %v6114 = vadd.f32 0.0, %v6113
      %v6115 = vpop.f32.mrf.mxu0
      %v6116 = vadd.f32 0.0, %v6115
      %v6117 = vpop.f32.mrf.mxu0
      %v6118 = vadd.f32 0.0, %v6117
      %v6119 = vpop.f32.mrf.mxu0
      %v6120 = vadd.f32 0.0, %v6119
      %6121 = vmatprep.mubr.bf16.mxu0 %v5729
      %6122 = vmatmul.mubr.bf16.gmra.mxu0 %v5728
      %v6123 = vpop.f32.mrf.mxu0
      %v6124 = vadd.f32 0.0, %v6123
      %v6125 = vpop.f32.mrf.mxu0
      %v6126 = vadd.f32 0.0, %v6125
      %v6127 = vpop.f32.mrf.mxu0
      %v6128 = vadd.f32 0.0, %v6127
      %v6129 = vpop.f32.mrf.mxu0
      %v6130 = vadd.f32 0.0, %v6129
      %6131 = vmatprep.mubr.bf16.mxu0 %v5731
      %6132 = vmatmul.mubr.bf16.gmra.mxu0 %v5730
      %v6133 = vpop.f32.mrf.mxu0
      %v6134 = vadd.f32 0.0, %v6133
      %v6135 = vpop.f32.mrf.mxu0
      %v6136 = vadd.f32 0.0, %v6135
      %v6137 = vpop.f32.mrf.mxu0
      %v6138 = vadd.f32 0.0, %v6137
      %v6139 = vpop.f32.mrf.mxu0
      %v6140 = vadd.f32 0.0, %v6139
      %6141 = vmatprep.mubr.bf16.mxu0 %v5733
      %6142 = vmatmul.mubr.bf16.gmra.mxu0 %v5732
      %v6143 = vpop.f32.mrf.mxu0
      %v6144 = vadd.f32 0.0, %v6143
      %v6145 = vpop.f32.mrf.mxu0
      %v6146 = vadd.f32 0.0, %v6145
      %v6147 = vpop.f32.mrf.mxu0
      %v6148 = vadd.f32 0.0, %v6147
      %v6149 = vpop.f32.mrf.mxu0
      %v6150 = vadd.f32 0.0, %v6149
      %6151 = vdwg.mxu0
      %v6184 = vunpack.c.l.b16 %v5542
      %v6185 = vunpack.c.l.b16 %v5543
      %v6186 = vunpack.c.l.b16 %v5544
      %v6187 = vunpack.c.l.b16 %v5545
      %v6188 = vunpack.c.l.b16 %v5546
      %v6189 = vunpack.c.l.b16 %v5547
      %v6190 = vunpack.c.l.b16 %v5548
      %v6191 = vunpack.c.l.b16 %v5549
      %v6192 = vunpack.c.l.b16 %v5550
      %v6193 = vunpack.c.l.b16 %v5551
      %v6194 = vunpack.c.l.b16 %v5552
      %v6195 = vunpack.c.l.b16 %v5553
      %v6196 = vunpack.c.l.b16 %v5554
      %v6197 = vunpack.c.l.b16 %v5555
      %v6198 = vunpack.c.l.b16 %v5556
      %v6199 = vunpack.c.l.b16 %v5557
      %v6200 = vunpack.c.l.b16 %v5558
      %v6201 = vunpack.c.l.b16 %v5559
      %v6202 = vunpack.c.l.b16 %v5560
      %v6203 = vunpack.c.l.b16 %v5561
      %v6204 = vunpack.c.l.b16 %v5562
      %v6205 = vunpack.c.l.b16 %v5563
      %v6206 = vunpack.c.l.b16 %v5564
      %v6207 = vunpack.c.l.b16 %v5565
      %v6208 = vunpack.c.l.b16 %v5566
      %v6209 = vunpack.c.l.b16 %v5567
      %v6210 = vunpack.c.l.b16 %v5568
      %v6211 = vunpack.c.l.b16 %v5569
      %v6212 = vunpack.c.l.b16 %v5570
      %v6213 = vunpack.c.l.b16 %v5571
      %v6214 = vunpack.c.l.b16 %v5572
      %v6215 = vunpack.c.l.b16 %v5573
      %v6216 = vpack.c.b16 %v6185, %v6184
      %v6217 = vpack.c.b16 %v6187, %v6186
      %v6218 = vpack.c.b16 %v6189, %v6188
      %v6219 = vpack.c.b16 %v6191, %v6190
      %v6220 = vpack.c.b16 %v6193, %v6192
      %v6221 = vpack.c.b16 %v6195, %v6194
      %v6222 = vpack.c.b16 %v6197, %v6196
      %v6223 = vpack.c.b16 %v6199, %v6198
      %v6224 = vpack.c.b16 %v6201, %v6200
      %v6225 = vpack.c.b16 %v6203, %v6202
      %v6226 = vpack.c.b16 %v6205, %v6204
      %v6227 = vpack.c.b16 %v6207, %v6206
      %v6228 = vpack.c.b16 %v6209, %v6208
      %v6229 = vpack.c.b16 %v6211, %v6210
      %v6230 = vpack.c.b16 %v6213, %v6212
      %v6231 = vpack.c.b16 %v6215, %v6214
      %v6233 = vsel %vm1054, %v6216, 0
      %v6236 = vsel %vm1054, %v6217, 0
      %v6239 = vsel %vm1054, %v6218, 0
      %v6242 = vsel %vm1054, %v6219, 0
      %v6245 = vsel %vm1054, %v6220, 0
      %v6248 = vsel %vm1054, %v6221, 0
      %v6251 = vsel %vm1054, %v6222, 0
      %v6254 = vsel %vm1054, %v6223, 0
      %v6257 = vsel %vm1054, %v6224, 0
      %v6260 = vsel %vm1054, %v6225, 0
      %v6263 = vsel %vm1054, %v6226, 0
      %v6266 = vsel %vm1054, %v6227, 0
      %v6269 = vsel %vm1054, %v6228, 0
      %v6272 = vsel %vm1054, %v6229, 0
      %v6275 = vsel %vm1054, %v6230, 0
      %v6278 = vsel %vm1054, %v6231, 0
      %6280 = vmatprep.subr.bf16.mxu0 0
      %6281 = vmatpush1.bf16.msra.mxu0 0
      %6282 = vmatprep.subr.bf16.mxu0 %v1108
      %6283 = vmatpush1.bf16.msra.mxu0 %v1105
      %6284 = vmatprep.subr.bf16.mxu0 %v743
      %6285 = vmatpush1.bf16.msra.mxu0 %v742
      %6286 = vmatprep.subr.bf16.mxu0 %v739
      %6287 = vmatpush1.bf16.msra.mxu0 %v738
      %6288 = vmatprep.subr.bf16.mxu0 %v735
      %6289 = vmatpush1.bf16.msra.mxu0 %v734
      %6290 = vmatprep.subr.bf16.mxu0 %v731
      %6291 = vmatpush1.bf16.msra.mxu0 %v730
      %6292 = vmatprep.subr.bf16.mxu0 %v727
      %6293 = vmatpush1.bf16.msra.mxu0 %v726
      %6294 = vmatprep.subr.bf16.mxu0 %v723
      %6295 = vmatpush1.bf16.msra.mxu0 %v722
      %6296 = vmatprep.subr.bf16.mxu0 0
      %6297 = vmatpush2.bf16.msra.mxu0 0
      %6298 = vmatprep.subr.bf16.mxu0 0
      %6299 = vmatpush2.bf16.msra.mxu0 0
      %6300 = vmatprep.subr.bf16.mxu0 0
      %6301 = vmatpush2.bf16.msra.mxu0 0
      %6302 = vmatprep.subr.bf16.mxu0 0
      %6303 = vmatpush2.bf16.msra.mxu0 0
      %6304 = vmatprep.subr.bf16.mxu0 0
      %6305 = vmatpush2.bf16.msra.mxu0 0
      %6306 = vmatprep.subr.bf16.mxu0 0
      %6307 = vmatpush2.bf16.msra.mxu0 0
      %6308 = vmatprep.subr.bf16.mxu0 0
      %6309 = vmatpush2.bf16.msra.mxu0 0
      %6310 = vmatprep.subr.bf16.mxu0 0
      %6311 = vmatpush2.bf16.msra.mxu0 0
      %6312 = vmatprep.mubr.bf16.mxu0 0
      %6313 = vmatmul.mubr.bf16.gmra.mxu0 %v6233
      %v6314 = vpop.f32.mrf.mxu0
      %v6315 = vadd.f32 %v5801, %v6314
      %v6316 = vpop.f32.mrf.mxu0
      %v6317 = vadd.f32 %v5803, %v6316
      %v6318 = vpop.f32.mrf.mxu0
      %v6319 = vadd.f32 %v5805, %v6318
      %v6320 = vpop.f32.mrf.mxu0
      %v6321 = vadd.f32 %v5807, %v6320
      %6322 = vmatprep.mubr.bf16.mxu0 0
      %6323 = vmatmul.mubr.bf16.gmra.mxu0 %v6236
      %v6324 = vpop.f32.mrf.mxu0
      %v6325 = vadd.f32 %v5811, %v6324
      %v6326 = vpop.f32.mrf.mxu0
      %v6327 = vadd.f32 %v5813, %v6326
      %v6328 = vpop.f32.mrf.mxu0
      %v6329 = vadd.f32 %v5815, %v6328
      %v6330 = vpop.f32.mrf.mxu0
      %v6331 = vadd.f32 %v5817, %v6330
      %6332 = vmatprep.mubr.bf16.mxu0 0
      %6333 = vmatmul.mubr.bf16.gmra.mxu0 %v6239
      %v6334 = vpop.f32.mrf.mxu0
      %v6335 = vadd.f32 %v5821, %v6334
      %v6336 = vpop.f32.mrf.mxu0
      %v6337 = vadd.f32 %v5823, %v6336
      %v6338 = vpop.f32.mrf.mxu0
      %v6339 = vadd.f32 %v5825, %v6338
      %v6340 = vpop.f32.mrf.mxu0
      %v6341 = vadd.f32 %v5827, %v6340
      %6342 = vmatprep.mubr.bf16.mxu0 0
      %6343 = vmatmul.mubr.bf16.gmra.mxu0 %v6242
      %v6344 = vpop.f32.mrf.mxu0
      %v6345 = vadd.f32 %v5831, %v6344
      %v6346 = vpop.f32.mrf.mxu0
      %v6347 = vadd.f32 %v5833, %v6346
      %v6348 = vpop.f32.mrf.mxu0
      %v6349 = vadd.f32 %v5835, %v6348
      %v6350 = vpop.f32.mrf.mxu0
      %v6351 = vadd.f32 %v5837, %v6350
      %6352 = vmatprep.mubr.bf16.mxu0 0
      %6353 = vmatmul.mubr.bf16.gmra.mxu0 %v6245
      %v6354 = vpop.f32.mrf.mxu0
      %v6355 = vadd.f32 %v5841, %v6354
      %v6356 = vpop.f32.mrf.mxu0
      %v6357 = vadd.f32 %v5843, %v6356
      %v6358 = vpop.f32.mrf.mxu0
      %v6359 = vadd.f32 %v5845, %v6358
      %v6360 = vpop.f32.mrf.mxu0
      %v6361 = vadd.f32 %v5847, %v6360
      %6362 = vmatprep.mubr.bf16.mxu0 0
      %6363 = vmatmul.mubr.bf16.gmra.mxu0 %v6248
      %v6364 = vpop.f32.mrf.mxu0
      %v6365 = vadd.f32 %v5851, %v6364
      %v6366 = vpop.f32.mrf.mxu0
      %v6367 = vadd.f32 %v5853, %v6366
      %v6368 = vpop.f32.mrf.mxu0
      %v6369 = vadd.f32 %v5855, %v6368
      %v6370 = vpop.f32.mrf.mxu0
      %v6371 = vadd.f32 %v5857, %v6370
      %6372 = vmatprep.mubr.bf16.mxu0 0
      %6373 = vmatmul.mubr.bf16.gmra.mxu0 %v6251
      %v6374 = vpop.f32.mrf.mxu0
      %v6375 = vadd.f32 %v5861, %v6374
      %v6376 = vpop.f32.mrf.mxu0
      %v6377 = vadd.f32 %v5863, %v6376
      %v6378 = vpop.f32.mrf.mxu0
      %v6379 = vadd.f32 %v5865, %v6378
      %v6380 = vpop.f32.mrf.mxu0
      %v6381 = vadd.f32 %v5867, %v6380
      %6382 = vmatprep.mubr.bf16.mxu0 0
      %6383 = vmatmul.mubr.bf16.gmra.mxu0 %v6254
      %v6384 = vpop.f32.mrf.mxu0
      %v6385 = vadd.f32 %v5871, %v6384
      %v6386 = vpop.f32.mrf.mxu0
      %v6387 = vadd.f32 %v5873, %v6386
      %v6388 = vpop.f32.mrf.mxu0
      %v6389 = vadd.f32 %v5875, %v6388
      %v6390 = vpop.f32.mrf.mxu0
      %v6391 = vadd.f32 %v5877, %v6390
      %6392 = vmatprep.mubr.bf16.mxu0 0
      %6393 = vmatmul.mubr.bf16.gmra.mxu0 %v6257
      %v6394 = vpop.f32.mrf.mxu0
      %v6395 = vadd.f32 %v5881, %v6394
      %v6396 = vpop.f32.mrf.mxu0
      %v6397 = vadd.f32 %v5883, %v6396
      %v6398 = vpop.f32.mrf.mxu0
      %v6399 = vadd.f32 %v5885, %v6398
      %v6400 = vpop.f32.mrf.mxu0
      %v6401 = vadd.f32 %v5887, %v6400
      %6402 = vmatprep.mubr.bf16.mxu0 0
      %6403 = vmatmul.mubr.bf16.gmra.mxu0 %v6260
      %v6404 = vpop.f32.mrf.mxu0
      %v6405 = vadd.f32 %v5891, %v6404
      %v6406 = vpop.f32.mrf.mxu0
      %v6407 = vadd.f32 %v5893, %v6406
      %v6408 = vpop.f32.mrf.mxu0
      %v6409 = vadd.f32 %v5895, %v6408
      %v6410 = vpop.f32.mrf.mxu0
      %v6411 = vadd.f32 %v5897, %v6410
      %6412 = vmatprep.mubr.bf16.mxu0 0
      %6413 = vmatmul.mubr.bf16.gmra.mxu0 %v6263
      %v6414 = vpop.f32.mrf.mxu0
      %v6415 = vadd.f32 %v5901, %v6414
      %v6416 = vpop.f32.mrf.mxu0
      %v6417 = vadd.f32 %v5903, %v6416
      %v6418 = vpop.f32.mrf.mxu0
      %v6419 = vadd.f32 %v5905, %v6418
      %v6420 = vpop.f32.mrf.mxu0
      %v6421 = vadd.f32 %v5907, %v6420
      %6422 = vmatprep.mubr.bf16.mxu0 0
      %6423 = vmatmul.mubr.bf16.gmra.mxu0 %v6266
      %v6424 = vpop.f32.mrf.mxu0
      %v6425 = vadd.f32 %v5911, %v6424
      %v6426 = vpop.f32.mrf.mxu0
      %v6427 = vadd.f32 %v5913, %v6426
      %v6428 = vpop.f32.mrf.mxu0
      %v6429 = vadd.f32 %v5915, %v6428
      %v6430 = vpop.f32.mrf.mxu0
      %v6431 = vadd.f32 %v5917, %v6430
      %6432 = vmatprep.mubr.bf16.mxu0 0
      %6433 = vmatmul.mubr.bf16.gmra.mxu0 %v6269
      %v6434 = vpop.f32.mrf.mxu0
      %v6435 = vadd.f32 %v5921, %v6434
      %v6436 = vpop.f32.mrf.mxu0
      %v6437 = vadd.f32 %v5923, %v6436
      %v6438 = vpop.f32.mrf.mxu0
      %v6439 = vadd.f32 %v5925, %v6438
      %v6440 = vpop.f32.mrf.mxu0
      %v6441 = vadd.f32 %v5927, %v6440
      %6442 = vmatprep.mubr.bf16.mxu0 0
      %6443 = vmatmul.mubr.bf16.gmra.mxu0 %v6272
      %v6444 = vpop.f32.mrf.mxu0
      %v6445 = vadd.f32 %v5931, %v6444
      %v6446 = vpop.f32.mrf.mxu0
      %v6447 = vadd.f32 %v5933, %v6446
      %v6448 = vpop.f32.mrf.mxu0
      %v6449 = vadd.f32 %v5935, %v6448
      %v6450 = vpop.f32.mrf.mxu0
      %v6451 = vadd.f32 %v5937, %v6450
      %6452 = vmatprep.mubr.bf16.mxu0 0
      %6453 = vmatmul.mubr.bf16.gmra.mxu0 %v6275
      %v6454 = vpop.f32.mrf.mxu0
      %v6455 = vadd.f32 %v5941, %v6454
      %v6456 = vpop.f32.mrf.mxu0
      %v6457 = vadd.f32 %v5943, %v6456
      %v6458 = vpop.f32.mrf.mxu0
      %v6459 = vadd.f32 %v5945, %v6458
      %v6460 = vpop.f32.mrf.mxu0
      %v6461 = vadd.f32 %v5947, %v6460
      %6462 = vmatprep.mubr.bf16.mxu0 0
      %6463 = vmatmul.mubr.bf16.gmra.mxu0 %v6278
      %v6464 = vpop.f32.mrf.mxu0
      %v6465 = vadd.f32 %v5951, %v6464
      %v6466 = vpop.f32.mrf.mxu0
      %v6467 = vadd.f32 %v5953, %v6466
      %v6468 = vpop.f32.mrf.mxu0
      %v6469 = vadd.f32 %v5955, %v6468
      %v6470 = vpop.f32.mrf.mxu0
      %v6471 = vadd.f32 %v5957, %v6470
      %6472 = vdwg.mxu0
      %6473 = vmatprep.subr.bf16.mxu0 0
      %6474 = vmatpush1.bf16.msra.mxu0 0
      %6475 = vmatprep.subr.bf16.mxu0 %v1114
      %6476 = vmatpush1.bf16.msra.mxu0 %v1111
      %6477 = vmatprep.subr.bf16.mxu0 %v745
      %6478 = vmatpush1.bf16.msra.mxu0 %v744
      %6479 = vmatprep.subr.bf16.mxu0 %v741
      %6480 = vmatpush1.bf16.msra.mxu0 %v740
      %6481 = vmatprep.subr.bf16.mxu0 %v737
      %6482 = vmatpush1.bf16.msra.mxu0 %v736
      %6483 = vmatprep.subr.bf16.mxu0 %v733
      %6484 = vmatpush1.bf16.msra.mxu0 %v732
      %6485 = vmatprep.subr.bf16.mxu0 %v729
      %6486 = vmatpush1.bf16.msra.mxu0 %v728
      %6487 = vmatprep.subr.bf16.mxu0 %v725
      %6488 = vmatpush1.bf16.msra.mxu0 %v724
      %6489 = vmatprep.subr.bf16.mxu0 0
      %6490 = vmatpush2.bf16.msra.mxu0 0
      %6491 = vmatprep.subr.bf16.mxu0 0
      %6492 = vmatpush2.bf16.msra.mxu0 0
      %6493 = vmatprep.subr.bf16.mxu0 0
      %6494 = vmatpush2.bf16.msra.mxu0 0
      %6495 = vmatprep.subr.bf16.mxu0 0
      %6496 = vmatpush2.bf16.msra.mxu0 0
      %6497 = vmatprep.subr.bf16.mxu0 0
      %6498 = vmatpush2.bf16.msra.mxu0 0
      %6499 = vmatprep.subr.bf16.mxu0 0
      %6500 = vmatpush2.bf16.msra.mxu0 0
      %6501 = vmatprep.subr.bf16.mxu0 0
      %6502 = vmatpush2.bf16.msra.mxu0 0
      %6503 = vmatprep.subr.bf16.mxu0 0
      %6504 = vmatpush2.bf16.msra.mxu0 0
      %6505 = vmatprep.mubr.bf16.mxu0 0
      %6506 = vmatmul.mubr.bf16.gmra.mxu0 %v6233
      %v6507 = vpop.f32.mrf.mxu0
      %v6508 = vadd.f32 %v5994, %v6507
      %v6509 = vpop.f32.mrf.mxu0
      %v6510 = vadd.f32 %v5996, %v6509
      %v6511 = vpop.f32.mrf.mxu0
      %v6512 = vadd.f32 %v5998, %v6511
      %v6513 = vpop.f32.mrf.mxu0
      %v6514 = vadd.f32 %v6000, %v6513
      %6515 = vmatprep.mubr.bf16.mxu0 0
      %6516 = vmatmul.mubr.bf16.gmra.mxu0 %v6236
      %v6517 = vpop.f32.mrf.mxu0
      %v6518 = vadd.f32 %v6004, %v6517
      %v6519 = vpop.f32.mrf.mxu0
      %v6520 = vadd.f32 %v6006, %v6519
      %v6521 = vpop.f32.mrf.mxu0
      %v6522 = vadd.f32 %v6008, %v6521
      %v6523 = vpop.f32.mrf.mxu0
      %v6524 = vadd.f32 %v6010, %v6523
      %6525 = vmatprep.mubr.bf16.mxu0 0
      %6526 = vmatmul.mubr.bf16.gmra.mxu0 %v6239
      %v6527 = vpop.f32.mrf.mxu0
      %v6528 = vadd.f32 %v6014, %v6527
      %v6529 = vpop.f32.mrf.mxu0
      %v6530 = vadd.f32 %v6016, %v6529
      %v6531 = vpop.f32.mrf.mxu0
      %v6532 = vadd.f32 %v6018, %v6531
      %v6533 = vpop.f32.mrf.mxu0
      %v6534 = vadd.f32 %v6020, %v6533
      %6535 = vmatprep.mubr.bf16.mxu0 0
      %6536 = vmatmul.mubr.bf16.gmra.mxu0 %v6242
      %v6537 = vpop.f32.mrf.mxu0
      %v6538 = vadd.f32 %v6024, %v6537
      %v6539 = vpop.f32.mrf.mxu0
      %v6540 = vadd.f32 %v6026, %v6539
      %v6541 = vpop.f32.mrf.mxu0
      %v6542 = vadd.f32 %v6028, %v6541
      %v6543 = vpop.f32.mrf.mxu0
      %v6544 = vadd.f32 %v6030, %v6543
      %6545 = vmatprep.mubr.bf16.mxu0 0
      %6546 = vmatmul.mubr.bf16.gmra.mxu0 %v6245
      %v6547 = vpop.f32.mrf.mxu0
      %v6548 = vadd.f32 %v6034, %v6547
      %v6549 = vpop.f32.mrf.mxu0
      %v6550 = vadd.f32 %v6036, %v6549
      %v6551 = vpop.f32.mrf.mxu0
      %v6552 = vadd.f32 %v6038, %v6551
      %v6553 = vpop.f32.mrf.mxu0
      %v6554 = vadd.f32 %v6040, %v6553
      %6555 = vmatprep.mubr.bf16.mxu0 0
      %6556 = vmatmul.mubr.bf16.gmra.mxu0 %v6248
      %v6557 = vpop.f32.mrf.mxu0
      %v6558 = vadd.f32 %v6044, %v6557
      %v6559 = vpop.f32.mrf.mxu0
      %v6560 = vadd.f32 %v6046, %v6559
      %v6561 = vpop.f32.mrf.mxu0
      %v6562 = vadd.f32 %v6048, %v6561
      %v6563 = vpop.f32.mrf.mxu0
      %v6564 = vadd.f32 %v6050, %v6563
      %6565 = vmatprep.mubr.bf16.mxu0 0
      %6566 = vmatmul.mubr.bf16.gmra.mxu0 %v6251
      %v6567 = vpop.f32.mrf.mxu0
      %v6568 = vadd.f32 %v6054, %v6567
      %v6569 = vpop.f32.mrf.mxu0
      %v6570 = vadd.f32 %v6056, %v6569
      %v6571 = vpop.f32.mrf.mxu0
      %v6572 = vadd.f32 %v6058, %v6571
      %v6573 = vpop.f32.mrf.mxu0
      %v6574 = vadd.f32 %v6060, %v6573
      %6575 = vmatprep.mubr.bf16.mxu0 0
      %6576 = vmatmul.mubr.bf16.gmra.mxu0 %v6254
      %v6577 = vpop.f32.mrf.mxu0
      %v6578 = vadd.f32 %v6064, %v6577
      %v6579 = vpop.f32.mrf.mxu0
      %v6580 = vadd.f32 %v6066, %v6579
      %v6581 = vpop.f32.mrf.mxu0
      %v6582 = vadd.f32 %v6068, %v6581
      %v6583 = vpop.f32.mrf.mxu0
      %v6584 = vadd.f32 %v6070, %v6583
      %6585 = vmatprep.mubr.bf16.mxu0 0
      %6586 = vmatmul.mubr.bf16.gmra.mxu0 %v6257
      %v6587 = vpop.f32.mrf.mxu0
      %v6588 = vadd.f32 %v6074, %v6587
      %v6589 = vpop.f32.mrf.mxu0
      %v6590 = vadd.f32 %v6076, %v6589
      %v6591 = vpop.f32.mrf.mxu0
      %v6592 = vadd.f32 %v6078, %v6591
      %v6593 = vpop.f32.mrf.mxu0
      %v6594 = vadd.f32 %v6080, %v6593
      %6595 = vmatprep.mubr.bf16.mxu0 0
      %6596 = vmatmul.mubr.bf16.gmra.mxu0 %v6260
      %v6597 = vpop.f32.mrf.mxu0
      %v6598 = vadd.f32 %v6084, %v6597
      %v6599 = vpop.f32.mrf.mxu0
      %v6600 = vadd.f32 %v6086, %v6599
      %v6601 = vpop.f32.mrf.mxu0
      %v6602 = vadd.f32 %v6088, %v6601
      %v6603 = vpop.f32.mrf.mxu0
      %v6604 = vadd.f32 %v6090, %v6603
      %6605 = vmatprep.mubr.bf16.mxu0 0
      %6606 = vmatmul.mubr.bf16.gmra.mxu0 %v6263
      %v6607 = vpop.f32.mrf.mxu0
      %v6608 = vadd.f32 %v6094, %v6607
      %v6609 = vpop.f32.mrf.mxu0
      %v6610 = vadd.f32 %v6096, %v6609
      %v6611 = vpop.f32.mrf.mxu0
      %v6612 = vadd.f32 %v6098, %v6611
      %v6613 = vpop.f32.mrf.mxu0
      %v6614 = vadd.f32 %v6100, %v6613
      %6615 = vmatprep.mubr.bf16.mxu0 0
      %6616 = vmatmul.mubr.bf16.gmra.mxu0 %v6266
      %v6617 = vpop.f32.mrf.mxu0
      %v6618 = vadd.f32 %v6104, %v6617
      %v6619 = vpop.f32.mrf.mxu0
      %v6620 = vadd.f32 %v6106, %v6619
      %v6621 = vpop.f32.mrf.mxu0
      %v6622 = vadd.f32 %v6108, %v6621
      %v6623 = vpop.f32.mrf.mxu0
      %v6624 = vadd.f32 %v6110, %v6623
      %6625 = vmatprep.mubr.bf16.mxu0 0
      %6626 = vmatmul.mubr.bf16.gmra.mxu0 %v6269
      %v6627 = vpop.f32.mrf.mxu0
      %v6628 = vadd.f32 %v6114, %v6627
      %v6629 = vpop.f32.mrf.mxu0
      %v6630 = vadd.f32 %v6116, %v6629
      %v6631 = vpop.f32.mrf.mxu0
      %v6632 = vadd.f32 %v6118, %v6631
      %v6633 = vpop.f32.mrf.mxu0
      %v6634 = vadd.f32 %v6120, %v6633
      %6635 = vmatprep.mubr.bf16.mxu0 0
      %6636 = vmatmul.mubr.bf16.gmra.mxu0 %v6272
      %v6637 = vpop.f32.mrf.mxu0
      %v6638 = vadd.f32 %v6124, %v6637
      %v6639 = vpop.f32.mrf.mxu0
      %v6640 = vadd.f32 %v6126, %v6639
      %v6641 = vpop.f32.mrf.mxu0
      %v6642 = vadd.f32 %v6128, %v6641
      %v6643 = vpop.f32.mrf.mxu0
      %v6644 = vadd.f32 %v6130, %v6643
      %6645 = vmatprep.mubr.bf16.mxu0 0
      %6646 = vmatmul.mubr.bf16.gmra.mxu0 %v6275
      %v6647 = vpop.f32.mrf.mxu0
      %v6648 = vadd.f32 %v6134, %v6647
      %v6649 = vpop.f32.mrf.mxu0
      %v6650 = vadd.f32 %v6136, %v6649
      %v6651 = vpop.f32.mrf.mxu0
      %v6652 = vadd.f32 %v6138, %v6651
      %v6653 = vpop.f32.mrf.mxu0
      %v6654 = vadd.f32 %v6140, %v6653
      %6655 = vmatprep.mubr.bf16.mxu0 0
      %6656 = vmatmul.mubr.bf16.gmra.mxu0 %v6278
      %v6657 = vpop.f32.mrf.mxu0
      %v6658 = vadd.f32 %v6144, %v6657
      %v6659 = vpop.f32.mrf.mxu0
      %v6660 = vadd.f32 %v6146, %v6659
      %v6661 = vpop.f32.mrf.mxu0
      %v6662 = vadd.f32 %v6148, %v6661
      %v6663 = vpop.f32.mrf.mxu0
      %v6664 = vadd.f32 %v6150, %v6663
      %6665 = vdwg.mxu0
      %v6666 = vld [vmem:[%s13] sm:$0xff]
      %v6667 = vld [vmem:[%s13 + $0x8] sm:$0xff]
      %v6668 = vld [vmem:[%s13 + $0x10] sm:$0xff]
      %v6669 = vld [vmem:[%s13 + $0x18] sm:$0xff]
      %v6670 = vld [vmem:[%s13 + $0x20] sm:$0xff]
      %v6671 = vld [vmem:[%s13 + $0x28] sm:$0xff]
      %v6672 = vld [vmem:[%s13 + $0x30] sm:$0xff]
      %v6673 = vld [vmem:[%s13 + $0x38] sm:$0xff]
      %v6674 = vld [vmem:[%s13 + $0x40] sm:$0xff]
      %v6675 = vld [vmem:[%s13 + $0x48] sm:$0xff]
      %v6676 = vld [vmem:[%s13 + $0x50] sm:$0xff]
      %v6677 = vld [vmem:[%s13 + $0x58] sm:$0xff]
      %v6678 = vld [vmem:[%s13 + $0x60] sm:$0xff]
      %v6679 = vld [vmem:[%s13 + $0x68] sm:$0xff]
      %v6680 = vld [vmem:[%s13 + $0x70] sm:$0xff]
      %v6681 = vld [vmem:[%s13 + $0x78] sm:$0xff]
      %v6682 = vld [vmem:[%s13 + $0x80] sm:$0xff]
      %v6683 = vld [vmem:[%s13 + $0x88] sm:$0xff]
      %v6684 = vld [vmem:[%s13 + $0x90] sm:$0xff]
      %v6685 = vld [vmem:[%s13 + $0x98] sm:$0xff]
      %v6686 = vld [vmem:[%s13 + $0xa0] sm:$0xff]
      %v6687 = vld [vmem:[%s13 + $0xa8] sm:$0xff]
      %v6688 = vld [vmem:[%s13 + $0xb0] sm:$0xff]
      %v6689 = vld [vmem:[%s13 + $0xb8] sm:$0xff]
      %v6690 = vld [vmem:[%s13 + $0xc0] sm:$0xff]
      %v6691 = vld [vmem:[%s13 + $0xc8] sm:$0xff]
      %v6692 = vld [vmem:[%s13 + $0xd0] sm:$0xff]
      %v6693 = vld [vmem:[%s13 + $0xd8] sm:$0xff]
      %v6694 = vld [vmem:[%s13 + $0xe0] sm:$0xff]
      %v6695 = vld [vmem:[%s13 + $0xe8] sm:$0xff]
      %v6696 = vld [vmem:[%s13 + $0xf0] sm:$0xff]
      %v6697 = vld [vmem:[%s13 + $0xf8] sm:$0xff]
      %6699 = vset.pattern.permute.xlu0 0
      %6700 = vperm.xlu0 %6699, %v6666
      %v6701 = vpop.permute.xlu0 %6700
      %6704 = vset.pattern.permute.xlu0 0
      %6705 = vperm.xlu0 %6704, %v6667
      %v6706 = vpop.permute.xlu0 %6705
      %6709 = vset.pattern.permute.xlu0 0
      %6710 = vperm.xlu0 %6709, %v6668
      %v6711 = vpop.permute.xlu0 %6710
      %6714 = vset.pattern.permute.xlu0 0
      %6715 = vperm.xlu0 %6714, %v6669
      %v6716 = vpop.permute.xlu0 %6715
      %6719 = vset.pattern.permute.xlu0 0
      %6720 = vperm.xlu0 %6719, %v6670
      %v6721 = vpop.permute.xlu0 %6720
      %6724 = vset.pattern.permute.xlu0 0
      %6725 = vperm.xlu0 %6724, %v6671
      %v6726 = vpop.permute.xlu0 %6725
      %6729 = vset.pattern.permute.xlu0 0
      %6730 = vperm.xlu0 %6729, %v6672
      %v6731 = vpop.permute.xlu0 %6730
      %6734 = vset.pattern.permute.xlu0 0
      %6735 = vperm.xlu0 %6734, %v6673
      %v6736 = vpop.permute.xlu0 %6735
      %6739 = vset.pattern.permute.xlu0 0
      %6740 = vperm.xlu0 %6739, %v6674
      %v6741 = vpop.permute.xlu0 %6740
      %6744 = vset.pattern.permute.xlu0 0
      %6745 = vperm.xlu0 %6744, %v6675
      %v6746 = vpop.permute.xlu0 %6745
      %6749 = vset.pattern.permute.xlu0 0
      %6750 = vperm.xlu0 %6749, %v6676
      %v6751 = vpop.permute.xlu0 %6750
      %6754 = vset.pattern.permute.xlu0 0
      %6755 = vperm.xlu0 %6754, %v6677
      %v6756 = vpop.permute.xlu0 %6755
      %6759 = vset.pattern.permute.xlu0 0
      %6760 = vperm.xlu0 %6759, %v6678
      %v6761 = vpop.permute.xlu0 %6760
      %6764 = vset.pattern.permute.xlu0 0
      %6765 = vperm.xlu0 %6764, %v6679
      %v6766 = vpop.permute.xlu0 %6765
      %6769 = vset.pattern.permute.xlu0 0
      %6770 = vperm.xlu0 %6769, %v6680
      %v6771 = vpop.permute.xlu0 %6770
      %6774 = vset.pattern.permute.xlu0 0
      %6775 = vperm.xlu0 %6774, %v6681
      %v6776 = vpop.permute.xlu0 %6775
      %6779 = vset.pattern.permute.xlu0 0
      %6780 = vperm.xlu0 %6779, %v6682
      %v6781 = vpop.permute.xlu0 %6780
      %6784 = vset.pattern.permute.xlu0 0
      %6785 = vperm.xlu0 %6784, %v6683
      %v6786 = vpop.permute.xlu0 %6785
      %6789 = vset.pattern.permute.xlu0 0
      %6790 = vperm.xlu0 %6789, %v6684
      %v6791 = vpop.permute.xlu0 %6790
      %6794 = vset.pattern.permute.xlu0 0
      %6795 = vperm.xlu0 %6794, %v6685
      %v6796 = vpop.permute.xlu0 %6795
      %6799 = vset.pattern.permute.xlu0 0
      %6800 = vperm.xlu0 %6799, %v6686
      %v6801 = vpop.permute.xlu0 %6800
      %6804 = vset.pattern.permute.xlu0 0
      %6805 = vperm.xlu0 %6804, %v6687
      %v6806 = vpop.permute.xlu0 %6805
      %6809 = vset.pattern.permute.xlu0 0
      %6810 = vperm.xlu0 %6809, %v6688
      %v6811 = vpop.permute.xlu0 %6810
      %6814 = vset.pattern.permute.xlu0 0
      %6815 = vperm.xlu0 %6814, %v6689
      %v6816 = vpop.permute.xlu0 %6815
      %6819 = vset.pattern.permute.xlu0 0
      %6820 = vperm.xlu0 %6819, %v6690
      %v6821 = vpop.permute.xlu0 %6820
      %6824 = vset.pattern.permute.xlu0 0
      %6825 = vperm.xlu0 %6824, %v6691
      %v6826 = vpop.permute.xlu0 %6825
      %6829 = vset.pattern.permute.xlu0 0
      %6830 = vperm.xlu0 %6829, %v6692
      %v6831 = vpop.permute.xlu0 %6830
      %6834 = vset.pattern.permute.xlu0 0
      %6835 = vperm.xlu0 %6834, %v6693
      %v6836 = vpop.permute.xlu0 %6835
      %6839 = vset.pattern.permute.xlu0 0
      %6840 = vperm.xlu0 %6839, %v6694
      %v6841 = vpop.permute.xlu0 %6840
      %6844 = vset.pattern.permute.xlu0 0
      %6845 = vperm.xlu0 %6844, %v6695
      %v6846 = vpop.permute.xlu0 %6845
      %6849 = vset.pattern.permute.xlu0 0
      %6850 = vperm.xlu0 %6849, %v6696
      %v6851 = vpop.permute.xlu0 %6850
      %6854 = vset.pattern.permute.xlu0 0
      %6855 = vperm.xlu0 %6854, %v6697
      %v6856 = vpop.permute.xlu0 %6855
      %v6858 = vadd.f32 %v6315, %v6701
      %v6859 = vadd.f32 %v6317, %v6701
      %v6860 = vadd.f32 %v6508, %v6701
      %v6861 = vadd.f32 %v6510, %v6701
      %v6862 = vadd.f32 %v6319, %v6706
      %v6863 = vadd.f32 %v6321, %v6706
      %v6864 = vadd.f32 %v6512, %v6706
      %v6865 = vadd.f32 %v6514, %v6706
      %v6866 = vadd.f32 %v6325, %v6711
      %v6867 = vadd.f32 %v6327, %v6711
      %v6868 = vadd.f32 %v6518, %v6711
      %v6869 = vadd.f32 %v6520, %v6711
      %v6870 = vadd.f32 %v6329, %v6716
      %v6871 = vadd.f32 %v6331, %v6716
      %v6872 = vadd.f32 %v6522, %v6716
      %v6873 = vadd.f32 %v6524, %v6716
      %v6874 = vadd.f32 %v6335, %v6721
      %v6875 = vadd.f32 %v6337, %v6721
      %v6876 = vadd.f32 %v6528, %v6721
      %v6877 = vadd.f32 %v6530, %v6721
      %v6878 = vadd.f32 %v6339, %v6726
      %v6879 = vadd.f32 %v6341, %v6726
      %v6880 = vadd.f32 %v6532, %v6726
      %v6881 = vadd.f32 %v6534, %v6726
      %v6882 = vadd.f32 %v6345, %v6731
      %v6883 = vadd.f32 %v6347, %v6731
      %v6884 = vadd.f32 %v6538, %v6731
      %v6885 = vadd.f32 %v6540, %v6731
      %v6886 = vadd.f32 %v6349, %v6736
      %v6887 = vadd.f32 %v6351, %v6736
      %v6888 = vadd.f32 %v6542, %v6736
      %v6889 = vadd.f32 %v6544, %v6736
      %v6890 = vadd.f32 %v6355, %v6741
      %v6891 = vadd.f32 %v6357, %v6741
      %v6892 = vadd.f32 %v6548, %v6741
      %v6893 = vadd.f32 %v6550, %v6741
      %v6894 = vadd.f32 %v6359, %v6746
      %v6895 = vadd.f32 %v6361, %v6746
      %v6896 = vadd.f32 %v6552, %v6746
      %v6897 = vadd.f32 %v6554, %v6746
      %v6898 = vadd.f32 %v6365, %v6751
      %v6899 = vadd.f32 %v6367, %v6751
      %v6900 = vadd.f32 %v6558, %v6751
      %v6901 = vadd.f32 %v6560, %v6751
      %v6902 = vadd.f32 %v6369, %v6756
      %v6903 = vadd.f32 %v6371, %v6756
      %v6904 = vadd.f32 %v6562, %v6756
      %v6905 = vadd.f32 %v6564, %v6756
      %v6906 = vadd.f32 %v6375, %v6761
      %v6907 = vadd.f32 %v6377, %v6761
      %v6908 = vadd.f32 %v6568, %v6761
      %v6909 = vadd.f32 %v6570, %v6761
      %v6910 = vadd.f32 %v6379, %v6766
      %v6911 = vadd.f32 %v6381, %v6766
      %v6912 = vadd.f32 %v6572, %v6766
      %v6913 = vadd.f32 %v6574, %v6766
      %v6914 = vadd.f32 %v6385, %v6771
      %v6915 = vadd.f32 %v6387, %v6771
      %v6916 = vadd.f32 %v6578, %v6771
      %v6917 = vadd.f32 %v6580, %v6771
      %v6918 = vadd.f32 %v6389, %v6776
      %v6919 = vadd.f32 %v6391, %v6776
      %v6920 = vadd.f32 %v6582, %v6776
      %v6921 = vadd.f32 %v6584, %v6776
      %v6922 = vadd.f32 %v6395, %v6781
      %v6923 = vadd.f32 %v6397, %v6781
      %v6924 = vadd.f32 %v6588, %v6781
      %v6925 = vadd.f32 %v6590, %v6781
      %v6926 = vadd.f32 %v6399, %v6786
      %v6927 = vadd.f32 %v6401, %v6786
      %v6928 = vadd.f32 %v6592, %v6786
      %v6929 = vadd.f32 %v6594, %v6786
      %v6930 = vadd.f32 %v6405, %v6791
      %v6931 = vadd.f32 %v6407, %v6791
      %v6932 = vadd.f32 %v6598, %v6791
      %v6933 = vadd.f32 %v6600, %v6791
      %v6934 = vadd.f32 %v6409, %v6796
      %v6935 = vadd.f32 %v6411, %v6796
      %v6936 = vadd.f32 %v6602, %v6796
      %v6937 = vadd.f32 %v6604, %v6796
      %v6938 = vadd.f32 %v6415, %v6801
      %v6939 = vadd.f32 %v6417, %v6801
      %v6940 = vadd.f32 %v6608, %v6801
      %v6941 = vadd.f32 %v6610, %v6801
      %v6942 = vadd.f32 %v6419, %v6806
      %v6943 = vadd.f32 %v6421, %v6806
      %v6944 = vadd.f32 %v6612, %v6806
      %v6945 = vadd.f32 %v6614, %v6806
      %v6946 = vadd.f32 %v6425, %v6811
      %v6947 = vadd.f32 %v6427, %v6811
      %v6948 = vadd.f32 %v6618, %v6811
      %v6949 = vadd.f32 %v6620, %v6811
      %v6950 = vadd.f32 %v6429, %v6816
      %v6951 = vadd.f32 %v6431, %v6816
      %v6952 = vadd.f32 %v6622, %v6816
      %v6953 = vadd.f32 %v6624, %v6816
      %v6954 = vadd.f32 %v6435, %v6821
      %v6955 = vadd.f32 %v6437, %v6821
      %v6956 = vadd.f32 %v6628, %v6821
      %v6957 = vadd.f32 %v6630, %v6821
      %v6958 = vadd.f32 %v6439, %v6826
      %v6959 = vadd.f32 %v6441, %v6826
      %v6960 = vadd.f32 %v6632, %v6826
      %v6961 = vadd.f32 %v6634, %v6826
      %v6962 = vadd.f32 %v6445, %v6831
      %v6963 = vadd.f32 %v6447, %v6831
      %v6964 = vadd.f32 %v6638, %v6831
      %v6965 = vadd.f32 %v6640, %v6831
      %v6966 = vadd.f32 %v6449, %v6836
      %v6967 = vadd.f32 %v6451, %v6836
      %v6968 = vadd.f32 %v6642, %v6836
      %v6969 = vadd.f32 %v6644, %v6836
      %v6970 = vadd.f32 %v6455, %v6841
      %v6971 = vadd.f32 %v6457, %v6841
      %v6972 = vadd.f32 %v6648, %v6841
      %v6973 = vadd.f32 %v6650, %v6841
      %v6974 = vadd.f32 %v6459, %v6846
      %v6975 = vadd.f32 %v6461, %v6846
      %v6976 = vadd.f32 %v6652, %v6846
      %v6977 = vadd.f32 %v6654, %v6846
      %v6978 = vadd.f32 %v6465, %v6851
      %v6979 = vadd.f32 %v6467, %v6851
      %v6980 = vadd.f32 %v6658, %v6851
      %v6981 = vadd.f32 %v6660, %v6851
      %v6982 = vadd.f32 %v6469, %v6856
      %v6983 = vadd.f32 %v6471, %v6856
      %v6984 = vadd.f32 %v6662, %v6856
      %v6985 = vadd.f32 %v6664, %v6856
      %v6986 = vmax.f32 %v6858, 0.0
      %v6987 = vmax.f32 %v6859, 0.0
      %v6988 = vmax.f32 %v6860, 0.0
      %v6989 = vmax.f32 %v6861, 0.0
      %v6990 = vmax.f32 %v6862, 0.0
      %v6991 = vmax.f32 %v6863, 0.0
      %v6992 = vmax.f32 %v6864, 0.0
      %v6993 = vmax.f32 %v6865, 0.0
      %v6994 = vmax.f32 %v6866, 0.0
      %v6995 = vmax.f32 %v6867, 0.0
      %v6996 = vmax.f32 %v6868, 0.0
      %v6997 = vmax.f32 %v6869, 0.0
      %v6998 = vmax.f32 %v6870, 0.0
      %v6999 = vmax.f32 %v6871, 0.0
      %v7000 = vmax.f32 %v6872, 0.0
      %v7001 = vmax.f32 %v6873, 0.0
      %v7002 = vmax.f32 %v6874, 0.0
      %v7003 = vmax.f32 %v6875, 0.0
      %v7004 = vmax.f32 %v6876, 0.0
      %v7005 = vmax.f32 %v6877, 0.0
      %v7006 = vmax.f32 %v6878, 0.0
      %v7007 = vmax.f32 %v6879, 0.0
      %v7008 = vmax.f32 %v6880, 0.0
      %v7009 = vmax.f32 %v6881, 0.0
      %v7010 = vmax.f32 %v6882, 0.0
      %v7011 = vmax.f32 %v6883, 0.0
      %v7012 = vmax.f32 %v6884, 0.0
      %v7013 = vmax.f32 %v6885, 0.0
      %v7014 = vmax.f32 %v6886, 0.0
      %v7015 = vmax.f32 %v6887, 0.0
      %v7016 = vmax.f32 %v6888, 0.0
      %v7017 = vmax.f32 %v6889, 0.0
      %v7018 = vmax.f32 %v6890, 0.0
      %v7019 = vmax.f32 %v6891, 0.0
      %v7020 = vmax.f32 %v6892, 0.0
      %v7021 = vmax.f32 %v6893, 0.0
      %v7022 = vmax.f32 %v6894, 0.0
      %v7023 = vmax.f32 %v6895, 0.0
      %v7024 = vmax.f32 %v6896, 0.0
      %v7025 = vmax.f32 %v6897, 0.0
      %v7026 = vmax.f32 %v6898, 0.0
      %v7027 = vmax.f32 %v6899, 0.0
      %v7028 = vmax.f32 %v6900, 0.0
      %v7029 = vmax.f32 %v6901, 0.0
      %v7030 = vmax.f32 %v6902, 0.0
      %v7031 = vmax.f32 %v6903, 0.0
      %v7032 = vmax.f32 %v6904, 0.0
      %v7033 = vmax.f32 %v6905, 0.0
      %v7034 = vmax.f32 %v6906, 0.0
      %v7035 = vmax.f32 %v6907, 0.0
      %v7036 = vmax.f32 %v6908, 0.0
      %v7037 = vmax.f32 %v6909, 0.0
      %v7038 = vmax.f32 %v6910, 0.0
      %v7039 = vmax.f32 %v6911, 0.0
      %v7040 = vmax.f32 %v6912, 0.0
      %v7041 = vmax.f32 %v6913, 0.0
      %v7042 = vmax.f32 %v6914, 0.0
      %v7043 = vmax.f32 %v6915, 0.0
      %v7044 = vmax.f32 %v6916, 0.0
      %v7045 = vmax.f32 %v6917, 0.0
      %v7046 = vmax.f32 %v6918, 0.0
      %v7047 = vmax.f32 %v6919, 0.0
      %v7048 = vmax.f32 %v6920, 0.0
      %v7049 = vmax.f32 %v6921, 0.0
      %v7050 = vmax.f32 %v6922, 0.0
      %v7051 = vmax.f32 %v6923, 0.0
      %v7052 = vmax.f32 %v6924, 0.0
      %v7053 = vmax.f32 %v6925, 0.0
      %v7054 = vmax.f32 %v6926, 0.0
      %v7055 = vmax.f32 %v6927, 0.0
      %v7056 = vmax.f32 %v6928, 0.0
      %v7057 = vmax.f32 %v6929, 0.0
      %v7058 = vmax.f32 %v6930, 0.0
      %v7059 = vmax.f32 %v6931, 0.0
      %v7060 = vmax.f32 %v6932, 0.0
      %v7061 = vmax.f32 %v6933, 0.0
      %v7062 = vmax.f32 %v6934, 0.0
      %v7063 = vmax.f32 %v6935, 0.0
      %v7064 = vmax.f32 %v6936, 0.0
      %v7065 = vmax.f32 %v6937, 0.0
      %v7066 = vmax.f32 %v6938, 0.0
      %v7067 = vmax.f32 %v6939, 0.0
      %v7068 = vmax.f32 %v6940, 0.0
      %v7069 = vmax.f32 %v6941, 0.0
      %v7070 = vmax.f32 %v6942, 0.0
      %v7071 = vmax.f32 %v6943, 0.0
      %v7072 = vmax.f32 %v6944, 0.0
      %v7073 = vmax.f32 %v6945, 0.0
      %v7074 = vmax.f32 %v6946, 0.0
      %v7075 = vmax.f32 %v6947, 0.0
      %v7076 = vmax.f32 %v6948, 0.0
      %v7077 = vmax.f32 %v6949, 0.0
      %v7078 = vmax.f32 %v6950, 0.0
      %v7079 = vmax.f32 %v6951, 0.0
      %v7080 = vmax.f32 %v6952, 0.0
      %v7081 = vmax.f32 %v6953, 0.0
      %v7082 = vmax.f32 %v6954, 0.0
      %v7083 = vmax.f32 %v6955, 0.0
      %v7084 = vmax.f32 %v6956, 0.0
      %v7085 = vmax.f32 %v6957, 0.0
      %v7086 = vmax.f32 %v6958, 0.0
      %v7087 = vmax.f32 %v6959, 0.0
      %v7088 = vmax.f32 %v6960, 0.0
      %v7089 = vmax.f32 %v6961, 0.0
      %v7090 = vmax.f32 %v6962, 0.0
      %v7091 = vmax.f32 %v6963, 0.0
      %v7092 = vmax.f32 %v6964, 0.0
      %v7093 = vmax.f32 %v6965, 0.0
      %v7094 = vmax.f32 %v6966, 0.0
      %v7095 = vmax.f32 %v6967, 0.0
      %v7096 = vmax.f32 %v6968, 0.0
      %v7097 = vmax.f32 %v6969, 0.0
      %v7098 = vmax.f32 %v6970, 0.0
      %v7099 = vmax.f32 %v6971, 0.0
      %v7100 = vmax.f32 %v6972, 0.0
      %v7101 = vmax.f32 %v6973, 0.0
      %v7102 = vmax.f32 %v6974, 0.0
      %v7103 = vmax.f32 %v6975, 0.0
      %v7104 = vmax.f32 %v6976, 0.0
      %v7105 = vmax.f32 %v6977, 0.0
      %v7106 = vmax.f32 %v6978, 0.0
      %v7107 = vmax.f32 %v6979, 0.0
      %v7108 = vmax.f32 %v6980, 0.0
      %v7109 = vmax.f32 %v6981, 0.0
      %v7110 = vmax.f32 %v6982, 0.0
      %v7111 = vmax.f32 %v6983, 0.0
      %v7112 = vmax.f32 %v6984, 0.0
      %v7113 = vmax.f32 %v6985, 0.0
      %v7114 = vpack.c.bf16 %v6990, %v6986
      %v7115 = vpack.c.bf16 %v6991, %v6987
      %v7116 = vpack.c.bf16 %v6992, %v6988
      %v7117 = vpack.c.bf16 %v6993, %v6989
      %v7118 = vpack.c.bf16 %v6998, %v6994
      %v7119 = vpack.c.bf16 %v6999, %v6995
      %v7120 = vpack.c.bf16 %v7000, %v6996
      %v7121 = vpack.c.bf16 %v7001, %v6997
      %v7122 = vpack.c.bf16 %v7006, %v7002
      %v7123 = vpack.c.bf16 %v7007, %v7003
      %v7124 = vpack.c.bf16 %v7008, %v7004
      %v7125 = vpack.c.bf16 %v7009, %v7005
      %v7126 = vpack.c.bf16 %v7014, %v7010
      %v7127 = vpack.c.bf16 %v7015, %v7011
      %v7128 = vpack.c.bf16 %v7016, %v7012
      %v7129 = vpack.c.bf16 %v7017, %v7013
      %v7130 = vpack.c.bf16 %v7022, %v7018
      %v7131 = vpack.c.bf16 %v7023, %v7019
      %v7132 = vpack.c.bf16 %v7024, %v7020
      %v7133 = vpack.c.bf16 %v7025, %v7021
      %v7134 = vpack.c.bf16 %v7030, %v7026
      %v7135 = vpack.c.bf16 %v7031, %v7027
      %v7136 = vpack.c.bf16 %v7032, %v7028
      %v7137 = vpack.c.bf16 %v7033, %v7029
      %v7138 = vpack.c.bf16 %v7038, %v7034
      %v7139 = vpack.c.bf16 %v7039, %v7035
      %v7140 = vpack.c.bf16 %v7040, %v7036
      %v7141 = vpack.c.bf16 %v7041, %v7037
      %v7142 = vpack.c.bf16 %v7046, %v7042
      %v7143 = vpack.c.bf16 %v7047, %v7043
      %v7144 = vpack.c.bf16 %v7048, %v7044
      %v7145 = vpack.c.bf16 %v7049, %v7045
      %v7146 = vpack.c.bf16 %v7054, %v7050
      %v7147 = vpack.c.bf16 %v7055, %v7051
      %v7148 = vpack.c.bf16 %v7056, %v7052
      %v7149 = vpack.c.bf16 %v7057, %v7053
      %v7150 = vpack.c.bf16 %v7062, %v7058
      %v7151 = vpack.c.bf16 %v7063, %v7059
      %v7152 = vpack.c.bf16 %v7064, %v7060
      %v7153 = vpack.c.bf16 %v7065, %v7061
      %v7154 = vpack.c.bf16 %v7070, %v7066
      %v7155 = vpack.c.bf16 %v7071, %v7067
      %v7156 = vpack.c.bf16 %v7072, %v7068
      %v7157 = vpack.c.bf16 %v7073, %v7069
      %v7158 = vpack.c.bf16 %v7078, %v7074
      %v7159 = vpack.c.bf16 %v7079, %v7075
      %v7160 = vpack.c.bf16 %v7080, %v7076
      %v7161 = vpack.c.bf16 %v7081, %v7077
      %v7162 = vpack.c.bf16 %v7086, %v7082
      %v7163 = vpack.c.bf16 %v7087, %v7083
      %v7164 = vpack.c.bf16 %v7088, %v7084
      %v7165 = vpack.c.bf16 %v7089, %v7085
      %v7166 = vpack.c.bf16 %v7094, %v7090
      %v7167 = vpack.c.bf16 %v7095, %v7091
      %v7168 = vpack.c.bf16 %v7096, %v7092
      %v7169 = vpack.c.bf16 %v7097, %v7093
      %v7170 = vpack.c.bf16 %v7102, %v7098
      %v7171 = vpack.c.bf16 %v7103, %v7099
      %v7172 = vpack.c.bf16 %v7104, %v7100
      %v7173 = vpack.c.bf16 %v7105, %v7101
      %v7174 = vpack.c.bf16 %v7110, %v7106
      %v7175 = vpack.c.bf16 %v7111, %v7107
      %v7176 = vpack.c.bf16 %v7112, %v7108
      %v7177 = vpack.c.bf16 %v7113, %v7109
      %v7178 = vld [vmem:[%s14] sm:$0xff]
      %v7179 = vld [vmem:[%s14 + $0x8] sm:$0xff]
      %v7180 = vld [vmem:[%s14 + $0x10] sm:$0xff]
      %v7181 = vld [vmem:[%s14 + $0x18] sm:$0xff]
      %v7182 = vld [vmem:[%s14 + $0x20] sm:$0xff]
      %v7183 = vld [vmem:[%s14 + $0x28] sm:$0xff]
      %v7184 = vld [vmem:[%s14 + $0x30] sm:$0xff]
      %v7185 = vld [vmem:[%s14 + $0x38] sm:$0xff]
      %v7186 = vld [vmem:[%s14 + $0x40] sm:$0xff]
      %v7187 = vld [vmem:[%s14 + $0x48] sm:$0xff]
      %v7188 = vld [vmem:[%s14 + $0x50] sm:$0xff]
      %v7189 = vld [vmem:[%s14 + $0x58] sm:$0xff]
      %v7190 = vld [vmem:[%s14 + $0x60] sm:$0xff]
      %v7191 = vld [vmem:[%s14 + $0x68] sm:$0xff]
      %v7192 = vld [vmem:[%s14 + $0x70] sm:$0xff]
      %v7193 = vld [vmem:[%s14 + $0x78] sm:$0xff]
      %v7194 = vld [vmem:[%s14 + $0x80] sm:$0xff]
      %v7195 = vld [vmem:[%s14 + $0x88] sm:$0xff]
      %v7196 = vld [vmem:[%s14 + $0x90] sm:$0xff]
      %v7197 = vld [vmem:[%s14 + $0x98] sm:$0xff]
      %v7198 = vld [vmem:[%s14 + $0xa0] sm:$0xff]
      %v7199 = vld [vmem:[%s14 + $0xa8] sm:$0xff]
      %v7200 = vld [vmem:[%s14 + $0xb0] sm:$0xff]
      %v7201 = vld [vmem:[%s14 + $0xb8] sm:$0xff]
      %v7202 = vld [vmem:[%s14 + $0xc0] sm:$0xff]
      %v7203 = vld [vmem:[%s14 + $0xc8] sm:$0xff]
      %v7204 = vld [vmem:[%s14 + $0xd0] sm:$0xff]
      %v7205 = vld [vmem:[%s14 + $0xd8] sm:$0xff]
      %v7206 = vld [vmem:[%s14 + $0xe0] sm:$0xff]
      %v7207 = vld [vmem:[%s14 + $0xe8] sm:$0xff]
      %v7208 = vld [vmem:[%s14 + $0xf0] sm:$0xff]
      %v7209 = vld [vmem:[%s14 + $0xf8] sm:$0xff]
      %v7210 = vld [vmem:[%s15] sm:$0xff]
      %v7211 = vld [vmem:[%s15 + $0x8] sm:$0xff]
      %v7212 = vld [vmem:[%s15 + $0x10] sm:$0xff]
      %v7213 = vld [vmem:[%s15 + $0x18] sm:$0xff]
      %v7214 = vld [vmem:[%s15 + $0x20] sm:$0xff]
      %v7215 = vld [vmem:[%s15 + $0x28] sm:$0xff]
      %v7216 = vld [vmem:[%s15 + $0x30] sm:$0xff]
      %v7217 = vld [vmem:[%s15 + $0x38] sm:$0xff]
      %v7218 = vld [vmem:[%s15 + $0x40] sm:$0xff]
      %v7219 = vld [vmem:[%s15 + $0x48] sm:$0xff]
      %v7220 = vld [vmem:[%s15 + $0x50] sm:$0xff]
      %v7221 = vld [vmem:[%s15 + $0x58] sm:$0xff]
      %v7222 = vld [vmem:[%s15 + $0x60] sm:$0xff]
      %v7223 = vld [vmem:[%s15 + $0x68] sm:$0xff]
      %v7224 = vld [vmem:[%s15 + $0x70] sm:$0xff]
      %v7225 = vld [vmem:[%s15 + $0x78] sm:$0xff]
      %v7226 = vld [vmem:[%s15 + $0x80] sm:$0xff]
      %v7227 = vld [vmem:[%s15 + $0x88] sm:$0xff]
      %v7228 = vld [vmem:[%s15 + $0x90] sm:$0xff]
      %v7229 = vld [vmem:[%s15 + $0x98] sm:$0xff]
      %v7230 = vld [vmem:[%s15 + $0xa0] sm:$0xff]
      %v7231 = vld [vmem:[%s15 + $0xa8] sm:$0xff]
      %v7232 = vld [vmem:[%s15 + $0xb0] sm:$0xff]
      %v7233 = vld [vmem:[%s15 + $0xb8] sm:$0xff]
      %v7234 = vld [vmem:[%s15 + $0xc0] sm:$0xff]
      %v7235 = vld [vmem:[%s15 + $0xc8] sm:$0xff]
      %v7236 = vld [vmem:[%s15 + $0xd0] sm:$0xff]
      %v7237 = vld [vmem:[%s15 + $0xd8] sm:$0xff]
      %v7238 = vld [vmem:[%s15 + $0xe0] sm:$0xff]
      %v7239 = vld [vmem:[%s15 + $0xe8] sm:$0xff]
      %v7240 = vld [vmem:[%s15 + $0xf0] sm:$0xff]
      %v7241 = vld [vmem:[%s15 + $0xf8] sm:$0xff]
      %7243 = vset.pattern.permute.xlu0 0
      %7244 = vperm.xlu0 %7243, %v7210
      %v7245 = vpop.permute.xlu0 %7244
      %7248 = vset.pattern.permute.xlu0 0
      %7249 = vperm.xlu0 %7248, %v7211
      %v7250 = vpop.permute.xlu0 %7249
      %7253 = vset.pattern.permute.xlu0 0
      %7254 = vperm.xlu0 %7253, %v7212
      %v7255 = vpop.permute.xlu0 %7254
      %7258 = vset.pattern.permute.xlu0 0
      %7259 = vperm.xlu0 %7258, %v7213
      %v7260 = vpop.permute.xlu0 %7259
      %7263 = vset.pattern.permute.xlu0 0
      %7264 = vperm.xlu0 %7263, %v7214
      %v7265 = vpop.permute.xlu0 %7264
      %7268 = vset.pattern.permute.xlu0 0
      %7269 = vperm.xlu0 %7268, %v7215
      %v7270 = vpop.permute.xlu0 %7269
      %7273 = vset.pattern.permute.xlu0 0
      %7274 = vperm.xlu0 %7273, %v7216
      %v7275 = vpop.permute.xlu0 %7274
      %7278 = vset.pattern.permute.xlu0 0
      %7279 = vperm.xlu0 %7278, %v7217
      %v7280 = vpop.permute.xlu0 %7279
      %7283 = vset.pattern.permute.xlu0 0
      %7284 = vperm.xlu0 %7283, %v7218
      %v7285 = vpop.permute.xlu0 %7284
      %7288 = vset.pattern.permute.xlu0 0
      %7289 = vperm.xlu0 %7288, %v7219
      %v7290 = vpop.permute.xlu0 %7289
      %7293 = vset.pattern.permute.xlu0 0
      %7294 = vperm.xlu0 %7293, %v7220
      %v7295 = vpop.permute.xlu0 %7294
      %7298 = vset.pattern.permute.xlu0 0
      %7299 = vperm.xlu0 %7298, %v7221
      %v7300 = vpop.permute.xlu0 %7299
      %7303 = vset.pattern.permute.xlu0 0
      %7304 = vperm.xlu0 %7303, %v7222
      %v7305 = vpop.permute.xlu0 %7304
      %7308 = vset.pattern.permute.xlu0 0
      %7309 = vperm.xlu0 %7308, %v7223
      %v7310 = vpop.permute.xlu0 %7309
      %7313 = vset.pattern.permute.xlu0 0
      %7314 = vperm.xlu0 %7313, %v7224
      %v7315 = vpop.permute.xlu0 %7314
      %7318 = vset.pattern.permute.xlu0 0
      %7319 = vperm.xlu0 %7318, %v7225
      %v7320 = vpop.permute.xlu0 %7319
      %7323 = vset.pattern.permute.xlu0 0
      %7324 = vperm.xlu0 %7323, %v7226
      %v7325 = vpop.permute.xlu0 %7324
      %7328 = vset.pattern.permute.xlu0 0
      %7329 = vperm.xlu0 %7328, %v7227
      %v7330 = vpop.permute.xlu0 %7329
      %7333 = vset.pattern.permute.xlu0 0
      %7334 = vperm.xlu0 %7333, %v7228
      %v7335 = vpop.permute.xlu0 %7334
      %7338 = vset.pattern.permute.xlu0 0
      %7339 = vperm.xlu0 %7338, %v7229
      %v7340 = vpop.permute.xlu0 %7339
      %7343 = vset.pattern.permute.xlu0 0
      %7344 = vperm.xlu0 %7343, %v7230
      %v7345 = vpop.permute.xlu0 %7344
      %7348 = vset.pattern.permute.xlu0 0
      %7349 = vperm.xlu0 %7348, %v7231
      %v7350 = vpop.permute.xlu0 %7349
      %7353 = vset.pattern.permute.xlu0 0
      %7354 = vperm.xlu0 %7353, %v7232
      %v7355 = vpop.permute.xlu0 %7354
      %7358 = vset.pattern.permute.xlu0 0
      %7359 = vperm.xlu0 %7358, %v7233
      %v7360 = vpop.permute.xlu0 %7359
      %7363 = vset.pattern.permute.xlu0 0
      %7364 = vperm.xlu0 %7363, %v7234
      %v7365 = vpop.permute.xlu0 %7364
      %7368 = vset.pattern.permute.xlu0 0
      %7369 = vperm.xlu0 %7368, %v7235
      %v7370 = vpop.permute.xlu0 %7369
      %7373 = vset.pattern.permute.xlu0 0
      %7374 = vperm.xlu0 %7373, %v7236
      %v7375 = vpop.permute.xlu0 %7374
      %7378 = vset.pattern.permute.xlu0 0
      %7379 = vperm.xlu0 %7378, %v7237
      %v7380 = vpop.permute.xlu0 %7379
      %7383 = vset.pattern.permute.xlu0 0
      %7384 = vperm.xlu0 %7383, %v7238
      %v7385 = vpop.permute.xlu0 %7384
      %7388 = vset.pattern.permute.xlu0 0
      %7389 = vperm.xlu0 %7388, %v7239
      %v7390 = vpop.permute.xlu0 %7389
      %7393 = vset.pattern.permute.xlu0 0
      %7394 = vperm.xlu0 %7393, %v7240
      %v7395 = vpop.permute.xlu0 %7394
      %7398 = vset.pattern.permute.xlu0 0
      %7399 = vperm.xlu0 %7398, %v7241
      %v7400 = vpop.permute.xlu0 %7399
      %v7434 = vunpack.c.l.b16 %v7178
      %v7435 = vunpack.c.h.b16 %v7178
      %v7436 = vunpack.c.l.b16 %v7179
      %v7437 = vunpack.c.h.b16 %v7179
      %v7438 = vunpack.c.l.b16 %v7180
      %v7439 = vunpack.c.h.b16 %v7180
      %v7440 = vunpack.c.l.b16 %v7181
      %v7441 = vunpack.c.h.b16 %v7181
      %v7442 = vunpack.c.l.b16 %v7182
      %v7443 = vunpack.c.h.b16 %v7182
      %v7444 = vunpack.c.l.b16 %v7183
      %v7445 = vunpack.c.h.b16 %v7183
      %v7446 = vunpack.c.l.b16 %v7184
      %v7447 = vunpack.c.h.b16 %v7184
      %v7448 = vunpack.c.l.b16 %v7185
      %v7449 = vunpack.c.h.b16 %v7185
      %v7450 = vunpack.c.l.b16 %v7186
      %v7451 = vunpack.c.h.b16 %v7186
      %v7452 = vunpack.c.l.b16 %v7187
      %v7453 = vunpack.c.h.b16 %v7187
      %v7454 = vunpack.c.l.b16 %v7188
      %v7455 = vunpack.c.h.b16 %v7188
      %v7456 = vunpack.c.l.b16 %v7189
      %v7457 = vunpack.c.h.b16 %v7189
      %v7458 = vunpack.c.l.b16 %v7190
      %v7459 = vunpack.c.h.b16 %v7190
      %v7460 = vunpack.c.l.b16 %v7191
      %v7461 = vunpack.c.h.b16 %v7191
      %v7462 = vunpack.c.l.b16 %v7192
      %v7463 = vunpack.c.h.b16 %v7192
      %v7464 = vunpack.c.l.b16 %v7193
      %v7465 = vunpack.c.h.b16 %v7193
      %v7466 = vunpack.c.l.b16 %v7194
      %v7467 = vunpack.c.h.b16 %v7194
      %v7468 = vunpack.c.l.b16 %v7195
      %v7469 = vunpack.c.h.b16 %v7195
      %v7470 = vunpack.c.l.b16 %v7196
      %v7471 = vunpack.c.h.b16 %v7196
      %v7472 = vunpack.c.l.b16 %v7197
      %v7473 = vunpack.c.h.b16 %v7197
      %v7474 = vunpack.c.l.b16 %v7198
      %v7475 = vunpack.c.h.b16 %v7198
      %v7476 = vunpack.c.l.b16 %v7199
      %v7477 = vunpack.c.h.b16 %v7199
      %v7478 = vunpack.c.l.b16 %v7200
      %v7479 = vunpack.c.h.b16 %v7200
      %v7480 = vunpack.c.l.b16 %v7201
      %v7481 = vunpack.c.h.b16 %v7201
      %v7482 = vunpack.c.l.b16 %v7202
      %v7483 = vunpack.c.h.b16 %v7202
      %v7484 = vunpack.c.l.b16 %v7203
      %v7485 = vunpack.c.h.b16 %v7203
      %v7486 = vunpack.c.l.b16 %v7204
      %v7487 = vunpack.c.h.b16 %v7204
      %v7488 = vunpack.c.l.b16 %v7205
      %v7489 = vunpack.c.h.b16 %v7205
      %v7490 = vunpack.c.l.b16 %v7206
      %v7491 = vunpack.c.h.b16 %v7206
      %v7492 = vunpack.c.l.b16 %v7207
      %v7493 = vunpack.c.h.b16 %v7207
      %v7494 = vunpack.c.l.b16 %v7208
      %v7495 = vunpack.c.h.b16 %v7208
      %v7496 = vunpack.c.l.b16 %v7209
      %v7497 = vunpack.c.h.b16 %v7209
      %v7498 = vpack.c.b16 %v7436, %v7434
      %v7499 = vpack.c.b16 %v7437, %v7435
      %v7500 = vpack.c.b16 %v7440, %v7438
      %v7501 = vpack.c.b16 %v7441, %v7439
      %v7502 = vpack.c.b16 %v7444, %v7442
      %v7503 = vpack.c.b16 %v7445, %v7443
      %v7504 = vpack.c.b16 %v7448, %v7446
      %v7505 = vpack.c.b16 %v7449, %v7447
      %v7506 = vpack.c.b16 %v7452, %v7450
      %v7507 = vpack.c.b16 %v7453, %v7451
      %v7508 = vpack.c.b16 %v7456, %v7454
      %v7509 = vpack.c.b16 %v7457, %v7455
      %v7510 = vpack.c.b16 %v7460, %v7458
      %v7511 = vpack.c.b16 %v7461, %v7459
      %v7512 = vpack.c.b16 %v7464, %v7462
      %v7513 = vpack.c.b16 %v7465, %v7463
      %v7514 = vpack.c.b16 %v7468, %v7466
      %v7515 = vpack.c.b16 %v7469, %v7467
      %v7516 = vpack.c.b16 %v7472, %v7470
      %v7517 = vpack.c.b16 %v7473, %v7471
      %v7518 = vpack.c.b16 %v7476, %v7474
      %v7519 = vpack.c.b16 %v7477, %v7475
      %v7520 = vpack.c.b16 %v7480, %v7478
      %v7521 = vpack.c.b16 %v7481, %v7479
      %v7522 = vpack.c.b16 %v7484, %v7482
      %v7523 = vpack.c.b16 %v7485, %v7483
      %v7524 = vpack.c.b16 %v7488, %v7486
      %v7525 = vpack.c.b16 %v7489, %v7487
      %v7526 = vpack.c.b16 %v7492, %v7490
      %v7527 = vpack.c.b16 %v7493, %v7491
      %v7528 = vpack.c.b16 %v7496, %v7494
      %v7529 = vpack.c.b16 %v7497, %v7495
      %7562 = vmatprep.subr.bf16.mxu0 %v7143
      %7563 = vmatpush1.bf16.msra.mxu0 %v7142
      %7564 = vmatprep.subr.bf16.mxu0 %v7139
      %7565 = vmatpush1.bf16.msra.mxu0 %v7138
      %7566 = vmatprep.subr.bf16.mxu0 %v7135
      %7567 = vmatpush1.bf16.msra.mxu0 %v7134
      %7568 = vmatprep.subr.bf16.mxu0 %v7131
      %7569 = vmatpush1.bf16.msra.mxu0 %v7130
      %7570 = vmatprep.subr.bf16.mxu0 %v7127
      %7571 = vmatpush1.bf16.msra.mxu0 %v7126
      %7572 = vmatprep.subr.bf16.mxu0 %v7123
      %7573 = vmatpush1.bf16.msra.mxu0 %v7122
      %7574 = vmatprep.subr.bf16.mxu0 %v7119
      %7575 = vmatpush1.bf16.msra.mxu0 %v7118
      %7576 = vmatprep.subr.bf16.mxu0 %v7115
      %7577 = vmatpush1.bf16.msra.mxu0 %v7114
      %7578 = vmatprep.subr.bf16.mxu0 %v7175
      %7579 = vmatpush2.bf16.msra.mxu0 %v7174
      %7580 = vmatprep.subr.bf16.mxu0 %v7171
      %7581 = vmatpush2.bf16.msra.mxu0 %v7170
      %7582 = vmatprep.subr.bf16.mxu0 %v7167
      %7583 = vmatpush2.bf16.msra.mxu0 %v7166
      %7584 = vmatprep.subr.bf16.mxu0 %v7163
      %7585 = vmatpush2.bf16.msra.mxu0 %v7162
      %7586 = vmatprep.subr.bf16.mxu0 %v7159
      %7587 = vmatpush2.bf16.msra.mxu0 %v7158
      %7588 = vmatprep.subr.bf16.mxu0 %v7155
      %7589 = vmatpush2.bf16.msra.mxu0 %v7154
      %7590 = vmatprep.subr.bf16.mxu0 %v7151
      %7591 = vmatpush2.bf16.msra.mxu0 %v7150
      %7592 = vmatprep.subr.bf16.mxu0 %v7147
      %7593 = vmatpush2.bf16.msra.mxu0 %v7146
      %7594 = vmatprep.mubr.bf16.mxu0 %v7499
      %7595 = vmatmul.mubr.bf16.gmra.mxu0 %v7498
      %v7596 = vpop.f32.mrf.mxu0
      %v7597 = vadd.f32 %v7245, %v7596
      %v7598 = vpop.f32.mrf.mxu0
      %v7599 = vadd.f32 %v7245, %v7598
      %v7600 = vpop.f32.mrf.mxu0
      %v7601 = vadd.f32 %v7250, %v7600
      %v7602 = vpop.f32.mrf.mxu0
      %v7603 = vadd.f32 %v7250, %v7602
      %7604 = vmatprep.mubr.bf16.mxu0 %v7501
      %7605 = vmatmul.mubr.bf16.gmra.mxu0 %v7500
      %v7606 = vpop.f32.mrf.mxu0
      %v7607 = vadd.f32 %v7255, %v7606
      %v7608 = vpop.f32.mrf.mxu0
      %v7609 = vadd.f32 %v7255, %v7608
      %v7610 = vpop.f32.mrf.mxu0
      %v7611 = vadd.f32 %v7260, %v7610
      %v7612 = vpop.f32.mrf.mxu0
      %v7613 = vadd.f32 %v7260, %v7612
      %7614 = vmatprep.mubr.bf16.mxu0 %v7503
      %7615 = vmatmul.mubr.bf16.gmra.mxu0 %v7502
      %v7616 = vpop.f32.mrf.mxu0
      %v7617 = vadd.f32 %v7265, %v7616
      %v7618 = vpop.f32.mrf.mxu0
      %v7619 = vadd.f32 %v7265, %v7618
      %v7620 = vpop.f32.mrf.mxu0
      %v7621 = vadd.f32 %v7270, %v7620
      %v7622 = vpop.f32.mrf.mxu0
      %v7623 = vadd.f32 %v7270, %v7622
      %7624 = vmatprep.mubr.bf16.mxu0 %v7505
      %7625 = vmatmul.mubr.bf16.gmra.mxu0 %v7504
      %v7626 = vpop.f32.mrf.mxu0
      %v7627 = vadd.f32 %v7275, %v7626
      %v7628 = vpop.f32.mrf.mxu0
      %v7629 = vadd.f32 %v7275, %v7628
      %v7630 = vpop.f32.mrf.mxu0
      %v7631 = vadd.f32 %v7280, %v7630
      %v7632 = vpop.f32.mrf.mxu0
      %v7633 = vadd.f32 %v7280, %v7632
      %7634 = vmatprep.mubr.bf16.mxu0 %v7507
      %7635 = vmatmul.mubr.bf16.gmra.mxu0 %v7506
      %v7636 = vpop.f32.mrf.mxu0
      %v7637 = vadd.f32 %v7285, %v7636
      %v7638 = vpop.f32.mrf.mxu0
      %v7639 = vadd.f32 %v7285, %v7638
      %v7640 = vpop.f32.mrf.mxu0
      %v7641 = vadd.f32 %v7290, %v7640
      %v7642 = vpop.f32.mrf.mxu0
      %v7643 = vadd.f32 %v7290, %v7642
      %7644 = vmatprep.mubr.bf16.mxu0 %v7509
      %7645 = vmatmul.mubr.bf16.gmra.mxu0 %v7508
      %v7646 = vpop.f32.mrf.mxu0
      %v7647 = vadd.f32 %v7295, %v7646
      %v7648 = vpop.f32.mrf.mxu0
      %v7649 = vadd.f32 %v7295, %v7648
      %v7650 = vpop.f32.mrf.mxu0
      %v7651 = vadd.f32 %v7300, %v7650
      %v7652 = vpop.f32.mrf.mxu0
      %v7653 = vadd.f32 %v7300, %v7652
      %7654 = vmatprep.mubr.bf16.mxu0 %v7511
      %7655 = vmatmul.mubr.bf16.gmra.mxu0 %v7510
      %v7656 = vpop.f32.mrf.mxu0
      %v7657 = vadd.f32 %v7305, %v7656
      %v7658 = vpop.f32.mrf.mxu0
      %v7659 = vadd.f32 %v7305, %v7658
      %v7660 = vpop.f32.mrf.mxu0
      %v7661 = vadd.f32 %v7310, %v7660
      %v7662 = vpop.f32.mrf.mxu0
      %v7663 = vadd.f32 %v7310, %v7662
      %7664 = vmatprep.mubr.bf16.mxu0 %v7513
      %7665 = vmatmul.mubr.bf16.gmra.mxu0 %v7512
      %v7666 = vpop.f32.mrf.mxu0
      %v7667 = vadd.f32 %v7315, %v7666
      %v7668 = vpop.f32.mrf.mxu0
      %v7669 = vadd.f32 %v7315, %v7668
      %v7670 = vpop.f32.mrf.mxu0
      %v7671 = vadd.f32 %v7320, %v7670
      %v7672 = vpop.f32.mrf.mxu0
      %v7673 = vadd.f32 %v7320, %v7672
      %7674 = vmatprep.mubr.bf16.mxu0 %v7515
      %7675 = vmatmul.mubr.bf16.gmra.mxu0 %v7514
      %v7676 = vpop.f32.mrf.mxu0
      %v7677 = vadd.f32 %v7325, %v7676
      %v7678 = vpop.f32.mrf.mxu0
      %v7679 = vadd.f32 %v7325, %v7678
      %v7680 = vpop.f32.mrf.mxu0
      %v7681 = vadd.f32 %v7330, %v7680
      %v7682 = vpop.f32.mrf.mxu0
      %v7683 = vadd.f32 %v7330, %v7682
      %7684 = vmatprep.mubr.bf16.mxu0 %v7517
      %7685 = vmatmul.mubr.bf16.gmra.mxu0 %v7516
      %v7686 = vpop.f32.mrf.mxu0
      %v7687 = vadd.f32 %v7335, %v7686
      %v7688 = vpop.f32.mrf.mxu0
      %v7689 = vadd.f32 %v7335, %v7688
      %v7690 = vpop.f32.mrf.mxu0
      %v7691 = vadd.f32 %v7340, %v7690
      %v7692 = vpop.f32.mrf.mxu0
      %v7693 = vadd.f32 %v7340, %v7692
      %7694 = vmatprep.mubr.bf16.mxu0 %v7519
      %7695 = vmatmul.mubr.bf16.gmra.mxu0 %v7518
      %v7696 = vpop.f32.mrf.mxu0
      %v7697 = vadd.f32 %v7345, %v7696
      %v7698 = vpop.f32.mrf.mxu0
      %v7699 = vadd.f32 %v7345, %v7698
      %v7700 = vpop.f32.mrf.mxu0
      %v7701 = vadd.f32 %v7350, %v7700
      %v7702 = vpop.f32.mrf.mxu0
      %v7703 = vadd.f32 %v7350, %v7702
      %7704 = vmatprep.mubr.bf16.mxu0 %v7521
      %7705 = vmatmul.mubr.bf16.gmra.mxu0 %v7520
      %v7706 = vpop.f32.mrf.mxu0
      %v7707 = vadd.f32 %v7355, %v7706
      %v7708 = vpop.f32.mrf.mxu0
      %v7709 = vadd.f32 %v7355, %v7708
      %v7710 = vpop.f32.mrf.mxu0
      %v7711 = vadd.f32 %v7360, %v7710
      %v7712 = vpop.f32.mrf.mxu0
      %v7713 = vadd.f32 %v7360, %v7712
      %7714 = vmatprep.mubr.bf16.mxu0 %v7523
      %7715 = vmatmul.mubr.bf16.gmra.mxu0 %v7522
      %v7716 = vpop.f32.mrf.mxu0
      %v7717 = vadd.f32 %v7365, %v7716
      %v7718 = vpop.f32.mrf.mxu0
      %v7719 = vadd.f32 %v7365, %v7718
      %v7720 = vpop.f32.mrf.mxu0
      %v7721 = vadd.f32 %v7370, %v7720
      %v7722 = vpop.f32.mrf.mxu0
      %v7723 = vadd.f32 %v7370, %v7722
      %7724 = vmatprep.mubr.bf16.mxu0 %v7525
      %7725 = vmatmul.mubr.bf16.gmra.mxu0 %v7524
      %v7726 = vpop.f32.mrf.mxu0
      %v7727 = vadd.f32 %v7375, %v7726
      %v7728 = vpop.f32.mrf.mxu0
      %v7729 = vadd.f32 %v7375, %v7728
      %v7730 = vpop.f32.mrf.mxu0
      %v7731 = vadd.f32 %v7380, %v7730
      %v7732 = vpop.f32.mrf.mxu0
      %v7733 = vadd.f32 %v7380, %v7732
      %7734 = vmatprep.mubr.bf16.mxu0 %v7527
      %7735 = vmatmul.mubr.bf16.gmra.mxu0 %v7526
      %v7736 = vpop.f32.mrf.mxu0
      %v7737 = vadd.f32 %v7385, %v7736
      %v7738 = vpop.f32.mrf.mxu0
      %v7739 = vadd.f32 %v7385, %v7738
      %v7740 = vpop.f32.mrf.mxu0
      %v7741 = vadd.f32 %v7390, %v7740
      %v7742 = vpop.f32.mrf.mxu0
      %v7743 = vadd.f32 %v7390, %v7742
      %7744 = vmatprep.mubr.bf16.mxu0 %v7529
      %7745 = vmatmul.mubr.bf16.gmra.mxu0 %v7528
      %v7746 = vpop.f32.mrf.mxu0
      %v7747 = vadd.f32 %v7395, %v7746
      %v7748 = vpop.f32.mrf.mxu0
      %v7749 = vadd.f32 %v7395, %v7748
      %v7750 = vpop.f32.mrf.mxu0
      %v7751 = vadd.f32 %v7400, %v7750
      %v7752 = vpop.f32.mrf.mxu0
      %v7753 = vadd.f32 %v7400, %v7752
      %7754 = vdwg.mxu0
      %7755 = vmatprep.subr.bf16.mxu0 %v7145
      %7756 = vmatpush1.bf16.msra.mxu0 %v7144
      %7757 = vmatprep.subr.bf16.mxu0 %v7141
      %7758 = vmatpush1.bf16.msra.mxu0 %v7140
      %7759 = vmatprep.subr.bf16.mxu0 %v7137
      %7760 = vmatpush1.bf16.msra.mxu0 %v7136
      %7761 = vmatprep.subr.bf16.mxu0 %v7133
      %7762 = vmatpush1.bf16.msra.mxu0 %v7132
      %7763 = vmatprep.subr.bf16.mxu0 %v7129
      %7764 = vmatpush1.bf16.msra.mxu0 %v7128
      %7765 = vmatprep.subr.bf16.mxu0 %v7125
      %7766 = vmatpush1.bf16.msra.mxu0 %v7124
      %7767 = vmatprep.subr.bf16.mxu0 %v7121
      %7768 = vmatpush1.bf16.msra.mxu0 %v7120
      %7769 = vmatprep.subr.bf16.mxu0 %v7117
      %7770 = vmatpush1.bf16.msra.mxu0 %v7116
      %7771 = vmatprep.subr.bf16.mxu0 %v7177
      %7772 = vmatpush2.bf16.msra.mxu0 %v7176
      %7773 = vmatprep.subr.bf16.mxu0 %v7173
      %7774 = vmatpush2.bf16.msra.mxu0 %v7172
      %7775 = vmatprep.subr.bf16.mxu0 %v7169
      %7776 = vmatpush2.bf16.msra.mxu0 %v7168
      %7777 = vmatprep.subr.bf16.mxu0 %v7165
      %7778 = vmatpush2.bf16.msra.mxu0 %v7164
      %7779 = vmatprep.subr.bf16.mxu0 %v7161
      %7780 = vmatpush2.bf16.msra.mxu0 %v7160
      %7781 = vmatprep.subr.bf16.mxu0 %v7157
      %7782 = vmatpush2.bf16.msra.mxu0 %v7156
      %7783 = vmatprep.subr.bf16.mxu0 %v7153
      %7784 = vmatpush2.bf16.msra.mxu0 %v7152
      %7785 = vmatprep.subr.bf16.mxu0 %v7149
      %7786 = vmatpush2.bf16.msra.mxu0 %v7148
      %7787 = vmatprep.mubr.bf16.mxu0 %v7499
      %7788 = vmatmul.mubr.bf16.gmra.mxu0 %v7498
      %v7789 = vpop.f32.mrf.mxu0
      %v7790 = vadd.f32 %v7245, %v7789
      %v7791 = vpop.f32.mrf.mxu0
      %v7792 = vadd.f32 %v7245, %v7791
      %v7793 = vpop.f32.mrf.mxu0
      %v7794 = vadd.f32 %v7250, %v7793
      %v7795 = vpop.f32.mrf.mxu0
      %v7796 = vadd.f32 %v7250, %v7795
      %7797 = vmatprep.mubr.bf16.mxu0 %v7501
      %7798 = vmatmul.mubr.bf16.gmra.mxu0 %v7500
      %v7799 = vpop.f32.mrf.mxu0
      %v7800 = vadd.f32 %v7255, %v7799
      %v7801 = vpop.f32.mrf.mxu0
      %v7802 = vadd.f32 %v7255, %v7801
      %v7803 = vpop.f32.mrf.mxu0
      %v7804 = vadd.f32 %v7260, %v7803
      %v7805 = vpop.f32.mrf.mxu0
      %v7806 = vadd.f32 %v7260, %v7805
      %7807 = vmatprep.mubr.bf16.mxu0 %v7503
      %7808 = vmatmul.mubr.bf16.gmra.mxu0 %v7502
      %v7809 = vpop.f32.mrf.mxu0
      %v7810 = vadd.f32 %v7265, %v7809
      %v7811 = vpop.f32.mrf.mxu0
      %v7812 = vadd.f32 %v7265, %v7811
      %v7813 = vpop.f32.mrf.mxu0
      %v7814 = vadd.f32 %v7270, %v7813
      %v7815 = vpop.f32.mrf.mxu0
      %v7816 = vadd.f32 %v7270, %v7815
      %7817 = vmatprep.mubr.bf16.mxu0 %v7505
      %7818 = vmatmul.mubr.bf16.gmra.mxu0 %v7504
      %v7819 = vpop.f32.mrf.mxu0
      %v7820 = vadd.f32 %v7275, %v7819
      %v7821 = vpop.f32.mrf.mxu0
      %v7822 = vadd.f32 %v7275, %v7821
      %v7823 = vpop.f32.mrf.mxu0
      %v7824 = vadd.f32 %v7280, %v7823
      %v7825 = vpop.f32.mrf.mxu0
      %v7826 = vadd.f32 %v7280, %v7825
      %7827 = vmatprep.mubr.bf16.mxu0 %v7507
      %7828 = vmatmul.mubr.bf16.gmra.mxu0 %v7506
      %v7829 = vpop.f32.mrf.mxu0
      %v7830 = vadd.f32 %v7285, %v7829
      %v7831 = vpop.f32.mrf.mxu0
      %v7832 = vadd.f32 %v7285, %v7831
      %v7833 = vpop.f32.mrf.mxu0
      %v7834 = vadd.f32 %v7290, %v7833
      %v7835 = vpop.f32.mrf.mxu0
      %v7836 = vadd.f32 %v7290, %v7835
      %7837 = vmatprep.mubr.bf16.mxu0 %v7509
      %7838 = vmatmul.mubr.bf16.gmra.mxu0 %v7508
      %v7839 = vpop.f32.mrf.mxu0
      %v7840 = vadd.f32 %v7295, %v7839
      %v7841 = vpop.f32.mrf.mxu0
      %v7842 = vadd.f32 %v7295, %v7841
      %v7843 = vpop.f32.mrf.mxu0
      %v7844 = vadd.f32 %v7300, %v7843
      %v7845 = vpop.f32.mrf.mxu0
      %v7846 = vadd.f32 %v7300, %v7845
      %7847 = vmatprep.mubr.bf16.mxu0 %v7511
      %7848 = vmatmul.mubr.bf16.gmra.mxu0 %v7510
      %v7849 = vpop.f32.mrf.mxu0
      %v7850 = vadd.f32 %v7305, %v7849
      %v7851 = vpop.f32.mrf.mxu0
      %v7852 = vadd.f32 %v7305, %v7851
      %v7853 = vpop.f32.mrf.mxu0
      %v7854 = vadd.f32 %v7310, %v7853
      %v7855 = vpop.f32.mrf.mxu0
      %v7856 = vadd.f32 %v7310, %v7855
      %7857 = vmatprep.mubr.bf16.mxu0 %v7513
      %7858 = vmatmul.mubr.bf16.gmra.mxu0 %v7512
      %v7859 = vpop.f32.mrf.mxu0
      %v7860 = vadd.f32 %v7315, %v7859
      %v7861 = vpop.f32.mrf.mxu0
      %v7862 = vadd.f32 %v7315, %v7861
      %v7863 = vpop.f32.mrf.mxu0
      %v7864 = vadd.f32 %v7320, %v7863
      %v7865 = vpop.f32.mrf.mxu0
      %v7866 = vadd.f32 %v7320, %v7865
      %7867 = vmatprep.mubr.bf16.mxu0 %v7515
      %7868 = vmatmul.mubr.bf16.gmra.mxu0 %v7514
      %v7869 = vpop.f32.mrf.mxu0
      %v7870 = vadd.f32 %v7325, %v7869
      %v7871 = vpop.f32.mrf.mxu0
      %v7872 = vadd.f32 %v7325, %v7871
      %v7873 = vpop.f32.mrf.mxu0
      %v7874 = vadd.f32 %v7330, %v7873
      %v7875 = vpop.f32.mrf.mxu0
      %v7876 = vadd.f32 %v7330, %v7875
      %7877 = vmatprep.mubr.bf16.mxu0 %v7517
      %7878 = vmatmul.mubr.bf16.gmra.mxu0 %v7516
      %v7879 = vpop.f32.mrf.mxu0
      %v7880 = vadd.f32 %v7335, %v7879
      %v7881 = vpop.f32.mrf.mxu0
      %v7882 = vadd.f32 %v7335, %v7881
      %v7883 = vpop.f32.mrf.mxu0
      %v7884 = vadd.f32 %v7340, %v7883
      %v7885 = vpop.f32.mrf.mxu0
      %v7886 = vadd.f32 %v7340, %v7885
      %7887 = vmatprep.mubr.bf16.mxu0 %v7519
      %7888 = vmatmul.mubr.bf16.gmra.mxu0 %v7518
      %v7889 = vpop.f32.mrf.mxu0
      %v7890 = vadd.f32 %v7345, %v7889
      %v7891 = vpop.f32.mrf.mxu0
      %v7892 = vadd.f32 %v7345, %v7891
      %v7893 = vpop.f32.mrf.mxu0
      %v7894 = vadd.f32 %v7350, %v7893
      %v7895 = vpop.f32.mrf.mxu0
      %v7896 = vadd.f32 %v7350, %v7895
      %7897 = vmatprep.mubr.bf16.mxu0 %v7521
      %7898 = vmatmul.mubr.bf16.gmra.mxu0 %v7520
      %v7899 = vpop.f32.mrf.mxu0
      %v7900 = vadd.f32 %v7355, %v7899
      %v7901 = vpop.f32.mrf.mxu0
      %v7902 = vadd.f32 %v7355, %v7901
      %v7903 = vpop.f32.mrf.mxu0
      %v7904 = vadd.f32 %v7360, %v7903
      %v7905 = vpop.f32.mrf.mxu0
      %v7906 = vadd.f32 %v7360, %v7905
      %7907 = vmatprep.mubr.bf16.mxu0 %v7523
      %7908 = vmatmul.mubr.bf16.gmra.mxu0 %v7522
      %v7909 = vpop.f32.mrf.mxu0
      %v7910 = vadd.f32 %v7365, %v7909
      %v7911 = vpop.f32.mrf.mxu0
      %v7912 = vadd.f32 %v7365, %v7911
      %v7913 = vpop.f32.mrf.mxu0
      %v7914 = vadd.f32 %v7370, %v7913
      %v7915 = vpop.f32.mrf.mxu0
      %v7916 = vadd.f32 %v7370, %v7915
      %7917 = vmatprep.mubr.bf16.mxu0 %v7525
      %7918 = vmatmul.mubr.bf16.gmra.mxu0 %v7524
      %v7919 = vpop.f32.mrf.mxu0
      %v7920 = vadd.f32 %v7375, %v7919
      %v7921 = vpop.f32.mrf.mxu0
      %v7922 = vadd.f32 %v7375, %v7921
      %v7923 = vpop.f32.mrf.mxu0
      %v7924 = vadd.f32 %v7380, %v7923
      %v7925 = vpop.f32.mrf.mxu0
      %v7926 = vadd.f32 %v7380, %v7925
      %7927 = vmatprep.mubr.bf16.mxu0 %v7527
      %7928 = vmatmul.mubr.bf16.gmra.mxu0 %v7526
      %v7929 = vpop.f32.mrf.mxu0
      %v7930 = vadd.f32 %v7385, %v7929
      %v7931 = vpop.f32.mrf.mxu0
      %v7932 = vadd.f32 %v7385, %v7931
      %v7933 = vpop.f32.mrf.mxu0
      %v7934 = vadd.f32 %v7390, %v7933
      %v7935 = vpop.f32.mrf.mxu0
      %v7936 = vadd.f32 %v7390, %v7935
      %7937 = vmatprep.mubr.bf16.mxu0 %v7529
      %7938 = vmatmul.mubr.bf16.gmra.mxu0 %v7528
      %v7939 = vpop.f32.mrf.mxu0
      %v7940 = vadd.f32 %v7395, %v7939
      %v7941 = vpop.f32.mrf.mxu0
      %v7942 = vadd.f32 %v7395, %v7941
      %v7943 = vpop.f32.mrf.mxu0
      %v7944 = vadd.f32 %v7400, %v7943
      %v7945 = vpop.f32.mrf.mxu0
      %v7946 = vadd.f32 %v7400, %v7945
      %7947 = vdwg.mxu0
      %v7948 = vmax.f32 %v7597, 0.0
      %v7949 = vmax.f32 %v7599, 0.0
      %v7950 = vmax.f32 %v7790, 0.0
      %v7951 = vmax.f32 %v7792, 0.0
      %v7952 = vmax.f32 %v7601, 0.0
      %v7953 = vmax.f32 %v7603, 0.0
      %v7954 = vmax.f32 %v7794, 0.0
      %v7955 = vmax.f32 %v7796, 0.0
      %v7956 = vmax.f32 %v7607, 0.0
      %v7957 = vmax.f32 %v7609, 0.0
      %v7958 = vmax.f32 %v7800, 0.0
      %v7959 = vmax.f32 %v7802, 0.0
      %v7960 = vmax.f32 %v7611, 0.0
      %v7961 = vmax.f32 %v7613, 0.0
      %v7962 = vmax.f32 %v7804, 0.0
      %v7963 = vmax.f32 %v7806, 0.0
      %v7964 = vmax.f32 %v7617, 0.0
      %v7965 = vmax.f32 %v7619, 0.0
      %v7966 = vmax.f32 %v7810, 0.0
      %v7967 = vmax.f32 %v7812, 0.0
      %v7968 = vmax.f32 %v7621, 0.0
      %v7969 = vmax.f32 %v7623, 0.0
      %v7970 = vmax.f32 %v7814, 0.0
      %v7971 = vmax.f32 %v7816, 0.0
      %v7972 = vmax.f32 %v7627, 0.0
      %v7973 = vmax.f32 %v7629, 0.0
      %v7974 = vmax.f32 %v7820, 0.0
      %v7975 = vmax.f32 %v7822, 0.0
      %v7976 = vmax.f32 %v7631, 0.0
      %v7977 = vmax.f32 %v7633, 0.0
      %v7978 = vmax.f32 %v7824, 0.0
      %v7979 = vmax.f32 %v7826, 0.0
      %v7980 = vmax.f32 %v7637, 0.0
      %v7981 = vmax.f32 %v7639, 0.0
      %v7982 = vmax.f32 %v7830, 0.0
      %v7983 = vmax.f32 %v7832, 0.0
      %v7984 = vmax.f32 %v7641, 0.0
      %v7985 = vmax.f32 %v7643, 0.0
      %v7986 = vmax.f32 %v7834, 0.0
      %v7987 = vmax.f32 %v7836, 0.0
      %v7988 = vmax.f32 %v7647, 0.0
      %v7989 = vmax.f32 %v7649, 0.0
      %v7990 = vmax.f32 %v7840, 0.0
      %v7991 = vmax.f32 %v7842, 0.0
      %v7992 = vmax.f32 %v7651, 0.0
      %v7993 = vmax.f32 %v7653, 0.0
      %v7994 = vmax.f32 %v7844, 0.0
      %v7995 = vmax.f32 %v7846, 0.0
      %v7996 = vmax.f32 %v7657, 0.0
      %v7997 = vmax.f32 %v7659, 0.0
      %v7998 = vmax.f32 %v7850, 0.0
      %v7999 = vmax.f32 %v7852, 0.0
      %v8000 = vmax.f32 %v7661, 0.0
      %v8001 = vmax.f32 %v7663, 0.0
      %v8002 = vmax.f32 %v7854, 0.0
      %v8003 = vmax.f32 %v7856, 0.0
      %v8004 = vmax.f32 %v7667, 0.0
      %v8005 = vmax.f32 %v7669, 0.0
      %v8006 = vmax.f32 %v7860, 0.0
      %v8007 = vmax.f32 %v7862, 0.0
      %v8008 = vmax.f32 %v7671, 0.0
      %v8009 = vmax.f32 %v7673, 0.0
      %v8010 = vmax.f32 %v7864, 0.0
      %v8011 = vmax.f32 %v7866, 0.0
      %v8012 = vmax.f32 %v7677, 0.0
      %v8013 = vmax.f32 %v7679, 0.0
      %v8014 = vmax.f32 %v7870, 0.0
      %v8015 = vmax.f32 %v7872, 0.0
      %v8016 = vmax.f32 %v7681, 0.0
      %v8017 = vmax.f32 %v7683, 0.0
      %v8018 = vmax.f32 %v7874, 0.0
      %v8019 = vmax.f32 %v7876, 0.0
      %v8020 = vmax.f32 %v7687, 0.0
      %v8021 = vmax.f32 %v7689, 0.0
      %v8022 = vmax.f32 %v7880, 0.0
      %v8023 = vmax.f32 %v7882, 0.0
      %v8024 = vmax.f32 %v7691, 0.0
      %v8025 = vmax.f32 %v7693, 0.0
      %v8026 = vmax.f32 %v7884, 0.0
      %v8027 = vmax.f32 %v7886, 0.0
      %v8028 = vmax.f32 %v7697, 0.0
      %v8029 = vmax.f32 %v7699, 0.0
      %v8030 = vmax.f32 %v7890, 0.0
      %v8031 = vmax.f32 %v7892, 0.0
      %v8032 = vmax.f32 %v7701, 0.0
      %v8033 = vmax.f32 %v7703, 0.0
      %v8034 = vmax.f32 %v7894, 0.0
      %v8035 = vmax.f32 %v7896, 0.0
      %v8036 = vmax.f32 %v7707, 0.0
      %v8037 = vmax.f32 %v7709, 0.0
      %v8038 = vmax.f32 %v7900, 0.0
      %v8039 = vmax.f32 %v7902, 0.0
      %v8040 = vmax.f32 %v7711, 0.0
      %v8041 = vmax.f32 %v7713, 0.0
      %v8042 = vmax.f32 %v7904, 0.0
      %v8043 = vmax.f32 %v7906, 0.0
      %v8044 = vmax.f32 %v7717, 0.0
      %v8045 = vmax.f32 %v7719, 0.0
      %v8046 = vmax.f32 %v7910, 0.0
      %v8047 = vmax.f32 %v7912, 0.0
      %v8048 = vmax.f32 %v7721, 0.0
      %v8049 = vmax.f32 %v7723, 0.0
      %v8050 = vmax.f32 %v7914, 0.0
      %v8051 = vmax.f32 %v7916, 0.0
      %v8052 = vmax.f32 %v7727, 0.0
      %v8053 = vmax.f32 %v7729, 0.0
      %v8054 = vmax.f32 %v7920, 0.0
      %v8055 = vmax.f32 %v7922, 0.0
      %v8056 = vmax.f32 %v7731, 0.0
      %v8057 = vmax.f32 %v7733, 0.0
      %v8058 = vmax.f32 %v7924, 0.0
      %v8059 = vmax.f32 %v7926, 0.0
      %v8060 = vmax.f32 %v7737, 0.0
      %v8061 = vmax.f32 %v7739, 0.0
      %v8062 = vmax.f32 %v7930, 0.0
      %v8063 = vmax.f32 %v7932, 0.0
      %v8064 = vmax.f32 %v7741, 0.0
      %v8065 = vmax.f32 %v7743, 0.0
      %v8066 = vmax.f32 %v7934, 0.0
      %v8067 = vmax.f32 %v7936, 0.0
      %v8068 = vmax.f32 %v7747, 0.0
      %v8069 = vmax.f32 %v7749, 0.0
      %v8070 = vmax.f32 %v7940, 0.0
      %v8071 = vmax.f32 %v7942, 0.0
      %v8072 = vmax.f32 %v7751, 0.0
      %v8073 = vmax.f32 %v7753, 0.0
      %v8074 = vmax.f32 %v7944, 0.0
      %v8075 = vmax.f32 %v7946, 0.0
      %v8076 = vpack.c.bf16 %v7952, %v7948
      %v8077 = vpack.c.bf16 %v7953, %v7949
      %v8078 = vpack.c.bf16 %v7954, %v7950
      %v8079 = vpack.c.bf16 %v7955, %v7951
      %v8080 = vpack.c.bf16 %v7960, %v7956
      %v8081 = vpack.c.bf16 %v7961, %v7957
      %v8082 = vpack.c.bf16 %v7962, %v7958
      %v8083 = vpack.c.bf16 %v7963, %v7959
      %v8084 = vpack.c.bf16 %v7968, %v7964
      %v8085 = vpack.c.bf16 %v7969, %v7965
      %v8086 = vpack.c.bf16 %v7970, %v7966
      %v8087 = vpack.c.bf16 %v7971, %v7967
      %v8088 = vpack.c.bf16 %v7976, %v7972
      %v8089 = vpack.c.bf16 %v7977, %v7973
      %v8090 = vpack.c.bf16 %v7978, %v7974
      %v8091 = vpack.c.bf16 %v7979, %v7975
      %v8092 = vpack.c.bf16 %v7984, %v7980
      %v8093 = vpack.c.bf16 %v7985, %v7981
      %v8094 = vpack.c.bf16 %v7986, %v7982
      %v8095 = vpack.c.bf16 %v7987, %v7983
      %v8096 = vpack.c.bf16 %v7992, %v7988
      %v8097 = vpack.c.bf16 %v7993, %v7989
      %v8098 = vpack.c.bf16 %v7994, %v7990
      %v8099 = vpack.c.bf16 %v7995, %v7991
      %v8100 = vpack.c.bf16 %v8000, %v7996
      %v8101 = vpack.c.bf16 %v8001, %v7997
      %v8102 = vpack.c.bf16 %v8002, %v7998
      %v8103 = vpack.c.bf16 %v8003, %v7999
      %v8104 = vpack.c.bf16 %v8008, %v8004
      %v8105 = vpack.c.bf16 %v8009, %v8005
      %v8106 = vpack.c.bf16 %v8010, %v8006
      %v8107 = vpack.c.bf16 %v8011, %v8007
      %v8108 = vpack.c.bf16 %v8016, %v8012
      %v8109 = vpack.c.bf16 %v8017, %v8013
      %v8110 = vpack.c.bf16 %v8018, %v8014
      %v8111 = vpack.c.bf16 %v8019, %v8015
      %v8112 = vpack.c.bf16 %v8024, %v8020
      %v8113 = vpack.c.bf16 %v8025, %v8021
      %v8114 = vpack.c.bf16 %v8026, %v8022
      %v8115 = vpack.c.bf16 %v8027, %v8023
      %v8116 = vpack.c.bf16 %v8032, %v8028
      %v8117 = vpack.c.bf16 %v8033, %v8029
      %v8118 = vpack.c.bf16 %v8034, %v8030
      %v8119 = vpack.c.bf16 %v8035, %v8031
      %v8120 = vpack.c.bf16 %v8040, %v8036
      %v8121 = vpack.c.bf16 %v8041, %v8037
      %v8122 = vpack.c.bf16 %v8042, %v8038
      %v8123 = vpack.c.bf16 %v8043, %v8039
      %v8124 = vpack.c.bf16 %v8048, %v8044
      %v8125 = vpack.c.bf16 %v8049, %v8045
      %v8126 = vpack.c.bf16 %v8050, %v8046
      %v8127 = vpack.c.bf16 %v8051, %v8047
      %v8128 = vpack.c.bf16 %v8056, %v8052
      %v8129 = vpack.c.bf16 %v8057, %v8053
      %v8130 = vpack.c.bf16 %v8058, %v8054
      %v8131 = vpack.c.bf16 %v8059, %v8055
      %v8132 = vpack.c.bf16 %v8064, %v8060
      %v8133 = vpack.c.bf16 %v8065, %v8061
      %v8134 = vpack.c.bf16 %v8066, %v8062
      %v8135 = vpack.c.bf16 %v8067, %v8063
      %v8136 = vpack.c.bf16 %v8072, %v8068
      %v8137 = vpack.c.bf16 %v8073, %v8069
      %v8138 = vpack.c.bf16 %v8074, %v8070
      %v8139 = vpack.c.bf16 %v8075, %v8071
      %v8140 = vld [vmem:[%s16] sm:$0xff]
      %v8141 = vld [vmem:[%s16 + $0x8] sm:$0xff]
      %v8142 = vld [vmem:[%s16 + $0x10] sm:$0xff]
      %v8143 = vld [vmem:[%s16 + $0x18] sm:$0xff]
      %v8144 = vld [vmem:[%s16 + $0x20] sm:$0xff]
      %v8145 = vld [vmem:[%s16 + $0x28] sm:$0xff]
      %v8146 = vld [vmem:[%s16 + $0x30] sm:$0xff]
      %v8147 = vld [vmem:[%s16 + $0x38] sm:$0xff]
      %v8148 = vld [vmem:[%s16 + $0x40] sm:$0xff]
      %v8149 = vld [vmem:[%s16 + $0x48] sm:$0xff]
      %v8150 = vld [vmem:[%s16 + $0x50] sm:$0xff]
      %v8151 = vld [vmem:[%s16 + $0x58] sm:$0xff]
      %v8152 = vld [vmem:[%s16 + $0x60] sm:$0xff]
      %v8153 = vld [vmem:[%s16 + $0x68] sm:$0xff]
      %v8154 = vld [vmem:[%s16 + $0x70] sm:$0xff]
      %v8155 = vld [vmem:[%s16 + $0x78] sm:$0xff]
      %v8156 = vld [vmem:[%s16 + $0x80] sm:$0xff]
      %v8157 = vld [vmem:[%s16 + $0x88] sm:$0xff]
      %v8158 = vld [vmem:[%s16 + $0x90] sm:$0xff]
      %v8159 = vld [vmem:[%s16 + $0x98] sm:$0xff]
      %v8160 = vld [vmem:[%s16 + $0xa0] sm:$0xff]
      %v8161 = vld [vmem:[%s16 + $0xa8] sm:$0xff]
      %v8162 = vld [vmem:[%s16 + $0xb0] sm:$0xff]
      %v8163 = vld [vmem:[%s16 + $0xb8] sm:$0xff]
      %v8164 = vld [vmem:[%s16 + $0xc0] sm:$0xff]
      %v8165 = vld [vmem:[%s16 + $0xc8] sm:$0xff]
      %v8166 = vld [vmem:[%s16 + $0xd0] sm:$0xff]
      %v8167 = vld [vmem:[%s16 + $0xd8] sm:$0xff]
      %v8168 = vld [vmem:[%s16 + $0xe0] sm:$0xff]
      %v8169 = vld [vmem:[%s16 + $0xe8] sm:$0xff]
      %v8170 = vld [vmem:[%s16 + $0xf0] sm:$0xff]
      %v8171 = vld [vmem:[%s16 + $0xf8] sm:$0xff]
      %v8172 = vld [vmem:[%s17] sm:$0xff]
      %v8173 = vld [vmem:[%s17 + $0x8] sm:$0xff]
      %v8174 = vld [vmem:[%s17 + $0x10] sm:$0xff]
      %v8175 = vld [vmem:[%s17 + $0x18] sm:$0xff]
      %v8176 = vld [vmem:[%s17 + $0x20] sm:$0xff]
      %v8177 = vld [vmem:[%s17 + $0x28] sm:$0xff]
      %v8178 = vld [vmem:[%s17 + $0x30] sm:$0xff]
      %v8179 = vld [vmem:[%s17 + $0x38] sm:$0xff]
      %v8180 = vld [vmem:[%s17 + $0x40] sm:$0xff]
      %v8181 = vld [vmem:[%s17 + $0x48] sm:$0xff]
      %v8182 = vld [vmem:[%s17 + $0x50] sm:$0xff]
      %v8183 = vld [vmem:[%s17 + $0x58] sm:$0xff]
      %v8184 = vld [vmem:[%s17 + $0x60] sm:$0xff]
      %v8185 = vld [vmem:[%s17 + $0x68] sm:$0xff]
      %v8186 = vld [vmem:[%s17 + $0x70] sm:$0xff]
      %v8187 = vld [vmem:[%s17 + $0x78] sm:$0xff]
      %v8188 = vld [vmem:[%s17 + $0x80] sm:$0xff]
      %v8189 = vld [vmem:[%s17 + $0x88] sm:$0xff]
      %v8190 = vld [vmem:[%s17 + $0x90] sm:$0xff]
      %v8191 = vld [vmem:[%s17 + $0x98] sm:$0xff]
      %v8192 = vld [vmem:[%s17 + $0xa0] sm:$0xff]
      %v8193 = vld [vmem:[%s17 + $0xa8] sm:$0xff]
      %v8194 = vld [vmem:[%s17 + $0xb0] sm:$0xff]
      %v8195 = vld [vmem:[%s17 + $0xb8] sm:$0xff]
      %v8196 = vld [vmem:[%s17 + $0xc0] sm:$0xff]
      %v8197 = vld [vmem:[%s17 + $0xc8] sm:$0xff]
      %v8198 = vld [vmem:[%s17 + $0xd0] sm:$0xff]
      %v8199 = vld [vmem:[%s17 + $0xd8] sm:$0xff]
      %v8200 = vld [vmem:[%s17 + $0xe0] sm:$0xff]
      %v8201 = vld [vmem:[%s17 + $0xe8] sm:$0xff]
      %v8202 = vld [vmem:[%s17 + $0xf0] sm:$0xff]
      %v8203 = vld [vmem:[%s17 + $0xf8] sm:$0xff]
      %8205 = vset.pattern.permute.xlu0 0
      %8206 = vperm.xlu0 %8205, %v8172
      %v8207 = vpop.permute.xlu0 %8206
      %8210 = vset.pattern.permute.xlu0 0
      %8211 = vperm.xlu0 %8210, %v8173
      %v8212 = vpop.permute.xlu0 %8211
      %8215 = vset.pattern.permute.xlu0 0
      %8216 = vperm.xlu0 %8215, %v8174
      %v8217 = vpop.permute.xlu0 %8216
      %8220 = vset.pattern.permute.xlu0 0
      %8221 = vperm.xlu0 %8220, %v8175
      %v8222 = vpop.permute.xlu0 %8221
      %8225 = vset.pattern.permute.xlu0 0
      %8226 = vperm.xlu0 %8225, %v8176
      %v8227 = vpop.permute.xlu0 %8226
      %8230 = vset.pattern.permute.xlu0 0
      %8231 = vperm.xlu0 %8230, %v8177
      %v8232 = vpop.permute.xlu0 %8231
      %8235 = vset.pattern.permute.xlu0 0
      %8236 = vperm.xlu0 %8235, %v8178
      %v8237 = vpop.permute.xlu0 %8236
      %8240 = vset.pattern.permute.xlu0 0
      %8241 = vperm.xlu0 %8240, %v8179
      %v8242 = vpop.permute.xlu0 %8241
      %8245 = vset.pattern.permute.xlu0 0
      %8246 = vperm.xlu0 %8245, %v8180
      %v8247 = vpop.permute.xlu0 %8246
      %8250 = vset.pattern.permute.xlu0 0
      %8251 = vperm.xlu0 %8250, %v8181
      %v8252 = vpop.permute.xlu0 %8251
      %8255 = vset.pattern.permute.xlu0 0
      %8256 = vperm.xlu0 %8255, %v8182
      %v8257 = vpop.permute.xlu0 %8256
      %8260 = vset.pattern.permute.xlu0 0
      %8261 = vperm.xlu0 %8260, %v8183
      %v8262 = vpop.permute.xlu0 %8261
      %8265 = vset.pattern.permute.xlu0 0
      %8266 = vperm.xlu0 %8265, %v8184
      %v8267 = vpop.permute.xlu0 %8266
      %8270 = vset.pattern.permute.xlu0 0
      %8271 = vperm.xlu0 %8270, %v8185
      %v8272 = vpop.permute.xlu0 %8271
      %8275 = vset.pattern.permute.xlu0 0
      %8276 = vperm.xlu0 %8275, %v8186
      %v8277 = vpop.permute.xlu0 %8276
      %8280 = vset.pattern.permute.xlu0 0
      %8281 = vperm.xlu0 %8280, %v8187
      %v8282 = vpop.permute.xlu0 %8281
      %8285 = vset.pattern.permute.xlu0 0
      %8286 = vperm.xlu0 %8285, %v8188
      %v8287 = vpop.permute.xlu0 %8286
      %8290 = vset.pattern.permute.xlu0 0
      %8291 = vperm.xlu0 %8290, %v8189
      %v8292 = vpop.permute.xlu0 %8291
      %8295 = vset.pattern.permute.xlu0 0
      %8296 = vperm.xlu0 %8295, %v8190
      %v8297 = vpop.permute.xlu0 %8296
      %8300 = vset.pattern.permute.xlu0 0
      %8301 = vperm.xlu0 %8300, %v8191
      %v8302 = vpop.permute.xlu0 %8301
      %8305 = vset.pattern.permute.xlu0 0
      %8306 = vperm.xlu0 %8305, %v8192
      %v8307 = vpop.permute.xlu0 %8306
      %8310 = vset.pattern.permute.xlu0 0
      %8311 = vperm.xlu0 %8310, %v8193
      %v8312 = vpop.permute.xlu0 %8311
      %8315 = vset.pattern.permute.xlu0 0
      %8316 = vperm.xlu0 %8315, %v8194
      %v8317 = vpop.permute.xlu0 %8316
      %8320 = vset.pattern.permute.xlu0 0
      %8321 = vperm.xlu0 %8320, %v8195
      %v8322 = vpop.permute.xlu0 %8321
      %8325 = vset.pattern.permute.xlu0 0
      %8326 = vperm.xlu0 %8325, %v8196
      %v8327 = vpop.permute.xlu0 %8326
      %8330 = vset.pattern.permute.xlu0 0
      %8331 = vperm.xlu0 %8330, %v8197
      %v8332 = vpop.permute.xlu0 %8331
      %8335 = vset.pattern.permute.xlu0 0
      %8336 = vperm.xlu0 %8335, %v8198
      %v8337 = vpop.permute.xlu0 %8336
      %8340 = vset.pattern.permute.xlu0 0
      %8341 = vperm.xlu0 %8340, %v8199
      %v8342 = vpop.permute.xlu0 %8341
      %8345 = vset.pattern.permute.xlu0 0
      %8346 = vperm.xlu0 %8345, %v8200
      %v8347 = vpop.permute.xlu0 %8346
      %8350 = vset.pattern.permute.xlu0 0
      %8351 = vperm.xlu0 %8350, %v8201
      %v8352 = vpop.permute.xlu0 %8351
      %8355 = vset.pattern.permute.xlu0 0
      %8356 = vperm.xlu0 %8355, %v8202
      %v8357 = vpop.permute.xlu0 %8356
      %8360 = vset.pattern.permute.xlu0 0
      %8361 = vperm.xlu0 %8360, %v8203
      %v8362 = vpop.permute.xlu0 %8361
      %v8396 = vunpack.c.l.b16 %v8140
      %v8397 = vunpack.c.h.b16 %v8140
      %v8398 = vunpack.c.l.b16 %v8141
      %v8399 = vunpack.c.h.b16 %v8141
      %v8400 = vunpack.c.l.b16 %v8142
      %v8401 = vunpack.c.h.b16 %v8142
      %v8402 = vunpack.c.l.b16 %v8143
      %v8403 = vunpack.c.h.b16 %v8143
      %v8404 = vunpack.c.l.b16 %v8144
      %v8405 = vunpack.c.h.b16 %v8144
      %v8406 = vunpack.c.l.b16 %v8145
      %v8407 = vunpack.c.h.b16 %v8145
      %v8408 = vunpack.c.l.b16 %v8146
      %v8409 = vunpack.c.h.b16 %v8146
      %v8410 = vunpack.c.l.b16 %v8147
      %v8411 = vunpack.c.h.b16 %v8147
      %v8412 = vunpack.c.l.b16 %v8148
      %v8413 = vunpack.c.h.b16 %v8148
      %v8414 = vunpack.c.l.b16 %v8149
      %v8415 = vunpack.c.h.b16 %v8149
      %v8416 = vunpack.c.l.b16 %v8150
      %v8417 = vunpack.c.h.b16 %v8150
      %v8418 = vunpack.c.l.b16 %v8151
      %v8419 = vunpack.c.h.b16 %v8151
      %v8420 = vunpack.c.l.b16 %v8152
      %v8421 = vunpack.c.h.b16 %v8152
      %v8422 = vunpack.c.l.b16 %v8153
      %v8423 = vunpack.c.h.b16 %v8153
      %v8424 = vunpack.c.l.b16 %v8154
      %v8425 = vunpack.c.h.b16 %v8154
      %v8426 = vunpack.c.l.b16 %v8155
      %v8427 = vunpack.c.h.b16 %v8155
      %v8428 = vunpack.c.l.b16 %v8156
      %v8429 = vunpack.c.h.b16 %v8156
      %v8430 = vunpack.c.l.b16 %v8157
      %v8431 = vunpack.c.h.b16 %v8157
      %v8432 = vunpack.c.l.b16 %v8158
      %v8433 = vunpack.c.h.b16 %v8158
      %v8434 = vunpack.c.l.b16 %v8159
      %v8435 = vunpack.c.h.b16 %v8159
      %v8436 = vunpack.c.l.b16 %v8160
      %v8437 = vunpack.c.h.b16 %v8160
      %v8438 = vunpack.c.l.b16 %v8161
      %v8439 = vunpack.c.h.b16 %v8161
      %v8440 = vunpack.c.l.b16 %v8162
      %v8441 = vunpack.c.h.b16 %v8162
      %v8442 = vunpack.c.l.b16 %v8163
      %v8443 = vunpack.c.h.b16 %v8163
      %v8444 = vunpack.c.l.b16 %v8164
      %v8445 = vunpack.c.h.b16 %v8164
      %v8446 = vunpack.c.l.b16 %v8165
      %v8447 = vunpack.c.h.b16 %v8165
      %v8448 = vunpack.c.l.b16 %v8166
      %v8449 = vunpack.c.h.b16 %v8166
      %v8450 = vunpack.c.l.b16 %v8167
      %v8451 = vunpack.c.h.b16 %v8167
      %v8452 = vunpack.c.l.b16 %v8168
      %v8453 = vunpack.c.h.b16 %v8168
      %v8454 = vunpack.c.l.b16 %v8169
      %v8455 = vunpack.c.h.b16 %v8169
      %v8456 = vunpack.c.l.b16 %v8170
      %v8457 = vunpack.c.h.b16 %v8170
      %v8458 = vunpack.c.l.b16 %v8171
      %v8459 = vunpack.c.h.b16 %v8171
      %v8460 = vpack.c.b16 %v8398, %v8396
      %v8461 = vpack.c.b16 %v8399, %v8397
      %v8462 = vpack.c.b16 %v8402, %v8400
      %v8463 = vpack.c.b16 %v8403, %v8401
      %v8464 = vpack.c.b16 %v8406, %v8404
      %v8465 = vpack.c.b16 %v8407, %v8405
      %v8466 = vpack.c.b16 %v8410, %v8408
      %v8467 = vpack.c.b16 %v8411, %v8409
      %v8468 = vpack.c.b16 %v8414, %v8412
      %v8469 = vpack.c.b16 %v8415, %v8413
      %v8470 = vpack.c.b16 %v8418, %v8416
      %v8471 = vpack.c.b16 %v8419, %v8417
      %v8472 = vpack.c.b16 %v8422, %v8420
      %v8473 = vpack.c.b16 %v8423, %v8421
      %v8474 = vpack.c.b16 %v8426, %v8424
      %v8475 = vpack.c.b16 %v8427, %v8425
      %v8476 = vpack.c.b16 %v8430, %v8428
      %v8477 = vpack.c.b16 %v8431, %v8429
      %v8478 = vpack.c.b16 %v8434, %v8432
      %v8479 = vpack.c.b16 %v8435, %v8433
      %v8480 = vpack.c.b16 %v8438, %v8436
      %v8481 = vpack.c.b16 %v8439, %v8437
      %v8482 = vpack.c.b16 %v8442, %v8440
      %v8483 = vpack.c.b16 %v8443, %v8441
      %v8484 = vpack.c.b16 %v8446, %v8444
      %v8485 = vpack.c.b16 %v8447, %v8445
      %v8486 = vpack.c.b16 %v8450, %v8448
      %v8487 = vpack.c.b16 %v8451, %v8449
      %v8488 = vpack.c.b16 %v8454, %v8452
      %v8489 = vpack.c.b16 %v8455, %v8453
      %v8490 = vpack.c.b16 %v8458, %v8456
      %v8491 = vpack.c.b16 %v8459, %v8457
      %8524 = vmatprep.subr.bf16.mxu0 %v8105
      %8525 = vmatpush1.bf16.msra.mxu0 %v8104
      %8526 = vmatprep.subr.bf16.mxu0 %v8101
      %8527 = vmatpush1.bf16.msra.mxu0 %v8100
      %8528 = vmatprep.subr.bf16.mxu0 %v8097
      %8529 = vmatpush1.bf16.msra.mxu0 %v8096
      %8530 = vmatprep.subr.bf16.mxu0 %v8093
      %8531 = vmatpush1.bf16.msra.mxu0 %v8092
      %8532 = vmatprep.subr.bf16.mxu0 %v8089
      %8533 = vmatpush1.bf16.msra.mxu0 %v8088
      %8534 = vmatprep.subr.bf16.mxu0 %v8085
      %8535 = vmatpush1.bf16.msra.mxu0 %v8084
      %8536 = vmatprep.subr.bf16.mxu0 %v8081
      %8537 = vmatpush1.bf16.msra.mxu0 %v8080
      %8538 = vmatprep.subr.bf16.mxu0 %v8077
      %8539 = vmatpush1.bf16.msra.mxu0 %v8076
      %8540 = vmatprep.subr.bf16.mxu0 %v8137
      %8541 = vmatpush2.bf16.msra.mxu0 %v8136
      %8542 = vmatprep.subr.bf16.mxu0 %v8133
      %8543 = vmatpush2.bf16.msra.mxu0 %v8132
      %8544 = vmatprep.subr.bf16.mxu0 %v8129
      %8545 = vmatpush2.bf16.msra.mxu0 %v8128
      %8546 = vmatprep.subr.bf16.mxu0 %v8125
      %8547 = vmatpush2.bf16.msra.mxu0 %v8124
      %8548 = vmatprep.subr.bf16.mxu0 %v8121
      %8549 = vmatpush2.bf16.msra.mxu0 %v8120
      %8550 = vmatprep.subr.bf16.mxu0 %v8117
      %8551 = vmatpush2.bf16.msra.mxu0 %v8116
      %8552 = vmatprep.subr.bf16.mxu0 %v8113
      %8553 = vmatpush2.bf16.msra.mxu0 %v8112
      %8554 = vmatprep.subr.bf16.mxu0 %v8109
      %8555 = vmatpush2.bf16.msra.mxu0 %v8108
      %8556 = vmatprep.mubr.bf16.mxu0 %v8461
      %8557 = vmatmul.mubr.bf16.gmra.mxu0 %v8460
      %v8558 = vpop.f32.mrf.mxu0
      %v8559 = vadd.f32 %v8207, %v8558
      %v8560 = vpop.f32.mrf.mxu0
      %v8561 = vadd.f32 %v8207, %v8560
      %v8562 = vpop.f32.mrf.mxu0
      %v8563 = vadd.f32 %v8212, %v8562
      %v8564 = vpop.f32.mrf.mxu0
      %v8565 = vadd.f32 %v8212, %v8564
      %8566 = vmatprep.mubr.bf16.mxu0 %v8463
      %8567 = vmatmul.mubr.bf16.gmra.mxu0 %v8462
      %v8568 = vpop.f32.mrf.mxu0
      %v8569 = vadd.f32 %v8217, %v8568
      %v8570 = vpop.f32.mrf.mxu0
      %v8571 = vadd.f32 %v8217, %v8570
      %v8572 = vpop.f32.mrf.mxu0
      %v8573 = vadd.f32 %v8222, %v8572
      %v8574 = vpop.f32.mrf.mxu0
      %v8575 = vadd.f32 %v8222, %v8574
      %8576 = vmatprep.mubr.bf16.mxu0 %v8465
      %8577 = vmatmul.mubr.bf16.gmra.mxu0 %v8464
      %v8578 = vpop.f32.mrf.mxu0
      %v8579 = vadd.f32 %v8227, %v8578
      %v8580 = vpop.f32.mrf.mxu0
      %v8581 = vadd.f32 %v8227, %v8580
      %v8582 = vpop.f32.mrf.mxu0
      %v8583 = vadd.f32 %v8232, %v8582
      %v8584 = vpop.f32.mrf.mxu0
      %v8585 = vadd.f32 %v8232, %v8584
      %8586 = vmatprep.mubr.bf16.mxu0 %v8467
      %8587 = vmatmul.mubr.bf16.gmra.mxu0 %v8466
      %v8588 = vpop.f32.mrf.mxu0
      %v8589 = vadd.f32 %v8237, %v8588
      %v8590 = vpop.f32.mrf.mxu0
      %v8591 = vadd.f32 %v8237, %v8590
      %v8592 = vpop.f32.mrf.mxu0
      %v8593 = vadd.f32 %v8242, %v8592
      %v8594 = vpop.f32.mrf.mxu0
      %v8595 = vadd.f32 %v8242, %v8594
      %8596 = vmatprep.mubr.bf16.mxu0 %v8469
      %8597 = vmatmul.mubr.bf16.gmra.mxu0 %v8468
      %v8598 = vpop.f32.mrf.mxu0
      %v8599 = vadd.f32 %v8247, %v8598
      %v8600 = vpop.f32.mrf.mxu0
      %v8601 = vadd.f32 %v8247, %v8600
      %v8602 = vpop.f32.mrf.mxu0
      %v8603 = vadd.f32 %v8252, %v8602
      %v8604 = vpop.f32.mrf.mxu0
      %v8605 = vadd.f32 %v8252, %v8604
      %8606 = vmatprep.mubr.bf16.mxu0 %v8471
      %8607 = vmatmul.mubr.bf16.gmra.mxu0 %v8470
      %v8608 = vpop.f32.mrf.mxu0
      %v8609 = vadd.f32 %v8257, %v8608
      %v8610 = vpop.f32.mrf.mxu0
      %v8611 = vadd.f32 %v8257, %v8610
      %v8612 = vpop.f32.mrf.mxu0
      %v8613 = vadd.f32 %v8262, %v8612
      %v8614 = vpop.f32.mrf.mxu0
      %v8615 = vadd.f32 %v8262, %v8614
      %8616 = vmatprep.mubr.bf16.mxu0 %v8473
      %8617 = vmatmul.mubr.bf16.gmra.mxu0 %v8472
      %v8618 = vpop.f32.mrf.mxu0
      %v8619 = vadd.f32 %v8267, %v8618
      %v8620 = vpop.f32.mrf.mxu0
      %v8621 = vadd.f32 %v8267, %v8620
      %v8622 = vpop.f32.mrf.mxu0
      %v8623 = vadd.f32 %v8272, %v8622
      %v8624 = vpop.f32.mrf.mxu0
      %v8625 = vadd.f32 %v8272, %v8624
      %8626 = vmatprep.mubr.bf16.mxu0 %v8475
      %8627 = vmatmul.mubr.bf16.gmra.mxu0 %v8474
      %v8628 = vpop.f32.mrf.mxu0
      %v8629 = vadd.f32 %v8277, %v8628
      %v8630 = vpop.f32.mrf.mxu0
      %v8631 = vadd.f32 %v8277, %v8630
      %v8632 = vpop.f32.mrf.mxu0
      %v8633 = vadd.f32 %v8282, %v8632
      %v8634 = vpop.f32.mrf.mxu0
      %v8635 = vadd.f32 %v8282, %v8634
      %8636 = vmatprep.mubr.bf16.mxu0 %v8477
      %8637 = vmatmul.mubr.bf16.gmra.mxu0 %v8476
      %v8638 = vpop.f32.mrf.mxu0
      %v8639 = vadd.f32 %v8287, %v8638
      %v8640 = vpop.f32.mrf.mxu0
      %v8641 = vadd.f32 %v8287, %v8640
      %v8642 = vpop.f32.mrf.mxu0
      %v8643 = vadd.f32 %v8292, %v8642
      %v8644 = vpop.f32.mrf.mxu0
      %v8645 = vadd.f32 %v8292, %v8644
      %8646 = vmatprep.mubr.bf16.mxu0 %v8479
      %8647 = vmatmul.mubr.bf16.gmra.mxu0 %v8478
      %v8648 = vpop.f32.mrf.mxu0
      %v8649 = vadd.f32 %v8297, %v8648
      %v8650 = vpop.f32.mrf.mxu0
      %v8651 = vadd.f32 %v8297, %v8650
      %v8652 = vpop.f32.mrf.mxu0
      %v8653 = vadd.f32 %v8302, %v8652
      %v8654 = vpop.f32.mrf.mxu0
      %v8655 = vadd.f32 %v8302, %v8654
      %8656 = vmatprep.mubr.bf16.mxu0 %v8481
      %8657 = vmatmul.mubr.bf16.gmra.mxu0 %v8480
      %v8658 = vpop.f32.mrf.mxu0
      %v8659 = vadd.f32 %v8307, %v8658
      %v8660 = vpop.f32.mrf.mxu0
      %v8661 = vadd.f32 %v8307, %v8660
      %v8662 = vpop.f32.mrf.mxu0
      %v8663 = vadd.f32 %v8312, %v8662
      %v8664 = vpop.f32.mrf.mxu0
      %v8665 = vadd.f32 %v8312, %v8664
      %8666 = vmatprep.mubr.bf16.mxu0 %v8483
      %8667 = vmatmul.mubr.bf16.gmra.mxu0 %v8482
      %v8668 = vpop.f32.mrf.mxu0
      %v8669 = vadd.f32 %v8317, %v8668
      %v8670 = vpop.f32.mrf.mxu0
      %v8671 = vadd.f32 %v8317, %v8670
      %v8672 = vpop.f32.mrf.mxu0
      %v8673 = vadd.f32 %v8322, %v8672
      %v8674 = vpop.f32.mrf.mxu0
      %v8675 = vadd.f32 %v8322, %v8674
      %8676 = vmatprep.mubr.bf16.mxu0 %v8485
      %8677 = vmatmul.mubr.bf16.gmra.mxu0 %v8484
      %v8678 = vpop.f32.mrf.mxu0
      %v8679 = vadd.f32 %v8327, %v8678
      %v8680 = vpop.f32.mrf.mxu0
      %v8681 = vadd.f32 %v8327, %v8680
      %v8682 = vpop.f32.mrf.mxu0
      %v8683 = vadd.f32 %v8332, %v8682
      %v8684 = vpop.f32.mrf.mxu0
      %v8685 = vadd.f32 %v8332, %v8684
      %8686 = vmatprep.mubr.bf16.mxu0 %v8487
      %8687 = vmatmul.mubr.bf16.gmra.mxu0 %v8486
      %v8688 = vpop.f32.mrf.mxu0
      %v8689 = vadd.f32 %v8337, %v8688
      %v8690 = vpop.f32.mrf.mxu0
      %v8691 = vadd.f32 %v8337, %v8690
      %v8692 = vpop.f32.mrf.mxu0
      %v8693 = vadd.f32 %v8342, %v8692
      %v8694 = vpop.f32.mrf.mxu0
      %v8695 = vadd.f32 %v8342, %v8694
      %8696 = vmatprep.mubr.bf16.mxu0 %v8489
      %8697 = vmatmul.mubr.bf16.gmra.mxu0 %v8488
      %v8698 = vpop.f32.mrf.mxu0
      %v8699 = vadd.f32 %v8347, %v8698
      %v8700 = vpop.f32.mrf.mxu0
      %v8701 = vadd.f32 %v8347, %v8700
      %v8702 = vpop.f32.mrf.mxu0
      %v8703 = vadd.f32 %v8352, %v8702
      %v8704 = vpop.f32.mrf.mxu0
      %v8705 = vadd.f32 %v8352, %v8704
      %8706 = vmatprep.mubr.bf16.mxu0 %v8491
      %8707 = vmatmul.mubr.bf16.gmra.mxu0 %v8490
      %v8708 = vpop.f32.mrf.mxu0
      %v8709 = vadd.f32 %v8357, %v8708
      %v8710 = vpop.f32.mrf.mxu0
      %v8711 = vadd.f32 %v8357, %v8710
      %v8712 = vpop.f32.mrf.mxu0
      %v8713 = vadd.f32 %v8362, %v8712
      %v8714 = vpop.f32.mrf.mxu0
      %v8715 = vadd.f32 %v8362, %v8714
      %8716 = vdwg.mxu0
      %8717 = vmatprep.subr.bf16.mxu0 %v8107
      %8718 = vmatpush1.bf16.msra.mxu0 %v8106
      %8719 = vmatprep.subr.bf16.mxu0 %v8103
      %8720 = vmatpush1.bf16.msra.mxu0 %v8102
      %8721 = vmatprep.subr.bf16.mxu0 %v8099
      %8722 = vmatpush1.bf16.msra.mxu0 %v8098
      %8723 = vmatprep.subr.bf16.mxu0 %v8095
      %8724 = vmatpush1.bf16.msra.mxu0 %v8094
      %8725 = vmatprep.subr.bf16.mxu0 %v8091
      %8726 = vmatpush1.bf16.msra.mxu0 %v8090
      %8727 = vmatprep.subr.bf16.mxu0 %v8087
      %8728 = vmatpush1.bf16.msra.mxu0 %v8086
      %8729 = vmatprep.subr.bf16.mxu0 %v8083
      %8730 = vmatpush1.bf16.msra.mxu0 %v8082
      %8731 = vmatprep.subr.bf16.mxu0 %v8079
      %8732 = vmatpush1.bf16.msra.mxu0 %v8078
      %8733 = vmatprep.subr.bf16.mxu0 %v8139
      %8734 = vmatpush2.bf16.msra.mxu0 %v8138
      %8735 = vmatprep.subr.bf16.mxu0 %v8135
      %8736 = vmatpush2.bf16.msra.mxu0 %v8134
      %8737 = vmatprep.subr.bf16.mxu0 %v8131
      %8738 = vmatpush2.bf16.msra.mxu0 %v8130
      %8739 = vmatprep.subr.bf16.mxu0 %v8127
      %8740 = vmatpush2.bf16.msra.mxu0 %v8126
      %8741 = vmatprep.subr.bf16.mxu0 %v8123
      %8742 = vmatpush2.bf16.msra.mxu0 %v8122
      %8743 = vmatprep.subr.bf16.mxu0 %v8119
      %8744 = vmatpush2.bf16.msra.mxu0 %v8118
      %8745 = vmatprep.subr.bf16.mxu0 %v8115
      %8746 = vmatpush2.bf16.msra.mxu0 %v8114
      %8747 = vmatprep.subr.bf16.mxu0 %v8111
      %8748 = vmatpush2.bf16.msra.mxu0 %v8110
      %8749 = vmatprep.mubr.bf16.mxu0 %v8461
      %8750 = vmatmul.mubr.bf16.gmra.mxu0 %v8460
      %v8751 = vpop.f32.mrf.mxu0
      %v8752 = vadd.f32 %v8207, %v8751
      %v8753 = vpop.f32.mrf.mxu0
      %v8754 = vadd.f32 %v8207, %v8753
      %v8755 = vpop.f32.mrf.mxu0
      %v8756 = vadd.f32 %v8212, %v8755
      %v8757 = vpop.f32.mrf.mxu0
      %v8758 = vadd.f32 %v8212, %v8757
      %8759 = vmatprep.mubr.bf16.mxu0 %v8463
      %8760 = vmatmul.mubr.bf16.gmra.mxu0 %v8462
      %v8761 = vpop.f32.mrf.mxu0
      %v8762 = vadd.f32 %v8217, %v8761
      %v8763 = vpop.f32.mrf.mxu0
      %v8764 = vadd.f32 %v8217, %v8763
      %v8765 = vpop.f32.mrf.mxu0
      %v8766 = vadd.f32 %v8222, %v8765
      %v8767 = vpop.f32.mrf.mxu0
      %v8768 = vadd.f32 %v8222, %v8767
      %8769 = vmatprep.mubr.bf16.mxu0 %v8465
      %8770 = vmatmul.mubr.bf16.gmra.mxu0 %v8464
      %v8771 = vpop.f32.mrf.mxu0
      %v8772 = vadd.f32 %v8227, %v8771
      %v8773 = vpop.f32.mrf.mxu0
      %v8774 = vadd.f32 %v8227, %v8773
      %v8775 = vpop.f32.mrf.mxu0
      %v8776 = vadd.f32 %v8232, %v8775
      %v8777 = vpop.f32.mrf.mxu0
      %v8778 = vadd.f32 %v8232, %v8777
      %8779 = vmatprep.mubr.bf16.mxu0 %v8467
      %8780 = vmatmul.mubr.bf16.gmra.mxu0 %v8466
      %v8781 = vpop.f32.mrf.mxu0
      %v8782 = vadd.f32 %v8237, %v8781
      %v8783 = vpop.f32.mrf.mxu0
      %v8784 = vadd.f32 %v8237, %v8783
      %v8785 = vpop.f32.mrf.mxu0
      %v8786 = vadd.f32 %v8242, %v8785
      %v8787 = vpop.f32.mrf.mxu0
      %v8788 = vadd.f32 %v8242, %v8787
      %8789 = vmatprep.mubr.bf16.mxu0 %v8469
      %8790 = vmatmul.mubr.bf16.gmra.mxu0 %v8468
      %v8791 = vpop.f32.mrf.mxu0
      %v8792 = vadd.f32 %v8247, %v8791
      %v8793 = vpop.f32.mrf.mxu0
      %v8794 = vadd.f32 %v8247, %v8793
      %v8795 = vpop.f32.mrf.mxu0
      %v8796 = vadd.f32 %v8252, %v8795
      %v8797 = vpop.f32.mrf.mxu0
      %v8798 = vadd.f32 %v8252, %v8797
      %8799 = vmatprep.mubr.bf16.mxu0 %v8471
      %8800 = vmatmul.mubr.bf16.gmra.mxu0 %v8470
      %v8801 = vpop.f32.mrf.mxu0
      %v8802 = vadd.f32 %v8257, %v8801
      %v8803 = vpop.f32.mrf.mxu0
      %v8804 = vadd.f32 %v8257, %v8803
      %v8805 = vpop.f32.mrf.mxu0
      %v8806 = vadd.f32 %v8262, %v8805
      %v8807 = vpop.f32.mrf.mxu0
      %v8808 = vadd.f32 %v8262, %v8807
      %8809 = vmatprep.mubr.bf16.mxu0 %v8473
      %8810 = vmatmul.mubr.bf16.gmra.mxu0 %v8472
      %v8811 = vpop.f32.mrf.mxu0
      %v8812 = vadd.f32 %v8267, %v8811
      %v8813 = vpop.f32.mrf.mxu0
      %v8814 = vadd.f32 %v8267, %v8813
      %v8815 = vpop.f32.mrf.mxu0
      %v8816 = vadd.f32 %v8272, %v8815
      %v8817 = vpop.f32.mrf.mxu0
      %v8818 = vadd.f32 %v8272, %v8817
      %8819 = vmatprep.mubr.bf16.mxu0 %v8475
      %8820 = vmatmul.mubr.bf16.gmra.mxu0 %v8474
      %v8821 = vpop.f32.mrf.mxu0
      %v8822 = vadd.f32 %v8277, %v8821
      %v8823 = vpop.f32.mrf.mxu0
      %v8824 = vadd.f32 %v8277, %v8823
      %v8825 = vpop.f32.mrf.mxu0
      %v8826 = vadd.f32 %v8282, %v8825
      %v8827 = vpop.f32.mrf.mxu0
      %v8828 = vadd.f32 %v8282, %v8827
      %8829 = vmatprep.mubr.bf16.mxu0 %v8477
      %8830 = vmatmul.mubr.bf16.gmra.mxu0 %v8476
      %v8831 = vpop.f32.mrf.mxu0
      %v8832 = vadd.f32 %v8287, %v8831
      %v8833 = vpop.f32.mrf.mxu0
      %v8834 = vadd.f32 %v8287, %v8833
      %v8835 = vpop.f32.mrf.mxu0
      %v8836 = vadd.f32 %v8292, %v8835
      %v8837 = vpop.f32.mrf.mxu0
      %v8838 = vadd.f32 %v8292, %v8837
      %8839 = vmatprep.mubr.bf16.mxu0 %v8479
      %8840 = vmatmul.mubr.bf16.gmra.mxu0 %v8478
      %v8841 = vpop.f32.mrf.mxu0
      %v8842 = vadd.f32 %v8297, %v8841
      %v8843 = vpop.f32.mrf.mxu0
      %v8844 = vadd.f32 %v8297, %v8843
      %v8845 = vpop.f32.mrf.mxu0
      %v8846 = vadd.f32 %v8302, %v8845
      %v8847 = vpop.f32.mrf.mxu0
      %v8848 = vadd.f32 %v8302, %v8847
      %8849 = vmatprep.mubr.bf16.mxu0 %v8481
      %8850 = vmatmul.mubr.bf16.gmra.mxu0 %v8480
      %v8851 = vpop.f32.mrf.mxu0
      %v8852 = vadd.f32 %v8307, %v8851
      %v8853 = vpop.f32.mrf.mxu0
      %v8854 = vadd.f32 %v8307, %v8853
      %v8855 = vpop.f32.mrf.mxu0
      %v8856 = vadd.f32 %v8312, %v8855
      %v8857 = vpop.f32.mrf.mxu0
      %v8858 = vadd.f32 %v8312, %v8857
      %8859 = vmatprep.mubr.bf16.mxu0 %v8483
      %8860 = vmatmul.mubr.bf16.gmra.mxu0 %v8482
      %v8861 = vpop.f32.mrf.mxu0
      %v8862 = vadd.f32 %v8317, %v8861
      %v8863 = vpop.f32.mrf.mxu0
      %v8864 = vadd.f32 %v8317, %v8863
      %v8865 = vpop.f32.mrf.mxu0
      %v8866 = vadd.f32 %v8322, %v8865
      %v8867 = vpop.f32.mrf.mxu0
      %v8868 = vadd.f32 %v8322, %v8867
      %8869 = vmatprep.mubr.bf16.mxu0 %v8485
      %8870 = vmatmul.mubr.bf16.gmra.mxu0 %v8484
      %v8871 = vpop.f32.mrf.mxu0
      %v8872 = vadd.f32 %v8327, %v8871
      %v8873 = vpop.f32.mrf.mxu0
      %v8874 = vadd.f32 %v8327, %v8873
      %v8875 = vpop.f32.mrf.mxu0
      %v8876 = vadd.f32 %v8332, %v8875
      %v8877 = vpop.f32.mrf.mxu0
      %v8878 = vadd.f32 %v8332, %v8877
      %8879 = vmatprep.mubr.bf16.mxu0 %v8487
      %8880 = vmatmul.mubr.bf16.gmra.mxu0 %v8486
      %v8881 = vpop.f32.mrf.mxu0
      %v8882 = vadd.f32 %v8337, %v8881
      %v8883 = vpop.f32.mrf.mxu0
      %v8884 = vadd.f32 %v8337, %v8883
      %v8885 = vpop.f32.mrf.mxu0
      %v8886 = vadd.f32 %v8342, %v8885
      %v8887 = vpop.f32.mrf.mxu0
      %v8888 = vadd.f32 %v8342, %v8887
      %8889 = vmatprep.mubr.bf16.mxu0 %v8489
      %8890 = vmatmul.mubr.bf16.gmra.mxu0 %v8488
      %v8891 = vpop.f32.mrf.mxu0
      %v8892 = vadd.f32 %v8347, %v8891
      %v8893 = vpop.f32.mrf.mxu0
      %v8894 = vadd.f32 %v8347, %v8893
      %v8895 = vpop.f32.mrf.mxu0
      %v8896 = vadd.f32 %v8352, %v8895
      %v8897 = vpop.f32.mrf.mxu0
      %v8898 = vadd.f32 %v8352, %v8897
      %8899 = vmatprep.mubr.bf16.mxu0 %v8491
      %8900 = vmatmul.mubr.bf16.gmra.mxu0 %v8490
      %v8901 = vpop.f32.mrf.mxu0
      %v8902 = vadd.f32 %v8357, %v8901
      %v8903 = vpop.f32.mrf.mxu0
      %v8904 = vadd.f32 %v8357, %v8903
      %v8905 = vpop.f32.mrf.mxu0
      %v8906 = vadd.f32 %v8362, %v8905
      %v8907 = vpop.f32.mrf.mxu0
      %v8908 = vadd.f32 %v8362, %v8907
      %8909 = vdwg.mxu0
      %v8910 = vmax.f32 %v8559, 0.0
      %v8911 = vmax.f32 %v8561, 0.0
      %v8912 = vmax.f32 %v8752, 0.0
      %v8913 = vmax.f32 %v8754, 0.0
      %v8914 = vmax.f32 %v8563, 0.0
      %v8915 = vmax.f32 %v8565, 0.0
      %v8916 = vmax.f32 %v8756, 0.0
      %v8917 = vmax.f32 %v8758, 0.0
      %v8918 = vmax.f32 %v8569, 0.0
      %v8919 = vmax.f32 %v8571, 0.0
      %v8920 = vmax.f32 %v8762, 0.0
      %v8921 = vmax.f32 %v8764, 0.0
      %v8922 = vmax.f32 %v8573, 0.0
      %v8923 = vmax.f32 %v8575, 0.0
      %v8924 = vmax.f32 %v8766, 0.0
      %v8925 = vmax.f32 %v8768, 0.0
      %v8926 = vmax.f32 %v8579, 0.0
      %v8927 = vmax.f32 %v8581, 0.0
      %v8928 = vmax.f32 %v8772, 0.0
      %v8929 = vmax.f32 %v8774, 0.0
      %v8930 = vmax.f32 %v8583, 0.0
      %v8931 = vmax.f32 %v8585, 0.0
      %v8932 = vmax.f32 %v8776, 0.0
      %v8933 = vmax.f32 %v8778, 0.0
      %v8934 = vmax.f32 %v8589, 0.0
      %v8935 = vmax.f32 %v8591, 0.0
      %v8936 = vmax.f32 %v8782, 0.0
      %v8937 = vmax.f32 %v8784, 0.0
      %v8938 = vmax.f32 %v8593, 0.0
      %v8939 = vmax.f32 %v8595, 0.0
      %v8940 = vmax.f32 %v8786, 0.0
      %v8941 = vmax.f32 %v8788, 0.0
      %v8942 = vmax.f32 %v8599, 0.0
      %v8943 = vmax.f32 %v8601, 0.0
      %v8944 = vmax.f32 %v8792, 0.0
      %v8945 = vmax.f32 %v8794, 0.0
      %v8946 = vmax.f32 %v8603, 0.0
      %v8947 = vmax.f32 %v8605, 0.0
      %v8948 = vmax.f32 %v8796, 0.0
      %v8949 = vmax.f32 %v8798, 0.0
      %v8950 = vmax.f32 %v8609, 0.0
      %v8951 = vmax.f32 %v8611, 0.0
      %v8952 = vmax.f32 %v8802, 0.0
      %v8953 = vmax.f32 %v8804, 0.0
      %v8954 = vmax.f32 %v8613, 0.0
      %v8955 = vmax.f32 %v8615, 0.0
      %v8956 = vmax.f32 %v8806, 0.0
      %v8957 = vmax.f32 %v8808, 0.0
      %v8958 = vmax.f32 %v8619, 0.0
      %v8959 = vmax.f32 %v8621, 0.0
      %v8960 = vmax.f32 %v8812, 0.0
      %v8961 = vmax.f32 %v8814, 0.0
      %v8962 = vmax.f32 %v8623, 0.0
      %v8963 = vmax.f32 %v8625, 0.0
      %v8964 = vmax.f32 %v8816, 0.0
      %v8965 = vmax.f32 %v8818, 0.0
      %v8966 = vmax.f32 %v8629, 0.0
      %v8967 = vmax.f32 %v8631, 0.0
      %v8968 = vmax.f32 %v8822, 0.0
      %v8969 = vmax.f32 %v8824, 0.0
      %v8970 = vmax.f32 %v8633, 0.0
      %v8971 = vmax.f32 %v8635, 0.0
      %v8972 = vmax.f32 %v8826, 0.0
      %v8973 = vmax.f32 %v8828, 0.0
      %v8974 = vmax.f32 %v8639, 0.0
      %v8975 = vmax.f32 %v8641, 0.0
      %v8976 = vmax.f32 %v8832, 0.0
      %v8977 = vmax.f32 %v8834, 0.0
      %v8978 = vmax.f32 %v8643, 0.0
      %v8979 = vmax.f32 %v8645, 0.0
      %v8980 = vmax.f32 %v8836, 0.0
      %v8981 = vmax.f32 %v8838, 0.0
      %v8982 = vmax.f32 %v8649, 0.0
      %v8983 = vmax.f32 %v8651, 0.0
      %v8984 = vmax.f32 %v8842, 0.0
      %v8985 = vmax.f32 %v8844, 0.0
      %v8986 = vmax.f32 %v8653, 0.0
      %v8987 = vmax.f32 %v8655, 0.0
      %v8988 = vmax.f32 %v8846, 0.0
      %v8989 = vmax.f32 %v8848, 0.0
      %v8990 = vmax.f32 %v8659, 0.0
      %v8991 = vmax.f32 %v8661, 0.0
      %v8992 = vmax.f32 %v8852, 0.0
      %v8993 = vmax.f32 %v8854, 0.0
      %v8994 = vmax.f32 %v8663, 0.0
      %v8995 = vmax.f32 %v8665, 0.0
      %v8996 = vmax.f32 %v8856, 0.0
      %v8997 = vmax.f32 %v8858, 0.0
      %v8998 = vmax.f32 %v8669, 0.0
      %v8999 = vmax.f32 %v8671, 0.0
      %v9000 = vmax.f32 %v8862, 0.0
      %v9001 = vmax.f32 %v8864, 0.0
      %v9002 = vmax.f32 %v8673, 0.0
      %v9003 = vmax.f32 %v8675, 0.0
      %v9004 = vmax.f32 %v8866, 0.0
      %v9005 = vmax.f32 %v8868, 0.0
      %v9006 = vmax.f32 %v8679, 0.0
      %v9007 = vmax.f32 %v8681, 0.0
      %v9008 = vmax.f32 %v8872, 0.0
      %v9009 = vmax.f32 %v8874, 0.0
      %v9010 = vmax.f32 %v8683, 0.0
      %v9011 = vmax.f32 %v8685, 0.0
      %v9012 = vmax.f32 %v8876, 0.0
      %v9013 = vmax.f32 %v8878, 0.0
      %v9014 = vmax.f32 %v8689, 0.0
      %v9015 = vmax.f32 %v8691, 0.0
      %v9016 = vmax.f32 %v8882, 0.0
      %v9017 = vmax.f32 %v8884, 0.0
      %v9018 = vmax.f32 %v8693, 0.0
      %v9019 = vmax.f32 %v8695, 0.0
      %v9020 = vmax.f32 %v8886, 0.0
      %v9021 = vmax.f32 %v8888, 0.0
      %v9022 = vmax.f32 %v8699, 0.0
      %v9023 = vmax.f32 %v8701, 0.0
      %v9024 = vmax.f32 %v8892, 0.0
      %v9025 = vmax.f32 %v8894, 0.0
      %v9026 = vmax.f32 %v8703, 0.0
      %v9027 = vmax.f32 %v8705, 0.0
      %v9028 = vmax.f32 %v8896, 0.0
      %v9029 = vmax.f32 %v8898, 0.0
      %v9030 = vmax.f32 %v8709, 0.0
      %v9031 = vmax.f32 %v8711, 0.0
      %v9032 = vmax.f32 %v8902, 0.0
      %v9033 = vmax.f32 %v8904, 0.0
      %v9034 = vmax.f32 %v8713, 0.0
      %v9035 = vmax.f32 %v8715, 0.0
      %v9036 = vmax.f32 %v8906, 0.0
      %v9037 = vmax.f32 %v8908, 0.0
      %v9038 = vpack.c.bf16 %v8914, %v8910
      %v9039 = vpack.c.bf16 %v8915, %v8911
      %v9040 = vpack.c.bf16 %v8916, %v8912
      %v9041 = vpack.c.bf16 %v8917, %v8913
      %v9042 = vpack.c.bf16 %v8922, %v8918
      %v9043 = vpack.c.bf16 %v8923, %v8919
      %v9044 = vpack.c.bf16 %v8924, %v8920
      %v9045 = vpack.c.bf16 %v8925, %v8921
      %v9046 = vpack.c.bf16 %v8930, %v8926
      %v9047 = vpack.c.bf16 %v8931, %v8927
      %v9048 = vpack.c.bf16 %v8932, %v8928
      %v9049 = vpack.c.bf16 %v8933, %v8929
      %v9050 = vpack.c.bf16 %v8938, %v8934
      %v9051 = vpack.c.bf16 %v8939, %v8935
      %v9052 = vpack.c.bf16 %v8940, %v8936
      %v9053 = vpack.c.bf16 %v8941, %v8937
      %v9054 = vpack.c.bf16 %v8946, %v8942
      %v9055 = vpack.c.bf16 %v8947, %v8943
      %v9056 = vpack.c.bf16 %v8948, %v8944
      %v9057 = vpack.c.bf16 %v8949, %v8945
      %v9058 = vpack.c.bf16 %v8954, %v8950
      %v9059 = vpack.c.bf16 %v8955, %v8951
      %v9060 = vpack.c.bf16 %v8956, %v8952
      %v9061 = vpack.c.bf16 %v8957, %v8953
      %v9062 = vpack.c.bf16 %v8962, %v8958
      %v9063 = vpack.c.bf16 %v8963, %v8959
      %v9064 = vpack.c.bf16 %v8964, %v8960
      %v9065 = vpack.c.bf16 %v8965, %v8961
      %v9066 = vpack.c.bf16 %v8970, %v8966
      %v9067 = vpack.c.bf16 %v8971, %v8967
      %v9068 = vpack.c.bf16 %v8972, %v8968
      %v9069 = vpack.c.bf16 %v8973, %v8969
      %v9070 = vpack.c.bf16 %v8978, %v8974
      %v9071 = vpack.c.bf16 %v8979, %v8975
      %v9072 = vpack.c.bf16 %v8980, %v8976
      %v9073 = vpack.c.bf16 %v8981, %v8977
      %v9074 = vpack.c.bf16 %v8986, %v8982
      %v9075 = vpack.c.bf16 %v8987, %v8983
      %v9076 = vpack.c.bf16 %v8988, %v8984
      %v9077 = vpack.c.bf16 %v8989, %v8985
      %v9078 = vpack.c.bf16 %v8994, %v8990
      %v9079 = vpack.c.bf16 %v8995, %v8991
      %v9080 = vpack.c.bf16 %v8996, %v8992
      %v9081 = vpack.c.bf16 %v8997, %v8993
      %v9082 = vpack.c.bf16 %v9002, %v8998
      %v9083 = vpack.c.bf16 %v9003, %v8999
      %v9084 = vpack.c.bf16 %v9004, %v9000
      %v9085 = vpack.c.bf16 %v9005, %v9001
      %v9086 = vpack.c.bf16 %v9010, %v9006
      %v9087 = vpack.c.bf16 %v9011, %v9007
      %v9088 = vpack.c.bf16 %v9012, %v9008
      %v9089 = vpack.c.bf16 %v9013, %v9009
      %v9090 = vpack.c.bf16 %v9018, %v9014
      %v9091 = vpack.c.bf16 %v9019, %v9015
      %v9092 = vpack.c.bf16 %v9020, %v9016
      %v9093 = vpack.c.bf16 %v9021, %v9017
      %v9094 = vpack.c.bf16 %v9026, %v9022
      %v9095 = vpack.c.bf16 %v9027, %v9023
      %v9096 = vpack.c.bf16 %v9028, %v9024
      %v9097 = vpack.c.bf16 %v9029, %v9025
      %v9098 = vpack.c.bf16 %v9034, %v9030
      %v9099 = vpack.c.bf16 %v9035, %v9031
      %v9100 = vpack.c.bf16 %v9036, %v9032
      %v9101 = vpack.c.bf16 %v9037, %v9033
      %v9102 = vld [vmem:[%s18] sm:$0xff]
      %v9103 = vld [vmem:[%s18 + $0x8] sm:$0xff]
      %v9104 = vld [vmem:[%s18 + $0x10] sm:$0xff]
      %v9105 = vld [vmem:[%s19] sm:$0xff]
      %v9106 = vld [vmem:[%s19 + $0x8] sm:$0xff]
      %v9107 = vld [vmem:[%s19 + $0x10] sm:$0xff]
      %9109 = vset.pattern.permute.xlu0 0
      %9110 = vperm.xlu0 %9109, %v9105
      %v9111 = vpop.permute.xlu0 %9110
      %9114 = vset.pattern.permute.xlu0 0
      %9115 = vperm.xlu0 %9114, %v9106
      %v9116 = vpop.permute.xlu0 %9115
      %9119 = vset.pattern.permute.xlu0 0
      %9120 = vperm.xlu0 %9119, %v9107
      %v9121 = vpop.permute.xlu0 %9120
      %v9126 = vunpack.c.l.b16 %v9102
      %v9127 = vunpack.c.h.b16 %v9102
      %v9128 = vunpack.c.l.b16 %v9103
      %v9129 = vunpack.c.h.b16 %v9103
      %v9130 = vunpack.c.l.b16 %v9104
      %v9131 = vunpack.c.h.b16 %v9104
      %v9132 = vpack.c.b16 %v9128, %v9126
      %v9133 = vpack.c.b16 %v9129, %v9127
      %v9134 = vpack.c.b16 %v9130, %v9130
      %v9135 = vpack.c.b16 %v9131, %v9131
      %9140 = vmatprep.subr.bf16.mxu0 %v9067
      %9141 = vmatpush1.bf16.msra.mxu0 %v9066
      %9142 = vmatprep.subr.bf16.mxu0 %v9063
      %9143 = vmatpush1.bf16.msra.mxu0 %v9062
      %9144 = vmatprep.subr.bf16.mxu0 %v9059
      %9145 = vmatpush1.bf16.msra.mxu0 %v9058
      %9146 = vmatprep.subr.bf16.mxu0 %v9055
      %9147 = vmatpush1.bf16.msra.mxu0 %v9054
      %9148 = vmatprep.subr.bf16.mxu0 %v9051
      %9149 = vmatpush1.bf16.msra.mxu0 %v9050
      %9150 = vmatprep.subr.bf16.mxu0 %v9047
      %9151 = vmatpush1.bf16.msra.mxu0 %v9046
      %9152 = vmatprep.subr.bf16.mxu0 %v9043
      %9153 = vmatpush1.bf16.msra.mxu0 %v9042
      %9154 = vmatprep.subr.bf16.mxu0 %v9039
      %9155 = vmatpush1.bf16.msra.mxu0 %v9038
      %9156 = vmatprep.subr.bf16.mxu0 %v9099
      %9157 = vmatpush2.bf16.msra.mxu0 %v9098
      %9158 = vmatprep.subr.bf16.mxu0 %v9095
      %9159 = vmatpush2.bf16.msra.mxu0 %v9094
      %9160 = vmatprep.subr.bf16.mxu0 %v9091
      %9161 = vmatpush2.bf16.msra.mxu0 %v9090
      %9162 = vmatprep.subr.bf16.mxu0 %v9087
      %9163 = vmatpush2.bf16.msra.mxu0 %v9086
      %9164 = vmatprep.subr.bf16.mxu0 %v9083
      %9165 = vmatpush2.bf16.msra.mxu0 %v9082
      %9166 = vmatprep.subr.bf16.mxu0 %v9079
      %9167 = vmatpush2.bf16.msra.mxu0 %v9078
      %9168 = vmatprep.subr.bf16.mxu0 %v9075
      %9169 = vmatpush2.bf16.msra.mxu0 %v9074
      %9170 = vmatprep.subr.bf16.mxu0 %v9071
      %9171 = vmatpush2.bf16.msra.mxu0 %v9070
      %9172 = vmatprep.mubr.bf16.mxu0 %v9133
      %9173 = vmatmul.mubr.bf16.gmra.mxu0 %v9132
      %v9174 = vpop.f32.mrf.mxu0
      %v9175 = vadd.f32 %v9111, %v9174
      %v9176 = vpop.f32.mrf.mxu0
      %v9177 = vadd.f32 %v9111, %v9176
      %v9178 = vpop.f32.mrf.mxu0
      %v9179 = vadd.f32 %v9116, %v9178
      %v9180 = vpop.f32.mrf.mxu0
      %v9181 = vadd.f32 %v9116, %v9180
      %9182 = vmatprep.mubr.bf16.mxu0 %v9135
      %9183 = vmatmul.mubr.bf16.gmra.mxu0 %v9134
      %v9184 = vpop.f32.mrf.mxu0
      %v9185 = vadd.f32 %v9121, %v9184
      %v9186 = vpop.f32.mrf.mxu0
      %v9187 = vadd.f32 %v9121, %v9186
      %v9188 = vpop.f32.mrf.mxu0
      %v9189 = vpop.f32.mrf.mxu0
      %9190 = vdwg.mxu0
      %9191 = vmatprep.subr.bf16.mxu0 %v9069
      %9192 = vmatpush1.bf16.msra.mxu0 %v9068
      %9193 = vmatprep.subr.bf16.mxu0 %v9065
      %9194 = vmatpush1.bf16.msra.mxu0 %v9064
      %9195 = vmatprep.subr.bf16.mxu0 %v9061
      %9196 = vmatpush1.bf16.msra.mxu0 %v9060
      %9197 = vmatprep.subr.bf16.mxu0 %v9057
      %9198 = vmatpush1.bf16.msra.mxu0 %v9056
      %9199 = vmatprep.subr.bf16.mxu0 %v9053
      %9200 = vmatpush1.bf16.msra.mxu0 %v9052
      %9201 = vmatprep.subr.bf16.mxu0 %v9049
      %9202 = vmatpush1.bf16.msra.mxu0 %v9048
      %9203 = vmatprep.subr.bf16.mxu0 %v9045
      %9204 = vmatpush1.bf16.msra.mxu0 %v9044
      %9205 = vmatprep.subr.bf16.mxu0 %v9041
      %9206 = vmatpush1.bf16.msra.mxu0 %v9040
      %9207 = vmatprep.subr.bf16.mxu0 %v9101
      %9208 = vmatpush2.bf16.msra.mxu0 %v9100
      %9209 = vmatprep.subr.bf16.mxu0 %v9097
      %9210 = vmatpush2.bf16.msra.mxu0 %v9096
      %9211 = vmatprep.subr.bf16.mxu0 %v9093
      %9212 = vmatpush2.bf16.msra.mxu0 %v9092
      %9213 = vmatprep.subr.bf16.mxu0 %v9089
      %9214 = vmatpush2.bf16.msra.mxu0 %v9088
      %9215 = vmatprep.subr.bf16.mxu0 %v9085
      %9216 = vmatpush2.bf16.msra.mxu0 %v9084
      %9217 = vmatprep.subr.bf16.mxu0 %v9081
      %9218 = vmatpush2.bf16.msra.mxu0 %v9080
      %9219 = vmatprep.subr.bf16.mxu0 %v9077
      %9220 = vmatpush2.bf16.msra.mxu0 %v9076
      %9221 = vmatprep.subr.bf16.mxu0 %v9073
      %9222 = vmatpush2.bf16.msra.mxu0 %v9072
      %9223 = vmatprep.mubr.bf16.mxu0 %v9133
      %9224 = vmatmul.mubr.bf16.gmra.mxu0 %v9132
      %v9225 = vpop.f32.mrf.mxu0
      %v9226 = vadd.f32 %v9111, %v9225
      %v9227 = vpop.f32.mrf.mxu0
      %v9228 = vadd.f32 %v9111, %v9227
      %v9229 = vpop.f32.mrf.mxu0
      %v9230 = vadd.f32 %v9116, %v9229
      %v9231 = vpop.f32.mrf.mxu0
      %v9232 = vadd.f32 %v9116, %v9231
      %9233 = vmatprep.mubr.bf16.mxu0 %v9135
      %9234 = vmatmul.mubr.bf16.gmra.mxu0 %v9134
      %v9235 = vpop.f32.mrf.mxu0
      %v9236 = vadd.f32 %v9121, %v9235
      %v9237 = vpop.f32.mrf.mxu0
      %v9238 = vadd.f32 %v9121, %v9237
      %v9239 = vpop.f32.mrf.mxu0
      %v9240 = vpop.f32.mrf.mxu0
      %9241 = vdwg.mxu0
      %v9242 = vadd.f32 %v670, 1e-09
      %v9243 = vadd.f32 %v671, 1e-09
      %v9244 = vadd.f32 %v672, 1e-09
      %v9245 = vadd.f32 %v673, 1e-09
      %v9246 = vadd.f32 %v674, 1e-09
      %v9247 = vadd.f32 %v675, 1e-09
      %v9248 = vadd.f32 %v676, 1e-09
      %v9249 = vadd.f32 %v677, 1e-09
      %v9250 = vadd.f32 %v678, 1e-09
      %v9251 = vadd.f32 %v679, 1e-09
      %v9252 = vadd.f32 %v680, 1e-09
      %v9253 = vadd.f32 %v681, 1e-09
      %v9254 = vlog2.pop %v9242
      %v9255 = vmul.f32 %v9254, 0.6931472
      %v9256 = vlog2.pop %v9243
      %v9257 = vmul.f32 %v9256, 0.6931472
      %v9258 = vlog2.pop %v9244
      %v9259 = vmul.f32 %v9258, 0.6931472
      %v9260 = vlog2.pop %v9245
      %v9261 = vmul.f32 %v9260, 0.6931472
      %v9262 = vlog2.pop %v9246
      %v9263 = vmul.f32 %v9262, 0.6931472
      %v9264 = vlog2.pop %v9247
      %v9265 = vmul.f32 %v9264, 0.6931472
      %v9266 = vlog2.pop %v9248
      %v9267 = vmul.f32 %v9266, 0.6931472
      %v9268 = vlog2.pop %v9249
      %v9269 = vmul.f32 %v9268, 0.6931472
      %v9270 = vlog2.pop %v9250
      %v9271 = vmul.f32 %v9270, 0.6931472
      %v9272 = vlog2.pop %v9251
      %v9273 = vmul.f32 %v9272, 0.6931472
      %v9274 = vlog2.pop %v9252
      %v9275 = vmul.f32 %v9274, 0.6931472
      %v9276 = vlog2.pop %v9253
      %v9277 = vmul.f32 %v9276, 0.6931472
      %v9278 = vadd.f32 %v9255, %v9175
      %v9279 = vadd.f32 %v9257, %v9177
      %v9280 = vadd.f32 %v9259, %v9226
      %v9281 = vadd.f32 %v9261, %v9228
      %v9282 = vadd.f32 %v9263, %v9179
      %v9283 = vadd.f32 %v9265, %v9181
      %v9284 = vadd.f32 %v9267, %v9230
      %v9285 = vadd.f32 %v9269, %v9232
      %v9286 = vadd.f32 %v9271, %v9185
      %v9287 = vadd.f32 %v9273, %v9187
      %v9288 = vadd.f32 %v9275, %v9236
      %v9289 = vadd.f32 %v9277, %v9238
      %v9290 = vmax.f32 %v9278, %v9282
      %v9291 = vmax.f32 %v9290, %v9286
      %v9292 = vrot.slane %v9291, 4
      %v9293 = vmax.f32 %v9291, %v9292
      %v9294 = vrot.slane %v9293, 2
      %v9295 = vmax.f32 %v9293, %v9294
      %v9296 = vrot.slane %v9295, 1
      %v9297 = vmax.f32 %v9295, %v9296
      %v9298 = vmax.f32 %v9279, %v9283
      %v9299 = vmax.f32 %v9298, %v9287
      %v9300 = vrot.slane %v9299, 4
      %v9301 = vmax.f32 %v9299, %v9300
      %v9302 = vrot.slane %v9301, 2
      %v9303 = vmax.f32 %v9301, %v9302
      %v9304 = vrot.slane %v9303, 1
      %v9305 = vmax.f32 %v9303, %v9304
      %v9306 = vmax.f32 %v9280, %v9284
      %v9307 = vmax.f32 %v9306, %v9288
      %v9308 = vrot.slane %v9307, 4
      %v9309 = vmax.f32 %v9307, %v9308
      %v9310 = vrot.slane %v9309, 2
      %v9311 = vmax.f32 %v9309, %v9310
      %v9312 = vrot.slane %v9311, 1
      %v9313 = vmax.f32 %v9311, %v9312
      %v9314 = vmax.f32 %v9281, %v9285
      %v9315 = vmax.f32 %v9314, %v9289
      %v9316 = vrot.slane %v9315, 4
      %v9317 = vmax.f32 %v9315, %v9316
      %v9318 = vrot.slane %v9317, 2
      %v9319 = vmax.f32 %v9317, %v9318
      %v9320 = vrot.slane %v9319, 1
      %v9321 = vmax.f32 %v9319, %v9320
      %v9322 = vsub.f32 %v9278, %v9297
      %v9323 = vsub.f32 %v9279, %v9305
      %v9324 = vsub.f32 %v9280, %v9313
      %v9325 = vsub.f32 %v9281, %v9321
      %v9326 = vsub.f32 %v9282, %v9297
      %v9327 = vsub.f32 %v9283, %v9305
      %v9328 = vsub.f32 %v9284, %v9313
      %v9329 = vsub.f32 %v9285, %v9321
      %v9330 = vsub.f32 %v9286, %v9297
      %v9331 = vsub.f32 %v9287, %v9305
      %v9332 = vsub.f32 %v9288, %v9313
      %v9333 = vsub.f32 %v9289, %v9321
      %v9334 = vmul.f32 %v9322, 1.442695
      %v9335 = vpow.pop %v9334
      %v9336 = vmul.f32 %v9323, 1.442695
      %v9337 = vpow.pop %v9336
      %v9338 = vmul.f32 %v9324, 1.442695
      %v9339 = vpow.pop %v9338
      %v9340 = vmul.f32 %v9325, 1.442695
      %v9341 = vpow.pop %v9340
      %v9342 = vmul.f32 %v9326, 1.442695
      %v9343 = vpow.pop %v9342
      %v9344 = vmul.f32 %v9327, 1.442695
      %v9345 = vpow.pop %v9344
      %v9346 = vmul.f32 %v9328, 1.442695
      %v9347 = vpow.pop %v9346
      %v9348 = vmul.f32 %v9329, 1.442695
      %v9349 = vpow.pop %v9348
      %v9350 = vmul.f32 %v9330, 1.442695
      %v9351 = vpow.pop %v9350
      %v9352 = vmul.f32 %v9331, 1.442695
      %v9353 = vpow.pop %v9352
      %v9354 = vmul.f32 %v9332, 1.442695
      %v9355 = vpow.pop %v9354
      %v9356 = vmul.f32 %v9333, 1.442695
      %v9357 = vpow.pop %v9356
      %v9358 = vadd.f32 %v9335, %v9343
      %v9359 = vadd.f32 %v9358, %v9351
      %v9360 = vrot.slane %v9359, 4
      %v9361 = vadd.f32 %v9359, %v9360
      %v9362 = vrot.slane %v9361, 2
      %v9363 = vadd.f32 %v9361, %v9362
      %v9364 = vrot.slane %v9363, 1
      %v9365 = vadd.f32 %v9363, %v9364
      %v9366 = vadd.f32 %v9337, %v9345
      %v9367 = vadd.f32 %v9366, %v9353
      %v9368 = vrot.slane %v9367, 4
      %v9369 = vadd.f32 %v9367, %v9368
      %v9370 = vrot.slane %v9369, 2
      %v9371 = vadd.f32 %v9369, %v9370
      %v9372 = vrot.slane %v9371, 1
      %v9373 = vadd.f32 %v9371, %v9372
      %v9374 = vadd.f32 %v9339, %v9347
      %v9375 = vadd.f32 %v9374, %v9355
      %v9376 = vrot.slane %v9375, 4
      %v9377 = vadd.f32 %v9375, %v9376
      %v9378 = vrot.slane %v9377, 2
      %v9379 = vadd.f32 %v9377, %v9378
      %v9380 = vrot.slane %v9379, 1
      %v9381 = vadd.f32 %v9379, %v9380
      %v9382 = vadd.f32 %v9341, %v9349
      %v9383 = vadd.f32 %v9382, %v9357
      %v9384 = vrot.slane %v9383, 4
      %v9385 = vadd.f32 %v9383, %v9384
      %v9386 = vrot.slane %v9385, 2
      %v9387 = vadd.f32 %v9385, %v9386
      %v9388 = vrot.slane %v9387, 1
      %v9389 = vadd.f32 %v9387, %v9388
      %v9390 = vrcp.pop %v9365
      %v9391 = vrcp.pop %v9373
      %v9392 = vrcp.pop %v9381
      %v9393 = vrcp.pop %v9389
      %v9394 = vmul.f32 %v9335, %v9390
      %v9395 = vmul.f32 %v9337, %v9391
      %v9396 = vmul.f32 %v9339, %v9392
      %v9397 = vmul.f32 %v9341, %v9393
      %v9398 = vmul.f32 %v9343, %v9390
      %v9399 = vmul.f32 %v9345, %v9391
      %v9400 = vmul.f32 %v9347, %v9392
      %v9401 = vmul.f32 %v9349, %v9393
      %v9402 = vmul.f32 %v9351, %v9390
      %v9403 = vmul.f32 %v9353, %v9391
      %v9404 = vmul.f32 %v9355, %v9392
      %v9405 = vmul.f32 %v9357, %v9393
      %9406 = vst [vmem:[%s667] sm:$0xff] %v9394
      %9407 = vst [vmem:[%s667 + $0x8] sm:$0xff] %v9395
      %9408 = vst [vmem:[%s667 + $0x10] sm:$0xff] %v9396
      %9409 = vst [vmem:[%s667 + $0x18] sm:$0xff] %v9397
      %9410 = vst [vmem:[%s667 + $0x20] sm:$0xff] %v9398
      %9411 = vst [vmem:[%s667 + $0x28] sm:$0xff] %v9399
      %9412 = vst [vmem:[%s667 + $0x30] sm:$0xff] %v9400
      %9413 = vst [vmem:[%s667 + $0x38] sm:$0xff] %v9401
      %9414 = vst [vmem:[%s667 + $0x40] sm:$0xff] %v9402
      %9415 = vst [vmem:[%s667 + $0x48] sm:$0xff] %v9403
      %9416 = vst [vmem:[%s667 + $0x50] sm:$0xff] %v9404
      %9417 = vst [vmem:[%s667 + $0x58] sm:$0xff] %v9405
      %s9418 = smul.u32 4, %s36
      %p9419 = scmp.lt.s32.totalorder %s35, 1
      %s9420 = scalar_select %p9419, %s35, 1
      %p9421 = scmp.lt.s32.totalorder %s9418, 3
      %s9422 = scalar_select %p9421, %s9418, 3
      %s9423 = smul.addr %s9420, 12
      %s9424 = sadd.s32 %s9422, %s9423
      %s9425 = smul.addr %s9424, 8
      %s9426 = scalar_lea.vmem %s20, %s9425
      // Predicated region
      $region101: #{bwrefine_forward.1} parent=99 // pred_check
        %p9427 = pneg %p490
      $region102: #{bwrefine_forward.1} parent=99 // pred_check_branch
        %9429 = sbr.rel (%p9427) target = $region104
      $region103: #{bwrefine_forward.1} parent=99 // pred_region
        %s9430 = smul.u32 4, %s36
      $region104: #{bwrefine_forward.1} parent=99 // pred_fallthru
        _
    $region100: #{bwrefine_forward.1} parent=5 // pred_fallthru
      _
    %p9431 = scmp.le.s32.totalorder 2, %s26
    // Predicated region
    $region105: #{bwrefine_forward.1} parent=5 // pred_check
      %p9432 = pneg %p9431
    $region106: #{bwrefine_forward.1} parent=5 // pred_check_branch
      %9434 = sbr.rel (%p9432) target = $region108
    $region107: #{bwrefine_forward.1} parent=5 // pred_region
      %s9435 = ssub.s32 %s26, 2
      // Predicated region
      $region109: #{bwrefine_forward.1} parent=107 // pred_check
        %p9436 = pneg %p496
      $region110: #{bwrefine_forward.1} parent=107 // pred_check_branch
        %9438 = sbr.rel (%p9436) target = $region112
      $region111: #{bwrefine_forward.1} parent=107 // pred_region
        %s9439 = smul.u32 4, %s38
        %p9440 = scmp.lt.s32.totalorder %s37, 1
        %s9441 = scalar_select %p9440, %s37, 1
        %p9442 = scmp.lt.s32.totalorder %s9439, 3
        %s9443 = scalar_select %p9442, %s9439, 3
        %s9444 = smul.addr %s9441, 12
        %s9445 = sadd.s32 %s9443, %s9444
        %s9446 = smul.addr %s9445, 8
        %s9447 = scalar_lea.vmem %s20, %s9446
      $region112: #{bwrefine_forward.1} parent=107 // pred_fallthru
        _
    $region108: #{bwrefine_forward.1} parent=5 // pred_fallthru
      _
  $region6: #{bwrefine_forward.1} parent=0 // loop_footer
    %s30 = sadd.s32 1, %s26
  $region7: #{bwrefine_forward.1} parent=0 // loop_footer_branch
    %25 = sbr.rel target = $region3
  $region8: #{bwrefine_forward.1} parent=0 // loop_exit
    _

</llo_original>
